<compile_context>
chip_gen: v7x
topology: tpu7x:2x2x1
jax: 0.10.0
libtpu: 0.0.40
codegen_flags: <defaults>
</compile_context>

<pallas_src>
import functools

import jax
import jax.numpy as jnp
from jax import lax
from jax.experimental import pallas as pl
from jax.experimental.pallas import tpu as pltpu

LANE = 128  # padded per-gate direction slot width: [fwd H | bwd H | zero pad]


# ----------------------------------------------------------------------------
# Fused kernel: (embedded tokens, packed weights) -> (padded logits, padded probs).
#
# Packed layouts (built once in prepare_params), LP = 128, G = 4*LP:
#   gate slot k (width LP): lanes [0:H)=fwd gate k, [H:2H)=bwd gate k, rest zero.
#   wih (layer 0)   : (E, G)    zero-free; applied to x(t); select picks fwd lanes
#                     from A[t] and bwd lanes from A[T-1-t].
#   wih (layer > 0) : (LP, 2G)  dual; cols [0:G) act on y_pack(t), [G:2G) on y_pack(T-1-t).
#   whh             : (LP, G)   rows [0:H)=fwd hidden, [H:2H)=bwd hidden, pad rows zero.
#   y_pack[t]       : (B, LP)   [fwd hidden at time t | bwd hidden at time T-1-t | 0].
# ----------------------------------------------------------------------------
def fused_lstm_classifier_kernel(*refs, T, B, H, LP, n_layers):
    x_ref = refs[0]
    layer_refs = [refs[1 + 3 * l: 1 + 3 * (l + 1)] for l in range(n_layers)]
    base = 1 + 3 * n_layers
    (h0_ref, c0_ref, wa_ref, wb_ref, bh_ref,
     logit_ref, prob_ref, a0_ref, a1_ref, xw_ref) = refs[base:base + 10]
    y_refs = refs[base + 10: base + 10 + n_layers]

    G = 4 * LP  # packed gate width: [i | f | g | o], each LP lanes

    # constant lane mask: True on the forward-direction lanes of every gate slot
    lane = lax.broadcasted_iota(jnp.int32, (1, G), 1)
    fwd_mask = (lane & (LP - 1)) < H

    for l in range(n_layers):
        wih_ref, whh_ref, b_ref = layer_refs[l]
        y_ref = y_refs[l]

        # ---- input projection: ONE matmul per layer over all T*B rows (off the
        #      serial path); bias folded in with a single broadcast. -----------------
        if l == 0:
            src = x_ref[...].reshape(T * B, -1)                      # (T*B, E)
            a0_ref[...] = (jnp.dot(src, wih_ref[...],
                                   preferred_element_type=jnp.float32)
                           + b_ref[...]).reshape(T, B, G)

            def pre(t, carry, a_ref=a0_ref):
                # fwd gate lanes <- time t, bwd gate lanes <- time T-1-t (pure VPU select)
                xw_ref[t] = jnp.where(fwd_mask, a_ref[t], a_ref[T - 1 - t])
                return carry
        else:
            src = y_refs[l - 1][...].reshape(T * B, LP)              # packed prev-layer out
            a1_ref[...] = (jnp.dot(src, wih_ref[...],
                                   preferred_element_type=jnp.float32)
                           + b_ref[...]).reshape(T, B, 2 * G)

            def pre(t, carry, a_ref=a1_ref):
                # dual weight: cols [0:G) act on y_pack(t), cols [G:2G) on y_pack(T-1-t)
                a_t = a_ref[t]
                a_r = a_ref[T - 1 - t]
                xw_ref[t] = a_t[:, 0:G] + a_r[:, G:2 * G]
                return carry

        lax.fori_loop(0, T, pre, 0, unroll=True)

        # ---- packed recurrence: one (B,LP)x(LP,G) matmul per step serves both
        #      directions; all gate slices / state / stores are full 128-lane vregs.
        #      whh is re-read per step: the padded (128,512) weight would be 64 vregs
        #      if hoisted across the unrolled loop -> guaranteed spills. -------------
        def step(t, carry, whh_ref=whh_ref, y_ref=y_ref):
            h_cat, c_cat = carry                                     # (B, LP) each
            gates = xw_ref[t] + jnp.dot(h_cat, whh_ref[...],
                                        preferred_element_type=jnp.float32)
            i = jax.nn.sigmoid(gates[:, 0 * LP:1 * LP])
            f = jax.nn.sigmoid(gates[:, 1 * LP:2 * LP])
            g = jnp.tanh(gates[:, 2 * LP:3 * LP])
            o = jax.nn.sigmoid(gates[:, 3 * LP:4 * LP])
            c_cat = f * c_cat + i * g
            h_cat = o * jnp.tanh(c_cat)
            y_ref[t] = h_cat            # single unmasked 128-lane store per step
            return (h_cat, c_cat)

        lax.fori_loop(0, T, step, (h0_ref[l], c0_ref[l]), unroll=True)

    # ---- fused head: (BN folded into) Linear + softmax over padded class lanes -----
    # lstm_output[:, -1] = [h_f(T-1) | h_b(T-1)] = [y[T-1][:,0:H] | y[0][:,H:2H)];
    # the split head weights read those lanes directly -> no lane concat.
    # TODO(synk): nn.Dropout(0.1) treated as identity (eval-mode semantics).
    y_last = y_refs[n_layers - 1]
    logits = (jnp.dot(y_last[T - 1], wa_ref[...], preferred_element_type=jnp.float32)
              + jnp.dot(y_last[0], wb_ref[...], preferred_element_type=jnp.float32)
              + bh_ref[...])                    # pad classes carry a -1e9 bias
    logit_ref[...] = logits
    m = jnp.max(logits, axis=1, keepdims=True)
    e = jnp.exp(logits - m)                     # pad classes -> exactly 0
    prob_ref[...] = e / jnp.sum(e, axis=1, keepdims=True)


# ----------------------------------------------------------------------------
# One-time weight packing (transposes + padded/gate-interleaved layouts + BN fold).
# ----------------------------------------------------------------------------
def prepare_params(params):
    H = params["layers"][0]["w_hh_f"].shape[1]
    LP = LANE
    assert 2 * H <= LP
    f32 = jnp.float32

    def pack_gates(mf, mb):
        """mf/mb: (K, 4H), gate blocks [i|f|g|o]; -> (K, 4*LP) padded direction slots."""
        K = mf.shape[0]
        pad = jnp.zeros((K, LP - 2 * H), f32)
        cols = []
        for g in range(4):
            cols += [mf[:, g * H:(g + 1) * H], mb[:, g * H:(g + 1) * H], pad]
        return jnp.concatenate(cols, axis=1)

    zH = jnp.zeros((H, 4 * H), f32)
    zpad_rows = jnp.zeros((LP - 2 * H, 4 * LP), f32)

    layers = []
    for l, p in enumerate(params["layers"]):
        wf_t = p["w_ih_f"].T.astype(f32)        # (IN, 4H)
        wb_t = p["w_ih_b"].T.astype(f32)
        whhf_t = p["w_hh_f"].T.astype(f32)      # (H, 4H)
        whhb_t = p["w_hh_b"].T.astype(f32)
        b_wide = pack_gates(p["b_f"].reshape(1, -1), p["b_b"].reshape(1, -1))  # (1, 4LP)

        if l == 0:
            # zero-free: both directions' W_ih applied to x(t); time selection done in
            # the kernel with one lane-mask select per timestep.
            wih = pack_gates(wf_t, wb_t)                                       # (E, 4LP)
            bias = b_wide
        else:
            # packed-y layout mixes times within a lane group, so a single select can't
            # express it: use a dual weight (same-step half | reversed-step half).
            part_same = jnp.concatenate([pack_gates(wf_t[0:H], zH),
                                         pack_gates(zH, wb_t[H:2 * H]),
                                         zpad_rows], axis=0)                   # (LP, 4LP)
            part_rev = jnp.concatenate([pack_gates(zH, wb_t[0:H]),
                                        pack_gates(wf_t[H:2 * H], zH),
                                        zpad_rows], axis=0)                    # (LP, 4LP)
            wih = jnp.concatenate([part_same, part_rev], axis=1)               # (LP, 8LP)
            bias = jnp.concatenate([b_wide, jnp.zeros((1, 4 * LP), f32)], axis=1)

        whh = jnp.concatenate([pack_gates(whhf_t, zH),
                               pack_gates(zH, whhb_t),
                               zpad_rows], axis=0)                             # (LP, 4LP)
        layers.append({"wih": wih, "whh": whh, "b": bias})

    # Fold eval-mode BatchNorm into the Linear head, split per direction and pad the
    # class dim to a full 128-lane slab (pad classes masked with a -1e9 bias).
    scale = params["bn_gamma"] * lax.rsqrt(params["bn_var"] + 1e-5)
    shift = params["bn_beta"] - params["bn_mean"] * scale
    Wp = params["lin_w"] * scale[None, :]                # (n_cls, 2H)
    bp = params["lin_b"] + params["lin_w"] @ shift       # (n_cls,)
    n_cls = Wp.shape[0]
    NCP = LANE
    w_head_a = jnp.zeros((LP, NCP), f32).at[0:H, 0:n_cls].set(Wp[:, 0:H].T)
    w_head_b = jnp.zeros((LP, NCP), f32).at[H:2 * H, 0:n_cls].set(Wp[:, H:2 * H].T)
    b_head = jnp.full((1, NCP), -1e9, f32).at[0, 0:n_cls].set(bp)

    return {"embedding": params["embedding"], "layers": layers,
            "w_head_a": w_head_a, "w_head_b": w_head_b, "b_head": b_head}


# ----------------------------------------------------------------------------
# Forward pass: embedding gather glue + a single fused pallas_call, tiled over batch.
# ----------------------------------------------------------------------------
def lstm_classifier_forward(X, prepped, h0, c0, *, n_cls=2, bt=8):
    return _forward(X, prepped, h0, c0, n_cls=n_cls, bt=bt)


@functools.partial(jax.jit, static_argnames=("n_cls", "bt"))
def _forward(X, prepped, h0, c0, *, n_cls, bt):
    B, T = X.shape
    n_layers = len(prepped["layers"])
    H = h0.shape[-1]
    LP = prepped["layers"][0]["whh"].shape[0]
    NCP = prepped["w_head_a"].shape[1]
    E = prepped["embedding"].shape[1]
    assert B % bt == 0, "batch must be a multiple of the batch tile"

    # TODO(synk): embedding gather stays as XLA glue (data-dependent row gather has no
    # cheap BlockSpec expression at this size).
    emb = prepped["embedding"][X.T].astype(jnp.float32)                 # (T, B, E)

    # pack initial states per layer: [h_f | h_b | zero pad] along lanes
    zpad = jnp.zeros((n_layers, B, LP - 2 * H), jnp.float32)
    h0_cat = jnp.concatenate([h0[0::2], h0[1::2], zpad], axis=-1)       # (L, B, LP)
    c0_cat = jnp.concatenate([c0[0::2], c0[1::2], zpad], axis=-1)

    args = [emb]
    in_specs = [pl.BlockSpec((T, bt, E), lambda b: (0, b, 0))]
    for lp in prepped["layers"]:
        for w in (lp["wih"], lp["whh"], lp["b"]):
            args.append(w)
            in_specs.append(pl.BlockSpec(w.shape, lambda b: (0, 0)))
    args += [h0_cat, c0_cat, prepped["w_head_a"], prepped["w_head_b"], prepped["b_head"]]
    in_specs += [pl.BlockSpec((n_layers, bt, LP), lambda b: (0, b, 0)),
                 pl.BlockSpec((n_layers, bt, LP), lambda b: (0, b, 0)),
                 pl.BlockSpec(prepped["w_head_a"].shape, lambda b: (0, 0)),
                 pl.BlockSpec(prepped["w_head_b"].shape, lambda b: (0, 0)),
                 pl.BlockSpec(prepped["b_head"].shape, lambda b: (0, 0))]

    kernel = functools.partial(fused_lstm_classifier_kernel,
                               T=T, B=bt, H=H, LP=LP, n_layers=n_layers)
    # Scratch footprint per batch tile is ~0.6 MiB here.
    # TODO(synk): if T/B/H scale up, chunk the pre-pass over time (or store xw/y in
    # bf16) and set vmem_limit_bytes so it still fits v7x's 64 MiB VMEM.
    logits, probs = pl.pallas_call(
        kernel,
        grid=(B // bt,),
        out_shape=(jax.ShapeDtypeStruct((B, NCP), jnp.float32),
                   jax.ShapeDtypeStruct((B, NCP), jnp.float32)),
        in_specs=in_specs,
        out_specs=(pl.BlockSpec((bt, NCP), lambda b: (b, 0)),
                   pl.BlockSpec((bt, NCP), lambda b: (b, 0))),
        scratch_shapes=(
            [pltpu.VMEM((T, bt, 4 * LP), jnp.float32),     # a0: layer-0 projection
             pltpu.VMEM((T, bt, 8 * LP), jnp.float32),     # a1: deeper-layer dual projection
             pltpu.VMEM((T, bt, 4 * LP), jnp.float32)]     # xw: per-step gate pre-acts
            + [pltpu.VMEM((T, bt, LP), jnp.float32)] * n_layers),  # packed layer outputs
        compiler_params=pltpu.CompilerParams(
            dimension_semantics=("parallel",)),            # batch tiles -> both TCs on v7x
    )(*args)
    return logits[:, :n_cls], probs[:, :n_cls]


# ----------------------------------------------------------------------------
# Pure-JAX reference (same math, original param layout) for correctness check.
# ----------------------------------------------------------------------------
def ref_lstm_dir(x_tbe, w_ih, w_hh, b, h0, c0):
    H = h0.shape[-1]

    def step(carry, x_t):
        h, c = carry
        gates = x_t @ w_ih.T + h @ w_hh.T + b
        i = jax.nn.sigmoid(gates[:, 0:H])
        f = jax.nn.sigmoid(gates[:, H:2 * H])
        g = jnp.tanh(gates[:, 2 * H:3 * H])
        o = jax.nn.sigmoid(gates[:, 3 * H:4 * H])
        c = f * c + i * g
        h = o * jnp.tanh(c)
        return (h, c), h

    _, ys = lax.scan(step, (h0, c0), x_tbe)
    return ys


def ref_forward(X, params, h0, c0):
    emb = params["embedding"][X]
    x = jnp.transpose(emb, (1, 0, 2)).astype(jnp.float32)
    for l, p in enumerate(params["layers"]):
        yf = ref_lstm_dir(x, p["w_ih_f"], p["w_hh_f"], p["b_f"], h0[2 * l], c0[2 * l])
        yb = ref_lstm_dir(x[::-1], p["w_ih_b"], p["w_hh_b"], p["b_b"],
                          h0[2 * l + 1], c0[2 * l + 1])[::-1]
        x = jnp.concatenate([yf, yb], axis=-1)
    feat = jnp.transpose(x, (1, 0, 2))[:, -1]
    xn = ((feat - params["bn_mean"]) * lax.rsqrt(params["bn_var"] + 1e-5)
          * params["bn_gamma"] + params["bn_beta"])
    logits = xn @ params["lin_w"].T + params["lin_b"]
    return logits, jax.nn.softmax(logits, axis=1)


# ----------------------------------------------------------------------------
# Deterministic parameter construction (shapes follow the nn.Module __init__).
# ----------------------------------------------------------------------------
def init_params(key, vocab, E, H, n_layers):
    n_cls = 2
    keys = jax.random.split(key, 3 + 8 * n_layers)
    ki = iter(keys)
    k = 1.0 / jnp.sqrt(H)

    def u(key_, shape):
        return jax.random.uniform(key_, shape, jnp.float32, -k, k)

    params = {"embedding": jax.random.normal(next(ki), (vocab, E), jnp.float32)}
    layers = []
    for l in range(n_layers):
        in_size = E if l == 0 else 2 * H
        layers.append({
            "w_ih_f": u(next(ki), (4 * H, in_size)),
            "w_hh_f": u(next(ki), (4 * H, H)),
            "b_f": u(next(ki), (4 * H,)) + u(next(ki), (4 * H,)),   # b_ih + b_hh
            "w_ih_b": u(next(ki), (4 * H, in_size)),
            "w_hh_b": u(next(ki), (4 * H, H)),
            "b_b": u(next(ki), (4 * H,)) + u(next(ki), (4 * H,)),
        })
    params["layers"] = layers
    params["bn_gamma"] = jnp.ones((2 * H,), jnp.float32)
    params["bn_beta"] = jnp.zeros((2 * H,), jnp.float32)
    params["bn_mean"] = jnp.zeros((2 * H,), jnp.float32)
    params["bn_var"] = jnp.ones((2 * H,), jnp.float32)
    params["lin_w"] = u(next(ki), (n_cls, 2 * H))
    params["lin_b"] = u(next(ki), (n_cls,))
    return params


if __name__ == "__main__":
    VOCAB, E, H, N_LAYERS = 50, 32, 32, 2
    # B raised to a multiple of the 8-row batch tile (perf review: sublane occupancy +
    # exercises the parallel batch-tile grid); still small.
    B, T = 16, 8

    root = jax.random.PRNGKey(0)
    k_par, k_x, k_h, k_c = jax.random.split(root, 4)

    params = init_params(k_par, VOCAB, E, H, N_LAYERS)
    prepped = prepare_params(params)          # one-time packing / transposes / BN fold
    X = jax.random.randint(k_x, (B, T), 0, VOCAB, dtype=jnp.int32)
    # PyTorch forward uses torch.randn initial states; drawn deterministically here.
    h0 = jax.random.normal(k_h, (2 * N_LAYERS, B, H), jnp.float32)
    c0 = jax.random.normal(k_c, (2 * N_LAYERS, B, H), jnp.float32)

    logits, probs = jax.block_until_ready(
        lstm_classifier_forward(X, prepped, h0, c0, n_cls=2, bt=8))

    ref_logits, ref_probs = ref_forward(X, params, h0, c0)
    assert logits.shape == (B, 2) and probs.shape == (B, 2)
    assert jnp.allclose(logits, ref_logits, rtol=2e-3, atol=2e-3)
    assert jnp.allclose(probs, ref_probs, rtol=2e-3, atol=2e-3)
    assert jnp.allclose(jnp.sum(probs, axis=1), 1.0, atol=1e-5)

    print("KERNEL_OK")
</pallas_src>

<mosaic_0001>
module attributes {stable_mosaic.version = 11 : i64} {
  func.func @fused_lstm_classifier_kernel(%arg0: i32, %arg1: memref<8x8x32xf32, #tpu.memory_space<vmem>>, %arg2: memref<32x512xf32, #tpu.memory_space<vmem>>, %arg3: memref<128x512xf32, #tpu.memory_space<vmem>>, %arg4: memref<1x512xf32, #tpu.memory_space<vmem>>, %arg5: memref<128x1024xf32, #tpu.memory_space<vmem>>, %arg6: memref<128x512xf32, #tpu.memory_space<vmem>>, %arg7: memref<1x1024xf32, #tpu.memory_space<vmem>>, %arg8: memref<2x8x128xf32, #tpu.memory_space<vmem>>, %arg9: memref<2x8x128xf32, #tpu.memory_space<vmem>>, %arg10: memref<128x128xf32, #tpu.memory_space<vmem>>, %arg11: memref<128x128xf32, #tpu.memory_space<vmem>>, %arg12: memref<1x128xf32, #tpu.memory_space<vmem>>, %arg13: memref<8x128xf32, #tpu.memory_space<vmem>>, %arg14: memref<8x128xf32, #tpu.memory_space<vmem>>, %arg15: memref<8x8x512xf32, #tpu.memory_space<vmem>>, %arg16: memref<8x8x1024xf32, #tpu.memory_space<vmem>>, %arg17: memref<8x8x512xf32, #tpu.memory_space<vmem>>, %arg18: memref<8x8x128xf32, #tpu.memory_space<vmem>>, %arg19: memref<8x8x128xf32, #tpu.memory_space<vmem>>) attributes {dimension_semantics = [#tpu.dimension_semantics<parallel>], iteration_bounds = array<i64: 2>, scalar_prefetch = 0 : i64, scratch_operands = 5 : i64, tpu.core_type = #tpu.core_type<tc>, window_params = [{transform_indices = @transform_0, window_bounds = array<i64: 8, 8, 32>}, {pipeline_mode = #tpu.pipeline_mode<synchronous>, transform_indices = @transform_1, window_bounds = array<i64: 32, 512>}, {pipeline_mode = #tpu.pipeline_mode<synchronous>, transform_indices = @transform_2, window_bounds = array<i64: 128, 512>}, {pipeline_mode = #tpu.pipeline_mode<synchronous>, transform_indices = @transform_3, window_bounds = array<i64: 1, 512>}, {pipeline_mode = #tpu.pipeline_mode<synchronous>, transform_indices = @transform_4, window_bounds = array<i64: 128, 1024>}, {pipeline_mode = #tpu.pipeline_mode<synchronous>, transform_indices = @transform_5, window_bounds = array<i64: 128, 512>}, {pipeline_mode = #tpu.pipeline_mode<synchronous>, transform_indices = @transform_6, window_bounds = array<i64: 1, 1024>}, {transform_indices = @transform_7, window_bounds = array<i64: 2, 8, 128>}, {transform_indices = @transform_8, window_bounds = array<i64: 2, 8, 128>}, {pipeline_mode = #tpu.pipeline_mode<synchronous>, transform_indices = @transform_9, window_bounds = array<i64: 128, 128>}, {pipeline_mode = #tpu.pipeline_mode<synchronous>, transform_indices = @transform_10, window_bounds = array<i64: 128, 128>}, {pipeline_mode = #tpu.pipeline_mode<synchronous>, transform_indices = @transform_11, window_bounds = array<i64: 1, 128>}, {transform_indices = @transform_12, window_bounds = array<i64: 8, 128>}, {transform_indices = @transform_13, window_bounds = array<i64: 8, 128>}]} {
    %0 = tpu.iota {dimensions = array<i32: 1>} : vector<1x512xi32>
    %c127_i32 = arith.constant 127 : i32
    %1 = vector.broadcast %c127_i32 : i32 to vector<1x512xi32>
    %2 = arith.andi %0, %1 : vector<1x512xi32>
    %c32_i32 = arith.constant 32 : i32
    %3 = vector.broadcast %c32_i32 : i32 to vector<1x512xi32>
    %4 = arith.cmpi slt, %2, %3 : vector<1x512xi32>
    %c0 = arith.constant 0 : index
    %c0_0 = arith.constant 0 : index
    %c0_1 = arith.constant 0 : index
    %5 = vector.load %arg1[%c0, %c0_0, %c0_1] : memref<8x8x32xf32, #tpu.memory_space<vmem>>, vector<8x8x32xf32>
    %6 = vector.shape_cast %5 : vector<8x8x32xf32> to vector<64x32xf32>
    %c0_2 = arith.constant 0 : index
    %c0_3 = arith.constant 0 : index
    %7 = vector.load %arg2[%c0_2, %c0_3] : memref<32x512xf32, #tpu.memory_space<vmem>>, vector<32x512xf32>
    %cst = arith.constant dense<0.000000e+00> : vector<64x512xf32>
    %8 = tpu.matmul %6, %7, %cst {dimension_numbers = #tpu.dot_dimension_numbers<[1], [0], [0], [1], [0, 0, 1, 1], [], []>} : vector<64x32xf32>, vector<32x512xf32>, vector<64x512xf32> -> vector<64x512xf32>
    %c0_4 = arith.constant 0 : index
    %c0_5 = arith.constant 0 : index
    %9 = vector.load %arg4[%c0_4, %c0_5] : memref<1x512xf32, #tpu.memory_space<vmem>>, vector<1x512xf32>
    %10 = vector.broadcast %9 : vector<1x512xf32> to vector<64x512xf32>
    %11 = arith.addf %8, %10 : vector<64x512xf32>
    %12 = vector.shape_cast %11 : vector<64x512xf32> to vector<8x8x512xf32>
    %c0_6 = arith.constant 0 : index
    %c0_7 = arith.constant 0 : index
    %c0_8 = arith.constant 0 : index
    %13 = vector.load %arg15[%c0_6, %c0_7, %c0_8] : memref<8x8x512xf32, #tpu.memory_space<vmem>>, vector<8x8x512xf32>
    tpu.vector_store %arg15[%c0_6, %c0_7, %c0_8], %12 {strides = array<i32>} : memref<8x8x512xf32, #tpu.memory_space<vmem>>, vector<8x8x512xf32>,
    %c0_i32 = arith.constant 0 : i32
    %14 = arith.index_cast %c0_i32 : i32 to index
    %c0_9 = arith.constant 0 : index
    %c0_10 = arith.constant 0 : index
    %15 = vector.load %arg15[%14, %c0_9, %c0_10] : memref<8x8x512xf32, #tpu.memory_space<vmem>>, vector<1x8x512xf32>
    %16 = vector.shape_cast %15 : vector<1x8x512xf32> to vector<8x512xf32>
    %c7_i32 = arith.constant 7 : i32
    %17 = arith.subi %c7_i32, %c0_i32 : i32
    %18 = arith.index_cast %17 : i32 to index
    %c0_11 = arith.constant 0 : index
    %c0_12 = arith.constant 0 : index
    %19 = vector.load %arg15[%18, %c0_11, %c0_12] : memref<8x8x512xf32, #tpu.memory_space<vmem>>, vector<1x8x512xf32>
    %20 = vector.shape_cast %19 : vector<1x8x512xf32> to vector<8x512xf32>
    %21 = vector.shape_cast %4 : vector<1x512xi1> to vector<1x512xi1>
    %22 = vector.broadcast %21 : vector<1x512xi1> to vector<8x512xi1>
    %23 = arith.select %22, %16, %20 : vector<8x512xi1>, vector<8x512xf32>
    %24 = arith.index_cast %c0_i32 : i32 to index
    %c0_13 = arith.constant 0 : index
    %c0_14 = arith.constant 0 : index
    %25 = vector.load %arg17[%24, %c0_13, %c0_14] : memref<8x8x512xf32, #tpu.memory_space<vmem>>, vector<1x8x512xf32>
    %26 = vector.shape_cast %25 : vector<1x8x512xf32> to vector<8x512xf32>
    %27 = vector.shape_cast %23 : vector<8x512xf32> to vector<1x8x512xf32>
    tpu.vector_store %arg17[%24, %c0_13, %c0_14], %27 {strides = array<i32>} : memref<8x8x512xf32, #tpu.memory_space<vmem>>, vector<1x8x512xf32>,
    %c1_i32 = arith.constant 1 : i32
    %28 = arith.index_cast %c1_i32 : i32 to index
    %c0_15 = arith.constant 0 : index
    %c0_16 = arith.constant 0 : index
    %29 = vector.load %arg15[%28, %c0_15, %c0_16] : memref<8x8x512xf32, #tpu.memory_space<vmem>>, vector<1x8x512xf32>
    %30 = vector.shape_cast %29 : vector<1x8x512xf32> to vector<8x512xf32>
    %c7_i32_17 = arith.constant 7 : i32
    %31 = arith.subi %c7_i32_17, %c1_i32 : i32
    %32 = arith.index_cast %31 : i32 to index
    %c0_18 = arith.constant 0 : index
    %c0_19 = arith.constant 0 : index
    %33 = vector.load %arg15[%32, %c0_18, %c0_19] : memref<8x8x512xf32, #tpu.memory_space<vmem>>, vector<1x8x512xf32>
    %34 = vector.shape_cast %33 : vector<1x8x512xf32> to vector<8x512xf32>
    %35 = vector.shape_cast %4 : vector<1x512xi1> to vector<1x512xi1>
    %36 = vector.broadcast %35 : vector<1x512xi1> to vector<8x512xi1>
    %37 = arith.select %36, %30, %34 : vector<8x512xi1>, vector<8x512xf32>
    %38 = arith.index_cast %c1_i32 : i32 to index
    %c0_20 = arith.constant 0 : index
    %c0_21 = arith.constant 0 : index
    %39 = vector.load %arg17[%38, %c0_20, %c0_21] : memref<8x8x512xf32, #tpu.memory_space<vmem>>, vector<1x8x512xf32>
    %40 = vector.shape_cast %39 : vector<1x8x512xf32> to vector<8x512xf32>
    %41 = vector.shape_cast %37 : vector<8x512xf32> to vector<1x8x512xf32>
    tpu.vector_store %arg17[%38, %c0_20, %c0_21], %41 {strides = array<i32>} : memref<8x8x512xf32, #tpu.memory_space<vmem>>, vector<1x8x512xf32>,
    %c2_i32 = arith.constant 2 : i32
    %42 = arith.index_cast %c2_i32 : i32 to index
    %c0_22 = arith.constant 0 : index
    %c0_23 = arith.constant 0 : index
    %43 = vector.load %arg15[%42, %c0_22, %c0_23] : memref<8x8x512xf32, #tpu.memory_space<vmem>>, vector<1x8x512xf32>
    %44 = vector.shape_cast %43 : vector<1x8x512xf32> to vector<8x512xf32>
    %c7_i32_24 = arith.constant 7 : i32
    %45 = arith.subi %c7_i32_24, %c2_i32 : i32
    %46 = arith.index_cast %45 : i32 to index
    %c0_25 = arith.constant 0 : index
    %c0_26 = arith.constant 0 : index
    %47 = vector.load %arg15[%46, %c0_25, %c0_26] : memref<8x8x512xf32, #tpu.memory_space<vmem>>, vector<1x8x512xf32>
    %48 = vector.shape_cast %47 : vector<1x8x512xf32> to vector<8x512xf32>
    %49 = vector.shape_cast %4 : vector<1x512xi1> to vector<1x512xi1>
    %50 = vector.broadcast %49 : vector<1x512xi1> to vector<8x512xi1>
    %51 = arith.select %50, %44, %48 : vector<8x512xi1>, vector<8x512xf32>
    %52 = arith.index_cast %c2_i32 : i32 to index
    %c0_27 = arith.constant 0 : index
    %c0_28 = arith.constant 0 : index
    %53 = vector.load %arg17[%52, %c0_27, %c0_28] : memref<8x8x512xf32, #tpu.memory_space<vmem>>, vector<1x8x512xf32>
    %54 = vector.shape_cast %53 : vector<1x8x512xf32> to vector<8x512xf32>
    %55 = vector.shape_cast %51 : vector<8x512xf32> to vector<1x8x512xf32>
    tpu.vector_store %arg17[%52, %c0_27, %c0_28], %55 {strides = array<i32>} : memref<8x8x512xf32, #tpu.memory_space<vmem>>, vector<1x8x512xf32>,
    %c3_i32 = arith.constant 3 : i32
    %56 = arith.index_cast %c3_i32 : i32 to index
    %c0_29 = arith.constant 0 : index
    %c0_30 = arith.constant 0 : index
    %57 = vector.load %arg15[%56, %c0_29, %c0_30] : memref<8x8x512xf32, #tpu.memory_space<vmem>>, vector<1x8x512xf32>
    %58 = vector.shape_cast %57 : vector<1x8x512xf32> to vector<8x512xf32>
    %c7_i32_31 = arith.constant 7 : i32
    %59 = arith.subi %c7_i32_31, %c3_i32 : i32
    %60 = arith.index_cast %59 : i32 to index
    %c0_32 = arith.constant 0 : index
    %c0_33 = arith.constant 0 : index
    %61 = vector.load %arg15[%60, %c0_32, %c0_33] : memref<8x8x512xf32, #tpu.memory_space<vmem>>, vector<1x8x512xf32>
    %62 = vector.shape_cast %61 : vector<1x8x512xf32> to vector<8x512xf32>
    %63 = vector.shape_cast %4 : vector<1x512xi1> to vector<1x512xi1>
    %64 = vector.broadcast %63 : vector<1x512xi1> to vector<8x512xi1>
    %65 = arith.select %64, %58, %62 : vector<8x512xi1>, vector<8x512xf32>
    %66 = arith.index_cast %c3_i32 : i32 to index
    %c0_34 = arith.constant 0 : index
    %c0_35 = arith.constant 0 : index
    %67 = vector.load %arg17[%66, %c0_34, %c0_35] : memref<8x8x512xf32, #tpu.memory_space<vmem>>, vector<1x8x512xf32>
    %68 = vector.shape_cast %67 : vector<1x8x512xf32> to vector<8x512xf32>
    %69 = vector.shape_cast %65 : vector<8x512xf32> to vector<1x8x512xf32>
    tpu.vector_store %arg17[%66, %c0_34, %c0_35], %69 {strides = array<i32>} : memref<8x8x512xf32, #tpu.memory_space<vmem>>, vector<1x8x512xf32>,
    %c4_i32 = arith.constant 4 : i32
    %70 = arith.index_cast %c4_i32 : i32 to index
    %c0_36 = arith.constant 0 : index
    %c0_37 = arith.constant 0 : index
    %71 = vector.load %arg15[%70, %c0_36, %c0_37] : memref<8x8x512xf32, #tpu.memory_space<vmem>>, vector<1x8x512xf32>
    %72 = vector.shape_cast %71 : vector<1x8x512xf32> to vector<8x512xf32>
    %c7_i32_38 = arith.constant 7 : i32
    %73 = arith.subi %c7_i32_38, %c4_i32 : i32
    %74 = arith.index_cast %73 : i32 to index
    %c0_39 = arith.constant 0 : index
    %c0_40 = arith.constant 0 : index
    %75 = vector.load %arg15[%74, %c0_39, %c0_40] : memref<8x8x512xf32, #tpu.memory_space<vmem>>, vector<1x8x512xf32>
    %76 = vector.shape_cast %75 : vector<1x8x512xf32> to vector<8x512xf32>
    %77 = vector.shape_cast %4 : vector<1x512xi1> to vector<1x512xi1>
    %78 = vector.broadcast %77 : vector<1x512xi1> to vector<8x512xi1>
    %79 = arith.select %78, %72, %76 : vector<8x512xi1>, vector<8x512xf32>
    %80 = arith.index_cast %c4_i32 : i32 to index
    %c0_41 = arith.constant 0 : index
    %c0_42 = arith.constant 0 : index
    %81 = vector.load %arg17[%80, %c0_41, %c0_42] : memref<8x8x512xf32, #tpu.memory_space<vmem>>, vector<1x8x512xf32>
    %82 = vector.shape_cast %81 : vector<1x8x512xf32> to vector<8x512xf32>
    %83 = vector.shape_cast %79 : vector<8x512xf32> to vector<1x8x512xf32>
    tpu.vector_store %arg17[%80, %c0_41, %c0_42], %83 {strides = array<i32>} : memref<8x8x512xf32, #tpu.memory_space<vmem>>, vector<1x8x512xf32>,
    %c5_i32 = arith.constant 5 : i32
    %84 = arith.index_cast %c5_i32 : i32 to index
    %c0_43 = arith.constant 0 : index
    %c0_44 = arith.constant 0 : index
    %85 = vector.load %arg15[%84, %c0_43, %c0_44] : memref<8x8x512xf32, #tpu.memory_space<vmem>>, vector<1x8x512xf32>
    %86 = vector.shape_cast %85 : vector<1x8x512xf32> to vector<8x512xf32>
    %c7_i32_45 = arith.constant 7 : i32
    %87 = arith.subi %c7_i32_45, %c5_i32 : i32
    %88 = arith.index_cast %87 : i32 to index
    %c0_46 = arith.constant 0 : index
    %c0_47 = arith.constant 0 : index
    %89 = vector.load %arg15[%88, %c0_46, %c0_47] : memref<8x8x512xf32, #tpu.memory_space<vmem>>, vector<1x8x512xf32>
    %90 = vector.shape_cast %89 : vector<1x8x512xf32> to vector<8x512xf32>
    %91 = vector.shape_cast %4 : vector<1x512xi1> to vector<1x512xi1>
    %92 = vector.broadcast %91 : vector<1x512xi1> to vector<8x512xi1>
    %93 = arith.select %92, %86, %90 : vector<8x512xi1>, vector<8x512xf32>
    %94 = arith.index_cast %c5_i32 : i32 to index
    %c0_48 = arith.constant 0 : index
    %c0_49 = arith.constant 0 : index
    %95 = vector.load %arg17[%94, %c0_48, %c0_49] : memref<8x8x512xf32, #tpu.memory_space<vmem>>, vector<1x8x512xf32>
    %96 = vector.shape_cast %95 : vector<1x8x512xf32> to vector<8x512xf32>
    %97 = vector.shape_cast %93 : vector<8x512xf32> to vector<1x8x512xf32>
    tpu.vector_store %arg17[%94, %c0_48, %c0_49], %97 {strides = array<i32>} : memref<8x8x512xf32, #tpu.memory_space<vmem>>, vector<1x8x512xf32>,
    %c6_i32 = arith.constant 6 : i32
    %98 = arith.index_cast %c6_i32 : i32 to index
    %c0_50 = arith.constant 0 : index
    %c0_51 = arith.constant 0 : index
    %99 = vector.load %arg15[%98, %c0_50, %c0_51] : memref<8x8x512xf32, #tpu.memory_space<vmem>>, vector<1x8x512xf32>
    %100 = vector.shape_cast %99 : vector<1x8x512xf32> to vector<8x512xf32>
    %c7_i32_52 = arith.constant 7 : i32
    %101 = arith.subi %c7_i32_52, %c6_i32 : i32
    %102 = arith.index_cast %101 : i32 to index
    %c0_53 = arith.constant 0 : index
    %c0_54 = arith.constant 0 : index
    %103 = vector.load %arg15[%102, %c0_53, %c0_54] : memref<8x8x512xf32, #tpu.memory_space<vmem>>, vector<1x8x512xf32>
    %104 = vector.shape_cast %103 : vector<1x8x512xf32> to vector<8x512xf32>
    %105 = vector.shape_cast %4 : vector<1x512xi1> to vector<1x512xi1>
    %106 = vector.broadcast %105 : vector<1x512xi1> to vector<8x512xi1>
    %107 = arith.select %106, %100, %104 : vector<8x512xi1>, vector<8x512xf32>
    %108 = arith.index_cast %c6_i32 : i32 to index
    %c0_55 = arith.constant 0 : index
    %c0_56 = arith.constant 0 : index
    %109 = vector.load %arg17[%108, %c0_55, %c0_56] : memref<8x8x512xf32, #tpu.memory_space<vmem>>, vector<1x8x512xf32>
    %110 = vector.shape_cast %109 : vector<1x8x512xf32> to vector<8x512xf32>
    %111 = vector.shape_cast %107 : vector<8x512xf32> to vector<1x8x512xf32>
    tpu.vector_store %arg17[%108, %c0_55, %c0_56], %111 {strides = array<i32>} : memref<8x8x512xf32, #tpu.memory_space<vmem>>, vector<1x8x512xf32>,
    %c7_i32_57 = arith.constant 7 : i32
    %112 = arith.index_cast %c7_i32_57 : i32 to index
    %c0_58 = arith.constant 0 : index
    %c0_59 = arith.constant 0 : index
    %113 = vector.load %arg15[%112, %c0_58, %c0_59] : memref<8x8x512xf32, #tpu.memory_space<vmem>>, vector<1x8x512xf32>
    %114 = vector.shape_cast %113 : vector<1x8x512xf32> to vector<8x512xf32>
    %c7_i32_60 = arith.constant 7 : i32
    %115 = arith.subi %c7_i32_60, %c7_i32_57 : i32
    %116 = arith.index_cast %115 : i32 to index
    %c0_61 = arith.constant 0 : index
    %c0_62 = arith.constant 0 : index
    %117 = vector.load %arg15[%116, %c0_61, %c0_62] : memref<8x8x512xf32, #tpu.memory_space<vmem>>, vector<1x8x512xf32>
    %118 = vector.shape_cast %117 : vector<1x8x512xf32> to vector<8x512xf32>
    %119 = vector.shape_cast %4 : vector<1x512xi1> to vector<1x512xi1>
    %120 = vector.broadcast %119 : vector<1x512xi1> to vector<8x512xi1>
    %121 = arith.select %120, %114, %118 : vector<8x512xi1>, vector<8x512xf32>
    %122 = arith.index_cast %c7_i32_57 : i32 to index
    %c0_63 = arith.constant 0 : index
    %c0_64 = arith.constant 0 : index
    %123 = vector.load %arg17[%122, %c0_63, %c0_64] : memref<8x8x512xf32, #tpu.memory_space<vmem>>, vector<1x8x512xf32>
    %124 = vector.shape_cast %123 : vector<1x8x512xf32> to vector<8x512xf32>
    %125 = vector.shape_cast %121 : vector<8x512xf32> to vector<1x8x512xf32>
    tpu.vector_store %arg17[%122, %c0_63, %c0_64], %125 {strides = array<i32>} : memref<8x8x512xf32, #tpu.memory_space<vmem>>, vector<1x8x512xf32>,
    %c8_i32 = arith.constant 8 : i32
    %c0_65 = arith.constant 0 : index
    %c0_66 = arith.constant 0 : index
    %c0_67 = arith.constant 0 : index
    %126 = vector.load %arg8[%c0_65, %c0_66, %c0_67] : memref<2x8x128xf32, #tpu.memory_space<vmem>>, vector<1x8x128xf32>
    %127 = vector.shape_cast %126 : vector<1x8x128xf32> to vector<8x128xf32>
    %c0_68 = arith.constant 0 : index
    %c0_69 = arith.constant 0 : index
    %c0_70 = arith.constant 0 : index
    %128 = vector.load %arg9[%c0_68, %c0_69, %c0_70] : memref<2x8x128xf32, #tpu.memory_space<vmem>>, vector<1x8x128xf32>
    %129 = vector.shape_cast %128 : vector<1x8x128xf32> to vector<8x128xf32>
    %c0_i32_71 = arith.constant 0 : i32
    %130 = arith.index_cast %c0_i32_71 : i32 to index
    %c0_72 = arith.constant 0 : index
    %c0_73 = arith.constant 0 : index
    %131 = vector.load %arg17[%130, %c0_72, %c0_73] : memref<8x8x512xf32, #tpu.memory_space<vmem>>, vector<1x8x512xf32>
    %132 = vector.shape_cast %131 : vector<1x8x512xf32> to vector<8x512xf32>
    %c0_74 = arith.constant 0 : index
    %c0_75 = arith.constant 0 : index
    %133 = vector.load %arg3[%c0_74, %c0_75] : memref<128x512xf32, #tpu.memory_space<vmem>>, vector<128x512xf32>
    %cst_76 = arith.constant dense<0.000000e+00> : vector<8x512xf32>
    %134 = tpu.matmul %127, %133, %cst_76 {dimension_numbers = #tpu.dot_dimension_numbers<[1], [0], [0], [1], [0, 0, 1, 1], [], []>} : vector<8x128xf32>, vector<128x512xf32>, vector<8x512xf32> -> vector<8x512xf32>
    %135 = arith.addf %132, %134 : vector<8x512xf32>
    %136 = vector.extract_strided_slice %135 {offsets = [0, 0], sizes = [8, 128], strides = [1, 1]} : vector<8x512xf32> to vector<8x128xf32>
    %137 = arith.negf %136 : vector<8x128xf32>
    %138 = math.exp %137 : vector<8x128xf32>
    %cst_77 = arith.constant 1.000000e+00 : f32
    %139 = vector.broadcast %cst_77 : f32 to vector<8x128xf32>
    %140 = arith.addf %139, %138 : vector<8x128xf32>
    %141 = arith.divf %139, %140 : vector<8x128xf32>
    %142 = vector.extract_strided_slice %135 {offsets = [0, 128], sizes = [8, 128], strides = [1, 1]} : vector<8x512xf32> to vector<8x128xf32>
    %143 = arith.negf %142 : vector<8x128xf32>
    %144 = math.exp %143 : vector<8x128xf32>
    %cst_78 = arith.constant 1.000000e+00 : f32
    %145 = vector.broadcast %cst_78 : f32 to vector<8x128xf32>
    %146 = arith.addf %145, %144 : vector<8x128xf32>
    %147 = arith.divf %145, %146 : vector<8x128xf32>
    %148 = vector.extract_strided_slice %135 {offsets = [0, 256], sizes = [8, 128], strides = [1, 1]} : vector<8x512xf32> to vector<8x128xf32>
    %149 = math.tanh %148 : vector<8x128xf32>
    %150 = vector.extract_strided_slice %135 {offsets = [0, 384], sizes = [8, 128], strides = [1, 1]} : vector<8x512xf32> to vector<8x128xf32>
    %151 = arith.negf %150 : vector<8x128xf32>
    %152 = math.exp %151 : vector<8x128xf32>
    %cst_79 = arith.constant 1.000000e+00 : f32
    %153 = vector.broadcast %cst_79 : f32 to vector<8x128xf32>
    %154 = arith.addf %153, %152 : vector<8x128xf32>
    %155 = arith.divf %153, %154 : vector<8x128xf32>
    %156 = arith.mulf %147, %129 : vector<8x128xf32>
    %157 = arith.mulf %141, %149 : vector<8x128xf32>
    %158 = arith.addf %156, %157 : vector<8x128xf32>
    %159 = math.tanh %158 : vector<8x128xf32>
    %160 = arith.mulf %155, %159 : vector<8x128xf32>
    %161 = arith.index_cast %c0_i32_71 : i32 to index
    %c0_80 = arith.constant 0 : index
    %c0_81 = arith.constant 0 : index
    %162 = vector.load %arg18[%161, %c0_80, %c0_81] : memref<8x8x128xf32, #tpu.memory_space<vmem>>, vector<1x8x128xf32>
    %163 = vector.shape_cast %162 : vector<1x8x128xf32> to vector<8x128xf32>
    %164 = vector.shape_cast %160 : vector<8x128xf32> to vector<1x8x128xf32>
    tpu.vector_store %arg18[%161, %c0_80, %c0_81], %164 {strides = array<i32>} : memref<8x8x128xf32, #tpu.memory_space<vmem>>, vector<1x8x128xf32>,
    %c1_i32_82 = arith.constant 1 : i32
    %165 = arith.index_cast %c1_i32_82 : i32 to index
    %c0_83 = arith.constant 0 : index
    %c0_84 = arith.constant 0 : index
    %166 = vector.load %arg17[%165, %c0_83, %c0_84] : memref<8x8x512xf32, #tpu.memory_space<vmem>>, vector<1x8x512xf32>
    %167 = vector.shape_cast %166 : vector<1x8x512xf32> to vector<8x512xf32>
    %c0_85 = arith.constant 0 : index
    %c0_86 = arith.constant 0 : index
    %168 = vector.load %arg3[%c0_85, %c0_86] : memref<128x512xf32, #tpu.memory_space<vmem>>, vector<128x512xf32>
    %cst_87 = arith.constant dense<0.000000e+00> : vector<8x512xf32>
    %169 = tpu.matmul %160, %168, %cst_87 {dimension_numbers = #tpu.dot_dimension_numbers<[1], [0], [0], [1], [0, 0, 1, 1], [], []>} : vector<8x128xf32>, vector<128x512xf32>, vector<8x512xf32> -> vector<8x512xf32>
    %170 = arith.addf %167, %169 : vector<8x512xf32>
    %171 = vector.extract_strided_slice %170 {offsets = [0, 0], sizes = [8, 128], strides = [1, 1]} : vector<8x512xf32> to vector<8x128xf32>
    %172 = arith.negf %171 : vector<8x128xf32>
    %173 = math.exp %172 : vector<8x128xf32>
    %cst_88 = arith.constant 1.000000e+00 : f32
    %174 = vector.broadcast %cst_88 : f32 to vector<8x128xf32>
    %175 = arith.addf %174, %173 : vector<8x128xf32>
    %176 = arith.divf %174, %175 : vector<8x128xf32>
    %177 = vector.extract_strided_slice %170 {offsets = [0, 128], sizes = [8, 128], strides = [1, 1]} : vector<8x512xf32> to vector<8x128xf32>
    %178 = arith.negf %177 : vector<8x128xf32>
    %179 = math.exp %178 : vector<8x128xf32>
    %cst_89 = arith.constant 1.000000e+00 : f32
    %180 = vector.broadcast %cst_89 : f32 to vector<8x128xf32>
    %181 = arith.addf %180, %179 : vector<8x128xf32>
    %182 = arith.divf %180, %181 : vector<8x128xf32>
    %183 = vector.extract_strided_slice %170 {offsets = [0, 256], sizes = [8, 128], strides = [1, 1]} : vector<8x512xf32> to vector<8x128xf32>
    %184 = math.tanh %183 : vector<8x128xf32>
    %185 = vector.extract_strided_slice %170 {offsets = [0, 384], sizes = [8, 128], strides = [1, 1]} : vector<8x512xf32> to vector<8x128xf32>
    %186 = arith.negf %185 : vector<8x128xf32>
    %187 = math.exp %186 : vector<8x128xf32>
    %cst_90 = arith.constant 1.000000e+00 : f32
    %188 = vector.broadcast %cst_90 : f32 to vector<8x128xf32>
    %189 = arith.addf %188, %187 : vector<8x128xf32>
    %190 = arith.divf %188, %189 : vector<8x128xf32>
    %191 = arith.mulf %182, %158 : vector<8x128xf32>
    %192 = arith.mulf %176, %184 : vector<8x128xf32>
    %193 = arith.addf %191, %192 : vector<8x128xf32>
    %194 = math.tanh %193 : vector<8x128xf32>
    %195 = arith.mulf %190, %194 : vector<8x128xf32>
    %196 = arith.index_cast %c1_i32_82 : i32 to index
    %c0_91 = arith.constant 0 : index
    %c0_92 = arith.constant 0 : index
    %197 = vector.load %arg18[%196, %c0_91, %c0_92] : memref<8x8x128xf32, #tpu.memory_space<vmem>>, vector<1x8x128xf32>
    %198 = vector.shape_cast %197 : vector<1x8x128xf32> to vector<8x128xf32>
    %199 = vector.shape_cast %195 : vector<8x128xf32> to vector<1x8x128xf32>
    tpu.vector_store %arg18[%196, %c0_91, %c0_92], %199 {strides = array<i32>} : memref<8x8x128xf32, #tpu.memory_space<vmem>>, vector<1x8x128xf32>,
    %c2_i32_93 = arith.constant 2 : i32
    %200 = arith.index_cast %c2_i32_93 : i32 to index
    %c0_94 = arith.constant 0 : index
    %c0_95 = arith.constant 0 : index
    %201 = vector.load %arg17[%200, %c0_94, %c0_95] : memref<8x8x512xf32, #tpu.memory_space<vmem>>, vector<1x8x512xf32>
    %202 = vector.shape_cast %201 : vector<1x8x512xf32> to vector<8x512xf32>
    %c0_96 = arith.constant 0 : index
    %c0_97 = arith.constant 0 : index
    %203 = vector.load %arg3[%c0_96, %c0_97] : memref<128x512xf32, #tpu.memory_space<vmem>>, vector<128x512xf32>
    %cst_98 = arith.constant dense<0.000000e+00> : vector<8x512xf32>
    %204 = tpu.matmul %195, %203, %cst_98 {dimension_numbers = #tpu.dot_dimension_numbers<[1], [0], [0], [1], [0, 0, 1, 1], [], []>} : vector<8x128xf32>, vector<128x512xf32>, vector<8x512xf32> -> vector<8x512xf32>
    %205 = arith.addf %202, %204 : vector<8x512xf32>
    %206 = vector.extract_strided_slice %205 {offsets = [0, 0], sizes = [8, 128], strides = [1, 1]} : vector<8x512xf32> to vector<8x128xf32>
    %207 = arith.negf %206 : vector<8x128xf32>
    %208 = math.exp %207 : vector<8x128xf32>
    %cst_99 = arith.constant 1.000000e+00 : f32
    %209 = vector.broadcast %cst_99 : f32 to vector<8x128xf32>
    %210 = arith.addf %209, %208 : vector<8x128xf32>
    %211 = arith.divf %209, %210 : vector<8x128xf32>
    %212 = vector.extract_strided_slice %205 {offsets = [0, 128], sizes = [8, 128], strides = [1, 1]} : vector<8x512xf32> to vector<8x128xf32>
    %213 = arith.negf %212 : vector<8x128xf32>
    %214 = math.exp %213 : vector<8x128xf32>
    %cst_100 = arith.constant 1.000000e+00 : f32
    %215 = vector.broadcast %cst_100 : f32 to vector<8x128xf32>
    %216 = arith.addf %215, %214 : vector<8x128xf32>
    %217 = arith.divf %215, %216 : vector<8x128xf32>
    %218 = vector.extract_strided_slice %205 {offsets = [0, 256], sizes = [8, 128], strides = [1, 1]} : vector<8x512xf32> to vector<8x128xf32>
    %219 = math.tanh %218 : vector<8x128xf32>
    %220 = vector.extract_strided_slice %205 {offsets = [0, 384], sizes = [8, 128], strides = [1, 1]} : vector<8x512xf32> to vector<8x128xf32>
    %221 = arith.negf %220 : vector<8x128xf32>
    %222 = math.exp %221 : vector<8x128xf32>
    %cst_101 = arith.constant 1.000000e+00 : f32
    %223 = vector.broadcast %cst_101 : f32 to vector<8x128xf32>
    %224 = arith.addf %223, %222 : vector<8x128xf32>
    %225 = arith.divf %223, %224 : vector<8x128xf32>
    %226 = arith.mulf %217, %193 : vector<8x128xf32>
    %227 = arith.mulf %211, %219 : vector<8x128xf32>
    %228 = arith.addf %226, %227 : vector<8x128xf32>
    %229 = math.tanh %228 : vector<8x128xf32>
    %230 = arith.mulf %225, %229 : vector<8x128xf32>
    %231 = arith.index_cast %c2_i32_93 : i32 to index
    %c0_102 = arith.constant 0 : index
    %c0_103 = arith.constant 0 : index
    %232 = vector.load %arg18[%231, %c0_102, %c0_103] : memref<8x8x128xf32, #tpu.memory_space<vmem>>, vector<1x8x128xf32>
    %233 = vector.shape_cast %232 : vector<1x8x128xf32> to vector<8x128xf32>
    %234 = vector.shape_cast %230 : vector<8x128xf32> to vector<1x8x128xf32>
    tpu.vector_store %arg18[%231, %c0_102, %c0_103], %234 {strides = array<i32>} : memref<8x8x128xf32, #tpu.memory_space<vmem>>, vector<1x8x128xf32>,
    %c3_i32_104 = arith.constant 3 : i32
    %235 = arith.index_cast %c3_i32_104 : i32 to index
    %c0_105 = arith.constant 0 : index
    %c0_106 = arith.constant 0 : index
    %236 = vector.load %arg17[%235, %c0_105, %c0_106] : memref<8x8x512xf32, #tpu.memory_space<vmem>>, vector<1x8x512xf32>
    %237 = vector.shape_cast %236 : vector<1x8x512xf32> to vector<8x512xf32>
    %c0_107 = arith.constant 0 : index
    %c0_108 = arith.constant 0 : index
    %238 = vector.load %arg3[%c0_107, %c0_108] : memref<128x512xf32, #tpu.memory_space<vmem>>, vector<128x512xf32>
    %cst_109 = arith.constant dense<0.000000e+00> : vector<8x512xf32>
    %239 = tpu.matmul %230, %238, %cst_109 {dimension_numbers = #tpu.dot_dimension_numbers<[1], [0], [0], [1], [0, 0, 1, 1], [], []>} : vector<8x128xf32>, vector<128x512xf32>, vector<8x512xf32> -> vector<8x512xf32>
    %240 = arith.addf %237, %239 : vector<8x512xf32>
    %241 = vector.extract_strided_slice %240 {offsets = [0, 0], sizes = [8, 128], strides = [1, 1]} : vector<8x512xf32> to vector<8x128xf32>
    %242 = arith.negf %241 : vector<8x128xf32>
    %243 = math.exp %242 : vector<8x128xf32>
    %cst_110 = arith.constant 1.000000e+00 : f32
    %244 = vector.broadcast %cst_110 : f32 to vector<8x128xf32>
    %245 = arith.addf %244, %243 : vector<8x128xf32>
    %246 = arith.divf %244, %245 : vector<8x128xf32>
    %247 = vector.extract_strided_slice %240 {offsets = [0, 128], sizes = [8, 128], strides = [1, 1]} : vector<8x512xf32> to vector<8x128xf32>
    %248 = arith.negf %247 : vector<8x128xf32>
    %249 = math.exp %248 : vector<8x128xf32>
    %cst_111 = arith.constant 1.000000e+00 : f32
    %250 = vector.broadcast %cst_111 : f32 to vector<8x128xf32>
    %251 = arith.addf %250, %249 : vector<8x128xf32>
    %252 = arith.divf %250, %251 : vector<8x128xf32>
    %253 = vector.extract_strided_slice %240 {offsets = [0, 256], sizes = [8, 128], strides = [1, 1]} : vector<8x512xf32> to vector<8x128xf32>
    %254 = math.tanh %253 : vector<8x128xf32>
    %255 = vector.extract_strided_slice %240 {offsets = [0, 384], sizes = [8, 128], strides = [1, 1]} : vector<8x512xf32> to vector<8x128xf32>
    %256 = arith.negf %255 : vector<8x128xf32>
    %257 = math.exp %256 : vector<8x128xf32>
    %cst_112 = arith.constant 1.000000e+00 : f32
    %258 = vector.broadcast %cst_112 : f32 to vector<8x128xf32>
    %259 = arith.addf %258, %257 : vector<8x128xf32>
    %260 = arith.divf %258, %259 : vector<8x128xf32>
    %261 = arith.mulf %252, %228 : vector<8x128xf32>
    %262 = arith.mulf %246, %254 : vector<8x128xf32>
    %263 = arith.addf %261, %262 : vector<8x128xf32>
    %264 = math.tanh %263 : vector<8x128xf32>
    %265 = arith.mulf %260, %264 : vector<8x128xf32>
    %266 = arith.index_cast %c3_i32_104 : i32 to index
    %c0_113 = arith.constant 0 : index
    %c0_114 = arith.constant 0 : index
    %267 = vector.load %arg18[%266, %c0_113, %c0_114] : memref<8x8x128xf32, #tpu.memory_space<vmem>>, vector<1x8x128xf32>
    %268 = vector.shape_cast %267 : vector<1x8x128xf32> to vector<8x128xf32>
    %269 = vector.shape_cast %265 : vector<8x128xf32> to vector<1x8x128xf32>
    tpu.vector_store %arg18[%266, %c0_113, %c0_114], %269 {strides = array<i32>} : memref<8x8x128xf32, #tpu.memory_space<vmem>>, vector<1x8x128xf32>,
    %c4_i32_115 = arith.constant 4 : i32
    %270 = arith.index_cast %c4_i32_115 : i32 to index
    %c0_116 = arith.constant 0 : index
    %c0_117 = arith.constant 0 : index
    %271 = vector.load %arg17[%270, %c0_116, %c0_117] : memref<8x8x512xf32, #tpu.memory_space<vmem>>, vector<1x8x512xf32>
    %272 = vector.shape_cast %271 : vector<1x8x512xf32> to vector<8x512xf32>
    %c0_118 = arith.constant 0 : index
    %c0_119 = arith.constant 0 : index
    %273 = vector.load %arg3[%c0_118, %c0_119] : memref<128x512xf32, #tpu.memory_space<vmem>>, vector<128x512xf32>
    %cst_120 = arith.constant dense<0.000000e+00> : vector<8x512xf32>
    %274 = tpu.matmul %265, %273, %cst_120 {dimension_numbers = #tpu.dot_dimension_numbers<[1], [0], [0], [1], [0, 0, 1, 1], [], []>} : vector<8x128xf32>, vector<128x512xf32>, vector<8x512xf32> -> vector<8x512xf32>
    %275 = arith.addf %272, %274 : vector<8x512xf32>
    %276 = vector.extract_strided_slice %275 {offsets = [0, 0], sizes = [8, 128], strides = [1, 1]} : vector<8x512xf32> to vector<8x128xf32>
    %277 = arith.negf %276 : vector<8x128xf32>
    %278 = math.exp %277 : vector<8x128xf32>
    %cst_121 = arith.constant 1.000000e+00 : f32
    %279 = vector.broadcast %cst_121 : f32 to vector<8x128xf32>
    %280 = arith.addf %279, %278 : vector<8x128xf32>
    %281 = arith.divf %279, %280 : vector<8x128xf32>
    %282 = vector.extract_strided_slice %275 {offsets = [0, 128], sizes = [8, 128], strides = [1, 1]} : vector<8x512xf32> to vector<8x128xf32>
    %283 = arith.negf %282 : vector<8x128xf32>
    %284 = math.exp %283 : vector<8x128xf32>
    %cst_122 = arith.constant 1.000000e+00 : f32
    %285 = vector.broadcast %cst_122 : f32 to vector<8x128xf32>
    %286 = arith.addf %285, %284 : vector<8x128xf32>
    %287 = arith.divf %285, %286 : vector<8x128xf32>
    %288 = vector.extract_strided_slice %275 {offsets = [0, 256], sizes = [8, 128], strides = [1, 1]} : vector<8x512xf32> to vector<8x128xf32>
    %289 = math.tanh %288 : vector<8x128xf32>
    %290 = vector.extract_strided_slice %275 {offsets = [0, 384], sizes = [8, 128], strides = [1, 1]} : vector<8x512xf32> to vector<8x128xf32>
    %291 = arith.negf %290 : vector<8x128xf32>
    %292 = math.exp %291 : vector<8x128xf32>
    %cst_123 = arith.constant 1.000000e+00 : f32
    %293 = vector.broadcast %cst_123 : f32 to vector<8x128xf32>
    %294 = arith.addf %293, %292 : vector<8x128xf32>
    %295 = arith.divf %293, %294 : vector<8x128xf32>
    %296 = arith.mulf %287, %263 : vector<8x128xf32>
    %297 = arith.mulf %281, %289 : vector<8x128xf32>
    %298 = arith.addf %296, %297 : vector<8x128xf32>
    %299 = math.tanh %298 : vector<8x128xf32>
    %300 = arith.mulf %295, %299 : vector<8x128xf32>
    %301 = arith.index_cast %c4_i32_115 : i32 to index
    %c0_124 = arith.constant 0 : index
    %c0_125 = arith.constant 0 : index
    %302 = vector.load %arg18[%301, %c0_124, %c0_125] : memref<8x8x128xf32, #tpu.memory_space<vmem>>, vector<1x8x128xf32>
    %303 = vector.shape_cast %302 : vector<1x8x128xf32> to vector<8x128xf32>
    %304 = vector.shape_cast %300 : vector<8x128xf32> to vector<1x8x128xf32>
    tpu.vector_store %arg18[%301, %c0_124, %c0_125], %304 {strides = array<i32>} : memref<8x8x128xf32, #tpu.memory_space<vmem>>, vector<1x8x128xf32>,
    %c5_i32_126 = arith.constant 5 : i32
    %305 = arith.index_cast %c5_i32_126 : i32 to index
    %c0_127 = arith.constant 0 : index
    %c0_128 = arith.constant 0 : index
    %306 = vector.load %arg17[%305, %c0_127, %c0_128] : memref<8x8x512xf32, #tpu.memory_space<vmem>>, vector<1x8x512xf32>
    %307 = vector.shape_cast %306 : vector<1x8x512xf32> to vector<8x512xf32>
    %c0_129 = arith.constant 0 : index
    %c0_130 = arith.constant 0 : index
    %308 = vector.load %arg3[%c0_129, %c0_130] : memref<128x512xf32, #tpu.memory_space<vmem>>, vector<128x512xf32>
    %cst_131 = arith.constant dense<0.000000e+00> : vector<8x512xf32>
    %309 = tpu.matmul %300, %308, %cst_131 {dimension_numbers = #tpu.dot_dimension_numbers<[1], [0], [0], [1], [0, 0, 1, 1], [], []>} : vector<8x128xf32>, vector<128x512xf32>, vector<8x512xf32> -> vector<8x512xf32>
    %310 = arith.addf %307, %309 : vector<8x512xf32>
    %311 = vector.extract_strided_slice %310 {offsets = [0, 0], sizes = [8, 128], strides = [1, 1]} : vector<8x512xf32> to vector<8x128xf32>
    %312 = arith.negf %311 : vector<8x128xf32>
    %313 = math.exp %312 : vector<8x128xf32>
    %cst_132 = arith.constant 1.000000e+00 : f32
    %314 = vector.broadcast %cst_132 : f32 to vector<8x128xf32>
    %315 = arith.addf %314, %313 : vector<8x128xf32>
    %316 = arith.divf %314, %315 : vector<8x128xf32>
    %317 = vector.extract_strided_slice %310 {offsets = [0, 128], sizes = [8, 128], strides = [1, 1]} : vector<8x512xf32> to vector<8x128xf32>
    %318 = arith.negf %317 : vector<8x128xf32>
    %319 = math.exp %318 : vector<8x128xf32>
    %cst_133 = arith.constant 1.000000e+00 : f32
    %320 = vector.broadcast %cst_133 : f32 to vector<8x128xf32>
    %321 = arith.addf %320, %319 : vector<8x128xf32>
    %322 = arith.divf %320, %321 : vector<8x128xf32>
    %323 = vector.extract_strided_slice %310 {offsets = [0, 256], sizes = [8, 128], strides = [1, 1]} : vector<8x512xf32> to vector<8x128xf32>
    %324 = math.tanh %323 : vector<8x128xf32>
    %325 = vector.extract_strided_slice %310 {offsets = [0, 384], sizes = [8, 128], strides = [1, 1]} : vector<8x512xf32> to vector<8x128xf32>
    %326 = arith.negf %325 : vector<8x128xf32>
    %327 = math.exp %326 : vector<8x128xf32>
    %cst_134 = arith.constant 1.000000e+00 : f32
    %328 = vector.broadcast %cst_134 : f32 to vector<8x128xf32>
    %329 = arith.addf %328, %327 : vector<8x128xf32>
    %330 = arith.divf %328, %329 : vector<8x128xf32>
    %331 = arith.mulf %322, %298 : vector<8x128xf32>
    %332 = arith.mulf %316, %324 : vector<8x128xf32>
    %333 = arith.addf %331, %332 : vector<8x128xf32>
    %334 = math.tanh %333 : vector<8x128xf32>
    %335 = arith.mulf %330, %334 : vector<8x128xf32>
    %336 = arith.index_cast %c5_i32_126 : i32 to index
    %c0_135 = arith.constant 0 : index
    %c0_136 = arith.constant 0 : index
    %337 = vector.load %arg18[%336, %c0_135, %c0_136] : memref<8x8x128xf32, #tpu.memory_space<vmem>>, vector<1x8x128xf32>
    %338 = vector.shape_cast %337 : vector<1x8x128xf32> to vector<8x128xf32>
    %339 = vector.shape_cast %335 : vector<8x128xf32> to vector<1x8x128xf32>
    tpu.vector_store %arg18[%336, %c0_135, %c0_136], %339 {strides = array<i32>} : memref<8x8x128xf32, #tpu.memory_space<vmem>>, vector<1x8x128xf32>,
    %c6_i32_137 = arith.constant 6 : i32
    %340 = arith.index_cast %c6_i32_137 : i32 to index
    %c0_138 = arith.constant 0 : index
    %c0_139 = arith.constant 0 : index
    %341 = vector.load %arg17[%340, %c0_138, %c0_139] : memref<8x8x512xf32, #tpu.memory_space<vmem>>, vector<1x8x512xf32>
    %342 = vector.shape_cast %341 : vector<1x8x512xf32> to vector<8x512xf32>
    %c0_140 = arith.constant 0 : index
    %c0_141 = arith.constant 0 : index
    %343 = vector.load %arg3[%c0_140, %c0_141] : memref<128x512xf32, #tpu.memory_space<vmem>>, vector<128x512xf32>
    %cst_142 = arith.constant dense<0.000000e+00> : vector<8x512xf32>
    %344 = tpu.matmul %335, %343, %cst_142 {dimension_numbers = #tpu.dot_dimension_numbers<[1], [0], [0], [1], [0, 0, 1, 1], [], []>} : vector<8x128xf32>, vector<128x512xf32>, vector<8x512xf32> -> vector<8x512xf32>
    %345 = arith.addf %342, %344 : vector<8x512xf32>
    %346 = vector.extract_strided_slice %345 {offsets = [0, 0], sizes = [8, 128], strides = [1, 1]} : vector<8x512xf32> to vector<8x128xf32>
    %347 = arith.negf %346 : vector<8x128xf32>
    %348 = math.exp %347 : vector<8x128xf32>
    %cst_143 = arith.constant 1.000000e+00 : f32
    %349 = vector.broadcast %cst_143 : f32 to vector<8x128xf32>
    %350 = arith.addf %349, %348 : vector<8x128xf32>
    %351 = arith.divf %349, %350 : vector<8x128xf32>
    %352 = vector.extract_strided_slice %345 {offsets = [0, 128], sizes = [8, 128], strides = [1, 1]} : vector<8x512xf32> to vector<8x128xf32>
    %353 = arith.negf %352 : vector<8x128xf32>
    %354 = math.exp %353 : vector<8x128xf32>
    %cst_144 = arith.constant 1.000000e+00 : f32
    %355 = vector.broadcast %cst_144 : f32 to vector<8x128xf32>
    %356 = arith.addf %355, %354 : vector<8x128xf32>
    %357 = arith.divf %355, %356 : vector<8x128xf32>
    %358 = vector.extract_strided_slice %345 {offsets = [0, 256], sizes = [8, 128], strides = [1, 1]} : vector<8x512xf32> to vector<8x128xf32>
    %359 = math.tanh %358 : vector<8x128xf32>
    %360 = vector.extract_strided_slice %345 {offsets = [0, 384], sizes = [8, 128], strides = [1, 1]} : vector<8x512xf32> to vector<8x128xf32>
    %361 = arith.negf %360 : vector<8x128xf32>
    %362 = math.exp %361 : vector<8x128xf32>
    %cst_145 = arith.constant 1.000000e+00 : f32
    %363 = vector.broadcast %cst_145 : f32 to vector<8x128xf32>
    %364 = arith.addf %363, %362 : vector<8x128xf32>
    %365 = arith.divf %363, %364 : vector<8x128xf32>
    %366 = arith.mulf %357, %333 : vector<8x128xf32>
    %367 = arith.mulf %351, %359 : vector<8x128xf32>
    %368 = arith.addf %366, %367 : vector<8x128xf32>
    %369 = math.tanh %368 : vector<8x128xf32>
    %370 = arith.mulf %365, %369 : vector<8x128xf32>
    %371 = arith.index_cast %c6_i32_137 : i32 to index
    %c0_146 = arith.constant 0 : index
    %c0_147 = arith.constant 0 : index
    %372 = vector.load %arg18[%371, %c0_146, %c0_147] : memref<8x8x128xf32, #tpu.memory_space<vmem>>, vector<1x8x128xf32>
    %373 = vector.shape_cast %372 : vector<1x8x128xf32> to vector<8x128xf32>
    %374 = vector.shape_cast %370 : vector<8x128xf32> to vector<1x8x128xf32>
    tpu.vector_store %arg18[%371, %c0_146, %c0_147], %374 {strides = array<i32>} : memref<8x8x128xf32, #tpu.memory_space<vmem>>, vector<1x8x128xf32>,
    %c7_i32_148 = arith.constant 7 : i32
    %375 = arith.index_cast %c7_i32_148 : i32 to index
    %c0_149 = arith.constant 0 : index
    %c0_150 = arith.constant 0 : index
    %376 = vector.load %arg17[%375, %c0_149, %c0_150] : memref<8x8x512xf32, #tpu.memory_space<vmem>>, vector<1x8x512xf32>
    %377 = vector.shape_cast %376 : vector<1x8x512xf32> to vector<8x512xf32>
    %c0_151 = arith.constant 0 : index
    %c0_152 = arith.constant 0 : index
    %378 = vector.load %arg3[%c0_151, %c0_152] : memref<128x512xf32, #tpu.memory_space<vmem>>, vector<128x512xf32>
    %cst_153 = arith.constant dense<0.000000e+00> : vector<8x512xf32>
    %379 = tpu.matmul %370, %378, %cst_153 {dimension_numbers = #tpu.dot_dimension_numbers<[1], [0], [0], [1], [0, 0, 1, 1], [], []>} : vector<8x128xf32>, vector<128x512xf32>, vector<8x512xf32> -> vector<8x512xf32>
    %380 = arith.addf %377, %379 : vector<8x512xf32>
    %381 = vector.extract_strided_slice %380 {offsets = [0, 0], sizes = [8, 128], strides = [1, 1]} : vector<8x512xf32> to vector<8x128xf32>
    %382 = arith.negf %381 : vector<8x128xf32>
    %383 = math.exp %382 : vector<8x128xf32>
    %cst_154 = arith.constant 1.000000e+00 : f32
    %384 = vector.broadcast %cst_154 : f32 to vector<8x128xf32>
    %385 = arith.addf %384, %383 : vector<8x128xf32>
    %386 = arith.divf %384, %385 : vector<8x128xf32>
    %387 = vector.extract_strided_slice %380 {offsets = [0, 128], sizes = [8, 128], strides = [1, 1]} : vector<8x512xf32> to vector<8x128xf32>
    %388 = arith.negf %387 : vector<8x128xf32>
    %389 = math.exp %388 : vector<8x128xf32>
    %cst_155 = arith.constant 1.000000e+00 : f32
    %390 = vector.broadcast %cst_155 : f32 to vector<8x128xf32>
    %391 = arith.addf %390, %389 : vector<8x128xf32>
    %392 = arith.divf %390, %391 : vector<8x128xf32>
    %393 = vector.extract_strided_slice %380 {offsets = [0, 256], sizes = [8, 128], strides = [1, 1]} : vector<8x512xf32> to vector<8x128xf32>
    %394 = math.tanh %393 : vector<8x128xf32>
    %395 = vector.extract_strided_slice %380 {offsets = [0, 384], sizes = [8, 128], strides = [1, 1]} : vector<8x512xf32> to vector<8x128xf32>
    %396 = arith.negf %395 : vector<8x128xf32>
    %397 = math.exp %396 : vector<8x128xf32>
    %cst_156 = arith.constant 1.000000e+00 : f32
    %398 = vector.broadcast %cst_156 : f32 to vector<8x128xf32>
    %399 = arith.addf %398, %397 : vector<8x128xf32>
    %400 = arith.divf %398, %399 : vector<8x128xf32>
    %401 = arith.mulf %392, %368 : vector<8x128xf32>
    %402 = arith.mulf %386, %394 : vector<8x128xf32>
    %403 = arith.addf %401, %402 : vector<8x128xf32>
    %404 = math.tanh %403 : vector<8x128xf32>
    %405 = arith.mulf %400, %404 : vector<8x128xf32>
    %406 = arith.index_cast %c7_i32_148 : i32 to index
    %c0_157 = arith.constant 0 : index
    %c0_158 = arith.constant 0 : index
    %407 = vector.load %arg18[%406, %c0_157, %c0_158] : memref<8x8x128xf32, #tpu.memory_space<vmem>>, vector<1x8x128xf32>
    %408 = vector.shape_cast %407 : vector<1x8x128xf32> to vector<8x128xf32>
    %409 = vector.shape_cast %405 : vector<8x128xf32> to vector<1x8x128xf32>
    tpu.vector_store %arg18[%406, %c0_157, %c0_158], %409 {strides = array<i32>} : memref<8x8x128xf32, #tpu.memory_space<vmem>>, vector<1x8x128xf32>,
    %c8_i32_159 = arith.constant 8 : i32
    %c0_160 = arith.constant 0 : index
    %c0_161 = arith.constant 0 : index
    %c0_162 = arith.constant 0 : index
    %410 = vector.load %arg18[%c0_160, %c0_161, %c0_162] : memref<8x8x128xf32, #tpu.memory_space<vmem>>, vector<8x8x128xf32>
    %411 = vector.shape_cast %410 : vector<8x8x128xf32> to vector<64x128xf32>
    %c0_163 = arith.constant 0 : index
    %c0_164 = arith.constant 0 : index
    %412 = vector.load %arg5[%c0_163, %c0_164] : memref<128x1024xf32, #tpu.memory_space<vmem>>, vector<128x1024xf32>
    %cst_165 = arith.constant dense<0.000000e+00> : vector<64x1024xf32>
    %413 = tpu.matmul %411, %412, %cst_165 {dimension_numbers = #tpu.dot_dimension_numbers<[1], [0], [0], [1], [0, 0, 1, 1], [], []>} : vector<64x128xf32>, vector<128x1024xf32>, vector<64x1024xf32> -> vector<64x1024xf32>
    %c0_166 = arith.constant 0 : index
    %c0_167 = arith.constant 0 : index
    %414 = vector.load %arg7[%c0_166, %c0_167] : memref<1x1024xf32, #tpu.memory_space<vmem>>, vector<1x1024xf32>
    %415 = vector.broadcast %414 : vector<1x1024xf32> to vector<64x1024xf32>
    %416 = arith.addf %413, %415 : vector<64x1024xf32>
    %417 = vector.shape_cast %416 : vector<64x1024xf32> to vector<8x8x1024xf32>
    %c0_168 = arith.constant 0 : index
    %c0_169 = arith.constant 0 : index
    %c0_170 = arith.constant 0 : index
    %418 = vector.load %arg16[%c0_168, %c0_169, %c0_170] : memref<8x8x1024xf32, #tpu.memory_space<vmem>>, vector<8x8x1024xf32>
    tpu.vector_store %arg16[%c0_168, %c0_169, %c0_170], %417 {strides = array<i32>} : memref<8x8x1024xf32, #tpu.memory_space<vmem>>, vector<8x8x1024xf32>,
    %c0_i32_171 = arith.constant 0 : i32
    %419 = arith.index_cast %c0_i32_171 : i32 to index
    %c0_172 = arith.constant 0 : index
    %c0_173 = arith.constant 0 : index
    %420 = vector.load %arg16[%419, %c0_172, %c0_173] : memref<8x8x1024xf32, #tpu.memory_space<vmem>>, vector<1x8x1024xf32>
    %421 = vector.shape_cast %420 : vector<1x8x1024xf32> to vector<8x1024xf32>
    %c7_i32_174 = arith.constant 7 : i32
    %422 = arith.subi %c7_i32_174, %c0_i32_171 : i32
    %423 = arith.index_cast %422 : i32 to index
    %c0_175 = arith.constant 0 : index
    %c0_176 = arith.constant 0 : index
    %424 = vector.load %arg16[%423, %c0_175, %c0_176] : memref<8x8x1024xf32, #tpu.memory_space<vmem>>, vector<1x8x1024xf32>
    %425 = vector.shape_cast %424 : vector<1x8x1024xf32> to vector<8x1024xf32>
    %426 = vector.extract_strided_slice %421 {offsets = [0, 0], sizes = [8, 512], strides = [1, 1]} : vector<8x1024xf32> to vector<8x512xf32>
    %427 = vector.extract_strided_slice %425 {offsets = [0, 512], sizes = [8, 512], strides = [1, 1]} : vector<8x1024xf32> to vector<8x512xf32>
    %428 = arith.addf %426, %427 : vector<8x512xf32>
    %429 = arith.index_cast %c0_i32_171 : i32 to index
    %c0_177 = arith.constant 0 : index
    %c0_178 = arith.constant 0 : index
    %430 = vector.load %arg17[%429, %c0_177, %c0_178] : memref<8x8x512xf32, #tpu.memory_space<vmem>>, vector<1x8x512xf32>
    %431 = vector.shape_cast %430 : vector<1x8x512xf32> to vector<8x512xf32>
    %432 = vector.shape_cast %428 : vector<8x512xf32> to vector<1x8x512xf32>
    tpu.vector_store %arg17[%429, %c0_177, %c0_178], %432 {strides = array<i32>} : memref<8x8x512xf32, #tpu.memory_space<vmem>>, vector<1x8x512xf32>,
    %c1_i32_179 = arith.constant 1 : i32
    %433 = arith.index_cast %c1_i32_179 : i32 to index
    %c0_180 = arith.constant 0 : index
    %c0_181 = arith.constant 0 : index
    %434 = vector.load %arg16[%433, %c0_180, %c0_181] : memref<8x8x1024xf32, #tpu.memory_space<vmem>>, vector<1x8x1024xf32>
    %435 = vector.shape_cast %434 : vector<1x8x1024xf32> to vector<8x1024xf32>
    %c7_i32_182 = arith.constant 7 : i32
    %436 = arith.subi %c7_i32_182, %c1_i32_179 : i32
    %437 = arith.index_cast %436 : i32 to index
    %c0_183 = arith.constant 0 : index
    %c0_184 = arith.constant 0 : index
    %438 = vector.load %arg16[%437, %c0_183, %c0_184] : memref<8x8x1024xf32, #tpu.memory_space<vmem>>, vector<1x8x1024xf32>
    %439 = vector.shape_cast %438 : vector<1x8x1024xf32> to vector<8x1024xf32>
    %440 = vector.extract_strided_slice %435 {offsets = [0, 0], sizes = [8, 512], strides = [1, 1]} : vector<8x1024xf32> to vector<8x512xf32>
    %441 = vector.extract_strided_slice %439 {offsets = [0, 512], sizes = [8, 512], strides = [1, 1]} : vector<8x1024xf32> to vector<8x512xf32>
    %442 = arith.addf %440, %441 : vector<8x512xf32>
    %443 = arith.index_cast %c1_i32_179 : i32 to index
    %c0_185 = arith.constant 0 : index
    %c0_186 = arith.constant 0 : index
    %444 = vector.load %arg17[%443, %c0_185, %c0_186] : memref<8x8x512xf32, #tpu.memory_space<vmem>>, vector<1x8x512xf32>
    %445 = vector.shape_cast %444 : vector<1x8x512xf32> to vector<8x512xf32>
    %446 = vector.shape_cast %442 : vector<8x512xf32> to vector<1x8x512xf32>
    tpu.vector_store %arg17[%443, %c0_185, %c0_186], %446 {strides = array<i32>} : memref<8x8x512xf32, #tpu.memory_space<vmem>>, vector<1x8x512xf32>,
    %c2_i32_187 = arith.constant 2 : i32
    %447 = arith.index_cast %c2_i32_187 : i32 to index
    %c0_188 = arith.constant 0 : index
    %c0_189 = arith.constant 0 : index
    %448 = vector.load %arg16[%447, %c0_188, %c0_189] : memref<8x8x1024xf32, #tpu.memory_space<vmem>>, vector<1x8x1024xf32>
    %449 = vector.shape_cast %448 : vector<1x8x1024xf32> to vector<8x1024xf32>
    %c7_i32_190 = arith.constant 7 : i32
    %450 = arith.subi %c7_i32_190, %c2_i32_187 : i32
    %451 = arith.index_cast %450 : i32 to index
    %c0_191 = arith.constant 0 : index
    %c0_192 = arith.constant 0 : index
    %452 = vector.load %arg16[%451, %c0_191, %c0_192] : memref<8x8x1024xf32, #tpu.memory_space<vmem>>, vector<1x8x1024xf32>
    %453 = vector.shape_cast %452 : vector<1x8x1024xf32> to vector<8x1024xf32>
    %454 = vector.extract_strided_slice %449 {offsets = [0, 0], sizes = [8, 512], strides = [1, 1]} : vector<8x1024xf32> to vector<8x512xf32>
    %455 = vector.extract_strided_slice %453 {offsets = [0, 512], sizes = [8, 512], strides = [1, 1]} : vector<8x1024xf32> to vector<8x512xf32>
    %456 = arith.addf %454, %455 : vector<8x512xf32>
    %457 = arith.index_cast %c2_i32_187 : i32 to index
    %c0_193 = arith.constant 0 : index
    %c0_194 = arith.constant 0 : index
    %458 = vector.load %arg17[%457, %c0_193, %c0_194] : memref<8x8x512xf32, #tpu.memory_space<vmem>>, vector<1x8x512xf32>
    %459 = vector.shape_cast %458 : vector<1x8x512xf32> to vector<8x512xf32>
    %460 = vector.shape_cast %456 : vector<8x512xf32> to vector<1x8x512xf32>
    tpu.vector_store %arg17[%457, %c0_193, %c0_194], %460 {strides = array<i32>} : memref<8x8x512xf32, #tpu.memory_space<vmem>>, vector<1x8x512xf32>,
    %c3_i32_195 = arith.constant 3 : i32
    %461 = arith.index_cast %c3_i32_195 : i32 to index
    %c0_196 = arith.constant 0 : index
    %c0_197 = arith.constant 0 : index
    %462 = vector.load %arg16[%461, %c0_196, %c0_197] : memref<8x8x1024xf32, #tpu.memory_space<vmem>>, vector<1x8x1024xf32>
    %463 = vector.shape_cast %462 : vector<1x8x1024xf32> to vector<8x1024xf32>
    %c7_i32_198 = arith.constant 7 : i32
    %464 = arith.subi %c7_i32_198, %c3_i32_195 : i32
    %465 = arith.index_cast %464 : i32 to index
    %c0_199 = arith.constant 0 : index
    %c0_200 = arith.constant 0 : index
    %466 = vector.load %arg16[%465, %c0_199, %c0_200] : memref<8x8x1024xf32, #tpu.memory_space<vmem>>, vector<1x8x1024xf32>
    %467 = vector.shape_cast %466 : vector<1x8x1024xf32> to vector<8x1024xf32>
    %468 = vector.extract_strided_slice %463 {offsets = [0, 0], sizes = [8, 512], strides = [1, 1]} : vector<8x1024xf32> to vector<8x512xf32>
    %469 = vector.extract_strided_slice %467 {offsets = [0, 512], sizes = [8, 512], strides = [1, 1]} : vector<8x1024xf32> to vector<8x512xf32>
    %470 = arith.addf %468, %469 : vector<8x512xf32>
    %471 = arith.index_cast %c3_i32_195 : i32 to index
    %c0_201 = arith.constant 0 : index
    %c0_202 = arith.constant 0 : index
    %472 = vector.load %arg17[%471, %c0_201, %c0_202] : memref<8x8x512xf32, #tpu.memory_space<vmem>>, vector<1x8x512xf32>
    %473 = vector.shape_cast %472 : vector<1x8x512xf32> to vector<8x512xf32>
    %474 = vector.shape_cast %470 : vector<8x512xf32> to vector<1x8x512xf32>
    tpu.vector_store %arg17[%471, %c0_201, %c0_202], %474 {strides = array<i32>} : memref<8x8x512xf32, #tpu.memory_space<vmem>>, vector<1x8x512xf32>,
    %c4_i32_203 = arith.constant 4 : i32
    %475 = arith.index_cast %c4_i32_203 : i32 to index
    %c0_204 = arith.constant 0 : index
    %c0_205 = arith.constant 0 : index
    %476 = vector.load %arg16[%475, %c0_204, %c0_205] : memref<8x8x1024xf32, #tpu.memory_space<vmem>>, vector<1x8x1024xf32>
    %477 = vector.shape_cast %476 : vector<1x8x1024xf32> to vector<8x1024xf32>
    %c7_i32_206 = arith.constant 7 : i32
    %478 = arith.subi %c7_i32_206, %c4_i32_203 : i32
    %479 = arith.index_cast %478 : i32 to index
    %c0_207 = arith.constant 0 : index
    %c0_208 = arith.constant 0 : index
    %480 = vector.load %arg16[%479, %c0_207, %c0_208] : memref<8x8x1024xf32, #tpu.memory_space<vmem>>, vector<1x8x1024xf32>
    %481 = vector.shape_cast %480 : vector<1x8x1024xf32> to vector<8x1024xf32>
    %482 = vector.extract_strided_slice %477 {offsets = [0, 0], sizes = [8, 512], strides = [1, 1]} : vector<8x1024xf32> to vector<8x512xf32>
    %483 = vector.extract_strided_slice %481 {offsets = [0, 512], sizes = [8, 512], strides = [1, 1]} : vector<8x1024xf32> to vector<8x512xf32>
    %484 = arith.addf %482, %483 : vector<8x512xf32>
    %485 = arith.index_cast %c4_i32_203 : i32 to index
    %c0_209 = arith.constant 0 : index
    %c0_210 = arith.constant 0 : index
    %486 = vector.load %arg17[%485, %c0_209, %c0_210] : memref<8x8x512xf32, #tpu.memory_space<vmem>>, vector<1x8x512xf32>
    %487 = vector.shape_cast %486 : vector<1x8x512xf32> to vector<8x512xf32>
    %488 = vector.shape_cast %484 : vector<8x512xf32> to vector<1x8x512xf32>
    tpu.vector_store %arg17[%485, %c0_209, %c0_210], %488 {strides = array<i32>} : memref<8x8x512xf32, #tpu.memory_space<vmem>>, vector<1x8x512xf32>,
    %c5_i32_211 = arith.constant 5 : i32
    %489 = arith.index_cast %c5_i32_211 : i32 to index
    %c0_212 = arith.constant 0 : index
    %c0_213 = arith.constant 0 : index
    %490 = vector.load %arg16[%489, %c0_212, %c0_213] : memref<8x8x1024xf32, #tpu.memory_space<vmem>>, vector<1x8x1024xf32>
    %491 = vector.shape_cast %490 : vector<1x8x1024xf32> to vector<8x1024xf32>
    %c7_i32_214 = arith.constant 7 : i32
    %492 = arith.subi %c7_i32_214, %c5_i32_211 : i32
    %493 = arith.index_cast %492 : i32 to index
    %c0_215 = arith.constant 0 : index
    %c0_216 = arith.constant 0 : index
    %494 = vector.load %arg16[%493, %c0_215, %c0_216] : memref<8x8x1024xf32, #tpu.memory_space<vmem>>, vector<1x8x1024xf32>
    %495 = vector.shape_cast %494 : vector<1x8x1024xf32> to vector<8x1024xf32>
    %496 = vector.extract_strided_slice %491 {offsets = [0, 0], sizes = [8, 512], strides = [1, 1]} : vector<8x1024xf32> to vector<8x512xf32>
    %497 = vector.extract_strided_slice %495 {offsets = [0, 512], sizes = [8, 512], strides = [1, 1]} : vector<8x1024xf32> to vector<8x512xf32>
    %498 = arith.addf %496, %497 : vector<8x512xf32>
    %499 = arith.index_cast %c5_i32_211 : i32 to index
    %c0_217 = arith.constant 0 : index
    %c0_218 = arith.constant 0 : index
    %500 = vector.load %arg17[%499, %c0_217, %c0_218] : memref<8x8x512xf32, #tpu.memory_space<vmem>>, vector<1x8x512xf32>
    %501 = vector.shape_cast %500 : vector<1x8x512xf32> to vector<8x512xf32>
    %502 = vector.shape_cast %498 : vector<8x512xf32> to vector<1x8x512xf32>
    tpu.vector_store %arg17[%499, %c0_217, %c0_218], %502 {strides = array<i32>} : memref<8x8x512xf32, #tpu.memory_space<vmem>>, vector<1x8x512xf32>,
    %c6_i32_219 = arith.constant 6 : i32
    %503 = arith.index_cast %c6_i32_219 : i32 to index
    %c0_220 = arith.constant 0 : index
    %c0_221 = arith.constant 0 : index
    %504 = vector.load %arg16[%503, %c0_220, %c0_221] : memref<8x8x1024xf32, #tpu.memory_space<vmem>>, vector<1x8x1024xf32>
    %505 = vector.shape_cast %504 : vector<1x8x1024xf32> to vector<8x1024xf32>
    %c7_i32_222 = arith.constant 7 : i32
    %506 = arith.subi %c7_i32_222, %c6_i32_219 : i32
    %507 = arith.index_cast %506 : i32 to index
    %c0_223 = arith.constant 0 : index
    %c0_224 = arith.constant 0 : index
    %508 = vector.load %arg16[%507, %c0_223, %c0_224] : memref<8x8x1024xf32, #tpu.memory_space<vmem>>, vector<1x8x1024xf32>
    %509 = vector.shape_cast %508 : vector<1x8x1024xf32> to vector<8x1024xf32>
    %510 = vector.extract_strided_slice %505 {offsets = [0, 0], sizes = [8, 512], strides = [1, 1]} : vector<8x1024xf32> to vector<8x512xf32>
    %511 = vector.extract_strided_slice %509 {offsets = [0, 512], sizes = [8, 512], strides = [1, 1]} : vector<8x1024xf32> to vector<8x512xf32>
    %512 = arith.addf %510, %511 : vector<8x512xf32>
    %513 = arith.index_cast %c6_i32_219 : i32 to index
    %c0_225 = arith.constant 0 : index
    %c0_226 = arith.constant 0 : index
    %514 = vector.load %arg17[%513, %c0_225, %c0_226] : memref<8x8x512xf32, #tpu.memory_space<vmem>>, vector<1x8x512xf32>
    %515 = vector.shape_cast %514 : vector<1x8x512xf32> to vector<8x512xf32>
    %516 = vector.shape_cast %512 : vector<8x512xf32> to vector<1x8x512xf32>
    tpu.vector_store %arg17[%513, %c0_225, %c0_226], %516 {strides = array<i32>} : memref<8x8x512xf32, #tpu.memory_space<vmem>>, vector<1x8x512xf32>,
    %c7_i32_227 = arith.constant 7 : i32
    %517 = arith.index_cast %c7_i32_227 : i32 to index
    %c0_228 = arith.constant 0 : index
    %c0_229 = arith.constant 0 : index
    %518 = vector.load %arg16[%517, %c0_228, %c0_229] : memref<8x8x1024xf32, #tpu.memory_space<vmem>>, vector<1x8x1024xf32>
    %519 = vector.shape_cast %518 : vector<1x8x1024xf32> to vector<8x1024xf32>
    %c7_i32_230 = arith.constant 7 : i32
    %520 = arith.subi %c7_i32_230, %c7_i32_227 : i32
    %521 = arith.index_cast %520 : i32 to index
    %c0_231 = arith.constant 0 : index
    %c0_232 = arith.constant 0 : index
    %522 = vector.load %arg16[%521, %c0_231, %c0_232] : memref<8x8x1024xf32, #tpu.memory_space<vmem>>, vector<1x8x1024xf32>
    %523 = vector.shape_cast %522 : vector<1x8x1024xf32> to vector<8x1024xf32>
    %524 = vector.extract_strided_slice %519 {offsets = [0, 0], sizes = [8, 512], strides = [1, 1]} : vector<8x1024xf32> to vector<8x512xf32>
    %525 = vector.extract_strided_slice %523 {offsets = [0, 512], sizes = [8, 512], strides = [1, 1]} : vector<8x1024xf32> to vector<8x512xf32>
    %526 = arith.addf %524, %525 : vector<8x512xf32>
    %527 = arith.index_cast %c7_i32_227 : i32 to index
    %c0_233 = arith.constant 0 : index
    %c0_234 = arith.constant 0 : index
    %528 = vector.load %arg17[%527, %c0_233, %c0_234] : memref<8x8x512xf32, #tpu.memory_space<vmem>>, vector<1x8x512xf32>
    %529 = vector.shape_cast %528 : vector<1x8x512xf32> to vector<8x512xf32>
    %530 = vector.shape_cast %526 : vector<8x512xf32> to vector<1x8x512xf32>
    tpu.vector_store %arg17[%527, %c0_233, %c0_234], %530 {strides = array<i32>} : memref<8x8x512xf32, #tpu.memory_space<vmem>>, vector<1x8x512xf32>,
    %c8_i32_235 = arith.constant 8 : i32
    %c1 = arith.constant 1 : index
    %c0_236 = arith.constant 0 : index
    %c0_237 = arith.constant 0 : index
    %531 = vector.load %arg8[%c1, %c0_236, %c0_237] : memref<2x8x128xf32, #tpu.memory_space<vmem>>, vector<1x8x128xf32>
    %532 = vector.shape_cast %531 : vector<1x8x128xf32> to vector<8x128xf32>
    %c1_238 = arith.constant 1 : index
    %c0_239 = arith.constant 0 : index
    %c0_240 = arith.constant 0 : index
    %533 = vector.load %arg9[%c1_238, %c0_239, %c0_240] : memref<2x8x128xf32, #tpu.memory_space<vmem>>, vector<1x8x128xf32>
    %534 = vector.shape_cast %533 : vector<1x8x128xf32> to vector<8x128xf32>
    %c0_i32_241 = arith.constant 0 : i32
    %535 = arith.index_cast %c0_i32_241 : i32 to index
    %c0_242 = arith.constant 0 : index
    %c0_243 = arith.constant 0 : index
    %536 = vector.load %arg17[%535, %c0_242, %c0_243] : memref<8x8x512xf32, #tpu.memory_space<vmem>>, vector<1x8x512xf32>
    %537 = vector.shape_cast %536 : vector<1x8x512xf32> to vector<8x512xf32>
    %c0_244 = arith.constant 0 : index
    %c0_245 = arith.constant 0 : index
    %538 = vector.load %arg6[%c0_244, %c0_245] : memref<128x512xf32, #tpu.memory_space<vmem>>, vector<128x512xf32>
    %cst_246 = arith.constant dense<0.000000e+00> : vector<8x512xf32>
    %539 = tpu.matmul %532, %538, %cst_246 {dimension_numbers = #tpu.dot_dimension_numbers<[1], [0], [0], [1], [0, 0, 1, 1], [], []>} : vector<8x128xf32>, vector<128x512xf32>, vector<8x512xf32> -> vector<8x512xf32>
    %540 = arith.addf %537, %539 : vector<8x512xf32>
    %541 = vector.extract_strided_slice %540 {offsets = [0, 0], sizes = [8, 128], strides = [1, 1]} : vector<8x512xf32> to vector<8x128xf32>
    %542 = arith.negf %541 : vector<8x128xf32>
    %543 = math.exp %542 : vector<8x128xf32>
    %cst_247 = arith.constant 1.000000e+00 : f32
    %544 = vector.broadcast %cst_247 : f32 to vector<8x128xf32>
    %545 = arith.addf %544, %543 : vector<8x128xf32>
    %546 = arith.divf %544, %545 : vector<8x128xf32>
    %547 = vector.extract_strided_slice %540 {offsets = [0, 128], sizes = [8, 128], strides = [1, 1]} : vector<8x512xf32> to vector<8x128xf32>
    %548 = arith.negf %547 : vector<8x128xf32>
    %549 = math.exp %548 : vector<8x128xf32>
    %cst_248 = arith.constant 1.000000e+00 : f32
    %550 = vector.broadcast %cst_248 : f32 to vector<8x128xf32>
    %551 = arith.addf %550, %549 : vector<8x128xf32>
    %552 = arith.divf %550, %551 : vector<8x128xf32>
    %553 = vector.extract_strided_slice %540 {offsets = [0, 256], sizes = [8, 128], strides = [1, 1]} : vector<8x512xf32> to vector<8x128xf32>
    %554 = math.tanh %553 : vector<8x128xf32>
    %555 = vector.extract_strided_slice %540 {offsets = [0, 384], sizes = [8, 128], strides = [1, 1]} : vector<8x512xf32> to vector<8x128xf32>
    %556 = arith.negf %555 : vector<8x128xf32>
    %557 = math.exp %556 : vector<8x128xf32>
    %cst_249 = arith.constant 1.000000e+00 : f32
    %558 = vector.broadcast %cst_249 : f32 to vector<8x128xf32>
    %559 = arith.addf %558, %557 : vector<8x128xf32>
    %560 = arith.divf %558, %559 : vector<8x128xf32>
    %561 = arith.mulf %552, %534 : vector<8x128xf32>
    %562 = arith.mulf %546, %554 : vector<8x128xf32>
    %563 = arith.addf %561, %562 : vector<8x128xf32>
    %564 = math.tanh %563 : vector<8x128xf32>
    %565 = arith.mulf %560, %564 : vector<8x128xf32>
    %566 = arith.index_cast %c0_i32_241 : i32 to index
    %c0_250 = arith.constant 0 : index
    %c0_251 = arith.constant 0 : index
    %567 = vector.load %arg19[%566, %c0_250, %c0_251] : memref<8x8x128xf32, #tpu.memory_space<vmem>>, vector<1x8x128xf32>
    %568 = vector.shape_cast %567 : vector<1x8x128xf32> to vector<8x128xf32>
    %569 = vector.shape_cast %565 : vector<8x128xf32> to vector<1x8x128xf32>
    tpu.vector_store %arg19[%566, %c0_250, %c0_251], %569 {strides = array<i32>} : memref<8x8x128xf32, #tpu.memory_space<vmem>>, vector<1x8x128xf32>,
    %c1_i32_252 = arith.constant 1 : i32
    %570 = arith.index_cast %c1_i32_252 : i32 to index
    %c0_253 = arith.constant 0 : index
    %c0_254 = arith.constant 0 : index
    %571 = vector.load %arg17[%570, %c0_253, %c0_254] : memref<8x8x512xf32, #tpu.memory_space<vmem>>, vector<1x8x512xf32>
    %572 = vector.shape_cast %571 : vector<1x8x512xf32> to vector<8x512xf32>
    %c0_255 = arith.constant 0 : index
    %c0_256 = arith.constant 0 : index
    %573 = vector.load %arg6[%c0_255, %c0_256] : memref<128x512xf32, #tpu.memory_space<vmem>>, vector<128x512xf32>
    %cst_257 = arith.constant dense<0.000000e+00> : vector<8x512xf32>
    %574 = tpu.matmul %565, %573, %cst_257 {dimension_numbers = #tpu.dot_dimension_numbers<[1], [0], [0], [1], [0, 0, 1, 1], [], []>} : vector<8x128xf32>, vector<128x512xf32>, vector<8x512xf32> -> vector<8x512xf32>
    %575 = arith.addf %572, %574 : vector<8x512xf32>
    %576 = vector.extract_strided_slice %575 {offsets = [0, 0], sizes = [8, 128], strides = [1, 1]} : vector<8x512xf32> to vector<8x128xf32>
    %577 = arith.negf %576 : vector<8x128xf32>
    %578 = math.exp %577 : vector<8x128xf32>
    %cst_258 = arith.constant 1.000000e+00 : f32
    %579 = vector.broadcast %cst_258 : f32 to vector<8x128xf32>
    %580 = arith.addf %579, %578 : vector<8x128xf32>
    %581 = arith.divf %579, %580 : vector<8x128xf32>
    %582 = vector.extract_strided_slice %575 {offsets = [0, 128], sizes = [8, 128], strides = [1, 1]} : vector<8x512xf32> to vector<8x128xf32>
    %583 = arith.negf %582 : vector<8x128xf32>
    %584 = math.exp %583 : vector<8x128xf32>
    %cst_259 = arith.constant 1.000000e+00 : f32
    %585 = vector.broadcast %cst_259 : f32 to vector<8x128xf32>
    %586 = arith.addf %585, %584 : vector<8x128xf32>
    %587 = arith.divf %585, %586 : vector<8x128xf32>
    %588 = vector.extract_strided_slice %575 {offsets = [0, 256], sizes = [8, 128], strides = [1, 1]} : vector<8x512xf32> to vector<8x128xf32>
    %589 = math.tanh %588 : vector<8x128xf32>
    %590 = vector.extract_strided_slice %575 {offsets = [0, 384], sizes = [8, 128], strides = [1, 1]} : vector<8x512xf32> to vector<8x128xf32>
    %591 = arith.negf %590 : vector<8x128xf32>
    %592 = math.exp %591 : vector<8x128xf32>
    %cst_260 = arith.constant 1.000000e+00 : f32
    %593 = vector.broadcast %cst_260 : f32 to vector<8x128xf32>
    %594 = arith.addf %593, %592 : vector<8x128xf32>
    %595 = arith.divf %593, %594 : vector<8x128xf32>
    %596 = arith.mulf %587, %563 : vector<8x128xf32>
    %597 = arith.mulf %581, %589 : vector<8x128xf32>
    %598 = arith.addf %596, %597 : vector<8x128xf32>
    %599 = math.tanh %598 : vector<8x128xf32>
    %600 = arith.mulf %595, %599 : vector<8x128xf32>
    %601 = arith.index_cast %c1_i32_252 : i32 to index
    %c0_261 = arith.constant 0 : index
    %c0_262 = arith.constant 0 : index
    %602 = vector.load %arg19[%601, %c0_261, %c0_262] : memref<8x8x128xf32, #tpu.memory_space<vmem>>, vector<1x8x128xf32>
    %603 = vector.shape_cast %602 : vector<1x8x128xf32> to vector<8x128xf32>
    %604 = vector.shape_cast %600 : vector<8x128xf32> to vector<1x8x128xf32>
    tpu.vector_store %arg19[%601, %c0_261, %c0_262], %604 {strides = array<i32>} : memref<8x8x128xf32, #tpu.memory_space<vmem>>, vector<1x8x128xf32>,
    %c2_i32_263 = arith.constant 2 : i32
    %605 = arith.index_cast %c2_i32_263 : i32 to index
    %c0_264 = arith.constant 0 : index
    %c0_265 = arith.constant 0 : index
    %606 = vector.load %arg17[%605, %c0_264, %c0_265] : memref<8x8x512xf32, #tpu.memory_space<vmem>>, vector<1x8x512xf32>
    %607 = vector.shape_cast %606 : vector<1x8x512xf32> to vector<8x512xf32>
    %c0_266 = arith.constant 0 : index
    %c0_267 = arith.constant 0 : index
    %608 = vector.load %arg6[%c0_266, %c0_267] : memref<128x512xf32, #tpu.memory_space<vmem>>, vector<128x512xf32>
    %cst_268 = arith.constant dense<0.000000e+00> : vector<8x512xf32>
    %609 = tpu.matmul %600, %608, %cst_268 {dimension_numbers = #tpu.dot_dimension_numbers<[1], [0], [0], [1], [0, 0, 1, 1], [], []>} : vector<8x128xf32>, vector<128x512xf32>, vector<8x512xf32> -> vector<8x512xf32>
    %610 = arith.addf %607, %609 : vector<8x512xf32>
    %611 = vector.extract_strided_slice %610 {offsets = [0, 0], sizes = [8, 128], strides = [1, 1]} : vector<8x512xf32> to vector<8x128xf32>
    %612 = arith.negf %611 : vector<8x128xf32>
    %613 = math.exp %612 : vector<8x128xf32>
    %cst_269 = arith.constant 1.000000e+00 : f32
    %614 = vector.broadcast %cst_269 : f32 to vector<8x128xf32>
    %615 = arith.addf %614, %613 : vector<8x128xf32>
    %616 = arith.divf %614, %615 : vector<8x128xf32>
    %617 = vector.extract_strided_slice %610 {offsets = [0, 128], sizes = [8, 128], strides = [1, 1]} : vector<8x512xf32> to vector<8x128xf32>
    %618 = arith.negf %617 : vector<8x128xf32>
    %619 = math.exp %618 : vector<8x128xf32>
    %cst_270 = arith.constant 1.000000e+00 : f32
    %620 = vector.broadcast %cst_270 : f32 to vector<8x128xf32>
    %621 = arith.addf %620, %619 : vector<8x128xf32>
    %622 = arith.divf %620, %621 : vector<8x128xf32>
    %623 = vector.extract_strided_slice %610 {offsets = [0, 256], sizes = [8, 128], strides = [1, 1]} : vector<8x512xf32> to vector<8x128xf32>
    %624 = math.tanh %623 : vector<8x128xf32>
    %625 = vector.extract_strided_slice %610 {offsets = [0, 384], sizes = [8, 128], strides = [1, 1]} : vector<8x512xf32> to vector<8x128xf32>
    %626 = arith.negf %625 : vector<8x128xf32>
    %627 = math.exp %626 : vector<8x128xf32>
    %cst_271 = arith.constant 1.000000e+00 : f32
    %628 = vector.broadcast %cst_271 : f32 to vector<8x128xf32>
    %629 = arith.addf %628, %627 : vector<8x128xf32>
    %630 = arith.divf %628, %629 : vector<8x128xf32>
    %631 = arith.mulf %622, %598 : vector<8x128xf32>
    %632 = arith.mulf %616, %624 : vector<8x128xf32>
    %633 = arith.addf %631, %632 : vector<8x128xf32>
    %634 = math.tanh %633 : vector<8x128xf32>
    %635 = arith.mulf %630, %634 : vector<8x128xf32>
    %636 = arith.index_cast %c2_i32_263 : i32 to index
    %c0_272 = arith.constant 0 : index
    %c0_273 = arith.constant 0 : index
    %637 = vector.load %arg19[%636, %c0_272, %c0_273] : memref<8x8x128xf32, #tpu.memory_space<vmem>>, vector<1x8x128xf32>
    %638 = vector.shape_cast %637 : vector<1x8x128xf32> to vector<8x128xf32>
    %639 = vector.shape_cast %635 : vector<8x128xf32> to vector<1x8x128xf32>
    tpu.vector_store %arg19[%636, %c0_272, %c0_273], %639 {strides = array<i32>} : memref<8x8x128xf32, #tpu.memory_space<vmem>>, vector<1x8x128xf32>,
    %c3_i32_274 = arith.constant 3 : i32
    %640 = arith.index_cast %c3_i32_274 : i32 to index
    %c0_275 = arith.constant 0 : index
    %c0_276 = arith.constant 0 : index
    %641 = vector.load %arg17[%640, %c0_275, %c0_276] : memref<8x8x512xf32, #tpu.memory_space<vmem>>, vector<1x8x512xf32>
    %642 = vector.shape_cast %641 : vector<1x8x512xf32> to vector<8x512xf32>
    %c0_277 = arith.constant 0 : index
    %c0_278 = arith.constant 0 : index
    %643 = vector.load %arg6[%c0_277, %c0_278] : memref<128x512xf32, #tpu.memory_space<vmem>>, vector<128x512xf32>
    %cst_279 = arith.constant dense<0.000000e+00> : vector<8x512xf32>
    %644 = tpu.matmul %635, %643, %cst_279 {dimension_numbers = #tpu.dot_dimension_numbers<[1], [0], [0], [1], [0, 0, 1, 1], [], []>} : vector<8x128xf32>, vector<128x512xf32>, vector<8x512xf32> -> vector<8x512xf32>
    %645 = arith.addf %642, %644 : vector<8x512xf32>
    %646 = vector.extract_strided_slice %645 {offsets = [0, 0], sizes = [8, 128], strides = [1, 1]} : vector<8x512xf32> to vector<8x128xf32>
    %647 = arith.negf %646 : vector<8x128xf32>
    %648 = math.exp %647 : vector<8x128xf32>
    %cst_280 = arith.constant 1.000000e+00 : f32
    %649 = vector.broadcast %cst_280 : f32 to vector<8x128xf32>
    %650 = arith.addf %649, %648 : vector<8x128xf32>
    %651 = arith.divf %649, %650 : vector<8x128xf32>
    %652 = vector.extract_strided_slice %645 {offsets = [0, 128], sizes = [8, 128], strides = [1, 1]} : vector<8x512xf32> to vector<8x128xf32>
    %653 = arith.negf %652 : vector<8x128xf32>
    %654 = math.exp %653 : vector<8x128xf32>
    %cst_281 = arith.constant 1.000000e+00 : f32
    %655 = vector.broadcast %cst_281 : f32 to vector<8x128xf32>
    %656 = arith.addf %655, %654 : vector<8x128xf32>
    %657 = arith.divf %655, %656 : vector<8x128xf32>
    %658 = vector.extract_strided_slice %645 {offsets = [0, 256], sizes = [8, 128], strides = [1, 1]} : vector<8x512xf32> to vector<8x128xf32>
    %659 = math.tanh %658 : vector<8x128xf32>
    %660 = vector.extract_strided_slice %645 {offsets = [0, 384], sizes = [8, 128], strides = [1, 1]} : vector<8x512xf32> to vector<8x128xf32>
    %661 = arith.negf %660 : vector<8x128xf32>
    %662 = math.exp %661 : vector<8x128xf32>
    %cst_282 = arith.constant 1.000000e+00 : f32
    %663 = vector.broadcast %cst_282 : f32 to vector<8x128xf32>
    %664 = arith.addf %663, %662 : vector<8x128xf32>
    %665 = arith.divf %663, %664 : vector<8x128xf32>
    %666 = arith.mulf %657, %633 : vector<8x128xf32>
    %667 = arith.mulf %651, %659 : vector<8x128xf32>
    %668 = arith.addf %666, %667 : vector<8x128xf32>
    %669 = math.tanh %668 : vector<8x128xf32>
    %670 = arith.mulf %665, %669 : vector<8x128xf32>
    %671 = arith.index_cast %c3_i32_274 : i32 to index
    %c0_283 = arith.constant 0 : index
    %c0_284 = arith.constant 0 : index
    %672 = vector.load %arg19[%671, %c0_283, %c0_284] : memref<8x8x128xf32, #tpu.memory_space<vmem>>, vector<1x8x128xf32>
    %673 = vector.shape_cast %672 : vector<1x8x128xf32> to vector<8x128xf32>
    %674 = vector.shape_cast %670 : vector<8x128xf32> to vector<1x8x128xf32>
    tpu.vector_store %arg19[%671, %c0_283, %c0_284], %674 {strides = array<i32>} : memref<8x8x128xf32, #tpu.memory_space<vmem>>, vector<1x8x128xf32>,
    %c4_i32_285 = arith.constant 4 : i32
    %675 = arith.index_cast %c4_i32_285 : i32 to index
    %c0_286 = arith.constant 0 : index
    %c0_287 = arith.constant 0 : index
    %676 = vector.load %arg17[%675, %c0_286, %c0_287] : memref<8x8x512xf32, #tpu.memory_space<vmem>>, vector<1x8x512xf32>
    %677 = vector.shape_cast %676 : vector<1x8x512xf32> to vector<8x512xf32>
    %c0_288 = arith.constant 0 : index
    %c0_289 = arith.constant 0 : index
    %678 = vector.load %arg6[%c0_288, %c0_289] : memref<128x512xf32, #tpu.memory_space<vmem>>, vector<128x512xf32>
    %cst_290 = arith.constant dense<0.000000e+00> : vector<8x512xf32>
    %679 = tpu.matmul %670, %678, %cst_290 {dimension_numbers = #tpu.dot_dimension_numbers<[1], [0], [0], [1], [0, 0, 1, 1], [], []>} : vector<8x128xf32>, vector<128x512xf32>, vector<8x512xf32> -> vector<8x512xf32>
    %680 = arith.addf %677, %679 : vector<8x512xf32>
    %681 = vector.extract_strided_slice %680 {offsets = [0, 0], sizes = [8, 128], strides = [1, 1]} : vector<8x512xf32> to vector<8x128xf32>
    %682 = arith.negf %681 : vector<8x128xf32>
    %683 = math.exp %682 : vector<8x128xf32>
    %cst_291 = arith.constant 1.000000e+00 : f32
    %684 = vector.broadcast %cst_291 : f32 to vector<8x128xf32>
    %685 = arith.addf %684, %683 : vector<8x128xf32>
    %686 = arith.divf %684, %685 : vector<8x128xf32>
    %687 = vector.extract_strided_slice %680 {offsets = [0, 128], sizes = [8, 128], strides = [1, 1]} : vector<8x512xf32> to vector<8x128xf32>
    %688 = arith.negf %687 : vector<8x128xf32>
    %689 = math.exp %688 : vector<8x128xf32>
    %cst_292 = arith.constant 1.000000e+00 : f32
    %690 = vector.broadcast %cst_292 : f32 to vector<8x128xf32>
    %691 = arith.addf %690, %689 : vector<8x128xf32>
    %692 = arith.divf %690, %691 : vector<8x128xf32>
    %693 = vector.extract_strided_slice %680 {offsets = [0, 256], sizes = [8, 128], strides = [1, 1]} : vector<8x512xf32> to vector<8x128xf32>
    %694 = math.tanh %693 : vector<8x128xf32>
    %695 = vector.extract_strided_slice %680 {offsets = [0, 384], sizes = [8, 128], strides = [1, 1]} : vector<8x512xf32> to vector<8x128xf32>
    %696 = arith.negf %695 : vector<8x128xf32>
    %697 = math.exp %696 : vector<8x128xf32>
    %cst_293 = arith.constant 1.000000e+00 : f32
    %698 = vector.broadcast %cst_293 : f32 to vector<8x128xf32>
    %699 = arith.addf %698, %697 : vector<8x128xf32>
    %700 = arith.divf %698, %699 : vector<8x128xf32>
    %701 = arith.mulf %692, %668 : vector<8x128xf32>
    %702 = arith.mulf %686, %694 : vector<8x128xf32>
    %703 = arith.addf %701, %702 : vector<8x128xf32>
    %704 = math.tanh %703 : vector<8x128xf32>
    %705 = arith.mulf %700, %704 : vector<8x128xf32>
    %706 = arith.index_cast %c4_i32_285 : i32 to index
    %c0_294 = arith.constant 0 : index
    %c0_295 = arith.constant 0 : index
    %707 = vector.load %arg19[%706, %c0_294, %c0_295] : memref<8x8x128xf32, #tpu.memory_space<vmem>>, vector<1x8x128xf32>
    %708 = vector.shape_cast %707 : vector<1x8x128xf32> to vector<8x128xf32>
    %709 = vector.shape_cast %705 : vector<8x128xf32> to vector<1x8x128xf32>
    tpu.vector_store %arg19[%706, %c0_294, %c0_295], %709 {strides = array<i32>} : memref<8x8x128xf32, #tpu.memory_space<vmem>>, vector<1x8x128xf32>,
    %c5_i32_296 = arith.constant 5 : i32
    %710 = arith.index_cast %c5_i32_296 : i32 to index
    %c0_297 = arith.constant 0 : index
    %c0_298 = arith.constant 0 : index
    %711 = vector.load %arg17[%710, %c0_297, %c0_298] : memref<8x8x512xf32, #tpu.memory_space<vmem>>, vector<1x8x512xf32>
    %712 = vector.shape_cast %711 : vector<1x8x512xf32> to vector<8x512xf32>
    %c0_299 = arith.constant 0 : index
    %c0_300 = arith.constant 0 : index
    %713 = vector.load %arg6[%c0_299, %c0_300] : memref<128x512xf32, #tpu.memory_space<vmem>>, vector<128x512xf32>
    %cst_301 = arith.constant dense<0.000000e+00> : vector<8x512xf32>
    %714 = tpu.matmul %705, %713, %cst_301 {dimension_numbers = #tpu.dot_dimension_numbers<[1], [0], [0], [1], [0, 0, 1, 1], [], []>} : vector<8x128xf32>, vector<128x512xf32>, vector<8x512xf32> -> vector<8x512xf32>
    %715 = arith.addf %712, %714 : vector<8x512xf32>
    %716 = vector.extract_strided_slice %715 {offsets = [0, 0], sizes = [8, 128], strides = [1, 1]} : vector<8x512xf32> to vector<8x128xf32>
    %717 = arith.negf %716 : vector<8x128xf32>
    %718 = math.exp %717 : vector<8x128xf32>
    %cst_302 = arith.constant 1.000000e+00 : f32
    %719 = vector.broadcast %cst_302 : f32 to vector<8x128xf32>
    %720 = arith.addf %719, %718 : vector<8x128xf32>
    %721 = arith.divf %719, %720 : vector<8x128xf32>
    %722 = vector.extract_strided_slice %715 {offsets = [0, 128], sizes = [8, 128], strides = [1, 1]} : vector<8x512xf32> to vector<8x128xf32>
    %723 = arith.negf %722 : vector<8x128xf32>
    %724 = math.exp %723 : vector<8x128xf32>
    %cst_303 = arith.constant 1.000000e+00 : f32
    %725 = vector.broadcast %cst_303 : f32 to vector<8x128xf32>
    %726 = arith.addf %725, %724 : vector<8x128xf32>
    %727 = arith.divf %725, %726 : vector<8x128xf32>
    %728 = vector.extract_strided_slice %715 {offsets = [0, 256], sizes = [8, 128], strides = [1, 1]} : vector<8x512xf32> to vector<8x128xf32>
    %729 = math.tanh %728 : vector<8x128xf32>
    %730 = vector.extract_strided_slice %715 {offsets = [0, 384], sizes = [8, 128], strides = [1, 1]} : vector<8x512xf32> to vector<8x128xf32>
    %731 = arith.negf %730 : vector<8x128xf32>
    %732 = math.exp %731 : vector<8x128xf32>
    %cst_304 = arith.constant 1.000000e+00 : f32
    %733 = vector.broadcast %cst_304 : f32 to vector<8x128xf32>
    %734 = arith.addf %733, %732 : vector<8x128xf32>
    %735 = arith.divf %733, %734 : vector<8x128xf32>
    %736 = arith.mulf %727, %703 : vector<8x128xf32>
    %737 = arith.mulf %721, %729 : vector<8x128xf32>
    %738 = arith.addf %736, %737 : vector<8x128xf32>
    %739 = math.tanh %738 : vector<8x128xf32>
    %740 = arith.mulf %735, %739 : vector<8x128xf32>
    %741 = arith.index_cast %c5_i32_296 : i32 to index
    %c0_305 = arith.constant 0 : index
    %c0_306 = arith.constant 0 : index
    %742 = vector.load %arg19[%741, %c0_305, %c0_306] : memref<8x8x128xf32, #tpu.memory_space<vmem>>, vector<1x8x128xf32>
    %743 = vector.shape_cast %742 : vector<1x8x128xf32> to vector<8x128xf32>
    %744 = vector.shape_cast %740 : vector<8x128xf32> to vector<1x8x128xf32>
    tpu.vector_store %arg19[%741, %c0_305, %c0_306], %744 {strides = array<i32>} : memref<8x8x128xf32, #tpu.memory_space<vmem>>, vector<1x8x128xf32>,
    %c6_i32_307 = arith.constant 6 : i32
    %745 = arith.index_cast %c6_i32_307 : i32 to index
    %c0_308 = arith.constant 0 : index
    %c0_309 = arith.constant 0 : index
    %746 = vector.load %arg17[%745, %c0_308, %c0_309] : memref<8x8x512xf32, #tpu.memory_space<vmem>>, vector<1x8x512xf32>
    %747 = vector.shape_cast %746 : vector<1x8x512xf32> to vector<8x512xf32>
    %c0_310 = arith.constant 0 : index
    %c0_311 = arith.constant 0 : index
    %748 = vector.load %arg6[%c0_310, %c0_311] : memref<128x512xf32, #tpu.memory_space<vmem>>, vector<128x512xf32>
    %cst_312 = arith.constant dense<0.000000e+00> : vector<8x512xf32>
    %749 = tpu.matmul %740, %748, %cst_312 {dimension_numbers = #tpu.dot_dimension_numbers<[1], [0], [0], [1], [0, 0, 1, 1], [], []>} : vector<8x128xf32>, vector<128x512xf32>, vector<8x512xf32> -> vector<8x512xf32>
    %750 = arith.addf %747, %749 : vector<8x512xf32>
    %751 = vector.extract_strided_slice %750 {offsets = [0, 0], sizes = [8, 128], strides = [1, 1]} : vector<8x512xf32> to vector<8x128xf32>
    %752 = arith.negf %751 : vector<8x128xf32>
    %753 = math.exp %752 : vector<8x128xf32>
    %cst_313 = arith.constant 1.000000e+00 : f32
    %754 = vector.broadcast %cst_313 : f32 to vector<8x128xf32>
    %755 = arith.addf %754, %753 : vector<8x128xf32>
    %756 = arith.divf %754, %755 : vector<8x128xf32>
    %757 = vector.extract_strided_slice %750 {offsets = [0, 128], sizes = [8, 128], strides = [1, 1]} : vector<8x512xf32> to vector<8x128xf32>
    %758 = arith.negf %757 : vector<8x128xf32>
    %759 = math.exp %758 : vector<8x128xf32>
    %cst_314 = arith.constant 1.000000e+00 : f32
    %760 = vector.broadcast %cst_314 : f32 to vector<8x128xf32>
    %761 = arith.addf %760, %759 : vector<8x128xf32>
    %762 = arith.divf %760, %761 : vector<8x128xf32>
    %763 = vector.extract_strided_slice %750 {offsets = [0, 256], sizes = [8, 128], strides = [1, 1]} : vector<8x512xf32> to vector<8x128xf32>
    %764 = math.tanh %763 : vector<8x128xf32>
    %765 = vector.extract_strided_slice %750 {offsets = [0, 384], sizes = [8, 128], strides = [1, 1]} : vector<8x512xf32> to vector<8x128xf32>
    %766 = arith.negf %765 : vector<8x128xf32>
    %767 = math.exp %766 : vector<8x128xf32>
    %cst_315 = arith.constant 1.000000e+00 : f32
    %768 = vector.broadcast %cst_315 : f32 to vector<8x128xf32>
    %769 = arith.addf %768, %767 : vector<8x128xf32>
    %770 = arith.divf %768, %769 : vector<8x128xf32>
    %771 = arith.mulf %762, %738 : vector<8x128xf32>
    %772 = arith.mulf %756, %764 : vector<8x128xf32>
    %773 = arith.addf %771, %772 : vector<8x128xf32>
    %774 = math.tanh %773 : vector<8x128xf32>
    %775 = arith.mulf %770, %774 : vector<8x128xf32>
    %776 = arith.index_cast %c6_i32_307 : i32 to index
    %c0_316 = arith.constant 0 : index
    %c0_317 = arith.constant 0 : index
    %777 = vector.load %arg19[%776, %c0_316, %c0_317] : memref<8x8x128xf32, #tpu.memory_space<vmem>>, vector<1x8x128xf32>
    %778 = vector.shape_cast %777 : vector<1x8x128xf32> to vector<8x128xf32>
    %779 = vector.shape_cast %775 : vector<8x128xf32> to vector<1x8x128xf32>
    tpu.vector_store %arg19[%776, %c0_316, %c0_317], %779 {strides = array<i32>} : memref<8x8x128xf32, #tpu.memory_space<vmem>>, vector<1x8x128xf32>,
    %c7_i32_318 = arith.constant 7 : i32
    %780 = arith.index_cast %c7_i32_318 : i32 to index
    %c0_319 = arith.constant 0 : index
    %c0_320 = arith.constant 0 : index
    %781 = vector.load %arg17[%780, %c0_319, %c0_320] : memref<8x8x512xf32, #tpu.memory_space<vmem>>, vector<1x8x512xf32>
    %782 = vector.shape_cast %781 : vector<1x8x512xf32> to vector<8x512xf32>
    %c0_321 = arith.constant 0 : index
    %c0_322 = arith.constant 0 : index
    %783 = vector.load %arg6[%c0_321, %c0_322] : memref<128x512xf32, #tpu.memory_space<vmem>>, vector<128x512xf32>
    %cst_323 = arith.constant dense<0.000000e+00> : vector<8x512xf32>
    %784 = tpu.matmul %775, %783, %cst_323 {dimension_numbers = #tpu.dot_dimension_numbers<[1], [0], [0], [1], [0, 0, 1, 1], [], []>} : vector<8x128xf32>, vector<128x512xf32>, vector<8x512xf32> -> vector<8x512xf32>
    %785 = arith.addf %782, %784 : vector<8x512xf32>
    %786 = vector.extract_strided_slice %785 {offsets = [0, 0], sizes = [8, 128], strides = [1, 1]} : vector<8x512xf32> to vector<8x128xf32>
    %787 = arith.negf %786 : vector<8x128xf32>
    %788 = math.exp %787 : vector<8x128xf32>
    %cst_324 = arith.constant 1.000000e+00 : f32
    %789 = vector.broadcast %cst_324 : f32 to vector<8x128xf32>
    %790 = arith.addf %789, %788 : vector<8x128xf32>
    %791 = arith.divf %789, %790 : vector<8x128xf32>
    %792 = vector.extract_strided_slice %785 {offsets = [0, 128], sizes = [8, 128], strides = [1, 1]} : vector<8x512xf32> to vector<8x128xf32>
    %793 = arith.negf %792 : vector<8x128xf32>
    %794 = math.exp %793 : vector<8x128xf32>
    %cst_325 = arith.constant 1.000000e+00 : f32
    %795 = vector.broadcast %cst_325 : f32 to vector<8x128xf32>
    %796 = arith.addf %795, %794 : vector<8x128xf32>
    %797 = arith.divf %795, %796 : vector<8x128xf32>
    %798 = vector.extract_strided_slice %785 {offsets = [0, 256], sizes = [8, 128], strides = [1, 1]} : vector<8x512xf32> to vector<8x128xf32>
    %799 = math.tanh %798 : vector<8x128xf32>
    %800 = vector.extract_strided_slice %785 {offsets = [0, 384], sizes = [8, 128], strides = [1, 1]} : vector<8x512xf32> to vector<8x128xf32>
    %801 = arith.negf %800 : vector<8x128xf32>
    %802 = math.exp %801 : vector<8x128xf32>
    %cst_326 = arith.constant 1.000000e+00 : f32
    %803 = vector.broadcast %cst_326 : f32 to vector<8x128xf32>
    %804 = arith.addf %803, %802 : vector<8x128xf32>
    %805 = arith.divf %803, %804 : vector<8x128xf32>
    %806 = arith.mulf %797, %773 : vector<8x128xf32>
    %807 = arith.mulf %791, %799 : vector<8x128xf32>
    %808 = arith.addf %806, %807 : vector<8x128xf32>
    %809 = math.tanh %808 : vector<8x128xf32>
    %810 = arith.mulf %805, %809 : vector<8x128xf32>
    %811 = arith.index_cast %c7_i32_318 : i32 to index
    %c0_327 = arith.constant 0 : index
    %c0_328 = arith.constant 0 : index
    %812 = vector.load %arg19[%811, %c0_327, %c0_328] : memref<8x8x128xf32, #tpu.memory_space<vmem>>, vector<1x8x128xf32>
    %813 = vector.shape_cast %812 : vector<1x8x128xf32> to vector<8x128xf32>
    %814 = vector.shape_cast %810 : vector<8x128xf32> to vector<1x8x128xf32>
    tpu.vector_store %arg19[%811, %c0_327, %c0_328], %814 {strides = array<i32>} : memref<8x8x128xf32, #tpu.memory_space<vmem>>, vector<1x8x128xf32>,
    %c8_i32_329 = arith.constant 8 : i32
    %c7 = arith.constant 7 : index
    %c0_330 = arith.constant 0 : index
    %c0_331 = arith.constant 0 : index
    %815 = vector.load %arg19[%c7, %c0_330, %c0_331] : memref<8x8x128xf32, #tpu.memory_space<vmem>>, vector<1x8x128xf32>
    %816 = vector.shape_cast %815 : vector<1x8x128xf32> to vector<8x128xf32>
    %c0_332 = arith.constant 0 : index
    %c0_333 = arith.constant 0 : index
    %817 = vector.load %arg10[%c0_332, %c0_333] : memref<128x128xf32, #tpu.memory_space<vmem>>, vector<128x128xf32>
    %cst_334 = arith.constant dense<0.000000e+00> : vector<8x128xf32>
    %818 = tpu.matmul %816, %817, %cst_334 {dimension_numbers = #tpu.dot_dimension_numbers<[1], [0], [0], [1], [0, 0, 1, 1], [], []>} : vector<8x128xf32>, vector<128x128xf32>, vector<8x128xf32> -> vector<8x128xf32>
    %c0_335 = arith.constant 0 : index
    %c0_336 = arith.constant 0 : index
    %c0_337 = arith.constant 0 : index
    %819 = vector.load %arg19[%c0_335, %c0_336, %c0_337] : memref<8x8x128xf32, #tpu.memory_space<vmem>>, vector<1x8x128xf32>
    %820 = vector.shape_cast %819 : vector<1x8x128xf32> to vector<8x128xf32>
    %c0_338 = arith.constant 0 : index
    %c0_339 = arith.constant 0 : index
    %821 = vector.load %arg11[%c0_338, %c0_339] : memref<128x128xf32, #tpu.memory_space<vmem>>, vector<128x128xf32>
    %cst_340 = arith.constant dense<0.000000e+00> : vector<8x128xf32>
    %822 = tpu.matmul %820, %821, %cst_340 {dimension_numbers = #tpu.dot_dimension_numbers<[1], [0], [0], [1], [0, 0, 1, 1], [], []>} : vector<8x128xf32>, vector<128x128xf32>, vector<8x128xf32> -> vector<8x128xf32>
    %823 = arith.addf %818, %822 : vector<8x128xf32>
    %c0_341 = arith.constant 0 : index
    %c0_342 = arith.constant 0 : index
    %824 = vector.load %arg12[%c0_341, %c0_342] : memref<1x128xf32, #tpu.memory_space<vmem>>, vector<1x128xf32>
    %825 = vector.broadcast %824 : vector<1x128xf32> to vector<8x128xf32>
    %826 = arith.addf %823, %825 : vector<8x128xf32>
    %c0_343 = arith.constant 0 : index
    %c0_344 = arith.constant 0 : index
    %827 = vector.load %arg13[%c0_343, %c0_344] : memref<8x128xf32, #tpu.memory_space<vmem>>, vector<8x128xf32>
    tpu.vector_store %arg13[%c0_343, %c0_344], %826 {strides = array<i32>} : memref<8x128xf32, #tpu.memory_space<vmem>>, vector<8x128xf32>,
    %cst_345 = arith.constant dense<0xFF800000> : vector<8xf32>
    %828 = vector.multi_reduction <maximumf>, %826, %cst_345 [1] : vector<8x128xf32> to vector<8xf32>
    %829 = vector.shape_cast %828 : vector<8xf32> to vector<8x1xf32>
    %830 = vector.broadcast %829 : vector<8x1xf32> to vector<8x128xf32>
    %831 = arith.subf %826, %830 : vector<8x128xf32>
    %832 = math.exp %831 : vector<8x128xf32>
    %cst_346 = arith.constant dense<0.000000e+00> : vector<8xf32>
    %833 = vector.multi_reduction <add>, %832, %cst_346 [1] : vector<8x128xf32> to vector<8xf32>
    %834 = vector.shape_cast %833 : vector<8xf32> to vector<8x1xf32>
    %835 = vector.broadcast %834 : vector<8x1xf32> to vector<8x128xf32>
    %836 = arith.divf %832, %835 : vector<8x128xf32>
    %c0_347 = arith.constant 0 : index
    %c0_348 = arith.constant 0 : index
    %837 = vector.load %arg14[%c0_347, %c0_348] : memref<8x128xf32, #tpu.memory_space<vmem>>, vector<8x128xf32>
    tpu.vector_store %arg14[%c0_347, %c0_348], %836 {strides = array<i32>} : memref<8x128xf32, #tpu.memory_space<vmem>>, vector<8x128xf32>,
    return
  }
  func.func @transform_0(%arg0: i32) -> (i32, i32, i32) {
    %c0_i32 = arith.constant 0 : i32
    %c0_i32_0 = arith.constant 0 : i32
    %c0_i32_1 = arith.constant 0 : i32
    return %c0_i32, %arg0, %c0_i32_0 : i32, i32, i32
  }
  func.func @transform_1(%arg0: i32) -> (i32, i32) {
    %c0_i32 = arith.constant 0 : i32
    %c0_i32_0 = arith.constant 0 : i32
    %c0_i32_1 = arith.constant 0 : i32
    return %c0_i32, %c0_i32_0 : i32, i32
  }
  func.func @transform_2(%arg0: i32) -> (i32, i32) {
    %c0_i32 = arith.constant 0 : i32
    %c0_i32_0 = arith.constant 0 : i32
    %c0_i32_1 = arith.constant 0 : i32
    return %c0_i32, %c0_i32_0 : i32, i32
  }
  func.func @transform_3(%arg0: i32) -> (i32, i32) {
    %c0_i32 = arith.constant 0 : i32
    %c0_i32_0 = arith.constant 0 : i32
    %c0_i32_1 = arith.constant 0 : i32
    return %c0_i32, %c0_i32_0 : i32, i32
  }
  func.func @transform_4(%arg0: i32) -> (i32, i32) {
    %c0_i32 = arith.constant 0 : i32
    %c0_i32_0 = arith.constant 0 : i32
    %c0_i32_1 = arith.constant 0 : i32
    return %c0_i32, %c0_i32_0 : i32, i32
  }
  func.func @transform_5(%arg0: i32) -> (i32, i32) {
    %c0_i32 = arith.constant 0 : i32
    %c0_i32_0 = arith.constant 0 : i32
    %c0_i32_1 = arith.constant 0 : i32
    return %c0_i32, %c0_i32_0 : i32, i32
  }
  func.func @transform_6(%arg0: i32) -> (i32, i32) {
    %c0_i32 = arith.constant 0 : i32
    %c0_i32_0 = arith.constant 0 : i32
    %c0_i32_1 = arith.constant 0 : i32
    return %c0_i32, %c0_i32_0 : i32, i32
  }
  func.func @transform_7(%arg0: i32) -> (i32, i32, i32) {
    %c0_i32 = arith.constant 0 : i32
    %c0_i32_0 = arith.constant 0 : i32
    %c0_i32_1 = arith.constant 0 : i32
    return %c0_i32, %arg0, %c0_i32_0 : i32, i32, i32
  }
  func.func @transform_8(%arg0: i32) -> (i32, i32, i32) {
    %c0_i32 = arith.constant 0 : i32
    %c0_i32_0 = arith.constant 0 : i32
    %c0_i32_1 = arith.constant 0 : i32
    return %c0_i32, %arg0, %c0_i32_0 : i32, i32, i32
  }
  func.func @transform_9(%arg0: i32) -> (i32, i32) {
    %c0_i32 = arith.constant 0 : i32
    %c0_i32_0 = arith.constant 0 : i32
    %c0_i32_1 = arith.constant 0 : i32
    return %c0_i32, %c0_i32_0 : i32, i32
  }
  func.func @transform_10(%arg0: i32) -> (i32, i32) {
    %c0_i32 = arith.constant 0 : i32
    %c0_i32_0 = arith.constant 0 : i32
    %c0_i32_1 = arith.constant 0 : i32
    return %c0_i32, %c0_i32_0 : i32, i32
  }
  func.func @transform_11(%arg0: i32) -> (i32, i32) {
    %c0_i32 = arith.constant 0 : i32
    %c0_i32_0 = arith.constant 0 : i32
    %c0_i32_1 = arith.constant 0 : i32
    return %c0_i32, %c0_i32_0 : i32, i32
  }
  func.func @transform_12(%arg0: i32) -> (i32, i32) {
    %c0_i32 = arith.constant 0 : i32
    %c0_i32_0 = arith.constant 0 : i32
    return %arg0, %c0_i32 : i32, i32
  }
  func.func @transform_13(%arg0: i32) -> (i32, i32) {
    %c0_i32 = arith.constant 0 : i32
    %c0_i32_0 = arith.constant 0 : i32
    return %arg0, %c0_i32 : i32, i32
  }
}

</mosaic_0001>

<llo_original>
// kernel: _forward.1
$region0: #{_forward.1}
  #allocation0 [shape = 'u32[]', space=smem, size = 0x4, offset = 0x4, fixed_abs, tag = 'smem constant byte address 0x4 - core index']
  #allocation1 [shape = 'u32[144,128]{1,0:T(1,128)}', space=vmem, size = 0x12000, scoped, tag = 'internal scratch']
  #allocation2 [shape = 'f32[8,8,512]{2,1,0:T(8,128)}', space=vmem, size = 0x20000, scoped, tag = 'scratch operand']
  #allocation3 [shape = 'f32[8,8,1024]{2,1,0:T(8,128)}', space=vmem, size = 0x40000, scoped, tag = 'scratch operand']
  #allocation4 [shape = 'f32[8,8,512]{2,1,0:T(8,128)}', space=vmem, size = 0x20000, scoped, tag = 'scratch operand']
  #allocation5 [shape = 'f32[8,8,128]{2,1,0:T(8,128)}', space=vmem, size = 0x8000, scoped, tag = 'scratch operand']
  #allocation6 [shape = 'f32[8,8,128]{2,1,0:T(8,128)}', space=vmem, size = 0x8000, scoped, tag = 'scratch operand']
  %s0 = inlined_call_operand.vmem [shape: f32[8,16,32], index: 0, kind: input, shape index: {}]
  %s1 = inlined_call_operand.vmem [shape: f32[32,512], index: 1, kind: input, shape index: {}]
  %s2 = inlined_call_operand.vmem [shape: f32[128,512], index: 2, kind: input, shape index: {}]
  %s3 = inlined_call_operand.vmem [shape: f32[1,512], index: 3, kind: input, shape index: {}]
  %s4 = inlined_call_operand.vmem [shape: f32[128,1024], index: 4, kind: input, shape index: {}]
  %s5 = inlined_call_operand.hbm [shape: f32[128,512], index: 5, kind: input, shape index: {}]
  %s6 = inlined_call_operand.vmem [shape: f32[1,1024], index: 6, kind: input, shape index: {}]
  %s7 = inlined_call_operand.vmem [shape: f32[2,16,128], index: 7, kind: input, shape index: {}]
  %s8 = inlined_call_operand.vmem [shape: f32[2,16,128], index: 8, kind: input, shape index: {}]
  %s9 = inlined_call_operand.hbm [shape: f32[128,128], index: 9, kind: input, shape index: {}]
  %s10 = inlined_call_operand.hbm [shape: f32[128,128], index: 10, kind: input, shape index: {}]
  %s11 = inlined_call_operand.vmem [shape: f32[1,128], index: 11, kind: input, shape index: {}]
  %s12 = inlined_call_operand.vmem [shape: f32[16,128], index: 12, kind: output, shape index: {0}]
  %s13 = inlined_call_operand.vmem [shape: f32[16,128], index: 13, kind: output, shape index: {1}]
  %14 = xla_tuple %s12, %s13
  %s15 = sld [smem:[#allocation0]]
  $region215: #{_forward.1} parent=0
    _
  %s17 = ssub.s32 1, %s15
  %s18 = scalar_select 0, %s17, %s15
  $region1: #{_forward.1} parent=0
    #allocation7 [shape = 'u8[65536]{0}', space=vmem, size = 0x10000, scoped, tag = 'input window, operand 0']
    #allocation8 [shape = 'u8[262144]{0}', space=vmem, size = 0x40000, scoped, tag = 'input window, operand 5, single buffered']
    #allocation9 [shape = 's32[2]{0}', space=sflag, size = 0x8, scoped, tag = 'scoped memory for _forward.1']
    #allocation10 [shape = 'u8[16384]{0}', space=vmem, size = 0x4000, scoped, tag = 'input window, operand 7']
    #allocation11 [shape = 'u8[16384]{0}', space=vmem, size = 0x4000, scoped, tag = 'input window, operand 8']
    #allocation12 [shape = 'u8[65536]{0}', space=vmem, size = 0x10000, scoped, tag = 'input window, operand 9, single buffered']
    #allocation13 [shape = 's32[1]{0}', space=sflag, size = 0x4, scoped, tag = 'scoped memory for _forward.1']
    #allocation14 [shape = 'u8[65536]{0}', space=vmem, size = 0x10000, scoped, tag = 'input window, operand 10, single buffered']
    %19 = vsyncpa [#allocation9], 0
    %20 = vsyncpa [#allocation13], 0
    loop: start=0, step=1, limit=4
    $region2: #{_forward.1} parent=1 // loop_pre_header
      _
    $region3: #{_forward.1} parent=1 // loop_header
      %s22 = sphi 0, %s26
      %p23 = scmp.ge.s32.totalorder %s22, 4
      %s32 = sphi 0, %s34
      %s35 = sphi 0, %s32
      %s36 = sphi 0, %s35
      %s52 = sphi 0, %s36
      %s56 = sphi 0, %s56
      %s58 = sphi 0, %s56
      %s59 = sphi 0, %s58
      %s73 = sphi 0, %s59
      %s77 = sphi 0, %s77
      %s79 = sphi 0, %s77
      %s80 = sphi 0, %s79
      %s94 = sphi 0, %s80
      %s98 = sphi 0, %s98
      %s100 = sphi 0, %s98
      %s101 = sphi 0, %s100
      %s115 = sphi 0, %s101
      %s119 = sphi 0, %s119
      %s121 = sphi 0, %s119
      %s122 = sphi 0, %s121
      %s136 = sphi 0, %s122
      %s140 = sphi 0, %s140
      %s142 = sphi 0, %s140
      %s143 = sphi 0, %s142
      %s157 = sphi 0, %s143
      %s161 = sphi 0, %s161
      %s163 = sphi 0, %s161
      %s164 = sphi 0, %s163
      %s178 = sphi 0, %s164
      %s184 = sphi 0, %s186
      %s187 = sphi 0, %s184
      %s188 = sphi 0, %s187
      %s204 = sphi 0, %s188
      %s210 = sphi 0, %s212
      %s213 = sphi 0, %s210
      %s214 = sphi 0, %s213
      %s230 = sphi 0, %s214
      %s234 = sphi 0, %s234
      %s236 = sphi 0, %s234
      %s237 = sphi 0, %s236
      %s251 = sphi 0, %s237
      %s255 = sphi 0, %s255
      %s257 = sphi 0, %s255
      %s258 = sphi 0, %s257
      %s272 = sphi 0, %s258
      %s276 = sphi 0, %s276
      %s278 = sphi 0, %s276
      %s279 = sphi 0, %s278
      %s293 = sphi 0, %s279
      %s299 = sphi 0, %s301
      %s302 = sphi 0, %s299
      %s303 = sphi 0, %s302
      %s319 = sphi 0, %s303
      %s325 = sphi 0, %s327
      %s328 = sphi 0, %s325
      %s329 = sphi 0, %s328
      %s345 = sphi 0, %s329
    $region4: #{_forward.1} parent=1 // loop_header_branch
      %25 = sbr.rel (%p23) target = $region8
    $region5: #{_forward.1} parent=1 // loop_body
      %s27 = ssub.s32 %s22, 1
      %s28 = ssub.s32 %s22, 2
      %s29 = sadd.s32 %s22, 1
      %s30 = ssub.s32 %s22, %s29
      %p31 = scmp.eq.s32.totalorder %s30, 0
      %s33 = sadd.s32 %s32, 1
      %s34 = scalar_select %p31, %s32, %s33
      %p37 = pneg %p31
      %p38 = scmp.eq.s32.totalorder %s22, 1
      %p39 = por %p37, %p38
      %p40 = scmp.ne.s32.totalorder %s32, %s35
      %p41 = scmp.eq.s32.totalorder %s22, 0
      %p42 = por %p40, %p41
      %p43 = scmp.ne.s32.totalorder %s32, %s35
      %p44 = scmp.eq.s32.totalorder %s27, 1
      %p45 = por %p43, %p44
      %p46 = scmp.ne.s32.totalorder %s35, %s36
      %p47 = scmp.eq.s32.totalorder %s27, 0
      %p48 = por %p46, %p47
      %p49 = scmp.ne.s32.totalorder %s35, %s36
      %p50 = scmp.eq.s32.totalorder %s28, 1
      %p51 = por %p49, %p50
      %p53 = scmp.ne.s32.totalorder %s36, %s52
      %p54 = scmp.eq.s32.totalorder %s28, 0
      %p55 = por %p53, %p54
      %s57 = sadd.s32 %s56, 1
      %p60 = scmp.eq.s32.totalorder %s22, 1
      %p61 = scmp.ne.s32.totalorder %s56, %s58
      %p62 = scmp.eq.s32.totalorder %s22, 0
      %p63 = por %p61, %p62
      %p64 = scmp.ne.s32.totalorder %s56, %s58
      %p65 = scmp.eq.s32.totalorder %s27, 1
      %p66 = por %p64, %p65
      %p67 = scmp.ne.s32.totalorder %s58, %s59
      %p68 = scmp.eq.s32.totalorder %s27, 0
      %p69 = por %p67, %p68
      %p70 = scmp.ne.s32.totalorder %s58, %s59
      %p71 = scmp.eq.s32.totalorder %s28, 1
      %p72 = por %p70, %p71
      %p74 = scmp.ne.s32.totalorder %s59, %s73
      %p75 = scmp.eq.s32.totalorder %s28, 0
      %p76 = por %p74, %p75
      %s78 = sadd.s32 %s77, 1
      %p81 = scmp.eq.s32.totalorder %s22, 1
      %p82 = scmp.ne.s32.totalorder %s77, %s79
      %p83 = scmp.eq.s32.totalorder %s22, 0
      %p84 = por %p82, %p83
      %p85 = scmp.ne.s32.totalorder %s77, %s79
      %p86 = scmp.eq.s32.totalorder %s27, 1
      %p87 = por %p85, %p86
      %p88 = scmp.ne.s32.totalorder %s79, %s80
      %p89 = scmp.eq.s32.totalorder %s27, 0
      %p90 = por %p88, %p89
      %p91 = scmp.ne.s32.totalorder %s79, %s80
      %p92 = scmp.eq.s32.totalorder %s28, 1
      %p93 = por %p91, %p92
      %p95 = scmp.ne.s32.totalorder %s80, %s94
      %p96 = scmp.eq.s32.totalorder %s28, 0
      %p97 = por %p95, %p96
      %s99 = sadd.s32 %s98, 1
      %p102 = scmp.eq.s32.totalorder %s22, 1
      %p103 = scmp.ne.s32.totalorder %s98, %s100
      %p104 = scmp.eq.s32.totalorder %s22, 0
      %p105 = por %p103, %p104
      %p106 = scmp.ne.s32.totalorder %s98, %s100
      %p107 = scmp.eq.s32.totalorder %s27, 1
      %p108 = por %p106, %p107
      %p109 = scmp.ne.s32.totalorder %s100, %s101
      %p110 = scmp.eq.s32.totalorder %s27, 0
      %p111 = por %p109, %p110
      %p112 = scmp.ne.s32.totalorder %s100, %s101
      %p113 = scmp.eq.s32.totalorder %s28, 1
      %p114 = por %p112, %p113
      %p116 = scmp.ne.s32.totalorder %s101, %s115
      %p117 = scmp.eq.s32.totalorder %s28, 0
      %p118 = por %p116, %p117
      %s120 = sadd.s32 %s119, 1
      %p123 = scmp.eq.s32.totalorder %s22, 1
      %p124 = scmp.ne.s32.totalorder %s119, %s121
      %p125 = scmp.eq.s32.totalorder %s22, 0
      %p126 = por %p124, %p125
      %p127 = scmp.ne.s32.totalorder %s119, %s121
      %p128 = scmp.eq.s32.totalorder %s27, 1
      %p129 = por %p127, %p128
      %p130 = scmp.ne.s32.totalorder %s121, %s122
      %p131 = scmp.eq.s32.totalorder %s27, 0
      %p132 = por %p130, %p131
      %p133 = scmp.ne.s32.totalorder %s121, %s122
      %p134 = scmp.eq.s32.totalorder %s28, 1
      %p135 = por %p133, %p134
      %p137 = scmp.ne.s32.totalorder %s122, %s136
      %p138 = scmp.eq.s32.totalorder %s28, 0
      %p139 = por %p137, %p138
      %s141 = sadd.s32 %s140, 1
      %p144 = scmp.eq.s32.totalorder %s22, 1
      %p145 = scmp.ne.s32.totalorder %s140, %s142
      %p146 = scmp.eq.s32.totalorder %s22, 0
      %p147 = por %p145, %p146
      %p148 = scmp.ne.s32.totalorder %s140, %s142
      %p149 = scmp.eq.s32.totalorder %s27, 1
      %p150 = por %p148, %p149
      %p151 = scmp.ne.s32.totalorder %s142, %s143
      %p152 = scmp.eq.s32.totalorder %s27, 0
      %p153 = por %p151, %p152
      %p154 = scmp.ne.s32.totalorder %s142, %s143
      %p155 = scmp.eq.s32.totalorder %s28, 1
      %p156 = por %p154, %p155
      %p158 = scmp.ne.s32.totalorder %s143, %s157
      %p159 = scmp.eq.s32.totalorder %s28, 0
      %p160 = por %p158, %p159
      %s162 = sadd.s32 %s161, 1
      %p165 = scmp.eq.s32.totalorder %s22, 1
      %p166 = scmp.ne.s32.totalorder %s161, %s163
      %p167 = scmp.eq.s32.totalorder %s22, 0
      %p168 = por %p166, %p167
      %p169 = scmp.ne.s32.totalorder %s161, %s163
      %p170 = scmp.eq.s32.totalorder %s27, 1
      %p171 = por %p169, %p170
      %p172 = scmp.ne.s32.totalorder %s163, %s164
      %p173 = scmp.eq.s32.totalorder %s27, 0
      %p174 = por %p172, %p173
      %p175 = scmp.ne.s32.totalorder %s163, %s164
      %p176 = scmp.eq.s32.totalorder %s28, 1
      %p177 = por %p175, %p176
      %p179 = scmp.ne.s32.totalorder %s164, %s178
      %p180 = scmp.eq.s32.totalorder %s28, 0
      %p181 = por %p179, %p180
      %s182 = ssub.s32 %s22, %s29
      %p183 = scmp.eq.s32.totalorder %s182, 0
      %s185 = sadd.s32 %s184, 1
      %s186 = scalar_select %p183, %s184, %s185
      %p189 = pneg %p183
      %p190 = scmp.eq.s32.totalorder %s22, 1
      %p191 = por %p189, %p190
      %p192 = scmp.ne.s32.totalorder %s184, %s187
      %p193 = scmp.eq.s32.totalorder %s22, 0
      %p194 = por %p192, %p193
      %p195 = scmp.ne.s32.totalorder %s184, %s187
      %p196 = scmp.eq.s32.totalorder %s27, 1
      %p197 = por %p195, %p196
      %p198 = scmp.ne.s32.totalorder %s187, %s188
      %p199 = scmp.eq.s32.totalorder %s27, 0
      %p200 = por %p198, %p199
      %p201 = scmp.ne.s32.totalorder %s187, %s188
      %p202 = scmp.eq.s32.totalorder %s28, 1
      %p203 = por %p201, %p202
      %p205 = scmp.ne.s32.totalorder %s188, %s204
      %p206 = scmp.eq.s32.totalorder %s28, 0
      %p207 = por %p205, %p206
      %s208 = ssub.s32 %s22, %s29
      %p209 = scmp.eq.s32.totalorder %s208, 0
      %s211 = sadd.s32 %s210, 1
      %s212 = scalar_select %p209, %s210, %s211
      %p215 = pneg %p209
      %p216 = scmp.eq.s32.totalorder %s22, 1
      %p217 = por %p215, %p216
      %p218 = scmp.ne.s32.totalorder %s210, %s213
      %p219 = scmp.eq.s32.totalorder %s22, 0
      %p220 = por %p218, %p219
      %p221 = scmp.ne.s32.totalorder %s210, %s213
      %p222 = scmp.eq.s32.totalorder %s27, 1
      %p223 = por %p221, %p222
      %p224 = scmp.ne.s32.totalorder %s213, %s214
      %p225 = scmp.eq.s32.totalorder %s27, 0
      %p226 = por %p224, %p225
      %p227 = scmp.ne.s32.totalorder %s213, %s214
      %p228 = scmp.eq.s32.totalorder %s28, 1
      %p229 = por %p227, %p228
      %p231 = scmp.ne.s32.totalorder %s214, %s230
      %p232 = scmp.eq.s32.totalorder %s28, 0
      %p233 = por %p231, %p232
      %s235 = sadd.s32 %s234, 1
      %p238 = scmp.eq.s32.totalorder %s22, 1
      %p239 = scmp.ne.s32.totalorder %s234, %s236
      %p240 = scmp.eq.s32.totalorder %s22, 0
      %p241 = por %p239, %p240
      %p242 = scmp.ne.s32.totalorder %s234, %s236
      %p243 = scmp.eq.s32.totalorder %s27, 1
      %p244 = por %p242, %p243
      %p245 = scmp.ne.s32.totalorder %s236, %s237
      %p246 = scmp.eq.s32.totalorder %s27, 0
      %p247 = por %p245, %p246
      %p248 = scmp.ne.s32.totalorder %s236, %s237
      %p249 = scmp.eq.s32.totalorder %s28, 1
      %p250 = por %p248, %p249
      %p252 = scmp.ne.s32.totalorder %s237, %s251
      %p253 = scmp.eq.s32.totalorder %s28, 0
      %p254 = por %p252, %p253
      %s256 = sadd.s32 %s255, 1
      %p259 = scmp.eq.s32.totalorder %s22, 1
      %p260 = scmp.ne.s32.totalorder %s255, %s257
      %p261 = scmp.eq.s32.totalorder %s22, 0
      %p262 = por %p260, %p261
      %p263 = scmp.ne.s32.totalorder %s255, %s257
      %p264 = scmp.eq.s32.totalorder %s27, 1
      %p265 = por %p263, %p264
      %p266 = scmp.ne.s32.totalorder %s257, %s258
      %p267 = scmp.eq.s32.totalorder %s27, 0
      %p268 = por %p266, %p267
      %p269 = scmp.ne.s32.totalorder %s257, %s258
      %p270 = scmp.eq.s32.totalorder %s28, 1
      %p271 = por %p269, %p270
      %p273 = scmp.ne.s32.totalorder %s258, %s272
      %p274 = scmp.eq.s32.totalorder %s28, 0
      %p275 = por %p273, %p274
      %s277 = sadd.s32 %s276, 1
      %p280 = scmp.eq.s32.totalorder %s22, 1
      %p281 = scmp.ne.s32.totalorder %s276, %s278
      %p282 = scmp.eq.s32.totalorder %s22, 0
      %p283 = por %p281, %p282
      %p284 = scmp.ne.s32.totalorder %s276, %s278
      %p285 = scmp.eq.s32.totalorder %s27, 1
      %p286 = por %p284, %p285
      %p287 = scmp.ne.s32.totalorder %s278, %s279
      %p288 = scmp.eq.s32.totalorder %s27, 0
      %p289 = por %p287, %p288
      %p290 = scmp.ne.s32.totalorder %s278, %s279
      %p291 = scmp.eq.s32.totalorder %s28, 1
      %p292 = por %p290, %p291
      %p294 = scmp.ne.s32.totalorder %s279, %s293
      %p295 = scmp.eq.s32.totalorder %s28, 0
      %p296 = por %p294, %p295
      %s297 = ssub.s32 %s22, %s29
      %p298 = scmp.eq.s32.totalorder %s297, 0
      %s300 = sadd.s32 %s299, 1
      %s301 = scalar_select %p298, %s299, %s300
      %p304 = pneg %p298
      %p305 = scmp.eq.s32.totalorder %s22, 1
      %p306 = por %p304, %p305
      %p307 = scmp.ne.s32.totalorder %s299, %s302
      %p308 = scmp.eq.s32.totalorder %s22, 0
      %p309 = por %p307, %p308
      %p310 = scmp.ne.s32.totalorder %s299, %s302
      %p311 = scmp.eq.s32.totalorder %s27, 1
      %p312 = por %p310, %p311
      %p313 = scmp.ne.s32.totalorder %s302, %s303
      %p314 = scmp.eq.s32.totalorder %s27, 0
      %p315 = por %p313, %p314
      %p316 = scmp.ne.s32.totalorder %s302, %s303
      %p317 = scmp.eq.s32.totalorder %s28, 1
      %p318 = por %p316, %p317
      %p320 = scmp.ne.s32.totalorder %s303, %s319
      %p321 = scmp.eq.s32.totalorder %s28, 0
      %p322 = por %p320, %p321
      %s323 = ssub.s32 %s22, %s29
      %p324 = scmp.eq.s32.totalorder %s323, 0
      %s326 = sadd.s32 %s325, 1
      %s327 = scalar_select %p324, %s325, %s326
      %p330 = pneg %p324
      %p331 = scmp.eq.s32.totalorder %s22, 1
      %p332 = por %p330, %p331
      %p333 = scmp.ne.s32.totalorder %s325, %s328
      %p334 = scmp.eq.s32.totalorder %s22, 0
      %p335 = por %p333, %p334
      %p336 = scmp.ne.s32.totalorder %s325, %s328
      %p337 = scmp.eq.s32.totalorder %s27, 1
      %p338 = por %p336, %p337
      %p339 = scmp.ne.s32.totalorder %s328, %s329
      %p340 = scmp.eq.s32.totalorder %s27, 0
      %p341 = por %p339, %p340
      %p342 = scmp.ne.s32.totalorder %s328, %s329
      %p343 = scmp.eq.s32.totalorder %s28, 1
      %p344 = por %p342, %p343
      %p346 = scmp.ne.s32.totalorder %s329, %s345
      %p347 = scmp.eq.s32.totalorder %s28, 0
      %p348 = por %p346, %p347
      %p349 = scmp.le.s32.totalorder 1, %s22
      %p350 = scmp.lt.s32.totalorder %s22, 3
      %p351 = pnand %p349, %p350
      %p352 = pneg %p351
      // Predicated region
      $region9: #{_forward.1} parent=5 // pred_check
        _
      $region10: #{_forward.1} parent=5 // pred_check_branch
        %354 = sbr.rel (%p351) target = $region12
      $region11: #{_forward.1} parent=5 // pred_region
        %s355 = ssub.s32 %s22, 1
        // Predicated region
        $region13: #{_forward.1} parent=11 // pred_check
          %p356 = pneg %p69
        $region14: #{_forward.1} parent=11 // pred_check_branch
          %358 = sbr.rel (%p356) target = $region16
        $region15: #{_forward.1} parent=11 // pred_region
          _
        $region16: #{_forward.1} parent=11 // pred_fallthru
          _
        // Predicated region
        $region17: #{_forward.1} parent=11 // pred_check
          %p359 = pneg %p90
        $region18: #{_forward.1} parent=11 // pred_check_branch
          %361 = sbr.rel (%p359) target = $region20
        $region19: #{_forward.1} parent=11 // pred_region
          _
        $region20: #{_forward.1} parent=11 // pred_fallthru
          _
        // Predicated region
        $region21: #{_forward.1} parent=11 // pred_check
          %p362 = pneg %p111
        $region22: #{_forward.1} parent=11 // pred_check_branch
          %364 = sbr.rel (%p362) target = $region24
        $region23: #{_forward.1} parent=11 // pred_region
          _
        $region24: #{_forward.1} parent=11 // pred_fallthru
          _
        // Predicated region
        $region25: #{_forward.1} parent=11 // pred_check
          %p365 = pneg %p132
        $region26: #{_forward.1} parent=11 // pred_check_branch
          %367 = sbr.rel (%p365) target = $region28
        $region27: #{_forward.1} parent=11 // pred_region
          _
        $region28: #{_forward.1} parent=11 // pred_fallthru
          _
        // Predicated region
        $region29: #{_forward.1} parent=11 // pred_check
          %p368 = pneg %p153
        $region30: #{_forward.1} parent=11 // pred_check_branch
          %370 = sbr.rel (%p368) target = $region32
        $region31: #{_forward.1} parent=11 // pred_region
          %s372 = ssub.s32 8192, 8192
          %373 = vsyncadd [#allocation9], %s372
          %s374 = sshll.u32 [#allocation8], 4
          %s375 = int_to_ptr.vmem [resolvable:$true] %s374
          %380 = dma.hbm_to_vmem [thread:$0]  %s5, 8192, %s375, [#allocation9], 512, 512, 32
        $region32: #{_forward.1} parent=11 // pred_fallthru
          _
        // Predicated region
        $region33: #{_forward.1} parent=11 // pred_check
          %p381 = pneg %p174
        $region34: #{_forward.1} parent=11 // pred_check_branch
          %383 = sbr.rel (%p381) target = $region36
        $region35: #{_forward.1} parent=11 // pred_region
          _
        $region36: #{_forward.1} parent=11 // pred_fallthru
          _
        // Predicated region
        $region37: #{_forward.1} parent=11 // pred_check
          %p384 = pneg %p247
        $region38: #{_forward.1} parent=11 // pred_check_branch
          %386 = sbr.rel (%p384) target = $region40
        $region39: #{_forward.1} parent=11 // pred_region
          %s388 = ssub.s32 2048, 2048
          %389 = vsyncadd [#allocation13], %s388
          %s390 = sshll.u32 [#allocation12], 4
          %s391 = int_to_ptr.vmem [resolvable:$true] %s390
          %396 = dma.hbm_to_vmem [thread:$0]  %s9, 2048, %s391, [#allocation13], 128, 128, 8
        $region40: #{_forward.1} parent=11 // pred_fallthru
          _
        // Predicated region
        $region41: #{_forward.1} parent=11 // pred_check
          %p397 = pneg %p268
        $region42: #{_forward.1} parent=11 // pred_check_branch
          %399 = sbr.rel (%p397) target = $region44
        $region43: #{_forward.1} parent=11 // pred_region
          %s401 = ssub.s32 2048, 2048
          %402 = vsyncadd [#allocation13], %s401
          %s403 = sshll.u32 [#allocation14], 4
          %s404 = int_to_ptr.vmem [resolvable:$true] %s403
          %409 = dma.hbm_to_vmem [thread:$0]  %s10, 2048, %s404, [#allocation13], 128, 128, 8
        $region44: #{_forward.1} parent=11 // pred_fallthru
          _
        // Predicated region
        $region45: #{_forward.1} parent=11 // pred_check
          %p410 = pneg %p289
        $region46: #{_forward.1} parent=11 // pred_check_branch
          %412 = sbr.rel (%p410) target = $region48
        $region47: #{_forward.1} parent=11 // pred_region
          _
        $region48: #{_forward.1} parent=11 // pred_fallthru
          _
      $region12: #{_forward.1} parent=5 // pred_fallthru
        _
      %p413 = scmp.lt.s32.totalorder %s22, 2
      // Predicated region
      $region49: #{_forward.1} parent=5 // pred_check
        %p414 = pneg %p413
      $region50: #{_forward.1} parent=5 // pred_check_branch
        %416 = sbr.rel (%p414) target = $region52
      $region51: #{_forward.1} parent=5 // pred_region
        // Predicated region
        $region53: #{_forward.1} parent=51 // pred_check
          %p417 = pneg %p42
        $region54: #{_forward.1} parent=51 // pred_check_branch
          %419 = sbr.rel (%p417) target = $region56
        $region55: #{_forward.1} parent=51 // pred_region
          %s420 = sand.u32 %s32, 1
          %s421 = sand.u32 %s32, 1
          %s422 = smul.addr %s421, 64
          %s423 = scalar_lea.vmem [#allocation7], %s422
          %s424 = smul.addr %s22, 8
          %s425 = scalar_lea.vmem %s0, %s424
          // Predicated region
          $region57: #{_forward.1} parent=55 // pred_check
            _
          $region58: #{_forward.1} parent=55 // pred_check_branch
            %427 = sbr.rel (0) target = $region60
          $region59: #{_forward.1} parent=55 // pred_region
            // Predicated region
            $region61: #{_forward.1} parent=59 // pred_check
              _
            $region62: #{_forward.1} parent=59 // pred_check_branch
              %429 = sbr.rel (0) target = $region64
            $region63: #{_forward.1} parent=59 // pred_region
              // Predicated region
              $region76: #{_forward.1} parent=63 // pred_check
                _
              $region77: #{_forward.1} parent=63 // pred_check_branch
                %458 = sbr.rel (0) target = $region79
              $region78: #{_forward.1} parent=63 // pred_region
                loop: start=0, step=1, limit=1
                $region80: #{_forward.1} parent=78 // loop_pre_header
                  _
                $region81: #{_forward.1} parent=78 // loop_header
                  %s460 = sphi 0, %s464
                  %p461 = scmp.ge.s32.totalorder %s460, 1
                  %s465 = sphi %s425, %s425
                  %s466 = sphi %s423, %s423
                $region82: #{_forward.1} parent=78 // loop_header_branch
                  %463 = sbr.rel (%p461) target = $region86
                $region83: #{_forward.1} parent=78 // loop_body
                  %v467 = vld [vmem:[%s465] sm:$0xff]
                  %468 = vst [vmem:[%s466] sm:$0xff] %v467
                  %v469 = vld [vmem:[%s465 + $0x10] sm:$0xff]
                  %470 = vst [vmem:[%s466 + $0x8] sm:$0xff] %v469
                  %v471 = vld [vmem:[%s465 + $0x20] sm:$0xff]
                  %472 = vst [vmem:[%s466 + $0x10] sm:$0xff] %v471
                  %v473 = vld [vmem:[%s465 + $0x30] sm:$0xff]
                  %474 = vst [vmem:[%s466 + $0x18] sm:$0xff] %v473
                  %v475 = vld [vmem:[%s465 + $0x40] sm:$0xff]
                  %476 = vst [vmem:[%s466 + $0x20] sm:$0xff] %v475
                  %v477 = vld [vmem:[%s465 + $0x50] sm:$0xff]
                  %478 = vst [vmem:[%s466 + $0x28] sm:$0xff] %v477
                  %v479 = vld [vmem:[%s465 + $0x60] sm:$0xff]
                  %480 = vst [vmem:[%s466 + $0x30] sm:$0xff] %v479
                  %v481 = vld [vmem:[%s465 + $0x70] sm:$0xff]
                  %482 = vst [vmem:[%s466 + $0x38] sm:$0xff] %v481
                $region84: #{_forward.1} parent=78 // loop_footer
                  %s464 = sadd.s32 1, %s460
                $region85: #{_forward.1} parent=78 // loop_footer_branch
                  %459 = sbr.rel target = $region81
                $region86: #{_forward.1} parent=78 // loop_exit
                  _
              $region79: #{_forward.1} parent=63 // pred_fallthru
                _
              // Predicated region
              $region87: #{_forward.1} parent=63 // pred_check
                _
              $region88: #{_forward.1} parent=63 // pred_check_branch
                %484 = sbr.rel target = $region90
              $region89: #{_forward.1} parent=63 // pred_region
                _
              $region90: #{_forward.1} parent=63 // pred_fallthru
                _
            $region64: #{_forward.1} parent=59 // pred_fallthru
              _
            // Predicated region
            $region65: #{_forward.1} parent=59 // pred_check
              _
            $region66: #{_forward.1} parent=59 // pred_check_branch
              %431 = sbr.rel target = $region68
            $region67: #{_forward.1} parent=59 // pred_region
              loop: start=0, step=1, limit=1
              $region69: #{_forward.1} parent=67 // loop_pre_header
                _
              $region70: #{_forward.1} parent=67 // loop_header
                %s434 = sphi 0, %s438
                %p435 = scmp.ge.s32.totalorder %s434, 1
                %s439 = sphi %s425, %s425
                %s440 = sphi %s423, %s423
              $region71: #{_forward.1} parent=67 // loop_header_branch
                %437 = sbr.rel (%p435) target = $region75
              $region72: #{_forward.1} parent=67 // loop_body
                %v441 = vld [vmem:[%s439] sm:$0xff]
                %442 = vst [vmem:[%s440] sm:$0xff] %v441
                %v443 = vld [vmem:[%s439 + $0x10] sm:$0xff]
                %444 = vst [vmem:[%s440 + $0x8] sm:$0xff] %v443
                %v445 = vld [vmem:[%s439 + $0x20] sm:$0xff]
                %446 = vst [vmem:[%s440 + $0x10] sm:$0xff] %v445
                %v447 = vld [vmem:[%s439 + $0x30] sm:$0xff]
                %448 = vst [vmem:[%s440 + $0x18] sm:$0xff] %v447
                %v449 = vld [vmem:[%s439 + $0x40] sm:$0xff]
                %450 = vst [vmem:[%s440 + $0x20] sm:$0xff] %v449
                %v451 = vld [vmem:[%s439 + $0x50] sm:$0xff]
                %452 = vst [vmem:[%s440 + $0x28] sm:$0xff] %v451
                %v453 = vld [vmem:[%s439 + $0x60] sm:$0xff]
                %454 = vst [vmem:[%s440 + $0x30] sm:$0xff] %v453
                %v455 = vld [vmem:[%s439 + $0x70] sm:$0xff]
                %456 = vst [vmem:[%s440 + $0x38] sm:$0xff] %v455
              $region73: #{_forward.1} parent=67 // loop_footer
                %s438 = sadd.s32 1, %s434
              $region74: #{_forward.1} parent=67 // loop_footer_branch
                %433 = sbr.rel target = $region70
              $region75: #{_forward.1} parent=67 // loop_exit
                _
            $region68: #{_forward.1} parent=59 // pred_fallthru
              _
          $region60: #{_forward.1} parent=55 // pred_fallthru
            _
          %485 = vnop
        $region56: #{_forward.1} parent=51 // pred_fallthru
          _
        // Predicated region
        $region91: #{_forward.1} parent=51 // pred_check
          %p486 = pneg %p194
        $region92: #{_forward.1} parent=51 // pred_check_branch
          %488 = sbr.rel (%p486) target = $region94
        $region93: #{_forward.1} parent=51 // pred_region
          %s489 = sand.u32 %s184, 1
          %s490 = sand.u32 %s184, 1
          %s491 = smul.addr %s490, 16
          %s492 = scalar_lea.vmem [#allocation10], %s491
          %s493 = smul.addr %s22, 8
          %s494 = scalar_lea.vmem %s7, %s493
          // Predicated region
          $region95: #{_forward.1} parent=93 // pred_check
            _
          $region96: #{_forward.1} parent=93 // pred_check_branch
            %496 = sbr.rel (0) target = $region98
          $region97: #{_forward.1} parent=93 // pred_region
            // Predicated region
            $region99: #{_forward.1} parent=97 // pred_check
              _
            $region100: #{_forward.1} parent=97 // pred_check_branch
              %498 = sbr.rel (0) target = $region102
            $region101: #{_forward.1} parent=97 // pred_region
              // Predicated region
              $region114: #{_forward.1} parent=101 // pred_check
                _
              $region115: #{_forward.1} parent=101 // pred_check_branch
                %515 = sbr.rel (0) target = $region117
              $region116: #{_forward.1} parent=101 // pred_region
                loop: start=0, step=1, limit=1
                $region118: #{_forward.1} parent=116 // loop_pre_header
                  _
                $region119: #{_forward.1} parent=116 // loop_header
                  %s517 = sphi 0, %s521
                  %p518 = scmp.ge.s32.totalorder %s517, 1
                  %s522 = sphi %s494, %s494
                  %s523 = sphi %s492, %s492
                $region120: #{_forward.1} parent=116 // loop_header_branch
                  %520 = sbr.rel (%p518) target = $region124
                $region121: #{_forward.1} parent=116 // loop_body
                  %v524 = vld [vmem:[%s522] sm:$0xff]
                  %525 = vst [vmem:[%s523] sm:$0xff] %v524
                  %v526 = vld [vmem:[%s522 + $0x10] sm:$0xff]
                  %527 = vst [vmem:[%s523 + $0x8] sm:$0xff] %v526
                $region122: #{_forward.1} parent=116 // loop_footer
                  %s521 = sadd.s32 1, %s517
                $region123: #{_forward.1} parent=116 // loop_footer_branch
                  %516 = sbr.rel target = $region119
                $region124: #{_forward.1} parent=116 // loop_exit
                  _
              $region117: #{_forward.1} parent=101 // pred_fallthru
                _
              // Predicated region
              $region125: #{_forward.1} parent=101 // pred_check
                _
              $region126: #{_forward.1} parent=101 // pred_check_branch
                %529 = sbr.rel target = $region128
              $region127: #{_forward.1} parent=101 // pred_region
                _
              $region128: #{_forward.1} parent=101 // pred_fallthru
                _
            $region102: #{_forward.1} parent=97 // pred_fallthru
              _
            // Predicated region
            $region103: #{_forward.1} parent=97 // pred_check
              _
            $region104: #{_forward.1} parent=97 // pred_check_branch
              %500 = sbr.rel target = $region106
            $region105: #{_forward.1} parent=97 // pred_region
              loop: start=0, step=1, limit=1
              $region107: #{_forward.1} parent=105 // loop_pre_header
                _
              $region108: #{_forward.1} parent=105 // loop_header
                %s503 = sphi 0, %s507
                %p504 = scmp.ge.s32.totalorder %s503, 1
                %s508 = sphi %s494, %s494
                %s509 = sphi %s492, %s492
              $region109: #{_forward.1} parent=105 // loop_header_branch
                %506 = sbr.rel (%p504) target = $region113
              $region110: #{_forward.1} parent=105 // loop_body
                %v510 = vld [vmem:[%s508] sm:$0xff]
                %511 = vst [vmem:[%s509] sm:$0xff] %v510
                %v512 = vld [vmem:[%s508 + $0x10] sm:$0xff]
                %513 = vst [vmem:[%s509 + $0x8] sm:$0xff] %v512
              $region111: #{_forward.1} parent=105 // loop_footer
                %s507 = sadd.s32 1, %s503
              $region112: #{_forward.1} parent=105 // loop_footer_branch
                %502 = sbr.rel target = $region108
              $region113: #{_forward.1} parent=105 // loop_exit
                _
            $region106: #{_forward.1} parent=97 // pred_fallthru
              _
          $region98: #{_forward.1} parent=93 // pred_fallthru
            _
          %530 = vnop
        $region94: #{_forward.1} parent=51 // pred_fallthru
          _
        // Predicated region
        $region129: #{_forward.1} parent=51 // pred_check
          %p531 = pneg %p220
        $region130: #{_forward.1} parent=51 // pred_check_branch
          %533 = sbr.rel (%p531) target = $region132
        $region131: #{_forward.1} parent=51 // pred_region
          %s534 = sand.u32 %s210, 1
          %s535 = sand.u32 %s210, 1
          %s536 = smul.addr %s535, 16
          %s537 = scalar_lea.vmem [#allocation11], %s536
          %s538 = smul.addr %s22, 8
          %s539 = scalar_lea.vmem %s8, %s538
          // Predicated region
          $region133: #{_forward.1} parent=131 // pred_check
            _
          $region134: #{_forward.1} parent=131 // pred_check_branch
            %541 = sbr.rel (0) target = $region136
          $region135: #{_forward.1} parent=131 // pred_region
            // Predicated region
            $region137: #{_forward.1} parent=135 // pred_check
              _
            $region138: #{_forward.1} parent=135 // pred_check_branch
              %543 = sbr.rel (0) target = $region140
            $region139: #{_forward.1} parent=135 // pred_region
              // Predicated region
              $region152: #{_forward.1} parent=139 // pred_check
                _
              $region153: #{_forward.1} parent=139 // pred_check_branch
                %560 = sbr.rel (0) target = $region155
              $region154: #{_forward.1} parent=139 // pred_region
                loop: start=0, step=1, limit=1
                $region156: #{_forward.1} parent=154 // loop_pre_header
                  _
                $region157: #{_forward.1} parent=154 // loop_header
                  %s562 = sphi 0, %s566
                  %p563 = scmp.ge.s32.totalorder %s562, 1
                  %s567 = sphi %s539, %s539
                  %s568 = sphi %s537, %s537
                $region158: #{_forward.1} parent=154 // loop_header_branch
                  %565 = sbr.rel (%p563) target = $region162
                $region159: #{_forward.1} parent=154 // loop_body
                  %v569 = vld [vmem:[%s567] sm:$0xff]
                  %570 = vst [vmem:[%s568] sm:$0xff] %v569
                  %v571 = vld [vmem:[%s567 + $0x10] sm:$0xff]
                  %572 = vst [vmem:[%s568 + $0x8] sm:$0xff] %v571
                $region160: #{_forward.1} parent=154 // loop_footer
                  %s566 = sadd.s32 1, %s562
                $region161: #{_forward.1} parent=154 // loop_footer_branch
                  %561 = sbr.rel target = $region157
                $region162: #{_forward.1} parent=154 // loop_exit
                  _
              $region155: #{_forward.1} parent=139 // pred_fallthru
                _
              // Predicated region
              $region163: #{_forward.1} parent=139 // pred_check
                _
              $region164: #{_forward.1} parent=139 // pred_check_branch
                %574 = sbr.rel target = $region166
              $region165: #{_forward.1} parent=139 // pred_region
                _
              $region166: #{_forward.1} parent=139 // pred_fallthru
                _
            $region140: #{_forward.1} parent=135 // pred_fallthru
              _
            // Predicated region
            $region141: #{_forward.1} parent=135 // pred_check
              _
            $region142: #{_forward.1} parent=135 // pred_check_branch
              %545 = sbr.rel target = $region144
            $region143: #{_forward.1} parent=135 // pred_region
              loop: start=0, step=1, limit=1
              $region145: #{_forward.1} parent=143 // loop_pre_header
                _
              $region146: #{_forward.1} parent=143 // loop_header
                %s548 = sphi 0, %s552
                %p549 = scmp.ge.s32.totalorder %s548, 1
                %s553 = sphi %s539, %s539
                %s554 = sphi %s537, %s537
              $region147: #{_forward.1} parent=143 // loop_header_branch
                %551 = sbr.rel (%p549) target = $region151
              $region148: #{_forward.1} parent=143 // loop_body
                %v555 = vld [vmem:[%s553] sm:$0xff]
                %556 = vst [vmem:[%s554] sm:$0xff] %v555
                %v557 = vld [vmem:[%s553 + $0x10] sm:$0xff]
                %558 = vst [vmem:[%s554 + $0x8] sm:$0xff] %v557
              $region149: #{_forward.1} parent=143 // loop_footer
                %s552 = sadd.s32 1, %s548
              $region150: #{_forward.1} parent=143 // loop_footer_branch
                %547 = sbr.rel target = $region146
              $region151: #{_forward.1} parent=143 // loop_exit
                _
            $region144: #{_forward.1} parent=135 // pred_fallthru
              _
          $region136: #{_forward.1} parent=131 // pred_fallthru
            _
          %575 = vnop
        $region132: #{_forward.1} parent=51 // pred_fallthru
          _
      $region52: #{_forward.1} parent=5 // pred_fallthru
        _
      %p576 = scmp.le.s32.totalorder 1, %s22
      %p577 = scmp.lt.s32.totalorder %s22, 3
      %p578 = pnand %p576, %p577
      %p579 = pneg %p578
      // Predicated region
      $region167: #{_forward.1} parent=5 // pred_check
        _
      $region168: #{_forward.1} parent=5 // pred_check_branch
        %581 = sbr.rel (%p578) target = $region170
      $region169: #{_forward.1} parent=5 // pred_region
        %s582 = ssub.s32 %s22, 1
        %s583 = sand.u32 %s35, 1
        %s584 = sand.u32 %s35, 1
        %s585 = smul.addr %s584, 64
        %s586 = scalar_lea.vmem [#allocation7], %s585
        // Predicated region
        $region171: #{_forward.1} parent=169 // pred_check
          %p587 = pneg %p48
        $region172: #{_forward.1} parent=169 // pred_check_branch
          %589 = sbr.rel (%p587) target = $region174
        $region173: #{_forward.1} parent=169 // pred_region
          _
        $region174: #{_forward.1} parent=169 // pred_fallthru
          _
        // Predicated region
        $region175: #{_forward.1} parent=169 // pred_check
          %p590 = pneg %p153
        $region176: #{_forward.1} parent=169 // pred_check_branch
          %592 = sbr.rel (%p590) target = $region178
        $region177: #{_forward.1} parent=169 // pred_region
          %593 = dma.done [#allocation9], 8192
        $region178: #{_forward.1} parent=169 // pred_fallthru
          _
        %s594 = sand.u32 %s187, 1
        %s595 = sand.u32 %s187, 1
        %s596 = smul.addr %s595, 16
        %s597 = scalar_lea.vmem [#allocation10], %s596
        // Predicated region
        $region179: #{_forward.1} parent=169 // pred_check
          %p598 = pneg %p200
        $region180: #{_forward.1} parent=169 // pred_check_branch
          %600 = sbr.rel (%p598) target = $region182
        $region181: #{_forward.1} parent=169 // pred_region
          _
        $region182: #{_forward.1} parent=169 // pred_fallthru
          _
        %s601 = sand.u32 %s213, 1
        %s602 = sand.u32 %s213, 1
        %s603 = smul.addr %s602, 16
        %s604 = scalar_lea.vmem [#allocation11], %s603
        // Predicated region
        $region183: #{_forward.1} parent=169 // pred_check
          %p605 = pneg %p226
        $region184: #{_forward.1} parent=169 // pred_check_branch
          %607 = sbr.rel (%p605) target = $region186
        $region185: #{_forward.1} parent=169 // pred_region
          _
        $region186: #{_forward.1} parent=169 // pred_fallthru
          _
        // Predicated region
        $region187: #{_forward.1} parent=169 // pred_check
          %p608 = pneg %p247
        $region188: #{_forward.1} parent=169 // pred_check_branch
          %610 = sbr.rel (%p608) target = $region190
        $region189: #{_forward.1} parent=169 // pred_region
          %611 = dma.done [#allocation13], 2048
        $region190: #{_forward.1} parent=169 // pred_fallthru
          _
        // Predicated region
        $region191: #{_forward.1} parent=169 // pred_check
          %p612 = pneg %p268
        $region192: #{_forward.1} parent=169 // pred_check_branch
          %614 = sbr.rel (%p612) target = $region194
        $region193: #{_forward.1} parent=169 // pred_region
          %615 = dma.done [#allocation13], 2048
        $region194: #{_forward.1} parent=169 // pred_fallthru
          _
        %s616 = sand.u32 %s35, 1
        %s617 = sand.u32 %s35, 1
        %s618 = smul.addr %s617, 64
        %s619 = scalar_lea.vmem [#allocation7], %s618
        %p620 = pneg %p48
        %p621 = pneg %p45
        %p622 = pneg %p69
        %p623 = pneg %p66
        %p624 = pneg %p90
        %p625 = pneg %p87
        %p626 = pneg %p111
        %p627 = pneg %p108
        %p628 = pneg %p132
        %p629 = pneg %p129
        %p630 = pneg %p153
        %p631 = pneg %p150
        %p632 = pneg %p174
        %p633 = pneg %p171
        %s634 = sand.u32 %s187, 1
        %s635 = sand.u32 %s187, 1
        %s636 = smul.addr %s635, 16
        %s637 = scalar_lea.vmem [#allocation10], %s636
        %p638 = pneg %p200
        %p639 = pneg %p197
        %s640 = sand.u32 %s213, 1
        %s641 = sand.u32 %s213, 1
        %s642 = smul.addr %s641, 16
        %s643 = scalar_lea.vmem [#allocation11], %s642
        %p644 = pneg %p226
        %p645 = pneg %p223
        %p646 = pneg %p247
        %p647 = pneg %p244
        %p648 = pneg %p268
        %p649 = pneg %p265
        %p650 = pneg %p289
        %p651 = pneg %p286
        %p652 = pneg %p315
        %p653 = pneg %p312
        %p654 = scmp.lt.s32.totalorder %s27, 1
        %s655 = scalar_select %p654, %s27, 1
        %s656 = smul.addr %s655, 8
        %s657 = scalar_lea.vmem %s12, %s656
        %p658 = pneg %p341
        %p659 = pneg %p338
        %p660 = scmp.lt.s32.totalorder %s27, 1
        %s661 = scalar_select %p660, %s27, 1
        %s662 = smul.addr %s661, 8
        %s663 = scalar_lea.vmem %s13, %s662
        %p664 = scmp.lt.s32.totalorder %s27, 1
        %s665 = scalar_select %p664, %s27, 1
        %s666 = smul.addr %s665, 8
        %s667 = scalar_lea.vmem %s12, %s666
        %p668 = scmp.lt.s32.totalorder %s27, 1
        %s669 = scalar_select %p668, %s27, 1
        %s670 = smul.addr %s669, 8
        %s671 = scalar_lea.vmem %s13, %s670
        %v672 = vlaneseq
        %v673 = vand.u32 %v672, 127
        %v674 = vadd.s32 %v673, 128
        %v675 = vadd.s32 %v673, 256
        %v676 = vadd.s32 %v673, 384
        %v677 = vand.u32 %v673, 127
        %v678 = vand.u32 %v674, 127
        %v679 = vand.u32 %v675, 127
        %v680 = vand.u32 %v676, 127
        %vm681 = vcmp.lt.s32.totalorder %v677, 32
        %vm682 = vcmp.lt.s32.totalorder %v678, 32
        %vm683 = vcmp.lt.s32.totalorder %v679, 32
        %vm684 = vcmp.lt.s32.totalorder %v680, 32
        %v685 = vld [vmem:[%s586] sm:$0xff]
        %v686 = vld [vmem:[%s586 + $0x8] sm:$0xff]
        %v687 = vld [vmem:[%s586 + $0x10] sm:$0xff]
        %v688 = vld [vmem:[%s586 + $0x18] sm:$0xff]
        %v689 = vld [vmem:[%s586 + $0x20] sm:$0xff]
        %v690 = vld [vmem:[%s586 + $0x28] sm:$0xff]
        %v691 = vld [vmem:[%s586 + $0x30] sm:$0xff]
        %v692 = vld [vmem:[%s586 + $0x38] sm:$0xff]
        %v693 = vld [vmem:[%s1] sm:$0xff]
        %v694 = vld [vmem:[%s1 + $0x8] sm:$0xff]
        %v695 = vld [vmem:[%s1 + $0x10] sm:$0xff]
        %v696 = vld [vmem:[%s1 + $0x18] sm:$0xff]
        %v697 = vld [vmem:[%s1 + $0x20] sm:$0xff]
        %v698 = vld [vmem:[%s1 + $0x28] sm:$0xff]
        %v699 = vld [vmem:[%s1 + $0x30] sm:$0xff]
        %v700 = vld [vmem:[%s1 + $0x38] sm:$0xff]
        %v701 = vld [vmem:[%s1 + $0x40] sm:$0xff]
        %v702 = vld [vmem:[%s1 + $0x48] sm:$0xff]
        %v703 = vld [vmem:[%s1 + $0x50] sm:$0xff]
        %v704 = vld [vmem:[%s1 + $0x58] sm:$0xff]
        %v705 = vld [vmem:[%s1 + $0x60] sm:$0xff]
        %v706 = vld [vmem:[%s1 + $0x68] sm:$0xff]
        %v707 = vld [vmem:[%s1 + $0x70] sm:$0xff]
        %v708 = vld [vmem:[%s1 + $0x78] sm:$0xff]
        %v709 = vld [vmem:[%s3] sm:$0xf]
        %v711 = vlaneseq
        %v712 = vshrl.u32 %v711, 7
        %v713 = vsub.s32 0, %v712
        %v714 = vrot.slane %v709, %v713
        %v715 = vlaneseq
        %v716 = vshrl.u32 %v715, 7
        %v717 = vsub.s32 1, %v716
        %v718 = vrot.slane %v709, %v717
        %v719 = vlaneseq
        %v720 = vshrl.u32 %v719, 7
        %v721 = vsub.s32 2, %v720
        %v722 = vrot.slane %v709, %v721
        %v723 = vlaneseq
        %v724 = vshrl.u32 %v723, 7
        %v725 = vsub.s32 3, %v724
        %v726 = vrot.slane %v709, %v725
        %vm731 = vcmask 261120
        %v733 = vsel %vm731, %v685, 0
        %v736 = vsel %vm731, %v686, 0
        %v739 = vsel %vm731, %v687, 0
        %v742 = vsel %vm731, %v688, 0
        %v745 = vsel %vm731, %v689, 0
        %v748 = vsel %vm731, %v690, 0
        %v751 = vsel %vm731, %v691, 0
        %v754 = vsel %vm731, %v692, 0
        %756 = vmatprep.subr.mxu0 %v694
        %757 = vmatpush1.msra.mxu0 %v693
        %758 = vmatprep.subr.mxu0 %v698
        %759 = vmatpush1.msra.mxu0 %v697
        %760 = vmatprep.subr.mxu0 %v702
        %761 = vmatpush1.msra.mxu0 %v701
        %762 = vmatprep.subr.mxu0 %v706
        %763 = vmatpush1.msra.mxu0 %v705
        %764 = vmatprep.subr.mxu0 0.0
        %765 = vmatpush1.msra.mxu0 0.0
        %766 = vmatprep.subr.mxu0 0.0
        %767 = vmatpush1.msra.mxu0 0.0
        %768 = vmatprep.subr.mxu0 0.0
        %769 = vmatpush1.msra.mxu0 0.0
        %770 = vmatprep.subr.mxu0 0.0
        %771 = vmatpush1.msra.mxu0 0.0
        %772 = vmatprep.subr.mxu0 0.0
        %773 = vmatpush1.msra.mxu0 0.0
        %774 = vmatprep.subr.mxu0 0.0
        %775 = vmatpush1.msra.mxu0 0.0
        %776 = vmatprep.subr.mxu0 0.0
        %777 = vmatpush1.msra.mxu0 0.0
        %778 = vmatprep.subr.mxu0 0.0
        %779 = vmatpush1.msra.mxu0 0.0
        %780 = vmatprep.subr.mxu0 0.0
        %781 = vmatpush1.msra.mxu0 0.0
        %782 = vmatprep.subr.mxu0 0.0
        %783 = vmatpush1.msra.mxu0 0.0
        %784 = vmatprep.subr.mxu0 0.0
        %785 = vmatpush1.msra.mxu0 0.0
        %786 = vmatprep.subr.mxu0 0.0
        %787 = vmatpush1.msra.mxu0 0.0
        %788 = vmatprep.subr.mxu0 0.0
        %789 = vmatpush1.msra.mxu0 0.0
        %790 = vmatprep.subr.mxu0 0.0
        %791 = vmatpush1.msra.mxu0 0.0
        %792 = vmatprep.subr.mxu0 0.0
        %793 = vmatpush1.msra.mxu0 0.0
        %794 = vmatprep.subr.mxu0 0.0
        %795 = vmatpush1.msra.mxu0 0.0
        %796 = vmatprep.subr.mxu0 0.0
        %797 = vmatpush1.msra.mxu0 0.0
        %798 = vmatprep.subr.mxu0 0.0
        %799 = vmatpush1.msra.mxu0 0.0
        %800 = vmatprep.subr.mxu0 0.0
        %801 = vmatpush1.msra.mxu0 0.0
        %802 = vmatprep.subr.mxu0 0.0
        %803 = vmatpush1.msra.mxu0 0.0
        %804 = vmatprep.subr.mxu0 0.0
        %805 = vmatpush1.msra.mxu0 0.0
        %806 = vmatprep.subr.mxu0 0.0
        %807 = vmatpush1.msra.mxu0 0.0
        %808 = vmatprep.subr.mxu0 0.0
        %809 = vmatpush1.msra.mxu0 0.0
        %810 = vmatprep.subr.mxu0 0.0
        %811 = vmatpush1.msra.mxu0 0.0
        %812 = vmatprep.subr.mxu0 0.0
        %813 = vmatpush1.msra.mxu0 0.0
        %814 = vmatprep.subr.mxu0 0.0
        %815 = vmatpush1.msra.mxu0 0.0
        %816 = vmatprep.subr.mxu0 0.0
        %817 = vmatpush1.msra.mxu0 0.0
        %818 = vmatprep.subr.mxu0 0.0
        %819 = vmatpush1.msra.mxu0 0.0
        %820 = vmatprep.mubr.f32.mxu0 0.0
        %821 = vmatmul.mubr.f32.gmra.mrb[0].mxu0 %v733
        %v822 = vpop.f32.mrb[0].mxu0
        %v823 = vadd.f32 %v714, %v822
        %v824 = vpop.f32.mrb[0].mxu0
        %v825 = vadd.f32 %v718, %v824
        %826 = vmatprep.mubr.f32.mxu0 0.0
        %827 = vmatmul.mubr.f32.gmra.mrb[0].mxu0 %v736
        %v828 = vpop.f32.mrb[0].mxu0
        %v829 = vadd.f32 %v714, %v828
        %v830 = vpop.f32.mrb[0].mxu0
        %v831 = vadd.f32 %v718, %v830
        %832 = vmatprep.mubr.f32.mxu0 0.0
        %833 = vmatmul.mubr.f32.gmra.mrb[0].mxu0 %v739
        %v834 = vpop.f32.mrb[0].mxu0
        %v835 = vadd.f32 %v714, %v834
        %v836 = vpop.f32.mrb[0].mxu0
        %v837 = vadd.f32 %v718, %v836
        %838 = vmatprep.mubr.f32.mxu0 0.0
        %839 = vmatmul.mubr.f32.gmra.mrb[0].mxu0 %v742
        %v840 = vpop.f32.mrb[0].mxu0
        %v841 = vadd.f32 %v714, %v840
        %v842 = vpop.f32.mrb[0].mxu0
        %v843 = vadd.f32 %v718, %v842
        %844 = vmatprep.mubr.f32.mxu0 0.0
        %845 = vmatmul.mubr.f32.gmra.mrb[0].mxu0 %v745
        %v846 = vpop.f32.mrb[0].mxu0
        %v847 = vadd.f32 %v714, %v846
        %v848 = vpop.f32.mrb[0].mxu0
        %v849 = vadd.f32 %v718, %v848
        %850 = vmatprep.mubr.f32.mxu0 0.0
        %851 = vmatmul.mubr.f32.gmra.mrb[0].mxu0 %v748
        %v852 = vpop.f32.mrb[0].mxu0
        %v853 = vadd.f32 %v714, %v852
        %v854 = vpop.f32.mrb[0].mxu0
        %v855 = vadd.f32 %v718, %v854
        %856 = vmatprep.mubr.f32.mxu0 0.0
        %857 = vmatmul.mubr.f32.gmra.mrb[0].mxu0 %v751
        %v858 = vpop.f32.mrb[0].mxu0
        %v859 = vadd.f32 %v714, %v858
        %v860 = vpop.f32.mrb[0].mxu0
        %v861 = vadd.f32 %v718, %v860
        %862 = vmatprep.mubr.f32.mxu0 0.0
        %863 = vmatmul.mubr.f32.gmra.mrb[0].mxu0 %v754
        %v864 = vpop.f32.mrb[0].mxu0
        %v865 = vadd.f32 %v714, %v864
        %v866 = vpop.f32.mrb[0].mxu0
        %v867 = vadd.f32 %v718, %v866
        %868 = vdwg.mxu0
        %869 = vmatprep.subr.mxu0 %v696
        %870 = vmatpush1.msra.mxu0 %v695
        %871 = vmatprep.subr.mxu0 %v700
        %872 = vmatpush1.msra.mxu0 %v699
        %873 = vmatprep.subr.mxu0 %v704
        %874 = vmatpush1.msra.mxu0 %v703
        %875 = vmatprep.subr.mxu0 %v708
        %876 = vmatpush1.msra.mxu0 %v707
        %877 = vmatprep.subr.mxu0 0.0
        %878 = vmatpush1.msra.mxu0 0.0
        %879 = vmatprep.subr.mxu0 0.0
        %880 = vmatpush1.msra.mxu0 0.0
        %881 = vmatprep.subr.mxu0 0.0
        %882 = vmatpush1.msra.mxu0 0.0
        %883 = vmatprep.subr.mxu0 0.0
        %884 = vmatpush1.msra.mxu0 0.0
        %885 = vmatprep.subr.mxu0 0.0
        %886 = vmatpush1.msra.mxu0 0.0
        %887 = vmatprep.subr.mxu0 0.0
        %888 = vmatpush1.msra.mxu0 0.0
        %889 = vmatprep.subr.mxu0 0.0
        %890 = vmatpush1.msra.mxu0 0.0
        %891 = vmatprep.subr.mxu0 0.0
        %892 = vmatpush1.msra.mxu0 0.0
        %893 = vmatprep.subr.mxu0 0.0
        %894 = vmatpush1.msra.mxu0 0.0
        %895 = vmatprep.subr.mxu0 0.0
        %896 = vmatpush1.msra.mxu0 0.0
        %897 = vmatprep.subr.mxu0 0.0
        %898 = vmatpush1.msra.mxu0 0.0
        %899 = vmatprep.subr.mxu0 0.0
        %900 = vmatpush1.msra.mxu0 0.0
        %901 = vmatprep.subr.mxu0 0.0
        %902 = vmatpush1.msra.mxu0 0.0
        %903 = vmatprep.subr.mxu0 0.0
        %904 = vmatpush1.msra.mxu0 0.0
        %905 = vmatprep.subr.mxu0 0.0
        %906 = vmatpush1.msra.mxu0 0.0
        %907 = vmatprep.subr.mxu0 0.0
        %908 = vmatpush1.msra.mxu0 0.0
        %909 = vmatprep.subr.mxu0 0.0
        %910 = vmatpush1.msra.mxu0 0.0
        %911 = vmatprep.subr.mxu0 0.0
        %912 = vmatpush1.msra.mxu0 0.0
        %913 = vmatprep.subr.mxu0 0.0
        %914 = vmatpush1.msra.mxu0 0.0
        %915 = vmatprep.subr.mxu0 0.0
        %916 = vmatpush1.msra.mxu0 0.0
        %917 = vmatprep.subr.mxu0 0.0
        %918 = vmatpush1.msra.mxu0 0.0
        %919 = vmatprep.subr.mxu0 0.0
        %920 = vmatpush1.msra.mxu0 0.0
        %921 = vmatprep.subr.mxu0 0.0
        %922 = vmatpush1.msra.mxu0 0.0
        %923 = vmatprep.subr.mxu0 0.0
        %924 = vmatpush1.msra.mxu0 0.0
        %925 = vmatprep.subr.mxu0 0.0
        %926 = vmatpush1.msra.mxu0 0.0
        %927 = vmatprep.subr.mxu0 0.0
        %928 = vmatpush1.msra.mxu0 0.0
        %929 = vmatprep.subr.mxu0 0.0
        %930 = vmatpush1.msra.mxu0 0.0
        %931 = vmatprep.subr.mxu0 0.0
        %932 = vmatpush1.msra.mxu0 0.0
        %933 = vmatprep.mubr.f32.mxu0 0.0
        %934 = vmatmul.mubr.f32.gmra.mrb[0].mxu0 %v733
        %v935 = vpop.f32.mrb[0].mxu0
        %v936 = vadd.f32 %v722, %v935
        %v937 = vpop.f32.mrb[0].mxu0
        %v938 = vadd.f32 %v726, %v937
        %939 = vmatprep.mubr.f32.mxu0 0.0
        %940 = vmatmul.mubr.f32.gmra.mrb[0].mxu0 %v736
        %v941 = vpop.f32.mrb[0].mxu0
        %v942 = vadd.f32 %v722, %v941
        %v943 = vpop.f32.mrb[0].mxu0
        %v944 = vadd.f32 %v726, %v943
        %945 = vmatprep.mubr.f32.mxu0 0.0
        %946 = vmatmul.mubr.f32.gmra.mrb[0].mxu0 %v739
        %v947 = vpop.f32.mrb[0].mxu0
        %v948 = vadd.f32 %v722, %v947
        %v949 = vpop.f32.mrb[0].mxu0
        %v950 = vadd.f32 %v726, %v949
        %951 = vmatprep.mubr.f32.mxu0 0.0
        %952 = vmatmul.mubr.f32.gmra.mrb[0].mxu0 %v742
        %v953 = vpop.f32.mrb[0].mxu0
        %v954 = vadd.f32 %v722, %v953
        %v955 = vpop.f32.mrb[0].mxu0
        %v956 = vadd.f32 %v726, %v955
        %957 = vmatprep.mubr.f32.mxu0 0.0
        %958 = vmatmul.mubr.f32.gmra.mrb[0].mxu0 %v745
        %v959 = vpop.f32.mrb[0].mxu0
        %v960 = vadd.f32 %v722, %v959
        %v961 = vpop.f32.mrb[0].mxu0
        %v962 = vadd.f32 %v726, %v961
        %963 = vmatprep.mubr.f32.mxu0 0.0
        %964 = vmatmul.mubr.f32.gmra.mrb[0].mxu0 %v748
        %v965 = vpop.f32.mrb[0].mxu0
        %v966 = vadd.f32 %v722, %v965
        %v967 = vpop.f32.mrb[0].mxu0
        %v968 = vadd.f32 %v726, %v967
        %969 = vmatprep.mubr.f32.mxu0 0.0
        %970 = vmatmul.mubr.f32.gmra.mrb[0].mxu0 %v751
        %v971 = vpop.f32.mrb[0].mxu0
        %v972 = vadd.f32 %v722, %v971
        %v973 = vpop.f32.mrb[0].mxu0
        %v974 = vadd.f32 %v726, %v973
        %975 = vmatprep.mubr.f32.mxu0 0.0
        %976 = vmatmul.mubr.f32.gmra.mrb[0].mxu0 %v754
        %v977 = vpop.f32.mrb[0].mxu0
        %v978 = vadd.f32 %v722, %v977
        %v979 = vpop.f32.mrb[0].mxu0
        %v980 = vadd.f32 %v726, %v979
        %981 = vdwg.mxu0
        %982 = vst [vmem:[#allocation2] sm:$0xff] %v823
        %983 = vst [vmem:[#allocation2 + $0x8] sm:$0xff] %v825
        %984 = vst [vmem:[#allocation2 + $0x10] sm:$0xff] %v936
        %985 = vst [vmem:[#allocation2 + $0x18] sm:$0xff] %v938
        %986 = vst [vmem:[#allocation2 + $0x20] sm:$0xff] %v829
        %987 = vst [vmem:[#allocation2 + $0x28] sm:$0xff] %v831
        %988 = vst [vmem:[#allocation2 + $0x30] sm:$0xff] %v942
        %989 = vst [vmem:[#allocation2 + $0x38] sm:$0xff] %v944
        %990 = vst [vmem:[#allocation2 + $0x40] sm:$0xff] %v835
        %991 = vst [vmem:[#allocation2 + $0x48] sm:$0xff] %v837
        %992 = vst [vmem:[#allocation2 + $0x50] sm:$0xff] %v948
        %993 = vst [vmem:[#allocation2 + $0x58] sm:$0xff] %v950
        %994 = vst [vmem:[#allocation2 + $0x60] sm:$0xff] %v841
        %995 = vst [vmem:[#allocation2 + $0x68] sm:$0xff] %v843
        %996 = vst [vmem:[#allocation2 + $0x70] sm:$0xff] %v954
        %997 = vst [vmem:[#allocation2 + $0x78] sm:$0xff] %v956
        %998 = vst [vmem:[#allocation2 + $0x80] sm:$0xff] %v847
        %999 = vst [vmem:[#allocation2 + $0x88] sm:$0xff] %v849
        %1000 = vst [vmem:[#allocation2 + $0x90] sm:$0xff] %v960
        %1001 = vst [vmem:[#allocation2 + $0x98] sm:$0xff] %v962
        %1002 = vst [vmem:[#allocation2 + $0xa0] sm:$0xff] %v853
        %1003 = vst [vmem:[#allocation2 + $0xa8] sm:$0xff] %v855
        %1004 = vst [vmem:[#allocation2 + $0xb0] sm:$0xff] %v966
        %1005 = vst [vmem:[#allocation2 + $0xb8] sm:$0xff] %v968
        %1006 = vst [vmem:[#allocation2 + $0xc0] sm:$0xff] %v859
        %1007 = vst [vmem:[#allocation2 + $0xc8] sm:$0xff] %v861
        %1008 = vst [vmem:[#allocation2 + $0xd0] sm:$0xff] %v972
        %1009 = vst [vmem:[#allocation2 + $0xd8] sm:$0xff] %v974
        %1010 = vst [vmem:[#allocation2 + $0xe0] sm:$0xff] %v865
        %1011 = vst [vmem:[#allocation2 + $0xe8] sm:$0xff] %v867
        %1012 = vst [vmem:[#allocation2 + $0xf0] sm:$0xff] %v978
        %1013 = vst [vmem:[#allocation2 + $0xf8] sm:$0xff] %v980
        %v1014 = vld [vmem:[#allocation2] sm:$0xff]
        %v1015 = vld [vmem:[#allocation2 + $0x8] sm:$0xff]
        %v1016 = vld [vmem:[#allocation2 + $0x10] sm:$0xff]
        %v1017 = vld [vmem:[#allocation2 + $0x18] sm:$0xff]
        %s1018 = scalar_lea.vmem [#allocation2], 224
        %v1019 = vld [vmem:[%s1018] sm:$0xff]
        %v1020 = vld [vmem:[%s1018 + $0x8] sm:$0xff]
        %v1021 = vld [vmem:[%s1018 + $0x10] sm:$0xff]
        %v1022 = vld [vmem:[%s1018 + $0x18] sm:$0xff]
        %v1023 = vsel %vm681, 1, 0
        %v1024 = vsel %vm682, 1, 0
        %v1025 = vsel %vm683, 1, 0
        %v1026 = vsel %vm684, 1, 0
        %vm1027 = vcmp.eq.s32.totalorder %v1023, 1
        %vm1028 = vcmp.eq.s32.totalorder %v1024, 1
        %vm1029 = vcmp.eq.s32.totalorder %v1025, 1
        %vm1030 = vcmp.eq.s32.totalorder %v1026, 1
        %v1031 = vsel %vm1027, %v1014, %v1019
        %v1032 = vsel %vm1028, %v1015, %v1020
        %v1033 = vsel %vm1029, %v1016, %v1021
        %v1034 = vsel %vm1030, %v1017, %v1022
        %1035 = vst [vmem:[#allocation4] sm:$0xff] %v1031
        %1036 = vst [vmem:[#allocation4 + $0x8] sm:$0xff] %v1032
        %1037 = vst [vmem:[#allocation4 + $0x10] sm:$0xff] %v1033
        %1038 = vst [vmem:[#allocation4 + $0x18] sm:$0xff] %v1034
        %s1039 = scalar_lea.vmem [#allocation2], 32
        %v1040 = vld [vmem:[%s1039] sm:$0xff]
        %v1041 = vld [vmem:[%s1039 + $0x8] sm:$0xff]
        %v1042 = vld [vmem:[%s1039 + $0x10] sm:$0xff]
        %v1043 = vld [vmem:[%s1039 + $0x18] sm:$0xff]
        %s1044 = scalar_lea.vmem [#allocation2], 192
        %v1045 = vld [vmem:[%s1044] sm:$0xff]
        %v1046 = vld [vmem:[%s1044 + $0x8] sm:$0xff]
        %v1047 = vld [vmem:[%s1044 + $0x10] sm:$0xff]
        %v1048 = vld [vmem:[%s1044 + $0x18] sm:$0xff]
        %v1049 = vsel %vm1027, %v1040, %v1045
        %v1050 = vsel %vm1028, %v1041, %v1046
        %v1051 = vsel %vm1029, %v1042, %v1047
        %v1052 = vsel %vm1030, %v1043, %v1048
        %s1053 = scalar_lea.vmem [#allocation4], 32
        %1054 = vst [vmem:[%s1053] sm:$0xff] %v1049
        %1055 = vst [vmem:[%s1053 + $0x8] sm:$0xff] %v1050
        %1056 = vst [vmem:[%s1053 + $0x10] sm:$0xff] %v1051
        %1057 = vst [vmem:[%s1053 + $0x18] sm:$0xff] %v1052
        %s1058 = scalar_lea.vmem [#allocation2], 64
        %v1059 = vld [vmem:[%s1058] sm:$0xff]
        %v1060 = vld [vmem:[%s1058 + $0x8] sm:$0xff]
        %v1061 = vld [vmem:[%s1058 + $0x10] sm:$0xff]
        %v1062 = vld [vmem:[%s1058 + $0x18] sm:$0xff]
        %s1063 = scalar_lea.vmem [#allocation2], 160
        %v1064 = vld [vmem:[%s1063] sm:$0xff]
        %v1065 = vld [vmem:[%s1063 + $0x8] sm:$0xff]
        %v1066 = vld [vmem:[%s1063 + $0x10] sm:$0xff]
        %v1067 = vld [vmem:[%s1063 + $0x18] sm:$0xff]
        %v1068 = vsel %vm1027, %v1059, %v1064
        %v1069 = vsel %vm1028, %v1060, %v1065
        %v1070 = vsel %vm1029, %v1061, %v1066
        %v1071 = vsel %vm1030, %v1062, %v1067
        %s1072 = scalar_lea.vmem [#allocation4], 64
        %1073 = vst [vmem:[%s1072] sm:$0xff] %v1068
        %1074 = vst [vmem:[%s1072 + $0x8] sm:$0xff] %v1069
        %1075 = vst [vmem:[%s1072 + $0x10] sm:$0xff] %v1070
        %1076 = vst [vmem:[%s1072 + $0x18] sm:$0xff] %v1071
        %s1077 = scalar_lea.vmem [#allocation2], 96
        %v1078 = vld [vmem:[%s1077] sm:$0xff]
        %v1079 = vld [vmem:[%s1077 + $0x8] sm:$0xff]
        %v1080 = vld [vmem:[%s1077 + $0x10] sm:$0xff]
        %v1081 = vld [vmem:[%s1077 + $0x18] sm:$0xff]
        %s1082 = scalar_lea.vmem [#allocation2], 128
        %v1083 = vld [vmem:[%s1082] sm:$0xff]
        %v1084 = vld [vmem:[%s1082 + $0x8] sm:$0xff]
        %v1085 = vld [vmem:[%s1082 + $0x10] sm:$0xff]
        %v1086 = vld [vmem:[%s1082 + $0x18] sm:$0xff]
        %v1087 = vsel %vm1027, %v1078, %v1083
        %v1088 = vsel %vm1028, %v1079, %v1084
        %v1089 = vsel %vm1029, %v1080, %v1085
        %v1090 = vsel %vm1030, %v1081, %v1086
        %s1091 = scalar_lea.vmem [#allocation4], 96
        %1092 = vst [vmem:[%s1091] sm:$0xff] %v1087
        %1093 = vst [vmem:[%s1091 + $0x8] sm:$0xff] %v1088
        %1094 = vst [vmem:[%s1091 + $0x10] sm:$0xff] %v1089
        %1095 = vst [vmem:[%s1091 + $0x18] sm:$0xff] %v1090
        %v1096 = vld [vmem:[%s1082] sm:$0xff]
        %v1097 = vld [vmem:[%s1082 + $0x8] sm:$0xff]
        %v1098 = vld [vmem:[%s1082 + $0x10] sm:$0xff]
        %v1099 = vld [vmem:[%s1082 + $0x18] sm:$0xff]
        %v1100 = vld [vmem:[%s1077] sm:$0xff]
        %v1101 = vld [vmem:[%s1077 + $0x8] sm:$0xff]
        %v1102 = vld [vmem:[%s1077 + $0x10] sm:$0xff]
        %v1103 = vld [vmem:[%s1077 + $0x18] sm:$0xff]
        %v1104 = vsel %vm1027, %v1096, %v1100
        %v1105 = vsel %vm1028, %v1097, %v1101
        %v1106 = vsel %vm1029, %v1098, %v1102
        %v1107 = vsel %vm1030, %v1099, %v1103
        %s1108 = scalar_lea.vmem [#allocation4], 128
        %1109 = vst [vmem:[%s1108] sm:$0xff] %v1104
        %1110 = vst [vmem:[%s1108 + $0x8] sm:$0xff] %v1105
        %1111 = vst [vmem:[%s1108 + $0x10] sm:$0xff] %v1106
        %1112 = vst [vmem:[%s1108 + $0x18] sm:$0xff] %v1107
        %v1113 = vld [vmem:[%s1063] sm:$0xff]
        %v1114 = vld [vmem:[%s1063 + $0x8] sm:$0xff]
        %v1115 = vld [vmem:[%s1063 + $0x10] sm:$0xff]
        %v1116 = vld [vmem:[%s1063 + $0x18] sm:$0xff]
        %v1117 = vld [vmem:[%s1058] sm:$0xff]
        %v1118 = vld [vmem:[%s1058 + $0x8] sm:$0xff]
        %v1119 = vld [vmem:[%s1058 + $0x10] sm:$0xff]
        %v1120 = vld [vmem:[%s1058 + $0x18] sm:$0xff]
        %v1121 = vsel %vm1027, %v1113, %v1117
        %v1122 = vsel %vm1028, %v1114, %v1118
        %v1123 = vsel %vm1029, %v1115, %v1119
        %v1124 = vsel %vm1030, %v1116, %v1120
        %s1125 = scalar_lea.vmem [#allocation4], 160
        %1126 = vst [vmem:[%s1125] sm:$0xff] %v1121
        %1127 = vst [vmem:[%s1125 + $0x8] sm:$0xff] %v1122
        %1128 = vst [vmem:[%s1125 + $0x10] sm:$0xff] %v1123
        %1129 = vst [vmem:[%s1125 + $0x18] sm:$0xff] %v1124
        %v1130 = vld [vmem:[%s1044] sm:$0xff]
        %v1131 = vld [vmem:[%s1044 + $0x8] sm:$0xff]
        %v1132 = vld [vmem:[%s1044 + $0x10] sm:$0xff]
        %v1133 = vld [vmem:[%s1044 + $0x18] sm:$0xff]
        %v1134 = vld [vmem:[%s1039] sm:$0xff]
        %v1135 = vld [vmem:[%s1039 + $0x8] sm:$0xff]
        %v1136 = vld [vmem:[%s1039 + $0x10] sm:$0xff]
        %v1137 = vld [vmem:[%s1039 + $0x18] sm:$0xff]
        %v1138 = vsel %vm1027, %v1130, %v1134
        %v1139 = vsel %vm1028, %v1131, %v1135
        %v1140 = vsel %vm1029, %v1132, %v1136
        %v1141 = vsel %vm1030, %v1133, %v1137
        %s1142 = scalar_lea.vmem [#allocation4], 192
        %1143 = vst [vmem:[%s1142] sm:$0xff] %v1138
        %1144 = vst [vmem:[%s1142 + $0x8] sm:$0xff] %v1139
        %1145 = vst [vmem:[%s1142 + $0x10] sm:$0xff] %v1140
        %1146 = vst [vmem:[%s1142 + $0x18] sm:$0xff] %v1141
        %v1147 = vld [vmem:[%s1018] sm:$0xff]
        %v1148 = vld [vmem:[%s1018 + $0x8] sm:$0xff]
        %v1149 = vld [vmem:[%s1018 + $0x10] sm:$0xff]
        %v1150 = vld [vmem:[%s1018 + $0x18] sm:$0xff]
        %v1151 = vld [vmem:[#allocation2] sm:$0xff]
        %v1152 = vld [vmem:[#allocation2 + $0x8] sm:$0xff]
        %v1153 = vld [vmem:[#allocation2 + $0x10] sm:$0xff]
        %v1154 = vld [vmem:[#allocation2 + $0x18] sm:$0xff]
        %v1155 = vsel %vm1027, %v1147, %v1151
        %v1156 = vsel %vm1028, %v1148, %v1152
        %v1157 = vsel %vm1029, %v1149, %v1153
        %v1158 = vsel %vm1030, %v1150, %v1154
        %s1159 = scalar_lea.vmem [#allocation4], 224
        %1160 = vst [vmem:[%s1159] sm:$0xff] %v1155
        %1161 = vst [vmem:[%s1159 + $0x8] sm:$0xff] %v1156
        %1162 = vst [vmem:[%s1159 + $0x10] sm:$0xff] %v1157
        %1163 = vst [vmem:[%s1159 + $0x18] sm:$0xff] %v1158
        %v1164 = vld [vmem:[%s597] sm:$0xff]
        %v1165 = vld [vmem:[%s604] sm:$0xff]
        %v1166 = vld [vmem:[#allocation4] sm:$0xff]
        %v1167 = vld [vmem:[#allocation4 + $0x8] sm:$0xff]
        %v1168 = vld [vmem:[#allocation4 + $0x10] sm:$0xff]
        %v1169 = vld [vmem:[#allocation4 + $0x18] sm:$0xff]
        %v1170 = vld [vmem:[%s2] sm:$0xff]
        %v1171 = vld [vmem:[%s2 + $0x8] sm:$0xff]
        %v1172 = vld [vmem:[%s2 + $0x10] sm:$0xff]
        %v1173 = vld [vmem:[%s2 + $0x18] sm:$0xff]
        %v1174 = vld [vmem:[%s2 + $0x20] sm:$0xff]
        %v1175 = vld [vmem:[%s2 + $0x28] sm:$0xff]
        %v1176 = vld [vmem:[%s2 + $0x30] sm:$0xff]
        %v1177 = vld [vmem:[%s2 + $0x38] sm:$0xff]
        %v1178 = vld [vmem:[%s2 + $0x40] sm:$0xff]
        %v1179 = vld [vmem:[%s2 + $0x48] sm:$0xff]
        %v1180 = vld [vmem:[%s2 + $0x50] sm:$0xff]
        %v1181 = vld [vmem:[%s2 + $0x58] sm:$0xff]
        %v1182 = vld [vmem:[%s2 + $0x60] sm:$0xff]
        %v1183 = vld [vmem:[%s2 + $0x68] sm:$0xff]
        %v1184 = vld [vmem:[%s2 + $0x70] sm:$0xff]
        %v1185 = vld [vmem:[%s2 + $0x78] sm:$0xff]
        %v1186 = vld [vmem:[%s2 + $0x80] sm:$0xff]
        %v1187 = vld [vmem:[%s2 + $0x88] sm:$0xff]
        %v1188 = vld [vmem:[%s2 + $0x90] sm:$0xff]
        %v1189 = vld [vmem:[%s2 + $0x98] sm:$0xff]
        %v1190 = vld [vmem:[%s2 + $0xa0] sm:$0xff]
        %v1191 = vld [vmem:[%s2 + $0xa8] sm:$0xff]
        %v1192 = vld [vmem:[%s2 + $0xb0] sm:$0xff]
        %v1193 = vld [vmem:[%s2 + $0xb8] sm:$0xff]
        %v1194 = vld [vmem:[%s2 + $0xc0] sm:$0xff]
        %v1195 = vld [vmem:[%s2 + $0xc8] sm:$0xff]
        %v1196 = vld [vmem:[%s2 + $0xd0] sm:$0xff]
        %v1197 = vld [vmem:[%s2 + $0xd8] sm:$0xff]
        %v1198 = vld [vmem:[%s2 + $0xe0] sm:$0xff]
        %v1199 = vld [vmem:[%s2 + $0xe8] sm:$0xff]
        %v1200 = vld [vmem:[%s2 + $0xf0] sm:$0xff]
        %v1201 = vld [vmem:[%s2 + $0xf8] sm:$0xff]
        %v1202 = vld [vmem:[%s2 + $0x100] sm:$0xff]
        %v1203 = vld [vmem:[%s2 + $0x108] sm:$0xff]
        %v1204 = vld [vmem:[%s2 + $0x110] sm:$0xff]
        %v1205 = vld [vmem:[%s2 + $0x118] sm:$0xff]
        %v1206 = vld [vmem:[%s2 + $0x120] sm:$0xff]
        %v1207 = vld [vmem:[%s2 + $0x128] sm:$0xff]
        %v1208 = vld [vmem:[%s2 + $0x130] sm:$0xff]
        %v1209 = vld [vmem:[%s2 + $0x138] sm:$0xff]
        %v1210 = vld [vmem:[%s2 + $0x140] sm:$0xff]
        %v1211 = vld [vmem:[%s2 + $0x148] sm:$0xff]
        %v1212 = vld [vmem:[%s2 + $0x150] sm:$0xff]
        %v1213 = vld [vmem:[%s2 + $0x158] sm:$0xff]
        %v1214 = vld [vmem:[%s2 + $0x160] sm:$0xff]
        %v1215 = vld [vmem:[%s2 + $0x168] sm:$0xff]
        %v1216 = vld [vmem:[%s2 + $0x170] sm:$0xff]
        %v1217 = vld [vmem:[%s2 + $0x178] sm:$0xff]
        %v1218 = vld [vmem:[%s2 + $0x180] sm:$0xff]
        %v1219 = vld [vmem:[%s2 + $0x188] sm:$0xff]
        %v1220 = vld [vmem:[%s2 + $0x190] sm:$0xff]
        %v1221 = vld [vmem:[%s2 + $0x198] sm:$0xff]
        %v1222 = vld [vmem:[%s2 + $0x1a0] sm:$0xff]
        %v1223 = vld [vmem:[%s2 + $0x1a8] sm:$0xff]
        %v1224 = vld [vmem:[%s2 + $0x1b0] sm:$0xff]
        %v1225 = vld [vmem:[%s2 + $0x1b8] sm:$0xff]
        %v1226 = vld [vmem:[%s2 + $0x1c0] sm:$0xff]
        %v1227 = vld [vmem:[%s2 + $0x1c8] sm:$0xff]
        %v1228 = vld [vmem:[%s2 + $0x1d0] sm:$0xff]
        %v1229 = vld [vmem:[%s2 + $0x1d8] sm:$0xff]
        %v1230 = vld [vmem:[%s2 + $0x1e0] sm:$0xff]
        %v1231 = vld [vmem:[%s2 + $0x1e8] sm:$0xff]
        %v1232 = vld [vmem:[%s2 + $0x1f0] sm:$0xff]
        %v1233 = vld [vmem:[%s2 + $0x1f8] sm:$0xff]
        %1234 = vmatprep.subr.mxu0 %v1171
        %1235 = vmatpush1.msra.mxu0 %v1170
        %1236 = vmatprep.subr.mxu0 %v1175
        %1237 = vmatpush1.msra.mxu0 %v1174
        %1238 = vmatprep.subr.mxu0 %v1179
        %1239 = vmatpush1.msra.mxu0 %v1178
        %1240 = vmatprep.subr.mxu0 %v1183
        %1241 = vmatpush1.msra.mxu0 %v1182
        %1242 = vmatprep.subr.mxu0 %v1187
        %1243 = vmatpush1.msra.mxu0 %v1186
        %1244 = vmatprep.subr.mxu0 %v1191
        %1245 = vmatpush1.msra.mxu0 %v1190
        %1246 = vmatprep.subr.mxu0 %v1195
        %1247 = vmatpush1.msra.mxu0 %v1194
        %1248 = vmatprep.subr.mxu0 %v1199
        %1249 = vmatpush1.msra.mxu0 %v1198
        %1250 = vmatprep.subr.mxu0 %v1203
        %1251 = vmatpush1.msra.mxu0 %v1202
        %1252 = vmatprep.subr.mxu0 %v1207
        %1253 = vmatpush1.msra.mxu0 %v1206
        %1254 = vmatprep.subr.mxu0 %v1211
        %1255 = vmatpush1.msra.mxu0 %v1210
        %1256 = vmatprep.subr.mxu0 %v1215
        %1257 = vmatpush1.msra.mxu0 %v1214
        %1258 = vmatprep.subr.mxu0 %v1219
        %1259 = vmatpush1.msra.mxu0 %v1218
        %1260 = vmatprep.subr.mxu0 %v1223
        %1261 = vmatpush1.msra.mxu0 %v1222
        %1262 = vmatprep.subr.mxu0 %v1227
        %1263 = vmatpush1.msra.mxu0 %v1226
        %1264 = vmatprep.subr.mxu0 %v1231
        %1265 = vmatpush1.msra.mxu0 %v1230
        %1266 = vmatprep.subr.mxu0 0.0
        %1267 = vmatpush1.msra.mxu0 0.0
        %1268 = vmatprep.subr.mxu0 0.0
        %1269 = vmatpush1.msra.mxu0 0.0
        %1270 = vmatprep.subr.mxu0 0.0
        %1271 = vmatpush1.msra.mxu0 0.0
        %1272 = vmatprep.subr.mxu0 0.0
        %1273 = vmatpush1.msra.mxu0 0.0
        %1274 = vmatprep.subr.mxu0 0.0
        %1275 = vmatpush1.msra.mxu0 0.0
        %1276 = vmatprep.subr.mxu0 0.0
        %1277 = vmatpush1.msra.mxu0 0.0
        %1278 = vmatprep.subr.mxu0 0.0
        %1279 = vmatpush1.msra.mxu0 0.0
        %1280 = vmatprep.subr.mxu0 0.0
        %1281 = vmatpush1.msra.mxu0 0.0
        %1282 = vmatprep.subr.mxu0 0.0
        %1283 = vmatpush1.msra.mxu0 0.0
        %1284 = vmatprep.subr.mxu0 0.0
        %1285 = vmatpush1.msra.mxu0 0.0
        %1286 = vmatprep.subr.mxu0 0.0
        %1287 = vmatpush1.msra.mxu0 0.0
        %1288 = vmatprep.subr.mxu0 0.0
        %1289 = vmatpush1.msra.mxu0 0.0
        %1290 = vmatprep.subr.mxu0 0.0
        %1291 = vmatpush1.msra.mxu0 0.0
        %1292 = vmatprep.subr.mxu0 0.0
        %1293 = vmatpush1.msra.mxu0 0.0
        %1294 = vmatprep.subr.mxu0 0.0
        %1295 = vmatpush1.msra.mxu0 0.0
        %1296 = vmatprep.subr.mxu0 0.0
        %1297 = vmatpush1.msra.mxu0 0.0
        %1298 = vmatprep.mubr.f32.mxu0 0.0
        %1299 = vmatmul.mubr.f32.gmra.mrb[0].mxu0 %v1164
        %v1300 = vpop.f32.mrb[0].mxu0
        %v1301 = vadd.f32 0.0, %v1300
        %v1302 = vpop.f32.mrb[0].mxu0
        %v1303 = vadd.f32 0.0, %v1302
        %1304 = vdwg.mxu0
        %1305 = vmatprep.subr.mxu0 %v1173
        %1306 = vmatpush1.msra.mxu0 %v1172
        %1307 = vmatprep.subr.mxu0 %v1177
        %1308 = vmatpush1.msra.mxu0 %v1176
        %1309 = vmatprep.subr.mxu0 %v1181
        %1310 = vmatpush1.msra.mxu0 %v1180
        %1311 = vmatprep.subr.mxu0 %v1185
        %1312 = vmatpush1.msra.mxu0 %v1184
        %1313 = vmatprep.subr.mxu0 %v1189
        %1314 = vmatpush1.msra.mxu0 %v1188
        %1315 = vmatprep.subr.mxu0 %v1193
        %1316 = vmatpush1.msra.mxu0 %v1192
        %1317 = vmatprep.subr.mxu0 %v1197
        %1318 = vmatpush1.msra.mxu0 %v1196
        %1319 = vmatprep.subr.mxu0 %v1201
        %1320 = vmatpush1.msra.mxu0 %v1200
        %1321 = vmatprep.subr.mxu0 %v1205
        %1322 = vmatpush1.msra.mxu0 %v1204
        %1323 = vmatprep.subr.mxu0 %v1209
        %1324 = vmatpush1.msra.mxu0 %v1208
        %1325 = vmatprep.subr.mxu0 %v1213
        %1326 = vmatpush1.msra.mxu0 %v1212
        %1327 = vmatprep.subr.mxu0 %v1217
        %1328 = vmatpush1.msra.mxu0 %v1216
        %1329 = vmatprep.subr.mxu0 %v1221
        %1330 = vmatpush1.msra.mxu0 %v1220
        %1331 = vmatprep.subr.mxu0 %v1225
        %1332 = vmatpush1.msra.mxu0 %v1224
        %1333 = vmatprep.subr.mxu0 %v1229
        %1334 = vmatpush1.msra.mxu0 %v1228
        %1335 = vmatprep.subr.mxu0 %v1233
        %1336 = vmatpush1.msra.mxu0 %v1232
        %1337 = vmatprep.subr.mxu0 0.0
        %1338 = vmatpush1.msra.mxu0 0.0
        %1339 = vmatprep.subr.mxu0 0.0
        %1340 = vmatpush1.msra.mxu0 0.0
        %1341 = vmatprep.subr.mxu0 0.0
        %1342 = vmatpush1.msra.mxu0 0.0
        %1343 = vmatprep.subr.mxu0 0.0
        %1344 = vmatpush1.msra.mxu0 0.0
        %1345 = vmatprep.subr.mxu0 0.0
        %1346 = vmatpush1.msra.mxu0 0.0
        %1347 = vmatprep.subr.mxu0 0.0
        %1348 = vmatpush1.msra.mxu0 0.0
        %1349 = vmatprep.subr.mxu0 0.0
        %1350 = vmatpush1.msra.mxu0 0.0
        %1351 = vmatprep.subr.mxu0 0.0
        %1352 = vmatpush1.msra.mxu0 0.0
        %1353 = vmatprep.subr.mxu0 0.0
        %1354 = vmatpush1.msra.mxu0 0.0
        %1355 = vmatprep.subr.mxu0 0.0
        %1356 = vmatpush1.msra.mxu0 0.0
        %1357 = vmatprep.subr.mxu0 0.0
        %1358 = vmatpush1.msra.mxu0 0.0
        %1359 = vmatprep.subr.mxu0 0.0
        %1360 = vmatpush1.msra.mxu0 0.0
        %1361 = vmatprep.subr.mxu0 0.0
        %1362 = vmatpush1.msra.mxu0 0.0
        %1363 = vmatprep.subr.mxu0 0.0
        %1364 = vmatpush1.msra.mxu0 0.0
        %1365 = vmatprep.subr.mxu0 0.0
        %1366 = vmatpush1.msra.mxu0 0.0
        %1367 = vmatprep.subr.mxu0 0.0
        %1368 = vmatpush1.msra.mxu0 0.0
        %1369 = vmatprep.mubr.f32.mxu0 0.0
        %1370 = vmatmul.mubr.f32.gmra.mrb[0].mxu0 %v1164
        %v1371 = vpop.f32.mrb[0].mxu0
        %v1372 = vadd.f32 0.0, %v1371
        %v1373 = vpop.f32.mrb[0].mxu0
        %v1374 = vadd.f32 0.0, %v1373
        %1375 = vdwg.mxu0
        %v1376 = vadd.f32 %v1166, %v1301
        %v1377 = vadd.f32 %v1167, %v1303
        %v1378 = vadd.f32 %v1168, %v1372
        %v1379 = vadd.f32 %v1169, %v1374
        %v1380 = vxor.u32 %v1376, 2147483648
        %v1381 = vmul.f32 %v1380, 1.442695
        %v1382 = vpow.pop %v1381
        %v1383 = vadd.f32 %v1382, 1.0
        %v1384 = vrcp.pop %v1383
        %v1385 = vmul.f32 1.0, %v1384
        %v1386 = vxor.u32 %v1377, 2147483648
        %v1387 = vmul.f32 %v1386, 1.442695
        %v1388 = vpow.pop %v1387
        %v1389 = vadd.f32 %v1388, 1.0
        %v1390 = vrcp.pop %v1389
        %v1391 = vmul.f32 1.0, %v1390
        %v1392 = vtanh.pop %v1378
        %v1393 = vxor.u32 %v1379, 2147483648
        %v1394 = vmul.f32 %v1393, 1.442695
        %v1395 = vpow.pop %v1394
        %v1396 = vadd.f32 %v1395, 1.0
        %v1397 = vrcp.pop %v1396
        %v1398 = vmul.f32 1.0, %v1397
        %v1399 = vmul.f32 %v1391, %v1165
        %v1400 = vmul.f32 %v1385, %v1392
        %v1401 = vadd.f32 %v1399, %v1400
        %v1402 = vtanh.pop %v1401
        %v1403 = vmul.f32 %v1398, %v1402
        %1404 = vst [vmem:[#allocation5] sm:$0xff] %v1403
        %v1405 = vld [vmem:[%s1053] sm:$0xff]
        %v1406 = vld [vmem:[%s1053 + $0x8] sm:$0xff]
        %v1407 = vld [vmem:[%s1053 + $0x10] sm:$0xff]
        %v1408 = vld [vmem:[%s1053 + $0x18] sm:$0xff]
        %v1409 = vld [vmem:[%s2] sm:$0xff]
        %v1410 = vld [vmem:[%s2 + $0x8] sm:$0xff]
        %v1411 = vld [vmem:[%s2 + $0x10] sm:$0xff]
        %v1412 = vld [vmem:[%s2 + $0x18] sm:$0xff]
        %v1413 = vld [vmem:[%s2 + $0x20] sm:$0xff]
        %v1414 = vld [vmem:[%s2 + $0x28] sm:$0xff]
        %v1415 = vld [vmem:[%s2 + $0x30] sm:$0xff]
        %v1416 = vld [vmem:[%s2 + $0x38] sm:$0xff]
        %v1417 = vld [vmem:[%s2 + $0x40] sm:$0xff]
        %v1418 = vld [vmem:[%s2 + $0x48] sm:$0xff]
        %v1419 = vld [vmem:[%s2 + $0x50] sm:$0xff]
        %v1420 = vld [vmem:[%s2 + $0x58] sm:$0xff]
        %v1421 = vld [vmem:[%s2 + $0x60] sm:$0xff]
        %v1422 = vld [vmem:[%s2 + $0x68] sm:$0xff]
        %v1423 = vld [vmem:[%s2 + $0x70] sm:$0xff]
        %v1424 = vld [vmem:[%s2 + $0x78] sm:$0xff]
        %v1425 = vld [vmem:[%s2 + $0x80] sm:$0xff]
        %v1426 = vld [vmem:[%s2 + $0x88] sm:$0xff]
        %v1427 = vld [vmem:[%s2 + $0x90] sm:$0xff]
        %v1428 = vld [vmem:[%s2 + $0x98] sm:$0xff]
        %v1429 = vld [vmem:[%s2 + $0xa0] sm:$0xff]
        %v1430 = vld [vmem:[%s2 + $0xa8] sm:$0xff]
        %v1431 = vld [vmem:[%s2 + $0xb0] sm:$0xff]
        %v1432 = vld [vmem:[%s2 + $0xb8] sm:$0xff]
        %v1433 = vld [vmem:[%s2 + $0xc0] sm:$0xff]
        %v1434 = vld [vmem:[%s2 + $0xc8] sm:$0xff]
        %v1435 = vld [vmem:[%s2 + $0xd0] sm:$0xff]
        %v1436 = vld [vmem:[%s2 + $0xd8] sm:$0xff]
        %v1437 = vld [vmem:[%s2 + $0xe0] sm:$0xff]
        %v1438 = vld [vmem:[%s2 + $0xe8] sm:$0xff]
        %v1439 = vld [vmem:[%s2 + $0xf0] sm:$0xff]
        %v1440 = vld [vmem:[%s2 + $0xf8] sm:$0xff]
        %v1441 = vld [vmem:[%s2 + $0x100] sm:$0xff]
        %v1442 = vld [vmem:[%s2 + $0x108] sm:$0xff]
        %v1443 = vld [vmem:[%s2 + $0x110] sm:$0xff]
        %v1444 = vld [vmem:[%s2 + $0x118] sm:$0xff]
        %v1445 = vld [vmem:[%s2 + $0x120] sm:$0xff]
        %v1446 = vld [vmem:[%s2 + $0x128] sm:$0xff]
        %v1447 = vld [vmem:[%s2 + $0x130] sm:$0xff]
        %v1448 = vld [vmem:[%s2 + $0x138] sm:$0xff]
        %v1449 = vld [vmem:[%s2 + $0x140] sm:$0xff]
        %v1450 = vld [vmem:[%s2 + $0x148] sm:$0xff]
        %v1451 = vld [vmem:[%s2 + $0x150] sm:$0xff]
        %v1452 = vld [vmem:[%s2 + $0x158] sm:$0xff]
        %v1453 = vld [vmem:[%s2 + $0x160] sm:$0xff]
        %v1454 = vld [vmem:[%s2 + $0x168] sm:$0xff]
        %v1455 = vld [vmem:[%s2 + $0x170] sm:$0xff]
        %v1456 = vld [vmem:[%s2 + $0x178] sm:$0xff]
        %v1457 = vld [vmem:[%s2 + $0x180] sm:$0xff]
        %v1458 = vld [vmem:[%s2 + $0x188] sm:$0xff]
        %v1459 = vld [vmem:[%s2 + $0x190] sm:$0xff]
        %v1460 = vld [vmem:[%s2 + $0x198] sm:$0xff]
        %v1461 = vld [vmem:[%s2 + $0x1a0] sm:$0xff]
        %v1462 = vld [vmem:[%s2 + $0x1a8] sm:$0xff]
        %v1463 = vld [vmem:[%s2 + $0x1b0] sm:$0xff]
        %v1464 = vld [vmem:[%s2 + $0x1b8] sm:$0xff]
        %v1465 = vld [vmem:[%s2 + $0x1c0] sm:$0xff]
        %v1466 = vld [vmem:[%s2 + $0x1c8] sm:$0xff]
        %v1467 = vld [vmem:[%s2 + $0x1d0] sm:$0xff]
        %v1468 = vld [vmem:[%s2 + $0x1d8] sm:$0xff]
        %v1469 = vld [vmem:[%s2 + $0x1e0] sm:$0xff]
        %v1470 = vld [vmem:[%s2 + $0x1e8] sm:$0xff]
        %v1471 = vld [vmem:[%s2 + $0x1f0] sm:$0xff]
        %v1472 = vld [vmem:[%s2 + $0x1f8] sm:$0xff]
        %1473 = vmatprep.subr.mxu0 %v1410
        %1474 = vmatpush1.msra.mxu0 %v1409
        %1475 = vmatprep.subr.mxu0 %v1414
        %1476 = vmatpush1.msra.mxu0 %v1413
        %1477 = vmatprep.subr.mxu0 %v1418
        %1478 = vmatpush1.msra.mxu0 %v1417
        %1479 = vmatprep.subr.mxu0 %v1422
        %1480 = vmatpush1.msra.mxu0 %v1421
        %1481 = vmatprep.subr.mxu0 %v1426
        %1482 = vmatpush1.msra.mxu0 %v1425
        %1483 = vmatprep.subr.mxu0 %v1430
        %1484 = vmatpush1.msra.mxu0 %v1429
        %1485 = vmatprep.subr.mxu0 %v1434
        %1486 = vmatpush1.msra.mxu0 %v1433
        %1487 = vmatprep.subr.mxu0 %v1438
        %1488 = vmatpush1.msra.mxu0 %v1437
        %1489 = vmatprep.subr.mxu0 %v1442
        %1490 = vmatpush1.msra.mxu0 %v1441
        %1491 = vmatprep.subr.mxu0 %v1446
        %1492 = vmatpush1.msra.mxu0 %v1445
        %1493 = vmatprep.subr.mxu0 %v1450
        %1494 = vmatpush1.msra.mxu0 %v1449
        %1495 = vmatprep.subr.mxu0 %v1454
        %1496 = vmatpush1.msra.mxu0 %v1453
        %1497 = vmatprep.subr.mxu0 %v1458
        %1498 = vmatpush1.msra.mxu0 %v1457
        %1499 = vmatprep.subr.mxu0 %v1462
        %1500 = vmatpush1.msra.mxu0 %v1461
        %1501 = vmatprep.subr.mxu0 %v1466
        %1502 = vmatpush1.msra.mxu0 %v1465
        %1503 = vmatprep.subr.mxu0 %v1470
        %1504 = vmatpush1.msra.mxu0 %v1469
        %1505 = vmatprep.subr.mxu0 0.0
        %1506 = vmatpush1.msra.mxu0 0.0
        %1507 = vmatprep.subr.mxu0 0.0
        %1508 = vmatpush1.msra.mxu0 0.0
        %1509 = vmatprep.subr.mxu0 0.0
        %1510 = vmatpush1.msra.mxu0 0.0
        %1511 = vmatprep.subr.mxu0 0.0
        %1512 = vmatpush1.msra.mxu0 0.0
        %1513 = vmatprep.subr.mxu0 0.0
        %1514 = vmatpush1.msra.mxu0 0.0
        %1515 = vmatprep.subr.mxu0 0.0
        %1516 = vmatpush1.msra.mxu0 0.0
        %1517 = vmatprep.subr.mxu0 0.0
        %1518 = vmatpush1.msra.mxu0 0.0
        %1519 = vmatprep.subr.mxu0 0.0
        %1520 = vmatpush1.msra.mxu0 0.0
        %1521 = vmatprep.subr.mxu0 0.0
        %1522 = vmatpush1.msra.mxu0 0.0
        %1523 = vmatprep.subr.mxu0 0.0
        %1524 = vmatpush1.msra.mxu0 0.0
        %1525 = vmatprep.subr.mxu0 0.0
        %1526 = vmatpush1.msra.mxu0 0.0
        %1527 = vmatprep.subr.mxu0 0.0
        %1528 = vmatpush1.msra.mxu0 0.0
        %1529 = vmatprep.subr.mxu0 0.0
        %1530 = vmatpush1.msra.mxu0 0.0
        %1531 = vmatprep.subr.mxu0 0.0
        %1532 = vmatpush1.msra.mxu0 0.0
        %1533 = vmatprep.subr.mxu0 0.0
        %1534 = vmatpush1.msra.mxu0 0.0
        %1535 = vmatprep.subr.mxu0 0.0
        %1536 = vmatpush1.msra.mxu0 0.0
        %1537 = vmatprep.mubr.f32.mxu0 0.0
        %1538 = vmatmul.mubr.f32.gmra.mrb[0].mxu0 %v1403
        %v1539 = vpop.f32.mrb[0].mxu0
        %v1540 = vadd.f32 0.0, %v1539
        %v1541 = vpop.f32.mrb[0].mxu0
        %v1542 = vadd.f32 0.0, %v1541
        %1543 = vdwg.mxu0
        %1544 = vmatprep.subr.mxu0 %v1412
        %1545 = vmatpush1.msra.mxu0 %v1411
        %1546 = vmatprep.subr.mxu0 %v1416
        %1547 = vmatpush1.msra.mxu0 %v1415
        %1548 = vmatprep.subr.mxu0 %v1420
        %1549 = vmatpush1.msra.mxu0 %v1419
        %1550 = vmatprep.subr.mxu0 %v1424
        %1551 = vmatpush1.msra.mxu0 %v1423
        %1552 = vmatprep.subr.mxu0 %v1428
        %1553 = vmatpush1.msra.mxu0 %v1427
        %1554 = vmatprep.subr.mxu0 %v1432
        %1555 = vmatpush1.msra.mxu0 %v1431
        %1556 = vmatprep.subr.mxu0 %v1436
        %1557 = vmatpush1.msra.mxu0 %v1435
        %1558 = vmatprep.subr.mxu0 %v1440
        %1559 = vmatpush1.msra.mxu0 %v1439
        %1560 = vmatprep.subr.mxu0 %v1444
        %1561 = vmatpush1.msra.mxu0 %v1443
        %1562 = vmatprep.subr.mxu0 %v1448
        %1563 = vmatpush1.msra.mxu0 %v1447
        %1564 = vmatprep.subr.mxu0 %v1452
        %1565 = vmatpush1.msra.mxu0 %v1451
        %1566 = vmatprep.subr.mxu0 %v1456
        %1567 = vmatpush1.msra.mxu0 %v1455
        %1568 = vmatprep.subr.mxu0 %v1460
        %1569 = vmatpush1.msra.mxu0 %v1459
        %1570 = vmatprep.subr.mxu0 %v1464
        %1571 = vmatpush1.msra.mxu0 %v1463
        %1572 = vmatprep.subr.mxu0 %v1468
        %1573 = vmatpush1.msra.mxu0 %v1467
        %1574 = vmatprep.subr.mxu0 %v1472
        %1575 = vmatpush1.msra.mxu0 %v1471
        %1576 = vmatprep.subr.mxu0 0.0
        %1577 = vmatpush1.msra.mxu0 0.0
        %1578 = vmatprep.subr.mxu0 0.0
        %1579 = vmatpush1.msra.mxu0 0.0
        %1580 = vmatprep.subr.mxu0 0.0
        %1581 = vmatpush1.msra.mxu0 0.0
        %1582 = vmatprep.subr.mxu0 0.0
        %1583 = vmatpush1.msra.mxu0 0.0
        %1584 = vmatprep.subr.mxu0 0.0
        %1585 = vmatpush1.msra.mxu0 0.0
        %1586 = vmatprep.subr.mxu0 0.0
        %1587 = vmatpush1.msra.mxu0 0.0
        %1588 = vmatprep.subr.mxu0 0.0
        %1589 = vmatpush1.msra.mxu0 0.0
        %1590 = vmatprep.subr.mxu0 0.0
        %1591 = vmatpush1.msra.mxu0 0.0
        %1592 = vmatprep.subr.mxu0 0.0
        %1593 = vmatpush1.msra.mxu0 0.0
        %1594 = vmatprep.subr.mxu0 0.0
        %1595 = vmatpush1.msra.mxu0 0.0
        %1596 = vmatprep.subr.mxu0 0.0
        %1597 = vmatpush1.msra.mxu0 0.0
        %1598 = vmatprep.subr.mxu0 0.0
        %1599 = vmatpush1.msra.mxu0 0.0
        %1600 = vmatprep.subr.mxu0 0.0
        %1601 = vmatpush1.msra.mxu0 0.0
        %1602 = vmatprep.subr.mxu0 0.0
        %1603 = vmatpush1.msra.mxu0 0.0
        %1604 = vmatprep.subr.mxu0 0.0
        %1605 = vmatpush1.msra.mxu0 0.0
        %1606 = vmatprep.subr.mxu0 0.0
        %1607 = vmatpush1.msra.mxu0 0.0
        %1608 = vmatprep.mubr.f32.mxu0 0.0
        %1609 = vmatmul.mubr.f32.gmra.mrb[0].mxu0 %v1403
        %v1610 = vpop.f32.mrb[0].mxu0
        %v1611 = vadd.f32 0.0, %v1610
        %v1612 = vpop.f32.mrb[0].mxu0
        %v1613 = vadd.f32 0.0, %v1612
        %1614 = vdwg.mxu0
        %v1615 = vadd.f32 %v1405, %v1540
        %v1616 = vadd.f32 %v1406, %v1542
        %v1617 = vadd.f32 %v1407, %v1611
        %v1618 = vadd.f32 %v1408, %v1613
        %v1619 = vxor.u32 %v1615, 2147483648
        %v1620 = vmul.f32 %v1619, 1.442695
        %v1621 = vpow.pop %v1620
        %v1622 = vadd.f32 %v1621, 1.0
        %v1623 = vrcp.pop %v1622
        %v1624 = vmul.f32 1.0, %v1623
        %v1625 = vxor.u32 %v1616, 2147483648
        %v1626 = vmul.f32 %v1625, 1.442695
        %v1627 = vpow.pop %v1626
        %v1628 = vadd.f32 %v1627, 1.0
        %v1629 = vrcp.pop %v1628
        %v1630 = vmul.f32 1.0, %v1629
        %v1631 = vtanh.pop %v1617
        %v1632 = vxor.u32 %v1618, 2147483648
        %v1633 = vmul.f32 %v1632, 1.442695
        %v1634 = vpow.pop %v1633
        %v1635 = vadd.f32 %v1634, 1.0
        %v1636 = vrcp.pop %v1635
        %v1637 = vmul.f32 1.0, %v1636
        %v1638 = vmul.f32 %v1630, %v1401
        %v1639 = vmul.f32 %v1624, %v1631
        %v1640 = vadd.f32 %v1638, %v1639
        %v1641 = vtanh.pop %v1640
        %v1642 = vmul.f32 %v1637, %v1641
        %s1643 = scalar_lea.vmem [#allocation5], 8
        %1644 = vst [vmem:[%s1643] sm:$0xff] %v1642
        %v1645 = vld [vmem:[%s1072] sm:$0xff]
        %v1646 = vld [vmem:[%s1072 + $0x8] sm:$0xff]
        %v1647 = vld [vmem:[%s1072 + $0x10] sm:$0xff]
        %v1648 = vld [vmem:[%s1072 + $0x18] sm:$0xff]
        %v1649 = vld [vmem:[%s2] sm:$0xff]
        %v1650 = vld [vmem:[%s2 + $0x8] sm:$0xff]
        %v1651 = vld [vmem:[%s2 + $0x10] sm:$0xff]
        %v1652 = vld [vmem:[%s2 + $0x18] sm:$0xff]
        %v1653 = vld [vmem:[%s2 + $0x20] sm:$0xff]
        %v1654 = vld [vmem:[%s2 + $0x28] sm:$0xff]
        %v1655 = vld [vmem:[%s2 + $0x30] sm:$0xff]
        %v1656 = vld [vmem:[%s2 + $0x38] sm:$0xff]
        %v1657 = vld [vmem:[%s2 + $0x40] sm:$0xff]
        %v1658 = vld [vmem:[%s2 + $0x48] sm:$0xff]
        %v1659 = vld [vmem:[%s2 + $0x50] sm:$0xff]
        %v1660 = vld [vmem:[%s2 + $0x58] sm:$0xff]
        %v1661 = vld [vmem:[%s2 + $0x60] sm:$0xff]
        %v1662 = vld [vmem:[%s2 + $0x68] sm:$0xff]
        %v1663 = vld [vmem:[%s2 + $0x70] sm:$0xff]
        %v1664 = vld [vmem:[%s2 + $0x78] sm:$0xff]
        %v1665 = vld [vmem:[%s2 + $0x80] sm:$0xff]
        %v1666 = vld [vmem:[%s2 + $0x88] sm:$0xff]
        %v1667 = vld [vmem:[%s2 + $0x90] sm:$0xff]
        %v1668 = vld [vmem:[%s2 + $0x98] sm:$0xff]
        %v1669 = vld [vmem:[%s2 + $0xa0] sm:$0xff]
        %v1670 = vld [vmem:[%s2 + $0xa8] sm:$0xff]
        %v1671 = vld [vmem:[%s2 + $0xb0] sm:$0xff]
        %v1672 = vld [vmem:[%s2 + $0xb8] sm:$0xff]
        %v1673 = vld [vmem:[%s2 + $0xc0] sm:$0xff]
        %v1674 = vld [vmem:[%s2 + $0xc8] sm:$0xff]
        %v1675 = vld [vmem:[%s2 + $0xd0] sm:$0xff]
        %v1676 = vld [vmem:[%s2 + $0xd8] sm:$0xff]
        %v1677 = vld [vmem:[%s2 + $0xe0] sm:$0xff]
        %v1678 = vld [vmem:[%s2 + $0xe8] sm:$0xff]
        %v1679 = vld [vmem:[%s2 + $0xf0] sm:$0xff]
        %v1680 = vld [vmem:[%s2 + $0xf8] sm:$0xff]
        %v1681 = vld [vmem:[%s2 + $0x100] sm:$0xff]
        %v1682 = vld [vmem:[%s2 + $0x108] sm:$0xff]
        %v1683 = vld [vmem:[%s2 + $0x110] sm:$0xff]
        %v1684 = vld [vmem:[%s2 + $0x118] sm:$0xff]
        %v1685 = vld [vmem:[%s2 + $0x120] sm:$0xff]
        %v1686 = vld [vmem:[%s2 + $0x128] sm:$0xff]
        %v1687 = vld [vmem:[%s2 + $0x130] sm:$0xff]
        %v1688 = vld [vmem:[%s2 + $0x138] sm:$0xff]
        %v1689 = vld [vmem:[%s2 + $0x140] sm:$0xff]
        %v1690 = vld [vmem:[%s2 + $0x148] sm:$0xff]
        %v1691 = vld [vmem:[%s2 + $0x150] sm:$0xff]
        %v1692 = vld [vmem:[%s2 + $0x158] sm:$0xff]
        %v1693 = vld [vmem:[%s2 + $0x160] sm:$0xff]
        %v1694 = vld [vmem:[%s2 + $0x168] sm:$0xff]
        %v1695 = vld [vmem:[%s2 + $0x170] sm:$0xff]
        %v1696 = vld [vmem:[%s2 + $0x178] sm:$0xff]
        %v1697 = vld [vmem:[%s2 + $0x180] sm:$0xff]
        %v1698 = vld [vmem:[%s2 + $0x188] sm:$0xff]
        %v1699 = vld [vmem:[%s2 + $0x190] sm:$0xff]
        %v1700 = vld [vmem:[%s2 + $0x198] sm:$0xff]
        %v1701 = vld [vmem:[%s2 + $0x1a0] sm:$0xff]
        %v1702 = vld [vmem:[%s2 + $0x1a8] sm:$0xff]
        %v1703 = vld [vmem:[%s2 + $0x1b0] sm:$0xff]
        %v1704 = vld [vmem:[%s2 + $0x1b8] sm:$0xff]
        %v1705 = vld [vmem:[%s2 + $0x1c0] sm:$0xff]
        %v1706 = vld [vmem:[%s2 + $0x1c8] sm:$0xff]
        %v1707 = vld [vmem:[%s2 + $0x1d0] sm:$0xff]
        %v1708 = vld [vmem:[%s2 + $0x1d8] sm:$0xff]
        %v1709 = vld [vmem:[%s2 + $0x1e0] sm:$0xff]
        %v1710 = vld [vmem:[%s2 + $0x1e8] sm:$0xff]
        %v1711 = vld [vmem:[%s2 + $0x1f0] sm:$0xff]
        %v1712 = vld [vmem:[%s2 + $0x1f8] sm:$0xff]
        %1713 = vmatprep.subr.mxu0 %v1650
        %1714 = vmatpush1.msra.mxu0 %v1649
        %1715 = vmatprep.subr.mxu0 %v1654
        %1716 = vmatpush1.msra.mxu0 %v1653
        %1717 = vmatprep.subr.mxu0 %v1658
        %1718 = vmatpush1.msra.mxu0 %v1657
        %1719 = vmatprep.subr.mxu0 %v1662
        %1720 = vmatpush1.msra.mxu0 %v1661
        %1721 = vmatprep.subr.mxu0 %v1666
        %1722 = vmatpush1.msra.mxu0 %v1665
        %1723 = vmatprep.subr.mxu0 %v1670
        %1724 = vmatpush1.msra.mxu0 %v1669
        %1725 = vmatprep.subr.mxu0 %v1674
        %1726 = vmatpush1.msra.mxu0 %v1673
        %1727 = vmatprep.subr.mxu0 %v1678
        %1728 = vmatpush1.msra.mxu0 %v1677
        %1729 = vmatprep.subr.mxu0 %v1682
        %1730 = vmatpush1.msra.mxu0 %v1681
        %1731 = vmatprep.subr.mxu0 %v1686
        %1732 = vmatpush1.msra.mxu0 %v1685
        %1733 = vmatprep.subr.mxu0 %v1690
        %1734 = vmatpush1.msra.mxu0 %v1689
        %1735 = vmatprep.subr.mxu0 %v1694
        %1736 = vmatpush1.msra.mxu0 %v1693
        %1737 = vmatprep.subr.mxu0 %v1698
        %1738 = vmatpush1.msra.mxu0 %v1697
        %1739 = vmatprep.subr.mxu0 %v1702
        %1740 = vmatpush1.msra.mxu0 %v1701
        %1741 = vmatprep.subr.mxu0 %v1706
        %1742 = vmatpush1.msra.mxu0 %v1705
        %1743 = vmatprep.subr.mxu0 %v1710
        %1744 = vmatpush1.msra.mxu0 %v1709
        %1745 = vmatprep.subr.mxu0 0.0
        %1746 = vmatpush1.msra.mxu0 0.0
        %1747 = vmatprep.subr.mxu0 0.0
        %1748 = vmatpush1.msra.mxu0 0.0
        %1749 = vmatprep.subr.mxu0 0.0
        %1750 = vmatpush1.msra.mxu0 0.0
        %1751 = vmatprep.subr.mxu0 0.0
        %1752 = vmatpush1.msra.mxu0 0.0
        %1753 = vmatprep.subr.mxu0 0.0
        %1754 = vmatpush1.msra.mxu0 0.0
        %1755 = vmatprep.subr.mxu0 0.0
        %1756 = vmatpush1.msra.mxu0 0.0
        %1757 = vmatprep.subr.mxu0 0.0
        %1758 = vmatpush1.msra.mxu0 0.0
        %1759 = vmatprep.subr.mxu0 0.0
        %1760 = vmatpush1.msra.mxu0 0.0
        %1761 = vmatprep.subr.mxu0 0.0
        %1762 = vmatpush1.msra.mxu0 0.0
        %1763 = vmatprep.subr.mxu0 0.0
        %1764 = vmatpush1.msra.mxu0 0.0
        %1765 = vmatprep.subr.mxu0 0.0
        %1766 = vmatpush1.msra.mxu0 0.0
        %1767 = vmatprep.subr.mxu0 0.0
        %1768 = vmatpush1.msra.mxu0 0.0
        %1769 = vmatprep.subr.mxu0 0.0
        %1770 = vmatpush1.msra.mxu0 0.0
        %1771 = vmatprep.subr.mxu0 0.0
        %1772 = vmatpush1.msra.mxu0 0.0
        %1773 = vmatprep.subr.mxu0 0.0
        %1774 = vmatpush1.msra.mxu0 0.0
        %1775 = vmatprep.subr.mxu0 0.0
        %1776 = vmatpush1.msra.mxu0 0.0
        %1777 = vmatprep.mubr.f32.mxu0 0.0
        %1778 = vmatmul.mubr.f32.gmra.mrb[0].mxu0 %v1642
        %v1779 = vpop.f32.mrb[0].mxu0
        %v1780 = vadd.f32 0.0, %v1779
        %v1781 = vpop.f32.mrb[0].mxu0
        %v1782 = vadd.f32 0.0, %v1781
        %1783 = vdwg.mxu0
        %1784 = vmatprep.subr.mxu0 %v1652
        %1785 = vmatpush1.msra.mxu0 %v1651
        %1786 = vmatprep.subr.mxu0 %v1656
        %1787 = vmatpush1.msra.mxu0 %v1655
        %1788 = vmatprep.subr.mxu0 %v1660
        %1789 = vmatpush1.msra.mxu0 %v1659
        %1790 = vmatprep.subr.mxu0 %v1664
        %1791 = vmatpush1.msra.mxu0 %v1663
        %1792 = vmatprep.subr.mxu0 %v1668
        %1793 = vmatpush1.msra.mxu0 %v1667
        %1794 = vmatprep.subr.mxu0 %v1672
        %1795 = vmatpush1.msra.mxu0 %v1671
        %1796 = vmatprep.subr.mxu0 %v1676
        %1797 = vmatpush1.msra.mxu0 %v1675
        %1798 = vmatprep.subr.mxu0 %v1680
        %1799 = vmatpush1.msra.mxu0 %v1679
        %1800 = vmatprep.subr.mxu0 %v1684
        %1801 = vmatpush1.msra.mxu0 %v1683
        %1802 = vmatprep.subr.mxu0 %v1688
        %1803 = vmatpush1.msra.mxu0 %v1687
        %1804 = vmatprep.subr.mxu0 %v1692
        %1805 = vmatpush1.msra.mxu0 %v1691
        %1806 = vmatprep.subr.mxu0 %v1696
        %1807 = vmatpush1.msra.mxu0 %v1695
        %1808 = vmatprep.subr.mxu0 %v1700
        %1809 = vmatpush1.msra.mxu0 %v1699
        %1810 = vmatprep.subr.mxu0 %v1704
        %1811 = vmatpush1.msra.mxu0 %v1703
        %1812 = vmatprep.subr.mxu0 %v1708
        %1813 = vmatpush1.msra.mxu0 %v1707
        %1814 = vmatprep.subr.mxu0 %v1712
        %1815 = vmatpush1.msra.mxu0 %v1711
        %1816 = vmatprep.subr.mxu0 0.0
        %1817 = vmatpush1.msra.mxu0 0.0
        %1818 = vmatprep.subr.mxu0 0.0
        %1819 = vmatpush1.msra.mxu0 0.0
        %1820 = vmatprep.subr.mxu0 0.0
        %1821 = vmatpush1.msra.mxu0 0.0
        %1822 = vmatprep.subr.mxu0 0.0
        %1823 = vmatpush1.msra.mxu0 0.0
        %1824 = vmatprep.subr.mxu0 0.0
        %1825 = vmatpush1.msra.mxu0 0.0
        %1826 = vmatprep.subr.mxu0 0.0
        %1827 = vmatpush1.msra.mxu0 0.0
        %1828 = vmatprep.subr.mxu0 0.0
        %1829 = vmatpush1.msra.mxu0 0.0
        %1830 = vmatprep.subr.mxu0 0.0
        %1831 = vmatpush1.msra.mxu0 0.0
        %1832 = vmatprep.subr.mxu0 0.0
        %1833 = vmatpush1.msra.mxu0 0.0
        %1834 = vmatprep.subr.mxu0 0.0
        %1835 = vmatpush1.msra.mxu0 0.0
        %1836 = vmatprep.subr.mxu0 0.0
        %1837 = vmatpush1.msra.mxu0 0.0
        %1838 = vmatprep.subr.mxu0 0.0
        %1839 = vmatpush1.msra.mxu0 0.0
        %1840 = vmatprep.subr.mxu0 0.0
        %1841 = vmatpush1.msra.mxu0 0.0
        %1842 = vmatprep.subr.mxu0 0.0
        %1843 = vmatpush1.msra.mxu0 0.0
        %1844 = vmatprep.subr.mxu0 0.0
        %1845 = vmatpush1.msra.mxu0 0.0
        %1846 = vmatprep.subr.mxu0 0.0
        %1847 = vmatpush1.msra.mxu0 0.0
        %1848 = vmatprep.mubr.f32.mxu0 0.0
        %1849 = vmatmul.mubr.f32.gmra.mrb[0].mxu0 %v1642
        %v1850 = vpop.f32.mrb[0].mxu0
        %v1851 = vadd.f32 0.0, %v1850
        %v1852 = vpop.f32.mrb[0].mxu0
        %v1853 = vadd.f32 0.0, %v1852
        %1854 = vdwg.mxu0
        %v1855 = vadd.f32 %v1645, %v1780
        %v1856 = vadd.f32 %v1646, %v1782
        %v1857 = vadd.f32 %v1647, %v1851
        %v1858 = vadd.f32 %v1648, %v1853
        %v1859 = vxor.u32 %v1855, 2147483648
        %v1860 = vmul.f32 %v1859, 1.442695
        %v1861 = vpow.pop %v1860
        %v1862 = vadd.f32 %v1861, 1.0
        %v1863 = vrcp.pop %v1862
        %v1864 = vmul.f32 1.0, %v1863
        %v1865 = vxor.u32 %v1856, 2147483648
        %v1866 = vmul.f32 %v1865, 1.442695
        %v1867 = vpow.pop %v1866
        %v1868 = vadd.f32 %v1867, 1.0
        %v1869 = vrcp.pop %v1868
        %v1870 = vmul.f32 1.0, %v1869
        %v1871 = vtanh.pop %v1857
        %v1872 = vxor.u32 %v1858, 2147483648
        %v1873 = vmul.f32 %v1872, 1.442695
        %v1874 = vpow.pop %v1873
        %v1875 = vadd.f32 %v1874, 1.0
        %v1876 = vrcp.pop %v1875
        %v1877 = vmul.f32 1.0, %v1876
        %v1878 = vmul.f32 %v1870, %v1640
        %v1879 = vmul.f32 %v1864, %v1871
        %v1880 = vadd.f32 %v1878, %v1879
        %v1881 = vtanh.pop %v1880
        %v1882 = vmul.f32 %v1877, %v1881
        %s1883 = scalar_lea.vmem [#allocation5], 16
        %1884 = vst [vmem:[%s1883] sm:$0xff] %v1882
        %v1885 = vld [vmem:[%s1091] sm:$0xff]
        %v1886 = vld [vmem:[%s1091 + $0x8] sm:$0xff]
        %v1887 = vld [vmem:[%s1091 + $0x10] sm:$0xff]
        %v1888 = vld [vmem:[%s1091 + $0x18] sm:$0xff]
        %v1889 = vld [vmem:[%s2] sm:$0xff]
        %v1890 = vld [vmem:[%s2 + $0x8] sm:$0xff]
        %v1891 = vld [vmem:[%s2 + $0x10] sm:$0xff]
        %v1892 = vld [vmem:[%s2 + $0x18] sm:$0xff]
        %v1893 = vld [vmem:[%s2 + $0x20] sm:$0xff]
        %v1894 = vld [vmem:[%s2 + $0x28] sm:$0xff]
        %v1895 = vld [vmem:[%s2 + $0x30] sm:$0xff]
        %v1896 = vld [vmem:[%s2 + $0x38] sm:$0xff]
        %v1897 = vld [vmem:[%s2 + $0x40] sm:$0xff]
        %v1898 = vld [vmem:[%s2 + $0x48] sm:$0xff]
        %v1899 = vld [vmem:[%s2 + $0x50] sm:$0xff]
        %v1900 = vld [vmem:[%s2 + $0x58] sm:$0xff]
        %v1901 = vld [vmem:[%s2 + $0x60] sm:$0xff]
        %v1902 = vld [vmem:[%s2 + $0x68] sm:$0xff]
        %v1903 = vld [vmem:[%s2 + $0x70] sm:$0xff]
        %v1904 = vld [vmem:[%s2 + $0x78] sm:$0xff]
        %v1905 = vld [vmem:[%s2 + $0x80] sm:$0xff]
        %v1906 = vld [vmem:[%s2 + $0x88] sm:$0xff]
        %v1907 = vld [vmem:[%s2 + $0x90] sm:$0xff]
        %v1908 = vld [vmem:[%s2 + $0x98] sm:$0xff]
        %v1909 = vld [vmem:[%s2 + $0xa0] sm:$0xff]
        %v1910 = vld [vmem:[%s2 + $0xa8] sm:$0xff]
        %v1911 = vld [vmem:[%s2 + $0xb0] sm:$0xff]
        %v1912 = vld [vmem:[%s2 + $0xb8] sm:$0xff]
        %v1913 = vld [vmem:[%s2 + $0xc0] sm:$0xff]
        %v1914 = vld [vmem:[%s2 + $0xc8] sm:$0xff]
        %v1915 = vld [vmem:[%s2 + $0xd0] sm:$0xff]
        %v1916 = vld [vmem:[%s2 + $0xd8] sm:$0xff]
        %v1917 = vld [vmem:[%s2 + $0xe0] sm:$0xff]
        %v1918 = vld [vmem:[%s2 + $0xe8] sm:$0xff]
        %v1919 = vld [vmem:[%s2 + $0xf0] sm:$0xff]
        %v1920 = vld [vmem:[%s2 + $0xf8] sm:$0xff]
        %v1921 = vld [vmem:[%s2 + $0x100] sm:$0xff]
        %v1922 = vld [vmem:[%s2 + $0x108] sm:$0xff]
        %v1923 = vld [vmem:[%s2 + $0x110] sm:$0xff]
        %v1924 = vld [vmem:[%s2 + $0x118] sm:$0xff]
        %v1925 = vld [vmem:[%s2 + $0x120] sm:$0xff]
        %v1926 = vld [vmem:[%s2 + $0x128] sm:$0xff]
        %v1927 = vld [vmem:[%s2 + $0x130] sm:$0xff]
        %v1928 = vld [vmem:[%s2 + $0x138] sm:$0xff]
        %v1929 = vld [vmem:[%s2 + $0x140] sm:$0xff]
        %v1930 = vld [vmem:[%s2 + $0x148] sm:$0xff]
        %v1931 = vld [vmem:[%s2 + $0x150] sm:$0xff]
        %v1932 = vld [vmem:[%s2 + $0x158] sm:$0xff]
        %v1933 = vld [vmem:[%s2 + $0x160] sm:$0xff]
        %v1934 = vld [vmem:[%s2 + $0x168] sm:$0xff]
        %v1935 = vld [vmem:[%s2 + $0x170] sm:$0xff]
        %v1936 = vld [vmem:[%s2 + $0x178] sm:$0xff]
        %v1937 = vld [vmem:[%s2 + $0x180] sm:$0xff]
        %v1938 = vld [vmem:[%s2 + $0x188] sm:$0xff]
        %v1939 = vld [vmem:[%s2 + $0x190] sm:$0xff]
        %v1940 = vld [vmem:[%s2 + $0x198] sm:$0xff]
        %v1941 = vld [vmem:[%s2 + $0x1a0] sm:$0xff]
        %v1942 = vld [vmem:[%s2 + $0x1a8] sm:$0xff]
        %v1943 = vld [vmem:[%s2 + $0x1b0] sm:$0xff]
        %v1944 = vld [vmem:[%s2 + $0x1b8] sm:$0xff]
        %v1945 = vld [vmem:[%s2 + $0x1c0] sm:$0xff]
        %v1946 = vld [vmem:[%s2 + $0x1c8] sm:$0xff]
        %v1947 = vld [vmem:[%s2 + $0x1d0] sm:$0xff]
        %v1948 = vld [vmem:[%s2 + $0x1d8] sm:$0xff]
        %v1949 = vld [vmem:[%s2 + $0x1e0] sm:$0xff]
        %v1950 = vld [vmem:[%s2 + $0x1e8] sm:$0xff]
        %v1951 = vld [vmem:[%s2 + $0x1f0] sm:$0xff]
        %v1952 = vld [vmem:[%s2 + $0x1f8] sm:$0xff]
        %1953 = vmatprep.subr.mxu0 %v1890
        %1954 = vmatpush1.msra.mxu0 %v1889
        %1955 = vmatprep.subr.mxu0 %v1894
        %1956 = vmatpush1.msra.mxu0 %v1893
        %1957 = vmatprep.subr.mxu0 %v1898
        %1958 = vmatpush1.msra.mxu0 %v1897
        %1959 = vmatprep.subr.mxu0 %v1902
        %1960 = vmatpush1.msra.mxu0 %v1901
        %1961 = vmatprep.subr.mxu0 %v1906
        %1962 = vmatpush1.msra.mxu0 %v1905
        %1963 = vmatprep.subr.mxu0 %v1910
        %1964 = vmatpush1.msra.mxu0 %v1909
        %1965 = vmatprep.subr.mxu0 %v1914
        %1966 = vmatpush1.msra.mxu0 %v1913
        %1967 = vmatprep.subr.mxu0 %v1918
        %1968 = vmatpush1.msra.mxu0 %v1917
        %1969 = vmatprep.subr.mxu0 %v1922
        %1970 = vmatpush1.msra.mxu0 %v1921
        %1971 = vmatprep.subr.mxu0 %v1926
        %1972 = vmatpush1.msra.mxu0 %v1925
        %1973 = vmatprep.subr.mxu0 %v1930
        %1974 = vmatpush1.msra.mxu0 %v1929
        %1975 = vmatprep.subr.mxu0 %v1934
        %1976 = vmatpush1.msra.mxu0 %v1933
        %1977 = vmatprep.subr.mxu0 %v1938
        %1978 = vmatpush1.msra.mxu0 %v1937
        %1979 = vmatprep.subr.mxu0 %v1942
        %1980 = vmatpush1.msra.mxu0 %v1941
        %1981 = vmatprep.subr.mxu0 %v1946
        %1982 = vmatpush1.msra.mxu0 %v1945
        %1983 = vmatprep.subr.mxu0 %v1950
        %1984 = vmatpush1.msra.mxu0 %v1949
        %1985 = vmatprep.subr.mxu0 0.0
        %1986 = vmatpush1.msra.mxu0 0.0
        %1987 = vmatprep.subr.mxu0 0.0
        %1988 = vmatpush1.msra.mxu0 0.0
        %1989 = vmatprep.subr.mxu0 0.0
        %1990 = vmatpush1.msra.mxu0 0.0
        %1991 = vmatprep.subr.mxu0 0.0
        %1992 = vmatpush1.msra.mxu0 0.0
        %1993 = vmatprep.subr.mxu0 0.0
        %1994 = vmatpush1.msra.mxu0 0.0
        %1995 = vmatprep.subr.mxu0 0.0
        %1996 = vmatpush1.msra.mxu0 0.0
        %1997 = vmatprep.subr.mxu0 0.0
        %1998 = vmatpush1.msra.mxu0 0.0
        %1999 = vmatprep.subr.mxu0 0.0
        %2000 = vmatpush1.msra.mxu0 0.0
        %2001 = vmatprep.subr.mxu0 0.0
        %2002 = vmatpush1.msra.mxu0 0.0
        %2003 = vmatprep.subr.mxu0 0.0
        %2004 = vmatpush1.msra.mxu0 0.0
        %2005 = vmatprep.subr.mxu0 0.0
        %2006 = vmatpush1.msra.mxu0 0.0
        %2007 = vmatprep.subr.mxu0 0.0
        %2008 = vmatpush1.msra.mxu0 0.0
        %2009 = vmatprep.subr.mxu0 0.0
        %2010 = vmatpush1.msra.mxu0 0.0
        %2011 = vmatprep.subr.mxu0 0.0
        %2012 = vmatpush1.msra.mxu0 0.0
        %2013 = vmatprep.subr.mxu0 0.0
        %2014 = vmatpush1.msra.mxu0 0.0
        %2015 = vmatprep.subr.mxu0 0.0
        %2016 = vmatpush1.msra.mxu0 0.0
        %2017 = vmatprep.mubr.f32.mxu0 0.0
        %2018 = vmatmul.mubr.f32.gmra.mrb[0].mxu0 %v1882
        %v2019 = vpop.f32.mrb[0].mxu0
        %v2020 = vadd.f32 0.0, %v2019
        %v2021 = vpop.f32.mrb[0].mxu0
        %v2022 = vadd.f32 0.0, %v2021
        %2023 = vdwg.mxu0
        %2024 = vmatprep.subr.mxu0 %v1892
        %2025 = vmatpush1.msra.mxu0 %v1891
        %2026 = vmatprep.subr.mxu0 %v1896
        %2027 = vmatpush1.msra.mxu0 %v1895
        %2028 = vmatprep.subr.mxu0 %v1900
        %2029 = vmatpush1.msra.mxu0 %v1899
        %2030 = vmatprep.subr.mxu0 %v1904
        %2031 = vmatpush1.msra.mxu0 %v1903
        %2032 = vmatprep.subr.mxu0 %v1908
        %2033 = vmatpush1.msra.mxu0 %v1907
        %2034 = vmatprep.subr.mxu0 %v1912
        %2035 = vmatpush1.msra.mxu0 %v1911
        %2036 = vmatprep.subr.mxu0 %v1916
        %2037 = vmatpush1.msra.mxu0 %v1915
        %2038 = vmatprep.subr.mxu0 %v1920
        %2039 = vmatpush1.msra.mxu0 %v1919
        %2040 = vmatprep.subr.mxu0 %v1924
        %2041 = vmatpush1.msra.mxu0 %v1923
        %2042 = vmatprep.subr.mxu0 %v1928
        %2043 = vmatpush1.msra.mxu0 %v1927
        %2044 = vmatprep.subr.mxu0 %v1932
        %2045 = vmatpush1.msra.mxu0 %v1931
        %2046 = vmatprep.subr.mxu0 %v1936
        %2047 = vmatpush1.msra.mxu0 %v1935
        %2048 = vmatprep.subr.mxu0 %v1940
        %2049 = vmatpush1.msra.mxu0 %v1939
        %2050 = vmatprep.subr.mxu0 %v1944
        %2051 = vmatpush1.msra.mxu0 %v1943
        %2052 = vmatprep.subr.mxu0 %v1948
        %2053 = vmatpush1.msra.mxu0 %v1947
        %2054 = vmatprep.subr.mxu0 %v1952
        %2055 = vmatpush1.msra.mxu0 %v1951
        %2056 = vmatprep.subr.mxu0 0.0
        %2057 = vmatpush1.msra.mxu0 0.0
        %2058 = vmatprep.subr.mxu0 0.0
        %2059 = vmatpush1.msra.mxu0 0.0
        %2060 = vmatprep.subr.mxu0 0.0
        %2061 = vmatpush1.msra.mxu0 0.0
        %2062 = vmatprep.subr.mxu0 0.0
        %2063 = vmatpush1.msra.mxu0 0.0
        %2064 = vmatprep.subr.mxu0 0.0
        %2065 = vmatpush1.msra.mxu0 0.0
        %2066 = vmatprep.subr.mxu0 0.0
        %2067 = vmatpush1.msra.mxu0 0.0
        %2068 = vmatprep.subr.mxu0 0.0
        %2069 = vmatpush1.msra.mxu0 0.0
        %2070 = vmatprep.subr.mxu0 0.0
        %2071 = vmatpush1.msra.mxu0 0.0
        %2072 = vmatprep.subr.mxu0 0.0
        %2073 = vmatpush1.msra.mxu0 0.0
        %2074 = vmatprep.subr.mxu0 0.0
        %2075 = vmatpush1.msra.mxu0 0.0
        %2076 = vmatprep.subr.mxu0 0.0
        %2077 = vmatpush1.msra.mxu0 0.0
        %2078 = vmatprep.subr.mxu0 0.0
        %2079 = vmatpush1.msra.mxu0 0.0
        %2080 = vmatprep.subr.mxu0 0.0
        %2081 = vmatpush1.msra.mxu0 0.0
        %2082 = vmatprep.subr.mxu0 0.0
        %2083 = vmatpush1.msra.mxu0 0.0
        %2084 = vmatprep.subr.mxu0 0.0
        %2085 = vmatpush1.msra.mxu0 0.0
        %2086 = vmatprep.subr.mxu0 0.0
        %2087 = vmatpush1.msra.mxu0 0.0
        %2088 = vmatprep.mubr.f32.mxu0 0.0
        %2089 = vmatmul.mubr.f32.gmra.mrb[0].mxu0 %v1882
        %v2090 = vpop.f32.mrb[0].mxu0
        %v2091 = vadd.f32 0.0, %v2090
        %v2092 = vpop.f32.mrb[0].mxu0
        %v2093 = vadd.f32 0.0, %v2092
        %2094 = vdwg.mxu0
        %v2095 = vadd.f32 %v1885, %v2020
        %v2096 = vadd.f32 %v1886, %v2022
        %v2097 = vadd.f32 %v1887, %v2091
        %v2098 = vadd.f32 %v1888, %v2093
        %v2099 = vxor.u32 %v2095, 2147483648
        %v2100 = vmul.f32 %v2099, 1.442695
        %v2101 = vpow.pop %v2100
        %v2102 = vadd.f32 %v2101, 1.0
        %v2103 = vrcp.pop %v2102
        %v2104 = vmul.f32 1.0, %v2103
        %v2105 = vxor.u32 %v2096, 2147483648
        %v2106 = vmul.f32 %v2105, 1.442695
        %v2107 = vpow.pop %v2106
        %v2108 = vadd.f32 %v2107, 1.0
        %v2109 = vrcp.pop %v2108
        %v2110 = vmul.f32 1.0, %v2109
        %v2111 = vtanh.pop %v2097
        %v2112 = vxor.u32 %v2098, 2147483648
        %v2113 = vmul.f32 %v2112, 1.442695
        %v2114 = vpow.pop %v2113
        %v2115 = vadd.f32 %v2114, 1.0
        %v2116 = vrcp.pop %v2115
        %v2117 = vmul.f32 1.0, %v2116
        %v2118 = vmul.f32 %v2110, %v1880
        %v2119 = vmul.f32 %v2104, %v2111
        %v2120 = vadd.f32 %v2118, %v2119
        %v2121 = vtanh.pop %v2120
        %v2122 = vmul.f32 %v2117, %v2121
        %s2123 = scalar_lea.vmem [#allocation5], 24
        %2124 = vst [vmem:[%s2123] sm:$0xff] %v2122
        %v2125 = vld [vmem:[%s1108] sm:$0xff]
        %v2126 = vld [vmem:[%s1108 + $0x8] sm:$0xff]
        %v2127 = vld [vmem:[%s1108 + $0x10] sm:$0xff]
        %v2128 = vld [vmem:[%s1108 + $0x18] sm:$0xff]
        %v2129 = vld [vmem:[%s2] sm:$0xff]
        %v2130 = vld [vmem:[%s2 + $0x8] sm:$0xff]
        %v2131 = vld [vmem:[%s2 + $0x10] sm:$0xff]
        %v2132 = vld [vmem:[%s2 + $0x18] sm:$0xff]
        %v2133 = vld [vmem:[%s2 + $0x20] sm:$0xff]
        %v2134 = vld [vmem:[%s2 + $0x28] sm:$0xff]
        %v2135 = vld [vmem:[%s2 + $0x30] sm:$0xff]
        %v2136 = vld [vmem:[%s2 + $0x38] sm:$0xff]
        %v2137 = vld [vmem:[%s2 + $0x40] sm:$0xff]
        %v2138 = vld [vmem:[%s2 + $0x48] sm:$0xff]
        %v2139 = vld [vmem:[%s2 + $0x50] sm:$0xff]
        %v2140 = vld [vmem:[%s2 + $0x58] sm:$0xff]
        %v2141 = vld [vmem:[%s2 + $0x60] sm:$0xff]
        %v2142 = vld [vmem:[%s2 + $0x68] sm:$0xff]
        %v2143 = vld [vmem:[%s2 + $0x70] sm:$0xff]
        %v2144 = vld [vmem:[%s2 + $0x78] sm:$0xff]
        %v2145 = vld [vmem:[%s2 + $0x80] sm:$0xff]
        %v2146 = vld [vmem:[%s2 + $0x88] sm:$0xff]
        %v2147 = vld [vmem:[%s2 + $0x90] sm:$0xff]
        %v2148 = vld [vmem:[%s2 + $0x98] sm:$0xff]
        %v2149 = vld [vmem:[%s2 + $0xa0] sm:$0xff]
        %v2150 = vld [vmem:[%s2 + $0xa8] sm:$0xff]
        %v2151 = vld [vmem:[%s2 + $0xb0] sm:$0xff]
        %v2152 = vld [vmem:[%s2 + $0xb8] sm:$0xff]
        %v2153 = vld [vmem:[%s2 + $0xc0] sm:$0xff]
        %v2154 = vld [vmem:[%s2 + $0xc8] sm:$0xff]
        %v2155 = vld [vmem:[%s2 + $0xd0] sm:$0xff]
        %v2156 = vld [vmem:[%s2 + $0xd8] sm:$0xff]
        %v2157 = vld [vmem:[%s2 + $0xe0] sm:$0xff]
        %v2158 = vld [vmem:[%s2 + $0xe8] sm:$0xff]
        %v2159 = vld [vmem:[%s2 + $0xf0] sm:$0xff]
        %v2160 = vld [vmem:[%s2 + $0xf8] sm:$0xff]
        %v2161 = vld [vmem:[%s2 + $0x100] sm:$0xff]
        %v2162 = vld [vmem:[%s2 + $0x108] sm:$0xff]
        %v2163 = vld [vmem:[%s2 + $0x110] sm:$0xff]
        %v2164 = vld [vmem:[%s2 + $0x118] sm:$0xff]
        %v2165 = vld [vmem:[%s2 + $0x120] sm:$0xff]
        %v2166 = vld [vmem:[%s2 + $0x128] sm:$0xff]
        %v2167 = vld [vmem:[%s2 + $0x130] sm:$0xff]
        %v2168 = vld [vmem:[%s2 + $0x138] sm:$0xff]
        %v2169 = vld [vmem:[%s2 + $0x140] sm:$0xff]
        %v2170 = vld [vmem:[%s2 + $0x148] sm:$0xff]
        %v2171 = vld [vmem:[%s2 + $0x150] sm:$0xff]
        %v2172 = vld [vmem:[%s2 + $0x158] sm:$0xff]
        %v2173 = vld [vmem:[%s2 + $0x160] sm:$0xff]
        %v2174 = vld [vmem:[%s2 + $0x168] sm:$0xff]
        %v2175 = vld [vmem:[%s2 + $0x170] sm:$0xff]
        %v2176 = vld [vmem:[%s2 + $0x178] sm:$0xff]
        %v2177 = vld [vmem:[%s2 + $0x180] sm:$0xff]
        %v2178 = vld [vmem:[%s2 + $0x188] sm:$0xff]
        %v2179 = vld [vmem:[%s2 + $0x190] sm:$0xff]
        %v2180 = vld [vmem:[%s2 + $0x198] sm:$0xff]
        %v2181 = vld [vmem:[%s2 + $0x1a0] sm:$0xff]
        %v2182 = vld [vmem:[%s2 + $0x1a8] sm:$0xff]
        %v2183 = vld [vmem:[%s2 + $0x1b0] sm:$0xff]
        %v2184 = vld [vmem:[%s2 + $0x1b8] sm:$0xff]
        %v2185 = vld [vmem:[%s2 + $0x1c0] sm:$0xff]
        %v2186 = vld [vmem:[%s2 + $0x1c8] sm:$0xff]
        %v2187 = vld [vmem:[%s2 + $0x1d0] sm:$0xff]
        %v2188 = vld [vmem:[%s2 + $0x1d8] sm:$0xff]
        %v2189 = vld [vmem:[%s2 + $0x1e0] sm:$0xff]
        %v2190 = vld [vmem:[%s2 + $0x1e8] sm:$0xff]
        %v2191 = vld [vmem:[%s2 + $0x1f0] sm:$0xff]
        %v2192 = vld [vmem:[%s2 + $0x1f8] sm:$0xff]
        %2193 = vmatprep.subr.mxu0 %v2130
        %2194 = vmatpush1.msra.mxu0 %v2129
        %2195 = vmatprep.subr.mxu0 %v2134
        %2196 = vmatpush1.msra.mxu0 %v2133
        %2197 = vmatprep.subr.mxu0 %v2138
        %2198 = vmatpush1.msra.mxu0 %v2137
        %2199 = vmatprep.subr.mxu0 %v2142
        %2200 = vmatpush1.msra.mxu0 %v2141
        %2201 = vmatprep.subr.mxu0 %v2146
        %2202 = vmatpush1.msra.mxu0 %v2145
        %2203 = vmatprep.subr.mxu0 %v2150
        %2204 = vmatpush1.msra.mxu0 %v2149
        %2205 = vmatprep.subr.mxu0 %v2154
        %2206 = vmatpush1.msra.mxu0 %v2153
        %2207 = vmatprep.subr.mxu0 %v2158
        %2208 = vmatpush1.msra.mxu0 %v2157
        %2209 = vmatprep.subr.mxu0 %v2162
        %2210 = vmatpush1.msra.mxu0 %v2161
        %2211 = vmatprep.subr.mxu0 %v2166
        %2212 = vmatpush1.msra.mxu0 %v2165
        %2213 = vmatprep.subr.mxu0 %v2170
        %2214 = vmatpush1.msra.mxu0 %v2169
        %2215 = vmatprep.subr.mxu0 %v2174
        %2216 = vmatpush1.msra.mxu0 %v2173
        %2217 = vmatprep.subr.mxu0 %v2178
        %2218 = vmatpush1.msra.mxu0 %v2177
        %2219 = vmatprep.subr.mxu0 %v2182
        %2220 = vmatpush1.msra.mxu0 %v2181
        %2221 = vmatprep.subr.mxu0 %v2186
        %2222 = vmatpush1.msra.mxu0 %v2185
        %2223 = vmatprep.subr.mxu0 %v2190
        %2224 = vmatpush1.msra.mxu0 %v2189
        %2225 = vmatprep.subr.mxu0 0.0
        %2226 = vmatpush1.msra.mxu0 0.0
        %2227 = vmatprep.subr.mxu0 0.0
        %2228 = vmatpush1.msra.mxu0 0.0
        %2229 = vmatprep.subr.mxu0 0.0
        %2230 = vmatpush1.msra.mxu0 0.0
        %2231 = vmatprep.subr.mxu0 0.0
        %2232 = vmatpush1.msra.mxu0 0.0
        %2233 = vmatprep.subr.mxu0 0.0
        %2234 = vmatpush1.msra.mxu0 0.0
        %2235 = vmatprep.subr.mxu0 0.0
        %2236 = vmatpush1.msra.mxu0 0.0
        %2237 = vmatprep.subr.mxu0 0.0
        %2238 = vmatpush1.msra.mxu0 0.0
        %2239 = vmatprep.subr.mxu0 0.0
        %2240 = vmatpush1.msra.mxu0 0.0
        %2241 = vmatprep.subr.mxu0 0.0
        %2242 = vmatpush1.msra.mxu0 0.0
        %2243 = vmatprep.subr.mxu0 0.0
        %2244 = vmatpush1.msra.mxu0 0.0
        %2245 = vmatprep.subr.mxu0 0.0
        %2246 = vmatpush1.msra.mxu0 0.0
        %2247 = vmatprep.subr.mxu0 0.0
        %2248 = vmatpush1.msra.mxu0 0.0
        %2249 = vmatprep.subr.mxu0 0.0
        %2250 = vmatpush1.msra.mxu0 0.0
        %2251 = vmatprep.subr.mxu0 0.0
        %2252 = vmatpush1.msra.mxu0 0.0
        %2253 = vmatprep.subr.mxu0 0.0
        %2254 = vmatpush1.msra.mxu0 0.0
        %2255 = vmatprep.subr.mxu0 0.0
        %2256 = vmatpush1.msra.mxu0 0.0
        %2257 = vmatprep.mubr.f32.mxu0 0.0
        %2258 = vmatmul.mubr.f32.gmra.mrb[0].mxu0 %v2122
        %v2259 = vpop.f32.mrb[0].mxu0
        %v2260 = vadd.f32 0.0, %v2259
        %v2261 = vpop.f32.mrb[0].mxu0
        %v2262 = vadd.f32 0.0, %v2261
        %2263 = vdwg.mxu0
        %2264 = vmatprep.subr.mxu0 %v2132
        %2265 = vmatpush1.msra.mxu0 %v2131
        %2266 = vmatprep.subr.mxu0 %v2136
        %2267 = vmatpush1.msra.mxu0 %v2135
        %2268 = vmatprep.subr.mxu0 %v2140
        %2269 = vmatpush1.msra.mxu0 %v2139
        %2270 = vmatprep.subr.mxu0 %v2144
        %2271 = vmatpush1.msra.mxu0 %v2143
        %2272 = vmatprep.subr.mxu0 %v2148
        %2273 = vmatpush1.msra.mxu0 %v2147
        %2274 = vmatprep.subr.mxu0 %v2152
        %2275 = vmatpush1.msra.mxu0 %v2151
        %2276 = vmatprep.subr.mxu0 %v2156
        %2277 = vmatpush1.msra.mxu0 %v2155
        %2278 = vmatprep.subr.mxu0 %v2160
        %2279 = vmatpush1.msra.mxu0 %v2159
        %2280 = vmatprep.subr.mxu0 %v2164
        %2281 = vmatpush1.msra.mxu0 %v2163
        %2282 = vmatprep.subr.mxu0 %v2168
        %2283 = vmatpush1.msra.mxu0 %v2167
        %2284 = vmatprep.subr.mxu0 %v2172
        %2285 = vmatpush1.msra.mxu0 %v2171
        %2286 = vmatprep.subr.mxu0 %v2176
        %2287 = vmatpush1.msra.mxu0 %v2175
        %2288 = vmatprep.subr.mxu0 %v2180
        %2289 = vmatpush1.msra.mxu0 %v2179
        %2290 = vmatprep.subr.mxu0 %v2184
        %2291 = vmatpush1.msra.mxu0 %v2183
        %2292 = vmatprep.subr.mxu0 %v2188
        %2293 = vmatpush1.msra.mxu0 %v2187
        %2294 = vmatprep.subr.mxu0 %v2192
        %2295 = vmatpush1.msra.mxu0 %v2191
        %2296 = vmatprep.subr.mxu0 0.0
        %2297 = vmatpush1.msra.mxu0 0.0
        %2298 = vmatprep.subr.mxu0 0.0
        %2299 = vmatpush1.msra.mxu0 0.0
        %2300 = vmatprep.subr.mxu0 0.0
        %2301 = vmatpush1.msra.mxu0 0.0
        %2302 = vmatprep.subr.mxu0 0.0
        %2303 = vmatpush1.msra.mxu0 0.0
        %2304 = vmatprep.subr.mxu0 0.0
        %2305 = vmatpush1.msra.mxu0 0.0
        %2306 = vmatprep.subr.mxu0 0.0
        %2307 = vmatpush1.msra.mxu0 0.0
        %2308 = vmatprep.subr.mxu0 0.0
        %2309 = vmatpush1.msra.mxu0 0.0
        %2310 = vmatprep.subr.mxu0 0.0
        %2311 = vmatpush1.msra.mxu0 0.0
        %2312 = vmatprep.subr.mxu0 0.0
        %2313 = vmatpush1.msra.mxu0 0.0
        %2314 = vmatprep.subr.mxu0 0.0
        %2315 = vmatpush1.msra.mxu0 0.0
        %2316 = vmatprep.subr.mxu0 0.0
        %2317 = vmatpush1.msra.mxu0 0.0
        %2318 = vmatprep.subr.mxu0 0.0
        %2319 = vmatpush1.msra.mxu0 0.0
        %2320 = vmatprep.subr.mxu0 0.0
        %2321 = vmatpush1.msra.mxu0 0.0
        %2322 = vmatprep.subr.mxu0 0.0
        %2323 = vmatpush1.msra.mxu0 0.0
        %2324 = vmatprep.subr.mxu0 0.0
        %2325 = vmatpush1.msra.mxu0 0.0
        %2326 = vmatprep.subr.mxu0 0.0
        %2327 = vmatpush1.msra.mxu0 0.0
        %2328 = vmatprep.mubr.f32.mxu0 0.0
        %2329 = vmatmul.mubr.f32.gmra.mrb[0].mxu0 %v2122
        %v2330 = vpop.f32.mrb[0].mxu0
        %v2331 = vadd.f32 0.0, %v2330
        %v2332 = vpop.f32.mrb[0].mxu0
        %v2333 = vadd.f32 0.0, %v2332
        %2334 = vdwg.mxu0
        %v2335 = vadd.f32 %v2125, %v2260
        %v2336 = vadd.f32 %v2126, %v2262
        %v2337 = vadd.f32 %v2127, %v2331
        %v2338 = vadd.f32 %v2128, %v2333
        %v2339 = vxor.u32 %v2335, 2147483648
        %v2340 = vmul.f32 %v2339, 1.442695
        %v2341 = vpow.pop %v2340
        %v2342 = vadd.f32 %v2341, 1.0
        %v2343 = vrcp.pop %v2342
        %v2344 = vmul.f32 1.0, %v2343
        %v2345 = vxor.u32 %v2336, 2147483648
        %v2346 = vmul.f32 %v2345, 1.442695
        %v2347 = vpow.pop %v2346
        %v2348 = vadd.f32 %v2347, 1.0
        %v2349 = vrcp.pop %v2348
        %v2350 = vmul.f32 1.0, %v2349
        %v2351 = vtanh.pop %v2337
        %v2352 = vxor.u32 %v2338, 2147483648
        %v2353 = vmul.f32 %v2352, 1.442695
        %v2354 = vpow.pop %v2353
        %v2355 = vadd.f32 %v2354, 1.0
        %v2356 = vrcp.pop %v2355
        %v2357 = vmul.f32 1.0, %v2356
        %v2358 = vmul.f32 %v2350, %v2120
        %v2359 = vmul.f32 %v2344, %v2351
        %v2360 = vadd.f32 %v2358, %v2359
        %v2361 = vtanh.pop %v2360
        %v2362 = vmul.f32 %v2357, %v2361
        %s2363 = scalar_lea.vmem [#allocation5], 32
        %2364 = vst [vmem:[%s2363] sm:$0xff] %v2362
        %v2365 = vld [vmem:[%s1125] sm:$0xff]
        %v2366 = vld [vmem:[%s1125 + $0x8] sm:$0xff]
        %v2367 = vld [vmem:[%s1125 + $0x10] sm:$0xff]
        %v2368 = vld [vmem:[%s1125 + $0x18] sm:$0xff]
        %v2369 = vld [vmem:[%s2] sm:$0xff]
        %v2370 = vld [vmem:[%s2 + $0x8] sm:$0xff]
        %v2371 = vld [vmem:[%s2 + $0x10] sm:$0xff]
        %v2372 = vld [vmem:[%s2 + $0x18] sm:$0xff]
        %v2373 = vld [vmem:[%s2 + $0x20] sm:$0xff]
        %v2374 = vld [vmem:[%s2 + $0x28] sm:$0xff]
        %v2375 = vld [vmem:[%s2 + $0x30] sm:$0xff]
        %v2376 = vld [vmem:[%s2 + $0x38] sm:$0xff]
        %v2377 = vld [vmem:[%s2 + $0x40] sm:$0xff]
        %v2378 = vld [vmem:[%s2 + $0x48] sm:$0xff]
        %v2379 = vld [vmem:[%s2 + $0x50] sm:$0xff]
        %v2380 = vld [vmem:[%s2 + $0x58] sm:$0xff]
        %v2381 = vld [vmem:[%s2 + $0x60] sm:$0xff]
        %v2382 = vld [vmem:[%s2 + $0x68] sm:$0xff]
        %v2383 = vld [vmem:[%s2 + $0x70] sm:$0xff]
        %v2384 = vld [vmem:[%s2 + $0x78] sm:$0xff]
        %v2385 = vld [vmem:[%s2 + $0x80] sm:$0xff]
        %v2386 = vld [vmem:[%s2 + $0x88] sm:$0xff]
        %v2387 = vld [vmem:[%s2 + $0x90] sm:$0xff]
        %v2388 = vld [vmem:[%s2 + $0x98] sm:$0xff]
        %v2389 = vld [vmem:[%s2 + $0xa0] sm:$0xff]
        %v2390 = vld [vmem:[%s2 + $0xa8] sm:$0xff]
        %v2391 = vld [vmem:[%s2 + $0xb0] sm:$0xff]
        %v2392 = vld [vmem:[%s2 + $0xb8] sm:$0xff]
        %v2393 = vld [vmem:[%s2 + $0xc0] sm:$0xff]
        %v2394 = vld [vmem:[%s2 + $0xc8] sm:$0xff]
        %v2395 = vld [vmem:[%s2 + $0xd0] sm:$0xff]
        %v2396 = vld [vmem:[%s2 + $0xd8] sm:$0xff]
        %v2397 = vld [vmem:[%s2 + $0xe0] sm:$0xff]
        %v2398 = vld [vmem:[%s2 + $0xe8] sm:$0xff]
        %v2399 = vld [vmem:[%s2 + $0xf0] sm:$0xff]
        %v2400 = vld [vmem:[%s2 + $0xf8] sm:$0xff]
        %v2401 = vld [vmem:[%s2 + $0x100] sm:$0xff]
        %v2402 = vld [vmem:[%s2 + $0x108] sm:$0xff]
        %v2403 = vld [vmem:[%s2 + $0x110] sm:$0xff]
        %v2404 = vld [vmem:[%s2 + $0x118] sm:$0xff]
        %v2405 = vld [vmem:[%s2 + $0x120] sm:$0xff]
        %v2406 = vld [vmem:[%s2 + $0x128] sm:$0xff]
        %v2407 = vld [vmem:[%s2 + $0x130] sm:$0xff]
        %v2408 = vld [vmem:[%s2 + $0x138] sm:$0xff]
        %v2409 = vld [vmem:[%s2 + $0x140] sm:$0xff]
        %v2410 = vld [vmem:[%s2 + $0x148] sm:$0xff]
        %v2411 = vld [vmem:[%s2 + $0x150] sm:$0xff]
        %v2412 = vld [vmem:[%s2 + $0x158] sm:$0xff]
        %v2413 = vld [vmem:[%s2 + $0x160] sm:$0xff]
        %v2414 = vld [vmem:[%s2 + $0x168] sm:$0xff]
        %v2415 = vld [vmem:[%s2 + $0x170] sm:$0xff]
        %v2416 = vld [vmem:[%s2 + $0x178] sm:$0xff]
        %v2417 = vld [vmem:[%s2 + $0x180] sm:$0xff]
        %v2418 = vld [vmem:[%s2 + $0x188] sm:$0xff]
        %v2419 = vld [vmem:[%s2 + $0x190] sm:$0xff]
        %v2420 = vld [vmem:[%s2 + $0x198] sm:$0xff]
        %v2421 = vld [vmem:[%s2 + $0x1a0] sm:$0xff]
        %v2422 = vld [vmem:[%s2 + $0x1a8] sm:$0xff]
        %v2423 = vld [vmem:[%s2 + $0x1b0] sm:$0xff]
        %v2424 = vld [vmem:[%s2 + $0x1b8] sm:$0xff]
        %v2425 = vld [vmem:[%s2 + $0x1c0] sm:$0xff]
        %v2426 = vld [vmem:[%s2 + $0x1c8] sm:$0xff]
        %v2427 = vld [vmem:[%s2 + $0x1d0] sm:$0xff]
        %v2428 = vld [vmem:[%s2 + $0x1d8] sm:$0xff]
        %v2429 = vld [vmem:[%s2 + $0x1e0] sm:$0xff]
        %v2430 = vld [vmem:[%s2 + $0x1e8] sm:$0xff]
        %v2431 = vld [vmem:[%s2 + $0x1f0] sm:$0xff]
        %v2432 = vld [vmem:[%s2 + $0x1f8] sm:$0xff]
        %2433 = vmatprep.subr.mxu0 %v2370
        %2434 = vmatpush1.msra.mxu0 %v2369
        %2435 = vmatprep.subr.mxu0 %v2374
        %2436 = vmatpush1.msra.mxu0 %v2373
        %2437 = vmatprep.subr.mxu0 %v2378
        %2438 = vmatpush1.msra.mxu0 %v2377
        %2439 = vmatprep.subr.mxu0 %v2382
        %2440 = vmatpush1.msra.mxu0 %v2381
        %2441 = vmatprep.subr.mxu0 %v2386
        %2442 = vmatpush1.msra.mxu0 %v2385
        %2443 = vmatprep.subr.mxu0 %v2390
        %2444 = vmatpush1.msra.mxu0 %v2389
        %2445 = vmatprep.subr.mxu0 %v2394
        %2446 = vmatpush1.msra.mxu0 %v2393
        %2447 = vmatprep.subr.mxu0 %v2398
        %2448 = vmatpush1.msra.mxu0 %v2397
        %2449 = vmatprep.subr.mxu0 %v2402
        %2450 = vmatpush1.msra.mxu0 %v2401
        %2451 = vmatprep.subr.mxu0 %v2406
        %2452 = vmatpush1.msra.mxu0 %v2405
        %2453 = vmatprep.subr.mxu0 %v2410
        %2454 = vmatpush1.msra.mxu0 %v2409
        %2455 = vmatprep.subr.mxu0 %v2414
        %2456 = vmatpush1.msra.mxu0 %v2413
        %2457 = vmatprep.subr.mxu0 %v2418
        %2458 = vmatpush1.msra.mxu0 %v2417
        %2459 = vmatprep.subr.mxu0 %v2422
        %2460 = vmatpush1.msra.mxu0 %v2421
        %2461 = vmatprep.subr.mxu0 %v2426
        %2462 = vmatpush1.msra.mxu0 %v2425
        %2463 = vmatprep.subr.mxu0 %v2430
        %2464 = vmatpush1.msra.mxu0 %v2429
        %2465 = vmatprep.subr.mxu0 0.0
        %2466 = vmatpush1.msra.mxu0 0.0
        %2467 = vmatprep.subr.mxu0 0.0
        %2468 = vmatpush1.msra.mxu0 0.0
        %2469 = vmatprep.subr.mxu0 0.0
        %2470 = vmatpush1.msra.mxu0 0.0
        %2471 = vmatprep.subr.mxu0 0.0
        %2472 = vmatpush1.msra.mxu0 0.0
        %2473 = vmatprep.subr.mxu0 0.0
        %2474 = vmatpush1.msra.mxu0 0.0
        %2475 = vmatprep.subr.mxu0 0.0
        %2476 = vmatpush1.msra.mxu0 0.0
        %2477 = vmatprep.subr.mxu0 0.0
        %2478 = vmatpush1.msra.mxu0 0.0
        %2479 = vmatprep.subr.mxu0 0.0
        %2480 = vmatpush1.msra.mxu0 0.0
        %2481 = vmatprep.subr.mxu0 0.0
        %2482 = vmatpush1.msra.mxu0 0.0
        %2483 = vmatprep.subr.mxu0 0.0
        %2484 = vmatpush1.msra.mxu0 0.0
        %2485 = vmatprep.subr.mxu0 0.0
        %2486 = vmatpush1.msra.mxu0 0.0
        %2487 = vmatprep.subr.mxu0 0.0
        %2488 = vmatpush1.msra.mxu0 0.0
        %2489 = vmatprep.subr.mxu0 0.0
        %2490 = vmatpush1.msra.mxu0 0.0
        %2491 = vmatprep.subr.mxu0 0.0
        %2492 = vmatpush1.msra.mxu0 0.0
        %2493 = vmatprep.subr.mxu0 0.0
        %2494 = vmatpush1.msra.mxu0 0.0
        %2495 = vmatprep.subr.mxu0 0.0
        %2496 = vmatpush1.msra.mxu0 0.0
        %2497 = vmatprep.mubr.f32.mxu0 0.0
        %2498 = vmatmul.mubr.f32.gmra.mrb[0].mxu0 %v2362
        %v2499 = vpop.f32.mrb[0].mxu0
        %v2500 = vadd.f32 0.0, %v2499
        %v2501 = vpop.f32.mrb[0].mxu0
        %v2502 = vadd.f32 0.0, %v2501
        %2503 = vdwg.mxu0
        %2504 = vmatprep.subr.mxu0 %v2372
        %2505 = vmatpush1.msra.mxu0 %v2371
        %2506 = vmatprep.subr.mxu0 %v2376
        %2507 = vmatpush1.msra.mxu0 %v2375
        %2508 = vmatprep.subr.mxu0 %v2380
        %2509 = vmatpush1.msra.mxu0 %v2379
        %2510 = vmatprep.subr.mxu0 %v2384
        %2511 = vmatpush1.msra.mxu0 %v2383
        %2512 = vmatprep.subr.mxu0 %v2388
        %2513 = vmatpush1.msra.mxu0 %v2387
        %2514 = vmatprep.subr.mxu0 %v2392
        %2515 = vmatpush1.msra.mxu0 %v2391
        %2516 = vmatprep.subr.mxu0 %v2396
        %2517 = vmatpush1.msra.mxu0 %v2395
        %2518 = vmatprep.subr.mxu0 %v2400
        %2519 = vmatpush1.msra.mxu0 %v2399
        %2520 = vmatprep.subr.mxu0 %v2404
        %2521 = vmatpush1.msra.mxu0 %v2403
        %2522 = vmatprep.subr.mxu0 %v2408
        %2523 = vmatpush1.msra.mxu0 %v2407
        %2524 = vmatprep.subr.mxu0 %v2412
        %2525 = vmatpush1.msra.mxu0 %v2411
        %2526 = vmatprep.subr.mxu0 %v2416
        %2527 = vmatpush1.msra.mxu0 %v2415
        %2528 = vmatprep.subr.mxu0 %v2420
        %2529 = vmatpush1.msra.mxu0 %v2419
        %2530 = vmatprep.subr.mxu0 %v2424
        %2531 = vmatpush1.msra.mxu0 %v2423
        %2532 = vmatprep.subr.mxu0 %v2428
        %2533 = vmatpush1.msra.mxu0 %v2427
        %2534 = vmatprep.subr.mxu0 %v2432
        %2535 = vmatpush1.msra.mxu0 %v2431
        %2536 = vmatprep.subr.mxu0 0.0
        %2537 = vmatpush1.msra.mxu0 0.0
        %2538 = vmatprep.subr.mxu0 0.0
        %2539 = vmatpush1.msra.mxu0 0.0
        %2540 = vmatprep.subr.mxu0 0.0
        %2541 = vmatpush1.msra.mxu0 0.0
        %2542 = vmatprep.subr.mxu0 0.0
        %2543 = vmatpush1.msra.mxu0 0.0
        %2544 = vmatprep.subr.mxu0 0.0
        %2545 = vmatpush1.msra.mxu0 0.0
        %2546 = vmatprep.subr.mxu0 0.0
        %2547 = vmatpush1.msra.mxu0 0.0
        %2548 = vmatprep.subr.mxu0 0.0
        %2549 = vmatpush1.msra.mxu0 0.0
        %2550 = vmatprep.subr.mxu0 0.0
        %2551 = vmatpush1.msra.mxu0 0.0
        %2552 = vmatprep.subr.mxu0 0.0
        %2553 = vmatpush1.msra.mxu0 0.0
        %2554 = vmatprep.subr.mxu0 0.0
        %2555 = vmatpush1.msra.mxu0 0.0
        %2556 = vmatprep.subr.mxu0 0.0
        %2557 = vmatpush1.msra.mxu0 0.0
        %2558 = vmatprep.subr.mxu0 0.0
        %2559 = vmatpush1.msra.mxu0 0.0
        %2560 = vmatprep.subr.mxu0 0.0
        %2561 = vmatpush1.msra.mxu0 0.0
        %2562 = vmatprep.subr.mxu0 0.0
        %2563 = vmatpush1.msra.mxu0 0.0
        %2564 = vmatprep.subr.mxu0 0.0
        %2565 = vmatpush1.msra.mxu0 0.0
        %2566 = vmatprep.subr.mxu0 0.0
        %2567 = vmatpush1.msra.mxu0 0.0
        %2568 = vmatprep.mubr.f32.mxu0 0.0
        %2569 = vmatmul.mubr.f32.gmra.mrb[0].mxu0 %v2362
        %v2570 = vpop.f32.mrb[0].mxu0
        %v2571 = vadd.f32 0.0, %v2570
        %v2572 = vpop.f32.mrb[0].mxu0
        %v2573 = vadd.f32 0.0, %v2572
        %2574 = vdwg.mxu0
        %v2575 = vadd.f32 %v2365, %v2500
        %v2576 = vadd.f32 %v2366, %v2502
        %v2577 = vadd.f32 %v2367, %v2571
        %v2578 = vadd.f32 %v2368, %v2573
        %v2579 = vxor.u32 %v2575, 2147483648
        %v2580 = vmul.f32 %v2579, 1.442695
        %v2581 = vpow.pop %v2580
        %v2582 = vadd.f32 %v2581, 1.0
        %v2583 = vrcp.pop %v2582
        %v2584 = vmul.f32 1.0, %v2583
        %v2585 = vxor.u32 %v2576, 2147483648
        %v2586 = vmul.f32 %v2585, 1.442695
        %v2587 = vpow.pop %v2586
        %v2588 = vadd.f32 %v2587, 1.0
        %v2589 = vrcp.pop %v2588
        %v2590 = vmul.f32 1.0, %v2589
        %v2591 = vtanh.pop %v2577
        %v2592 = vxor.u32 %v2578, 2147483648
        %v2593 = vmul.f32 %v2592, 1.442695
        %v2594 = vpow.pop %v2593
        %v2595 = vadd.f32 %v2594, 1.0
        %v2596 = vrcp.pop %v2595
        %v2597 = vmul.f32 1.0, %v2596
        %v2598 = vmul.f32 %v2590, %v2360
        %v2599 = vmul.f32 %v2584, %v2591
        %v2600 = vadd.f32 %v2598, %v2599
        %v2601 = vtanh.pop %v2600
        %v2602 = vmul.f32 %v2597, %v2601
        %s2603 = scalar_lea.vmem [#allocation5], 40
        %2604 = vst [vmem:[%s2603] sm:$0xff] %v2602
        %v2605 = vld [vmem:[%s1142] sm:$0xff]
        %v2606 = vld [vmem:[%s1142 + $0x8] sm:$0xff]
        %v2607 = vld [vmem:[%s1142 + $0x10] sm:$0xff]
        %v2608 = vld [vmem:[%s1142 + $0x18] sm:$0xff]
        %v2609 = vld [vmem:[%s2] sm:$0xff]
        %v2610 = vld [vmem:[%s2 + $0x8] sm:$0xff]
        %v2611 = vld [vmem:[%s2 + $0x10] sm:$0xff]
        %v2612 = vld [vmem:[%s2 + $0x18] sm:$0xff]
        %v2613 = vld [vmem:[%s2 + $0x20] sm:$0xff]
        %v2614 = vld [vmem:[%s2 + $0x28] sm:$0xff]
        %v2615 = vld [vmem:[%s2 + $0x30] sm:$0xff]
        %v2616 = vld [vmem:[%s2 + $0x38] sm:$0xff]
        %v2617 = vld [vmem:[%s2 + $0x40] sm:$0xff]
        %v2618 = vld [vmem:[%s2 + $0x48] sm:$0xff]
        %v2619 = vld [vmem:[%s2 + $0x50] sm:$0xff]
        %v2620 = vld [vmem:[%s2 + $0x58] sm:$0xff]
        %v2621 = vld [vmem:[%s2 + $0x60] sm:$0xff]
        %v2622 = vld [vmem:[%s2 + $0x68] sm:$0xff]
        %v2623 = vld [vmem:[%s2 + $0x70] sm:$0xff]
        %v2624 = vld [vmem:[%s2 + $0x78] sm:$0xff]
        %v2625 = vld [vmem:[%s2 + $0x80] sm:$0xff]
        %v2626 = vld [vmem:[%s2 + $0x88] sm:$0xff]
        %v2627 = vld [vmem:[%s2 + $0x90] sm:$0xff]
        %v2628 = vld [vmem:[%s2 + $0x98] sm:$0xff]
        %v2629 = vld [vmem:[%s2 + $0xa0] sm:$0xff]
        %v2630 = vld [vmem:[%s2 + $0xa8] sm:$0xff]
        %v2631 = vld [vmem:[%s2 + $0xb0] sm:$0xff]
        %v2632 = vld [vmem:[%s2 + $0xb8] sm:$0xff]
        %v2633 = vld [vmem:[%s2 + $0xc0] sm:$0xff]
        %v2634 = vld [vmem:[%s2 + $0xc8] sm:$0xff]
        %v2635 = vld [vmem:[%s2 + $0xd0] sm:$0xff]
        %v2636 = vld [vmem:[%s2 + $0xd8] sm:$0xff]
        %v2637 = vld [vmem:[%s2 + $0xe0] sm:$0xff]
        %v2638 = vld [vmem:[%s2 + $0xe8] sm:$0xff]
        %v2639 = vld [vmem:[%s2 + $0xf0] sm:$0xff]
        %v2640 = vld [vmem:[%s2 + $0xf8] sm:$0xff]
        %v2641 = vld [vmem:[%s2 + $0x100] sm:$0xff]
        %v2642 = vld [vmem:[%s2 + $0x108] sm:$0xff]
        %v2643 = vld [vmem:[%s2 + $0x110] sm:$0xff]
        %v2644 = vld [vmem:[%s2 + $0x118] sm:$0xff]
        %v2645 = vld [vmem:[%s2 + $0x120] sm:$0xff]
        %v2646 = vld [vmem:[%s2 + $0x128] sm:$0xff]
        %v2647 = vld [vmem:[%s2 + $0x130] sm:$0xff]
        %v2648 = vld [vmem:[%s2 + $0x138] sm:$0xff]
        %v2649 = vld [vmem:[%s2 + $0x140] sm:$0xff]
        %v2650 = vld [vmem:[%s2 + $0x148] sm:$0xff]
        %v2651 = vld [vmem:[%s2 + $0x150] sm:$0xff]
        %v2652 = vld [vmem:[%s2 + $0x158] sm:$0xff]
        %v2653 = vld [vmem:[%s2 + $0x160] sm:$0xff]
        %v2654 = vld [vmem:[%s2 + $0x168] sm:$0xff]
        %v2655 = vld [vmem:[%s2 + $0x170] sm:$0xff]
        %v2656 = vld [vmem:[%s2 + $0x178] sm:$0xff]
        %v2657 = vld [vmem:[%s2 + $0x180] sm:$0xff]
        %v2658 = vld [vmem:[%s2 + $0x188] sm:$0xff]
        %v2659 = vld [vmem:[%s2 + $0x190] sm:$0xff]
        %v2660 = vld [vmem:[%s2 + $0x198] sm:$0xff]
        %v2661 = vld [vmem:[%s2 + $0x1a0] sm:$0xff]
        %v2662 = vld [vmem:[%s2 + $0x1a8] sm:$0xff]
        %v2663 = vld [vmem:[%s2 + $0x1b0] sm:$0xff]
        %v2664 = vld [vmem:[%s2 + $0x1b8] sm:$0xff]
        %v2665 = vld [vmem:[%s2 + $0x1c0] sm:$0xff]
        %v2666 = vld [vmem:[%s2 + $0x1c8] sm:$0xff]
        %v2667 = vld [vmem:[%s2 + $0x1d0] sm:$0xff]
        %v2668 = vld [vmem:[%s2 + $0x1d8] sm:$0xff]
        %v2669 = vld [vmem:[%s2 + $0x1e0] sm:$0xff]
        %v2670 = vld [vmem:[%s2 + $0x1e8] sm:$0xff]
        %v2671 = vld [vmem:[%s2 + $0x1f0] sm:$0xff]
        %v2672 = vld [vmem:[%s2 + $0x1f8] sm:$0xff]
        %2673 = vmatprep.subr.mxu0 %v2610
        %2674 = vmatpush1.msra.mxu0 %v2609
        %2675 = vmatprep.subr.mxu0 %v2614
        %2676 = vmatpush1.msra.mxu0 %v2613
        %2677 = vmatprep.subr.mxu0 %v2618
        %2678 = vmatpush1.msra.mxu0 %v2617
        %2679 = vmatprep.subr.mxu0 %v2622
        %2680 = vmatpush1.msra.mxu0 %v2621
        %2681 = vmatprep.subr.mxu0 %v2626
        %2682 = vmatpush1.msra.mxu0 %v2625
        %2683 = vmatprep.subr.mxu0 %v2630
        %2684 = vmatpush1.msra.mxu0 %v2629
        %2685 = vmatprep.subr.mxu0 %v2634
        %2686 = vmatpush1.msra.mxu0 %v2633
        %2687 = vmatprep.subr.mxu0 %v2638
        %2688 = vmatpush1.msra.mxu0 %v2637
        %2689 = vmatprep.subr.mxu0 %v2642
        %2690 = vmatpush1.msra.mxu0 %v2641
        %2691 = vmatprep.subr.mxu0 %v2646
        %2692 = vmatpush1.msra.mxu0 %v2645
        %2693 = vmatprep.subr.mxu0 %v2650
        %2694 = vmatpush1.msra.mxu0 %v2649
        %2695 = vmatprep.subr.mxu0 %v2654
        %2696 = vmatpush1.msra.mxu0 %v2653
        %2697 = vmatprep.subr.mxu0 %v2658
        %2698 = vmatpush1.msra.mxu0 %v2657
        %2699 = vmatprep.subr.mxu0 %v2662
        %2700 = vmatpush1.msra.mxu0 %v2661
        %2701 = vmatprep.subr.mxu0 %v2666
        %2702 = vmatpush1.msra.mxu0 %v2665
        %2703 = vmatprep.subr.mxu0 %v2670
        %2704 = vmatpush1.msra.mxu0 %v2669
        %2705 = vmatprep.subr.mxu0 0.0
        %2706 = vmatpush1.msra.mxu0 0.0
        %2707 = vmatprep.subr.mxu0 0.0
        %2708 = vmatpush1.msra.mxu0 0.0
        %2709 = vmatprep.subr.mxu0 0.0
        %2710 = vmatpush1.msra.mxu0 0.0
        %2711 = vmatprep.subr.mxu0 0.0
        %2712 = vmatpush1.msra.mxu0 0.0
        %2713 = vmatprep.subr.mxu0 0.0
        %2714 = vmatpush1.msra.mxu0 0.0
        %2715 = vmatprep.subr.mxu0 0.0
        %2716 = vmatpush1.msra.mxu0 0.0
        %2717 = vmatprep.subr.mxu0 0.0
        %2718 = vmatpush1.msra.mxu0 0.0
        %2719 = vmatprep.subr.mxu0 0.0
        %2720 = vmatpush1.msra.mxu0 0.0
        %2721 = vmatprep.subr.mxu0 0.0
        %2722 = vmatpush1.msra.mxu0 0.0
        %2723 = vmatprep.subr.mxu0 0.0
        %2724 = vmatpush1.msra.mxu0 0.0
        %2725 = vmatprep.subr.mxu0 0.0
        %2726 = vmatpush1.msra.mxu0 0.0
        %2727 = vmatprep.subr.mxu0 0.0
        %2728 = vmatpush1.msra.mxu0 0.0
        %2729 = vmatprep.subr.mxu0 0.0
        %2730 = vmatpush1.msra.mxu0 0.0
        %2731 = vmatprep.subr.mxu0 0.0
        %2732 = vmatpush1.msra.mxu0 0.0
        %2733 = vmatprep.subr.mxu0 0.0
        %2734 = vmatpush1.msra.mxu0 0.0
        %2735 = vmatprep.subr.mxu0 0.0
        %2736 = vmatpush1.msra.mxu0 0.0
        %2737 = vmatprep.mubr.f32.mxu0 0.0
        %2738 = vmatmul.mubr.f32.gmra.mrb[0].mxu0 %v2602
        %v2739 = vpop.f32.mrb[0].mxu0
        %v2740 = vadd.f32 0.0, %v2739
        %v2741 = vpop.f32.mrb[0].mxu0
        %v2742 = vadd.f32 0.0, %v2741
        %2743 = vdwg.mxu0
        %2744 = vmatprep.subr.mxu0 %v2612
        %2745 = vmatpush1.msra.mxu0 %v2611
        %2746 = vmatprep.subr.mxu0 %v2616
        %2747 = vmatpush1.msra.mxu0 %v2615
        %2748 = vmatprep.subr.mxu0 %v2620
        %2749 = vmatpush1.msra.mxu0 %v2619
        %2750 = vmatprep.subr.mxu0 %v2624
        %2751 = vmatpush1.msra.mxu0 %v2623
        %2752 = vmatprep.subr.mxu0 %v2628
        %2753 = vmatpush1.msra.mxu0 %v2627
        %2754 = vmatprep.subr.mxu0 %v2632
        %2755 = vmatpush1.msra.mxu0 %v2631
        %2756 = vmatprep.subr.mxu0 %v2636
        %2757 = vmatpush1.msra.mxu0 %v2635
        %2758 = vmatprep.subr.mxu0 %v2640
        %2759 = vmatpush1.msra.mxu0 %v2639
        %2760 = vmatprep.subr.mxu0 %v2644
        %2761 = vmatpush1.msra.mxu0 %v2643
        %2762 = vmatprep.subr.mxu0 %v2648
        %2763 = vmatpush1.msra.mxu0 %v2647
        %2764 = vmatprep.subr.mxu0 %v2652
        %2765 = vmatpush1.msra.mxu0 %v2651
        %2766 = vmatprep.subr.mxu0 %v2656
        %2767 = vmatpush1.msra.mxu0 %v2655
        %2768 = vmatprep.subr.mxu0 %v2660
        %2769 = vmatpush1.msra.mxu0 %v2659
        %2770 = vmatprep.subr.mxu0 %v2664
        %2771 = vmatpush1.msra.mxu0 %v2663
        %2772 = vmatprep.subr.mxu0 %v2668
        %2773 = vmatpush1.msra.mxu0 %v2667
        %2774 = vmatprep.subr.mxu0 %v2672
        %2775 = vmatpush1.msra.mxu0 %v2671
        %2776 = vmatprep.subr.mxu0 0.0
        %2777 = vmatpush1.msra.mxu0 0.0
        %2778 = vmatprep.subr.mxu0 0.0
        %2779 = vmatpush1.msra.mxu0 0.0
        %2780 = vmatprep.subr.mxu0 0.0
        %2781 = vmatpush1.msra.mxu0 0.0
        %2782 = vmatprep.subr.mxu0 0.0
        %2783 = vmatpush1.msra.mxu0 0.0
        %2784 = vmatprep.subr.mxu0 0.0
        %2785 = vmatpush1.msra.mxu0 0.0
        %2786 = vmatprep.subr.mxu0 0.0
        %2787 = vmatpush1.msra.mxu0 0.0
        %2788 = vmatprep.subr.mxu0 0.0
        %2789 = vmatpush1.msra.mxu0 0.0
        %2790 = vmatprep.subr.mxu0 0.0
        %2791 = vmatpush1.msra.mxu0 0.0
        %2792 = vmatprep.subr.mxu0 0.0
        %2793 = vmatpush1.msra.mxu0 0.0
        %2794 = vmatprep.subr.mxu0 0.0
        %2795 = vmatpush1.msra.mxu0 0.0
        %2796 = vmatprep.subr.mxu0 0.0
        %2797 = vmatpush1.msra.mxu0 0.0
        %2798 = vmatprep.subr.mxu0 0.0
        %2799 = vmatpush1.msra.mxu0 0.0
        %2800 = vmatprep.subr.mxu0 0.0
        %2801 = vmatpush1.msra.mxu0 0.0
        %2802 = vmatprep.subr.mxu0 0.0
        %2803 = vmatpush1.msra.mxu0 0.0
        %2804 = vmatprep.subr.mxu0 0.0
        %2805 = vmatpush1.msra.mxu0 0.0
        %2806 = vmatprep.subr.mxu0 0.0
        %2807 = vmatpush1.msra.mxu0 0.0
        %2808 = vmatprep.mubr.f32.mxu0 0.0
        %2809 = vmatmul.mubr.f32.gmra.mrb[0].mxu0 %v2602
        %v2810 = vpop.f32.mrb[0].mxu0
        %v2811 = vadd.f32 0.0, %v2810
        %v2812 = vpop.f32.mrb[0].mxu0
        %v2813 = vadd.f32 0.0, %v2812
        %2814 = vdwg.mxu0
        %v2815 = vadd.f32 %v2605, %v2740
        %v2816 = vadd.f32 %v2606, %v2742
        %v2817 = vadd.f32 %v2607, %v2811
        %v2818 = vadd.f32 %v2608, %v2813
        %v2819 = vxor.u32 %v2815, 2147483648
        %v2820 = vmul.f32 %v2819, 1.442695
        %v2821 = vpow.pop %v2820
        %v2822 = vadd.f32 %v2821, 1.0
        %v2823 = vrcp.pop %v2822
        %v2824 = vmul.f32 1.0, %v2823
        %v2825 = vxor.u32 %v2816, 2147483648
        %v2826 = vmul.f32 %v2825, 1.442695
        %v2827 = vpow.pop %v2826
        %v2828 = vadd.f32 %v2827, 1.0
        %v2829 = vrcp.pop %v2828
        %v2830 = vmul.f32 1.0, %v2829
        %v2831 = vtanh.pop %v2817
        %v2832 = vxor.u32 %v2818, 2147483648
        %v2833 = vmul.f32 %v2832, 1.442695
        %v2834 = vpow.pop %v2833
        %v2835 = vadd.f32 %v2834, 1.0
        %v2836 = vrcp.pop %v2835
        %v2837 = vmul.f32 1.0, %v2836
        %v2838 = vmul.f32 %v2830, %v2600
        %v2839 = vmul.f32 %v2824, %v2831
        %v2840 = vadd.f32 %v2838, %v2839
        %v2841 = vtanh.pop %v2840
        %v2842 = vmul.f32 %v2837, %v2841
        %s2843 = scalar_lea.vmem [#allocation5], 48
        %2844 = vst [vmem:[%s2843] sm:$0xff] %v2842
        %v2845 = vld [vmem:[%s1159] sm:$0xff]
        %v2846 = vld [vmem:[%s1159 + $0x8] sm:$0xff]
        %v2847 = vld [vmem:[%s1159 + $0x10] sm:$0xff]
        %v2848 = vld [vmem:[%s1159 + $0x18] sm:$0xff]
        %v2849 = vld [vmem:[%s2] sm:$0xff]
        %v2850 = vld [vmem:[%s2 + $0x8] sm:$0xff]
        %v2851 = vld [vmem:[%s2 + $0x10] sm:$0xff]
        %v2852 = vld [vmem:[%s2 + $0x18] sm:$0xff]
        %v2853 = vld [vmem:[%s2 + $0x20] sm:$0xff]
        %v2854 = vld [vmem:[%s2 + $0x28] sm:$0xff]
        %v2855 = vld [vmem:[%s2 + $0x30] sm:$0xff]
        %v2856 = vld [vmem:[%s2 + $0x38] sm:$0xff]
        %v2857 = vld [vmem:[%s2 + $0x40] sm:$0xff]
        %v2858 = vld [vmem:[%s2 + $0x48] sm:$0xff]
        %v2859 = vld [vmem:[%s2 + $0x50] sm:$0xff]
        %v2860 = vld [vmem:[%s2 + $0x58] sm:$0xff]
        %v2861 = vld [vmem:[%s2 + $0x60] sm:$0xff]
        %v2862 = vld [vmem:[%s2 + $0x68] sm:$0xff]
        %v2863 = vld [vmem:[%s2 + $0x70] sm:$0xff]
        %v2864 = vld [vmem:[%s2 + $0x78] sm:$0xff]
        %v2865 = vld [vmem:[%s2 + $0x80] sm:$0xff]
        %v2866 = vld [vmem:[%s2 + $0x88] sm:$0xff]
        %v2867 = vld [vmem:[%s2 + $0x90] sm:$0xff]
        %v2868 = vld [vmem:[%s2 + $0x98] sm:$0xff]
        %v2869 = vld [vmem:[%s2 + $0xa0] sm:$0xff]
        %v2870 = vld [vmem:[%s2 + $0xa8] sm:$0xff]
        %v2871 = vld [vmem:[%s2 + $0xb0] sm:$0xff]
        %v2872 = vld [vmem:[%s2 + $0xb8] sm:$0xff]
        %v2873 = vld [vmem:[%s2 + $0xc0] sm:$0xff]
        %v2874 = vld [vmem:[%s2 + $0xc8] sm:$0xff]
        %v2875 = vld [vmem:[%s2 + $0xd0] sm:$0xff]
        %v2876 = vld [vmem:[%s2 + $0xd8] sm:$0xff]
        %v2877 = vld [vmem:[%s2 + $0xe0] sm:$0xff]
        %v2878 = vld [vmem:[%s2 + $0xe8] sm:$0xff]
        %v2879 = vld [vmem:[%s2 + $0xf0] sm:$0xff]
        %v2880 = vld [vmem:[%s2 + $0xf8] sm:$0xff]
        %v2881 = vld [vmem:[%s2 + $0x100] sm:$0xff]
        %v2882 = vld [vmem:[%s2 + $0x108] sm:$0xff]
        %v2883 = vld [vmem:[%s2 + $0x110] sm:$0xff]
        %v2884 = vld [vmem:[%s2 + $0x118] sm:$0xff]
        %v2885 = vld [vmem:[%s2 + $0x120] sm:$0xff]
        %v2886 = vld [vmem:[%s2 + $0x128] sm:$0xff]
        %v2887 = vld [vmem:[%s2 + $0x130] sm:$0xff]
        %v2888 = vld [vmem:[%s2 + $0x138] sm:$0xff]
        %v2889 = vld [vmem:[%s2 + $0x140] sm:$0xff]
        %v2890 = vld [vmem:[%s2 + $0x148] sm:$0xff]
        %v2891 = vld [vmem:[%s2 + $0x150] sm:$0xff]
        %v2892 = vld [vmem:[%s2 + $0x158] sm:$0xff]
        %v2893 = vld [vmem:[%s2 + $0x160] sm:$0xff]
        %v2894 = vld [vmem:[%s2 + $0x168] sm:$0xff]
        %v2895 = vld [vmem:[%s2 + $0x170] sm:$0xff]
        %v2896 = vld [vmem:[%s2 + $0x178] sm:$0xff]
        %v2897 = vld [vmem:[%s2 + $0x180] sm:$0xff]
        %v2898 = vld [vmem:[%s2 + $0x188] sm:$0xff]
        %v2899 = vld [vmem:[%s2 + $0x190] sm:$0xff]
        %v2900 = vld [vmem:[%s2 + $0x198] sm:$0xff]
        %v2901 = vld [vmem:[%s2 + $0x1a0] sm:$0xff]
        %v2902 = vld [vmem:[%s2 + $0x1a8] sm:$0xff]
        %v2903 = vld [vmem:[%s2 + $0x1b0] sm:$0xff]
        %v2904 = vld [vmem:[%s2 + $0x1b8] sm:$0xff]
        %v2905 = vld [vmem:[%s2 + $0x1c0] sm:$0xff]
        %v2906 = vld [vmem:[%s2 + $0x1c8] sm:$0xff]
        %v2907 = vld [vmem:[%s2 + $0x1d0] sm:$0xff]
        %v2908 = vld [vmem:[%s2 + $0x1d8] sm:$0xff]
        %v2909 = vld [vmem:[%s2 + $0x1e0] sm:$0xff]
        %v2910 = vld [vmem:[%s2 + $0x1e8] sm:$0xff]
        %v2911 = vld [vmem:[%s2 + $0x1f0] sm:$0xff]
        %v2912 = vld [vmem:[%s2 + $0x1f8] sm:$0xff]
        %2913 = vmatprep.subr.mxu0 %v2850
        %2914 = vmatpush1.msra.mxu0 %v2849
        %2915 = vmatprep.subr.mxu0 %v2854
        %2916 = vmatpush1.msra.mxu0 %v2853
        %2917 = vmatprep.subr.mxu0 %v2858
        %2918 = vmatpush1.msra.mxu0 %v2857
        %2919 = vmatprep.subr.mxu0 %v2862
        %2920 = vmatpush1.msra.mxu0 %v2861
        %2921 = vmatprep.subr.mxu0 %v2866
        %2922 = vmatpush1.msra.mxu0 %v2865
        %2923 = vmatprep.subr.mxu0 %v2870
        %2924 = vmatpush1.msra.mxu0 %v2869
        %2925 = vmatprep.subr.mxu0 %v2874
        %2926 = vmatpush1.msra.mxu0 %v2873
        %2927 = vmatprep.subr.mxu0 %v2878
        %2928 = vmatpush1.msra.mxu0 %v2877
        %2929 = vmatprep.subr.mxu0 %v2882
        %2930 = vmatpush1.msra.mxu0 %v2881
        %2931 = vmatprep.subr.mxu0 %v2886
        %2932 = vmatpush1.msra.mxu0 %v2885
        %2933 = vmatprep.subr.mxu0 %v2890
        %2934 = vmatpush1.msra.mxu0 %v2889
        %2935 = vmatprep.subr.mxu0 %v2894
        %2936 = vmatpush1.msra.mxu0 %v2893
        %2937 = vmatprep.subr.mxu0 %v2898
        %2938 = vmatpush1.msra.mxu0 %v2897
        %2939 = vmatprep.subr.mxu0 %v2902
        %2940 = vmatpush1.msra.mxu0 %v2901
        %2941 = vmatprep.subr.mxu0 %v2906
        %2942 = vmatpush1.msra.mxu0 %v2905
        %2943 = vmatprep.subr.mxu0 %v2910
        %2944 = vmatpush1.msra.mxu0 %v2909
        %2945 = vmatprep.subr.mxu0 0.0
        %2946 = vmatpush1.msra.mxu0 0.0
        %2947 = vmatprep.subr.mxu0 0.0
        %2948 = vmatpush1.msra.mxu0 0.0
        %2949 = vmatprep.subr.mxu0 0.0
        %2950 = vmatpush1.msra.mxu0 0.0
        %2951 = vmatprep.subr.mxu0 0.0
        %2952 = vmatpush1.msra.mxu0 0.0
        %2953 = vmatprep.subr.mxu0 0.0
        %2954 = vmatpush1.msra.mxu0 0.0
        %2955 = vmatprep.subr.mxu0 0.0
        %2956 = vmatpush1.msra.mxu0 0.0
        %2957 = vmatprep.subr.mxu0 0.0
        %2958 = vmatpush1.msra.mxu0 0.0
        %2959 = vmatprep.subr.mxu0 0.0
        %2960 = vmatpush1.msra.mxu0 0.0
        %2961 = vmatprep.subr.mxu0 0.0
        %2962 = vmatpush1.msra.mxu0 0.0
        %2963 = vmatprep.subr.mxu0 0.0
        %2964 = vmatpush1.msra.mxu0 0.0
        %2965 = vmatprep.subr.mxu0 0.0
        %2966 = vmatpush1.msra.mxu0 0.0
        %2967 = vmatprep.subr.mxu0 0.0
        %2968 = vmatpush1.msra.mxu0 0.0
        %2969 = vmatprep.subr.mxu0 0.0
        %2970 = vmatpush1.msra.mxu0 0.0
        %2971 = vmatprep.subr.mxu0 0.0
        %2972 = vmatpush1.msra.mxu0 0.0
        %2973 = vmatprep.subr.mxu0 0.0
        %2974 = vmatpush1.msra.mxu0 0.0
        %2975 = vmatprep.subr.mxu0 0.0
        %2976 = vmatpush1.msra.mxu0 0.0
        %2977 = vmatprep.mubr.f32.mxu0 0.0
        %2978 = vmatmul.mubr.f32.gmra.mrb[0].mxu0 %v2842
        %v2979 = vpop.f32.mrb[0].mxu0
        %v2980 = vadd.f32 0.0, %v2979
        %v2981 = vpop.f32.mrb[0].mxu0
        %v2982 = vadd.f32 0.0, %v2981
        %2983 = vdwg.mxu0
        %2984 = vmatprep.subr.mxu0 %v2852
        %2985 = vmatpush1.msra.mxu0 %v2851
        %2986 = vmatprep.subr.mxu0 %v2856
        %2987 = vmatpush1.msra.mxu0 %v2855
        %2988 = vmatprep.subr.mxu0 %v2860
        %2989 = vmatpush1.msra.mxu0 %v2859
        %2990 = vmatprep.subr.mxu0 %v2864
        %2991 = vmatpush1.msra.mxu0 %v2863
        %2992 = vmatprep.subr.mxu0 %v2868
        %2993 = vmatpush1.msra.mxu0 %v2867
        %2994 = vmatprep.subr.mxu0 %v2872
        %2995 = vmatpush1.msra.mxu0 %v2871
        %2996 = vmatprep.subr.mxu0 %v2876
        %2997 = vmatpush1.msra.mxu0 %v2875
        %2998 = vmatprep.subr.mxu0 %v2880
        %2999 = vmatpush1.msra.mxu0 %v2879
        %3000 = vmatprep.subr.mxu0 %v2884
        %3001 = vmatpush1.msra.mxu0 %v2883
        %3002 = vmatprep.subr.mxu0 %v2888
        %3003 = vmatpush1.msra.mxu0 %v2887
        %3004 = vmatprep.subr.mxu0 %v2892
        %3005 = vmatpush1.msra.mxu0 %v2891
        %3006 = vmatprep.subr.mxu0 %v2896
        %3007 = vmatpush1.msra.mxu0 %v2895
        %3008 = vmatprep.subr.mxu0 %v2900
        %3009 = vmatpush1.msra.mxu0 %v2899
        %3010 = vmatprep.subr.mxu0 %v2904
        %3011 = vmatpush1.msra.mxu0 %v2903
        %3012 = vmatprep.subr.mxu0 %v2908
        %3013 = vmatpush1.msra.mxu0 %v2907
        %3014 = vmatprep.subr.mxu0 %v2912
        %3015 = vmatpush1.msra.mxu0 %v2911
        %3016 = vmatprep.subr.mxu0 0.0
        %3017 = vmatpush1.msra.mxu0 0.0
        %3018 = vmatprep.subr.mxu0 0.0
        %3019 = vmatpush1.msra.mxu0 0.0
        %3020 = vmatprep.subr.mxu0 0.0
        %3021 = vmatpush1.msra.mxu0 0.0
        %3022 = vmatprep.subr.mxu0 0.0
        %3023 = vmatpush1.msra.mxu0 0.0
        %3024 = vmatprep.subr.mxu0 0.0
        %3025 = vmatpush1.msra.mxu0 0.0
        %3026 = vmatprep.subr.mxu0 0.0
        %3027 = vmatpush1.msra.mxu0 0.0
        %3028 = vmatprep.subr.mxu0 0.0
        %3029 = vmatpush1.msra.mxu0 0.0
        %3030 = vmatprep.subr.mxu0 0.0
        %3031 = vmatpush1.msra.mxu0 0.0
        %3032 = vmatprep.subr.mxu0 0.0
        %3033 = vmatpush1.msra.mxu0 0.0
        %3034 = vmatprep.subr.mxu0 0.0
        %3035 = vmatpush1.msra.mxu0 0.0
        %3036 = vmatprep.subr.mxu0 0.0
        %3037 = vmatpush1.msra.mxu0 0.0
        %3038 = vmatprep.subr.mxu0 0.0
        %3039 = vmatpush1.msra.mxu0 0.0
        %3040 = vmatprep.subr.mxu0 0.0
        %3041 = vmatpush1.msra.mxu0 0.0
        %3042 = vmatprep.subr.mxu0 0.0
        %3043 = vmatpush1.msra.mxu0 0.0
        %3044 = vmatprep.subr.mxu0 0.0
        %3045 = vmatpush1.msra.mxu0 0.0
        %3046 = vmatprep.subr.mxu0 0.0
        %3047 = vmatpush1.msra.mxu0 0.0
        %3048 = vmatprep.mubr.f32.mxu0 0.0
        %3049 = vmatmul.mubr.f32.gmra.mrb[0].mxu0 %v2842
        %v3050 = vpop.f32.mrb[0].mxu0
        %v3051 = vadd.f32 0.0, %v3050
        %v3052 = vpop.f32.mrb[0].mxu0
        %v3053 = vadd.f32 0.0, %v3052
        %3054 = vdwg.mxu0
        %v3055 = vadd.f32 %v2845, %v2980
        %v3056 = vadd.f32 %v2846, %v2982
        %v3057 = vadd.f32 %v2847, %v3051
        %v3058 = vadd.f32 %v2848, %v3053
        %v3059 = vxor.u32 %v3055, 2147483648
        %v3060 = vmul.f32 %v3059, 1.442695
        %v3061 = vpow.pop %v3060
        %v3062 = vadd.f32 %v3061, 1.0
        %v3063 = vrcp.pop %v3062
        %v3064 = vmul.f32 1.0, %v3063
        %v3065 = vxor.u32 %v3056, 2147483648
        %v3066 = vmul.f32 %v3065, 1.442695
        %v3067 = vpow.pop %v3066
        %v3068 = vadd.f32 %v3067, 1.0
        %v3069 = vrcp.pop %v3068
        %v3070 = vmul.f32 1.0, %v3069
        %v3071 = vtanh.pop %v3057
        %v3072 = vxor.u32 %v3058, 2147483648
        %v3073 = vmul.f32 %v3072, 1.442695
        %v3074 = vpow.pop %v3073
        %v3075 = vadd.f32 %v3074, 1.0
        %v3076 = vrcp.pop %v3075
        %v3077 = vmul.f32 1.0, %v3076
        %v3078 = vmul.f32 %v3070, %v2840
        %v3079 = vmul.f32 %v3064, %v3071
        %v3080 = vadd.f32 %v3078, %v3079
        %v3081 = vtanh.pop %v3080
        %v3082 = vmul.f32 %v3077, %v3081
        %s3083 = scalar_lea.vmem [#allocation5], 56
        %3084 = vst [vmem:[%s3083] sm:$0xff] %v3082
        %v3085 = vld [vmem:[#allocation5] sm:$0xff]
        %v3086 = vld [vmem:[#allocation5 + $0x8] sm:$0xff]
        %v3087 = vld [vmem:[#allocation5 + $0x10] sm:$0xff]
        %v3088 = vld [vmem:[#allocation5 + $0x18] sm:$0xff]
        %v3089 = vld [vmem:[#allocation5 + $0x20] sm:$0xff]
        %v3090 = vld [vmem:[#allocation5 + $0x28] sm:$0xff]
        %v3091 = vld [vmem:[#allocation5 + $0x30] sm:$0xff]
        %v3092 = vld [vmem:[#allocation5 + $0x38] sm:$0xff]
        %v3093 = vld [vmem:[%s4] sm:$0xff]
        %v3094 = vld [vmem:[%s4 + $0x8] sm:$0xff]
        %v3095 = vld [vmem:[%s4 + $0x10] sm:$0xff]
        %v3096 = vld [vmem:[%s4 + $0x18] sm:$0xff]
        %v3097 = vld [vmem:[%s4 + $0x20] sm:$0xff]
        %v3098 = vld [vmem:[%s4 + $0x28] sm:$0xff]
        %v3099 = vld [vmem:[%s4 + $0x30] sm:$0xff]
        %v3100 = vld [vmem:[%s4 + $0x38] sm:$0xff]
        %v3101 = vld [vmem:[%s4 + $0x40] sm:$0xff]
        %v3102 = vld [vmem:[%s4 + $0x48] sm:$0xff]
        %v3103 = vld [vmem:[%s4 + $0x50] sm:$0xff]
        %v3104 = vld [vmem:[%s4 + $0x58] sm:$0xff]
        %v3105 = vld [vmem:[%s4 + $0x60] sm:$0xff]
        %v3106 = vld [vmem:[%s4 + $0x68] sm:$0xff]
        %v3107 = vld [vmem:[%s4 + $0x70] sm:$0xff]
        %v3108 = vld [vmem:[%s4 + $0x78] sm:$0xff]
        %v3109 = vld [vmem:[%s4 + $0x80] sm:$0xff]
        %v3110 = vld [vmem:[%s4 + $0x88] sm:$0xff]
        %v3111 = vld [vmem:[%s4 + $0x90] sm:$0xff]
        %v3112 = vld [vmem:[%s4 + $0x98] sm:$0xff]
        %v3113 = vld [vmem:[%s4 + $0xa0] sm:$0xff]
        %v3114 = vld [vmem:[%s4 + $0xa8] sm:$0xff]
        %v3115 = vld [vmem:[%s4 + $0xb0] sm:$0xff]
        %v3116 = vld [vmem:[%s4 + $0xb8] sm:$0xff]
        %v3117 = vld [vmem:[%s4 + $0xc0] sm:$0xff]
        %v3118 = vld [vmem:[%s4 + $0xc8] sm:$0xff]
        %v3119 = vld [vmem:[%s4 + $0xd0] sm:$0xff]
        %v3120 = vld [vmem:[%s4 + $0xd8] sm:$0xff]
        %v3121 = vld [vmem:[%s4 + $0xe0] sm:$0xff]
        %v3122 = vld [vmem:[%s4 + $0xe8] sm:$0xff]
        %v3123 = vld [vmem:[%s4 + $0xf0] sm:$0xff]
        %v3124 = vld [vmem:[%s4 + $0xf8] sm:$0xff]
        %v3125 = vld [vmem:[%s4 + $0x100] sm:$0xff]
        %v3126 = vld [vmem:[%s4 + $0x108] sm:$0xff]
        %v3127 = vld [vmem:[%s4 + $0x110] sm:$0xff]
        %v3128 = vld [vmem:[%s4 + $0x118] sm:$0xff]
        %v3129 = vld [vmem:[%s4 + $0x120] sm:$0xff]
        %v3130 = vld [vmem:[%s4 + $0x128] sm:$0xff]
        %v3131 = vld [vmem:[%s4 + $0x130] sm:$0xff]
        %v3132 = vld [vmem:[%s4 + $0x138] sm:$0xff]
        %v3133 = vld [vmem:[%s4 + $0x140] sm:$0xff]
        %v3134 = vld [vmem:[%s4 + $0x148] sm:$0xff]
        %v3135 = vld [vmem:[%s4 + $0x150] sm:$0xff]
        %v3136 = vld [vmem:[%s4 + $0x158] sm:$0xff]
        %v3137 = vld [vmem:[%s4 + $0x160] sm:$0xff]
        %v3138 = vld [vmem:[%s4 + $0x168] sm:$0xff]
        %v3139 = vld [vmem:[%s4 + $0x170] sm:$0xff]
        %v3140 = vld [vmem:[%s4 + $0x178] sm:$0xff]
        %v3141 = vld [vmem:[%s4 + $0x180] sm:$0xff]
        %v3142 = vld [vmem:[%s4 + $0x188] sm:$0xff]
        %v3143 = vld [vmem:[%s4 + $0x190] sm:$0xff]
        %v3144 = vld [vmem:[%s4 + $0x198] sm:$0xff]
        %v3145 = vld [vmem:[%s4 + $0x1a0] sm:$0xff]
        %v3146 = vld [vmem:[%s4 + $0x1a8] sm:$0xff]
        %v3147 = vld [vmem:[%s4 + $0x1b0] sm:$0xff]
        %v3148 = vld [vmem:[%s4 + $0x1b8] sm:$0xff]
        %v3149 = vld [vmem:[%s4 + $0x1c0] sm:$0xff]
        %v3150 = vld [vmem:[%s4 + $0x1c8] sm:$0xff]
        %v3151 = vld [vmem:[%s4 + $0x1d0] sm:$0xff]
        %v3152 = vld [vmem:[%s4 + $0x1d8] sm:$0xff]
        %v3153 = vld [vmem:[%s4 + $0x1e0] sm:$0xff]
        %v3154 = vld [vmem:[%s4 + $0x1e8] sm:$0xff]
        %v3155 = vld [vmem:[%s4 + $0x1f0] sm:$0xff]
        %v3156 = vld [vmem:[%s4 + $0x1f8] sm:$0xff]
        %v3157 = vld [vmem:[%s4 + $0x200] sm:$0xff]
        %v3158 = vld [vmem:[%s4 + $0x208] sm:$0xff]
        %v3159 = vld [vmem:[%s4 + $0x210] sm:$0xff]
        %v3160 = vld [vmem:[%s4 + $0x218] sm:$0xff]
        %v3161 = vld [vmem:[%s4 + $0x220] sm:$0xff]
        %v3162 = vld [vmem:[%s4 + $0x228] sm:$0xff]
        %v3163 = vld [vmem:[%s4 + $0x230] sm:$0xff]
        %v3164 = vld [vmem:[%s4 + $0x238] sm:$0xff]
        %v3165 = vld [vmem:[%s4 + $0x240] sm:$0xff]
        %v3166 = vld [vmem:[%s4 + $0x248] sm:$0xff]
        %v3167 = vld [vmem:[%s4 + $0x250] sm:$0xff]
        %v3168 = vld [vmem:[%s4 + $0x258] sm:$0xff]
        %v3169 = vld [vmem:[%s4 + $0x260] sm:$0xff]
        %v3170 = vld [vmem:[%s4 + $0x268] sm:$0xff]
        %v3171 = vld [vmem:[%s4 + $0x270] sm:$0xff]
        %v3172 = vld [vmem:[%s4 + $0x278] sm:$0xff]
        %v3173 = vld [vmem:[%s4 + $0x280] sm:$0xff]
        %v3174 = vld [vmem:[%s4 + $0x288] sm:$0xff]
        %v3175 = vld [vmem:[%s4 + $0x290] sm:$0xff]
        %v3176 = vld [vmem:[%s4 + $0x298] sm:$0xff]
        %v3177 = vld [vmem:[%s4 + $0x2a0] sm:$0xff]
        %v3178 = vld [vmem:[%s4 + $0x2a8] sm:$0xff]
        %v3179 = vld [vmem:[%s4 + $0x2b0] sm:$0xff]
        %v3180 = vld [vmem:[%s4 + $0x2b8] sm:$0xff]
        %v3181 = vld [vmem:[%s4 + $0x2c0] sm:$0xff]
        %v3182 = vld [vmem:[%s4 + $0x2c8] sm:$0xff]
        %v3183 = vld [vmem:[%s4 + $0x2d0] sm:$0xff]
        %v3184 = vld [vmem:[%s4 + $0x2d8] sm:$0xff]
        %v3185 = vld [vmem:[%s4 + $0x2e0] sm:$0xff]
        %v3186 = vld [vmem:[%s4 + $0x2e8] sm:$0xff]
        %v3187 = vld [vmem:[%s4 + $0x2f0] sm:$0xff]
        %v3188 = vld [vmem:[%s4 + $0x2f8] sm:$0xff]
        %v3189 = vld [vmem:[%s4 + $0x300] sm:$0xff]
        %v3190 = vld [vmem:[%s4 + $0x308] sm:$0xff]
        %v3191 = vld [vmem:[%s4 + $0x310] sm:$0xff]
        %v3192 = vld [vmem:[%s4 + $0x318] sm:$0xff]
        %v3193 = vld [vmem:[%s4 + $0x320] sm:$0xff]
        %v3194 = vld [vmem:[%s4 + $0x328] sm:$0xff]
        %v3195 = vld [vmem:[%s4 + $0x330] sm:$0xff]
        %v3196 = vld [vmem:[%s4 + $0x338] sm:$0xff]
        %v3197 = vld [vmem:[%s4 + $0x340] sm:$0xff]
        %v3198 = vld [vmem:[%s4 + $0x348] sm:$0xff]
        %v3199 = vld [vmem:[%s4 + $0x350] sm:$0xff]
        %v3200 = vld [vmem:[%s4 + $0x358] sm:$0xff]
        %v3201 = vld [vmem:[%s4 + $0x360] sm:$0xff]
        %v3202 = vld [vmem:[%s4 + $0x368] sm:$0xff]
        %v3203 = vld [vmem:[%s4 + $0x370] sm:$0xff]
        %v3204 = vld [vmem:[%s4 + $0x378] sm:$0xff]
        %v3205 = vld [vmem:[%s4 + $0x380] sm:$0xff]
        %v3206 = vld [vmem:[%s4 + $0x388] sm:$0xff]
        %v3207 = vld [vmem:[%s4 + $0x390] sm:$0xff]
        %v3208 = vld [vmem:[%s4 + $0x398] sm:$0xff]
        %v3209 = vld [vmem:[%s4 + $0x3a0] sm:$0xff]
        %v3210 = vld [vmem:[%s4 + $0x3a8] sm:$0xff]
        %v3211 = vld [vmem:[%s4 + $0x3b0] sm:$0xff]
        %v3212 = vld [vmem:[%s4 + $0x3b8] sm:$0xff]
        %v3213 = vld [vmem:[%s4 + $0x3c0] sm:$0xff]
        %v3214 = vld [vmem:[%s4 + $0x3c8] sm:$0xff]
        %v3215 = vld [vmem:[%s4 + $0x3d0] sm:$0xff]
        %v3216 = vld [vmem:[%s4 + $0x3d8] sm:$0xff]
        %v3217 = vld [vmem:[%s4 + $0x3e0] sm:$0xff]
        %v3218 = vld [vmem:[%s4 + $0x3e8] sm:$0xff]
        %v3219 = vld [vmem:[%s4 + $0x3f0] sm:$0xff]
        %v3220 = vld [vmem:[%s4 + $0x3f8] sm:$0xff]
        %v3221 = vld [vmem:[%s6] sm:$0xff]
        %v3223 = vlaneseq
        %v3224 = vshrl.u32 %v3223, 7
        %v3225 = vsub.s32 0, %v3224
        %v3226 = vrot.slane %v3221, %v3225
        %v3227 = vlaneseq
        %v3228 = vshrl.u32 %v3227, 7
        %v3229 = vsub.s32 1, %v3228
        %v3230 = vrot.slane %v3221, %v3229
        %v3231 = vlaneseq
        %v3232 = vshrl.u32 %v3231, 7
        %v3233 = vsub.s32 2, %v3232
        %v3234 = vrot.slane %v3221, %v3233
        %v3235 = vlaneseq
        %v3236 = vshrl.u32 %v3235, 7
        %v3237 = vsub.s32 3, %v3236
        %v3238 = vrot.slane %v3221, %v3237
        %v3239 = vlaneseq
        %v3240 = vshrl.u32 %v3239, 7
        %v3241 = vsub.s32 4, %v3240
        %v3242 = vrot.slane %v3221, %v3241
        %v3243 = vlaneseq
        %v3244 = vshrl.u32 %v3243, 7
        %v3245 = vsub.s32 5, %v3244
        %v3246 = vrot.slane %v3221, %v3245
        %v3247 = vlaneseq
        %v3248 = vshrl.u32 %v3247, 7
        %v3249 = vsub.s32 6, %v3248
        %v3250 = vrot.slane %v3221, %v3249
        %v3251 = vlaneseq
        %v3252 = vshrl.u32 %v3251, 7
        %v3253 = vsub.s32 7, %v3252
        %v3254 = vrot.slane %v3221, %v3253
        %3263 = vmatprep.subr.mxu0 %v3094
        %3264 = vmatpush1.msra.mxu0 %v3093
        %3265 = vmatprep.subr.mxu0 %v3102
        %3266 = vmatpush1.msra.mxu0 %v3101
        %3267 = vmatprep.subr.mxu0 %v3110
        %3268 = vmatpush1.msra.mxu0 %v3109
        %3269 = vmatprep.subr.mxu0 %v3118
        %3270 = vmatpush1.msra.mxu0 %v3117
        %3271 = vmatprep.subr.mxu0 %v3126
        %3272 = vmatpush1.msra.mxu0 %v3125
        %3273 = vmatprep.subr.mxu0 %v3134
        %3274 = vmatpush1.msra.mxu0 %v3133
        %3275 = vmatprep.subr.mxu0 %v3142
        %3276 = vmatpush1.msra.mxu0 %v3141
        %3277 = vmatprep.subr.mxu0 %v3150
        %3278 = vmatpush1.msra.mxu0 %v3149
        %3279 = vmatprep.subr.mxu0 %v3158
        %3280 = vmatpush1.msra.mxu0 %v3157
        %3281 = vmatprep.subr.mxu0 %v3166
        %3282 = vmatpush1.msra.mxu0 %v3165
        %3283 = vmatprep.subr.mxu0 %v3174
        %3284 = vmatpush1.msra.mxu0 %v3173
        %3285 = vmatprep.subr.mxu0 %v3182
        %3286 = vmatpush1.msra.mxu0 %v3181
        %3287 = vmatprep.subr.mxu0 %v3190
        %3288 = vmatpush1.msra.mxu0 %v3189
        %3289 = vmatprep.subr.mxu0 %v3198
        %3290 = vmatpush1.msra.mxu0 %v3197
        %3291 = vmatprep.subr.mxu0 %v3206
        %3292 = vmatpush1.msra.mxu0 %v3205
        %3293 = vmatprep.subr.mxu0 %v3214
        %3294 = vmatpush1.msra.mxu0 %v3213
        %3295 = vmatprep.subr.mxu0 0.0
        %3296 = vmatpush1.msra.mxu0 0.0
        %3297 = vmatprep.subr.mxu0 0.0
        %3298 = vmatpush1.msra.mxu0 0.0
        %3299 = vmatprep.subr.mxu0 0.0
        %3300 = vmatpush1.msra.mxu0 0.0
        %3301 = vmatprep.subr.mxu0 0.0
        %3302 = vmatpush1.msra.mxu0 0.0
        %3303 = vmatprep.subr.mxu0 0.0
        %3304 = vmatpush1.msra.mxu0 0.0
        %3305 = vmatprep.subr.mxu0 0.0
        %3306 = vmatpush1.msra.mxu0 0.0
        %3307 = vmatprep.subr.mxu0 0.0
        %3308 = vmatpush1.msra.mxu0 0.0
        %3309 = vmatprep.subr.mxu0 0.0
        %3310 = vmatpush1.msra.mxu0 0.0
        %3311 = vmatprep.subr.mxu0 0.0
        %3312 = vmatpush1.msra.mxu0 0.0
        %3313 = vmatprep.subr.mxu0 0.0
        %3314 = vmatpush1.msra.mxu0 0.0
        %3315 = vmatprep.subr.mxu0 0.0
        %3316 = vmatpush1.msra.mxu0 0.0
        %3317 = vmatprep.subr.mxu0 0.0
        %3318 = vmatpush1.msra.mxu0 0.0
        %3319 = vmatprep.subr.mxu0 0.0
        %3320 = vmatpush1.msra.mxu0 0.0
        %3321 = vmatprep.subr.mxu0 0.0
        %3322 = vmatpush1.msra.mxu0 0.0
        %3323 = vmatprep.subr.mxu0 0.0
        %3324 = vmatpush1.msra.mxu0 0.0
        %3325 = vmatprep.subr.mxu0 0.0
        %3326 = vmatpush1.msra.mxu0 0.0
        %3327 = vmatprep.mubr.f32.mxu0 0.0
        %3328 = vmatmul.mubr.f32.gmra.mrb[0].mxu0 %v3085
        %v3329 = vpop.f32.mrb[0].mxu0
        %v3330 = vadd.f32 %v3226, %v3329
        %v3331 = vpop.f32.mrb[0].mxu0
        %v3332 = vadd.f32 %v3230, %v3331
        %3333 = vmatprep.mubr.f32.mxu0 0.0
        %3334 = vmatmul.mubr.f32.gmra.mrb[0].mxu0 %v3086
        %v3335 = vpop.f32.mrb[0].mxu0
        %v3336 = vadd.f32 %v3226, %v3335
        %v3337 = vpop.f32.mrb[0].mxu0
        %v3338 = vadd.f32 %v3230, %v3337
        %3339 = vmatprep.mubr.f32.mxu0 0.0
        %3340 = vmatmul.mubr.f32.gmra.mrb[0].mxu0 %v3087
        %v3341 = vpop.f32.mrb[0].mxu0
        %v3342 = vadd.f32 %v3226, %v3341
        %v3343 = vpop.f32.mrb[0].mxu0
        %v3344 = vadd.f32 %v3230, %v3343
        %3345 = vmatprep.mubr.f32.mxu0 0.0
        %3346 = vmatmul.mubr.f32.gmra.mrb[0].mxu0 %v3088
        %v3347 = vpop.f32.mrb[0].mxu0
        %v3348 = vadd.f32 %v3226, %v3347
        %v3349 = vpop.f32.mrb[0].mxu0
        %v3350 = vadd.f32 %v3230, %v3349
        %3351 = vmatprep.mubr.f32.mxu0 0.0
        %3352 = vmatmul.mubr.f32.gmra.mrb[0].mxu0 %v3089
        %v3353 = vpop.f32.mrb[0].mxu0
        %v3354 = vadd.f32 %v3226, %v3353
        %v3355 = vpop.f32.mrb[0].mxu0
        %v3356 = vadd.f32 %v3230, %v3355
        %3357 = vmatprep.mubr.f32.mxu0 0.0
        %3358 = vmatmul.mubr.f32.gmra.mrb[0].mxu0 %v3090
        %v3359 = vpop.f32.mrb[0].mxu0
        %v3360 = vadd.f32 %v3226, %v3359
        %v3361 = vpop.f32.mrb[0].mxu0
        %v3362 = vadd.f32 %v3230, %v3361
        %3363 = vmatprep.mubr.f32.mxu0 0.0
        %3364 = vmatmul.mubr.f32.gmra.mrb[0].mxu0 %v3091
        %v3365 = vpop.f32.mrb[0].mxu0
        %v3366 = vadd.f32 %v3226, %v3365
        %v3367 = vpop.f32.mrb[0].mxu0
        %v3368 = vadd.f32 %v3230, %v3367
        %3369 = vmatprep.mubr.f32.mxu0 0.0
        %3370 = vmatmul.mubr.f32.gmra.mrb[0].mxu0 %v3092
        %v3371 = vpop.f32.mrb[0].mxu0
        %v3372 = vadd.f32 %v3226, %v3371
        %v3373 = vpop.f32.mrb[0].mxu0
        %v3374 = vadd.f32 %v3230, %v3373
        %3375 = vdwg.mxu0
        %3376 = vmatprep.subr.mxu0 %v3096
        %3377 = vmatpush1.msra.mxu0 %v3095
        %3378 = vmatprep.subr.mxu0 %v3104
        %3379 = vmatpush1.msra.mxu0 %v3103
        %3380 = vmatprep.subr.mxu0 %v3112
        %3381 = vmatpush1.msra.mxu0 %v3111
        %3382 = vmatprep.subr.mxu0 %v3120
        %3383 = vmatpush1.msra.mxu0 %v3119
        %3384 = vmatprep.subr.mxu0 %v3128
        %3385 = vmatpush1.msra.mxu0 %v3127
        %3386 = vmatprep.subr.mxu0 %v3136
        %3387 = vmatpush1.msra.mxu0 %v3135
        %3388 = vmatprep.subr.mxu0 %v3144
        %3389 = vmatpush1.msra.mxu0 %v3143
        %3390 = vmatprep.subr.mxu0 %v3152
        %3391 = vmatpush1.msra.mxu0 %v3151
        %3392 = vmatprep.subr.mxu0 %v3160
        %3393 = vmatpush1.msra.mxu0 %v3159
        %3394 = vmatprep.subr.mxu0 %v3168
        %3395 = vmatpush1.msra.mxu0 %v3167
        %3396 = vmatprep.subr.mxu0 %v3176
        %3397 = vmatpush1.msra.mxu0 %v3175
        %3398 = vmatprep.subr.mxu0 %v3184
        %3399 = vmatpush1.msra.mxu0 %v3183
        %3400 = vmatprep.subr.mxu0 %v3192
        %3401 = vmatpush1.msra.mxu0 %v3191
        %3402 = vmatprep.subr.mxu0 %v3200
        %3403 = vmatpush1.msra.mxu0 %v3199
        %3404 = vmatprep.subr.mxu0 %v3208
        %3405 = vmatpush1.msra.mxu0 %v3207
        %3406 = vmatprep.subr.mxu0 %v3216
        %3407 = vmatpush1.msra.mxu0 %v3215
        %3408 = vmatprep.subr.mxu0 0.0
        %3409 = vmatpush1.msra.mxu0 0.0
        %3410 = vmatprep.subr.mxu0 0.0
        %3411 = vmatpush1.msra.mxu0 0.0
        %3412 = vmatprep.subr.mxu0 0.0
        %3413 = vmatpush1.msra.mxu0 0.0
        %3414 = vmatprep.subr.mxu0 0.0
        %3415 = vmatpush1.msra.mxu0 0.0
        %3416 = vmatprep.subr.mxu0 0.0
        %3417 = vmatpush1.msra.mxu0 0.0
        %3418 = vmatprep.subr.mxu0 0.0
        %3419 = vmatpush1.msra.mxu0 0.0
        %3420 = vmatprep.subr.mxu0 0.0
        %3421 = vmatpush1.msra.mxu0 0.0
        %3422 = vmatprep.subr.mxu0 0.0
        %3423 = vmatpush1.msra.mxu0 0.0
        %3424 = vmatprep.subr.mxu0 0.0
        %3425 = vmatpush1.msra.mxu0 0.0
        %3426 = vmatprep.subr.mxu0 0.0
        %3427 = vmatpush1.msra.mxu0 0.0
        %3428 = vmatprep.subr.mxu0 0.0
        %3429 = vmatpush1.msra.mxu0 0.0
        %3430 = vmatprep.subr.mxu0 0.0
        %3431 = vmatpush1.msra.mxu0 0.0
        %3432 = vmatprep.subr.mxu0 0.0
        %3433 = vmatpush1.msra.mxu0 0.0
        %3434 = vmatprep.subr.mxu0 0.0
        %3435 = vmatpush1.msra.mxu0 0.0
        %3436 = vmatprep.subr.mxu0 0.0
        %3437 = vmatpush1.msra.mxu0 0.0
        %3438 = vmatprep.subr.mxu0 0.0
        %3439 = vmatpush1.msra.mxu0 0.0
        %3440 = vmatprep.mubr.f32.mxu0 0.0
        %3441 = vmatmul.mubr.f32.gmra.mrb[0].mxu0 %v3085
        %v3442 = vpop.f32.mrb[0].mxu0
        %v3443 = vadd.f32 %v3234, %v3442
        %v3444 = vpop.f32.mrb[0].mxu0
        %v3445 = vadd.f32 %v3238, %v3444
        %3446 = vmatprep.mubr.f32.mxu0 0.0
        %3447 = vmatmul.mubr.f32.gmra.mrb[0].mxu0 %v3086
        %v3448 = vpop.f32.mrb[0].mxu0
        %v3449 = vadd.f32 %v3234, %v3448
        %v3450 = vpop.f32.mrb[0].mxu0
        %v3451 = vadd.f32 %v3238, %v3450
        %3452 = vmatprep.mubr.f32.mxu0 0.0
        %3453 = vmatmul.mubr.f32.gmra.mrb[0].mxu0 %v3087
        %v3454 = vpop.f32.mrb[0].mxu0
        %v3455 = vadd.f32 %v3234, %v3454
        %v3456 = vpop.f32.mrb[0].mxu0
        %v3457 = vadd.f32 %v3238, %v3456
        %3458 = vmatprep.mubr.f32.mxu0 0.0
        %3459 = vmatmul.mubr.f32.gmra.mrb[0].mxu0 %v3088
        %v3460 = vpop.f32.mrb[0].mxu0
        %v3461 = vadd.f32 %v3234, %v3460
        %v3462 = vpop.f32.mrb[0].mxu0
        %v3463 = vadd.f32 %v3238, %v3462
        %3464 = vmatprep.mubr.f32.mxu0 0.0
        %3465 = vmatmul.mubr.f32.gmra.mrb[0].mxu0 %v3089
        %v3466 = vpop.f32.mrb[0].mxu0
        %v3467 = vadd.f32 %v3234, %v3466
        %v3468 = vpop.f32.mrb[0].mxu0
        %v3469 = vadd.f32 %v3238, %v3468
        %3470 = vmatprep.mubr.f32.mxu0 0.0
        %3471 = vmatmul.mubr.f32.gmra.mrb[0].mxu0 %v3090
        %v3472 = vpop.f32.mrb[0].mxu0
        %v3473 = vadd.f32 %v3234, %v3472
        %v3474 = vpop.f32.mrb[0].mxu0
        %v3475 = vadd.f32 %v3238, %v3474
        %3476 = vmatprep.mubr.f32.mxu0 0.0
        %3477 = vmatmul.mubr.f32.gmra.mrb[0].mxu0 %v3091
        %v3478 = vpop.f32.mrb[0].mxu0
        %v3479 = vadd.f32 %v3234, %v3478
        %v3480 = vpop.f32.mrb[0].mxu0
        %v3481 = vadd.f32 %v3238, %v3480
        %3482 = vmatprep.mubr.f32.mxu0 0.0
        %3483 = vmatmul.mubr.f32.gmra.mrb[0].mxu0 %v3092
        %v3484 = vpop.f32.mrb[0].mxu0
        %v3485 = vadd.f32 %v3234, %v3484
        %v3486 = vpop.f32.mrb[0].mxu0
        %v3487 = vadd.f32 %v3238, %v3486
        %3488 = vdwg.mxu0
        %3489 = vmatprep.subr.mxu0 %v3098
        %3490 = vmatpush1.msra.mxu0 %v3097
        %3491 = vmatprep.subr.mxu0 %v3106
        %3492 = vmatpush1.msra.mxu0 %v3105
        %3493 = vmatprep.subr.mxu0 %v3114
        %3494 = vmatpush1.msra.mxu0 %v3113
        %3495 = vmatprep.subr.mxu0 %v3122
        %3496 = vmatpush1.msra.mxu0 %v3121
        %3497 = vmatprep.subr.mxu0 %v3130
        %3498 = vmatpush1.msra.mxu0 %v3129
        %3499 = vmatprep.subr.mxu0 %v3138
        %3500 = vmatpush1.msra.mxu0 %v3137
        %3501 = vmatprep.subr.mxu0 %v3146
        %3502 = vmatpush1.msra.mxu0 %v3145
        %3503 = vmatprep.subr.mxu0 %v3154
        %3504 = vmatpush1.msra.mxu0 %v3153
        %3505 = vmatprep.subr.mxu0 %v3162
        %3506 = vmatpush1.msra.mxu0 %v3161
        %3507 = vmatprep.subr.mxu0 %v3170
        %3508 = vmatpush1.msra.mxu0 %v3169
        %3509 = vmatprep.subr.mxu0 %v3178
        %3510 = vmatpush1.msra.mxu0 %v3177
        %3511 = vmatprep.subr.mxu0 %v3186
        %3512 = vmatpush1.msra.mxu0 %v3185
        %3513 = vmatprep.subr.mxu0 %v3194
        %3514 = vmatpush1.msra.mxu0 %v3193
        %3515 = vmatprep.subr.mxu0 %v3202
        %3516 = vmatpush1.msra.mxu0 %v3201
        %3517 = vmatprep.subr.mxu0 %v3210
        %3518 = vmatpush1.msra.mxu0 %v3209
        %3519 = vmatprep.subr.mxu0 %v3218
        %3520 = vmatpush1.msra.mxu0 %v3217
        %3521 = vmatprep.subr.mxu0 0.0
        %3522 = vmatpush1.msra.mxu0 0.0
        %3523 = vmatprep.subr.mxu0 0.0
        %3524 = vmatpush1.msra.mxu0 0.0
        %3525 = vmatprep.subr.mxu0 0.0
        %3526 = vmatpush1.msra.mxu0 0.0
        %3527 = vmatprep.subr.mxu0 0.0
        %3528 = vmatpush1.msra.mxu0 0.0
        %3529 = vmatprep.subr.mxu0 0.0
        %3530 = vmatpush1.msra.mxu0 0.0
        %3531 = vmatprep.subr.mxu0 0.0
        %3532 = vmatpush1.msra.mxu0 0.0
        %3533 = vmatprep.subr.mxu0 0.0
        %3534 = vmatpush1.msra.mxu0 0.0
        %3535 = vmatprep.subr.mxu0 0.0
        %3536 = vmatpush1.msra.mxu0 0.0
        %3537 = vmatprep.subr.mxu0 0.0
        %3538 = vmatpush1.msra.mxu0 0.0
        %3539 = vmatprep.subr.mxu0 0.0
        %3540 = vmatpush1.msra.mxu0 0.0
        %3541 = vmatprep.subr.mxu0 0.0
        %3542 = vmatpush1.msra.mxu0 0.0
        %3543 = vmatprep.subr.mxu0 0.0
        %3544 = vmatpush1.msra.mxu0 0.0
        %3545 = vmatprep.subr.mxu0 0.0
        %3546 = vmatpush1.msra.mxu0 0.0
        %3547 = vmatprep.subr.mxu0 0.0
        %3548 = vmatpush1.msra.mxu0 0.0
        %3549 = vmatprep.subr.mxu0 0.0
        %3550 = vmatpush1.msra.mxu0 0.0
        %3551 = vmatprep.subr.mxu0 0.0
        %3552 = vmatpush1.msra.mxu0 0.0
        %3553 = vmatprep.mubr.f32.mxu0 0.0
        %3554 = vmatmul.mubr.f32.gmra.mrb[0].mxu0 %v3085
        %v3555 = vpop.f32.mrb[0].mxu0
        %v3556 = vadd.f32 %v3242, %v3555
        %v3557 = vpop.f32.mrb[0].mxu0
        %v3558 = vadd.f32 %v3246, %v3557
        %3559 = vmatprep.mubr.f32.mxu0 0.0
        %3560 = vmatmul.mubr.f32.gmra.mrb[0].mxu0 %v3086
        %v3561 = vpop.f32.mrb[0].mxu0
        %v3562 = vadd.f32 %v3242, %v3561
        %v3563 = vpop.f32.mrb[0].mxu0
        %v3564 = vadd.f32 %v3246, %v3563
        %3565 = vmatprep.mubr.f32.mxu0 0.0
        %3566 = vmatmul.mubr.f32.gmra.mrb[0].mxu0 %v3087
        %v3567 = vpop.f32.mrb[0].mxu0
        %v3568 = vadd.f32 %v3242, %v3567
        %v3569 = vpop.f32.mrb[0].mxu0
        %v3570 = vadd.f32 %v3246, %v3569
        %3571 = vmatprep.mubr.f32.mxu0 0.0
        %3572 = vmatmul.mubr.f32.gmra.mrb[0].mxu0 %v3088
        %v3573 = vpop.f32.mrb[0].mxu0
        %v3574 = vadd.f32 %v3242, %v3573
        %v3575 = vpop.f32.mrb[0].mxu0
        %v3576 = vadd.f32 %v3246, %v3575
        %3577 = vmatprep.mubr.f32.mxu0 0.0
        %3578 = vmatmul.mubr.f32.gmra.mrb[0].mxu0 %v3089
        %v3579 = vpop.f32.mrb[0].mxu0
        %v3580 = vadd.f32 %v3242, %v3579
        %v3581 = vpop.f32.mrb[0].mxu0
        %v3582 = vadd.f32 %v3246, %v3581
        %3583 = vmatprep.mubr.f32.mxu0 0.0
        %3584 = vmatmul.mubr.f32.gmra.mrb[0].mxu0 %v3090
        %v3585 = vpop.f32.mrb[0].mxu0
        %v3586 = vadd.f32 %v3242, %v3585
        %v3587 = vpop.f32.mrb[0].mxu0
        %v3588 = vadd.f32 %v3246, %v3587
        %3589 = vmatprep.mubr.f32.mxu0 0.0
        %3590 = vmatmul.mubr.f32.gmra.mrb[0].mxu0 %v3091
        %v3591 = vpop.f32.mrb[0].mxu0
        %v3592 = vadd.f32 %v3242, %v3591
        %v3593 = vpop.f32.mrb[0].mxu0
        %v3594 = vadd.f32 %v3246, %v3593
        %3595 = vmatprep.mubr.f32.mxu0 0.0
        %3596 = vmatmul.mubr.f32.gmra.mrb[0].mxu0 %v3092
        %v3597 = vpop.f32.mrb[0].mxu0
        %v3598 = vadd.f32 %v3242, %v3597
        %v3599 = vpop.f32.mrb[0].mxu0
        %v3600 = vadd.f32 %v3246, %v3599
        %3601 = vdwg.mxu0
        %3602 = vmatprep.subr.mxu0 %v3100
        %3603 = vmatpush1.msra.mxu0 %v3099
        %3604 = vmatprep.subr.mxu0 %v3108
        %3605 = vmatpush1.msra.mxu0 %v3107
        %3606 = vmatprep.subr.mxu0 %v3116
        %3607 = vmatpush1.msra.mxu0 %v3115
        %3608 = vmatprep.subr.mxu0 %v3124
        %3609 = vmatpush1.msra.mxu0 %v3123
        %3610 = vmatprep.subr.mxu0 %v3132
        %3611 = vmatpush1.msra.mxu0 %v3131
        %3612 = vmatprep.subr.mxu0 %v3140
        %3613 = vmatpush1.msra.mxu0 %v3139
        %3614 = vmatprep.subr.mxu0 %v3148
        %3615 = vmatpush1.msra.mxu0 %v3147
        %3616 = vmatprep.subr.mxu0 %v3156
        %3617 = vmatpush1.msra.mxu0 %v3155
        %3618 = vmatprep.subr.mxu0 %v3164
        %3619 = vmatpush1.msra.mxu0 %v3163
        %3620 = vmatprep.subr.mxu0 %v3172
        %3621 = vmatpush1.msra.mxu0 %v3171
        %3622 = vmatprep.subr.mxu0 %v3180
        %3623 = vmatpush1.msra.mxu0 %v3179
        %3624 = vmatprep.subr.mxu0 %v3188
        %3625 = vmatpush1.msra.mxu0 %v3187
        %3626 = vmatprep.subr.mxu0 %v3196
        %3627 = vmatpush1.msra.mxu0 %v3195
        %3628 = vmatprep.subr.mxu0 %v3204
        %3629 = vmatpush1.msra.mxu0 %v3203
        %3630 = vmatprep.subr.mxu0 %v3212
        %3631 = vmatpush1.msra.mxu0 %v3211
        %3632 = vmatprep.subr.mxu0 %v3220
        %3633 = vmatpush1.msra.mxu0 %v3219
        %3634 = vmatprep.subr.mxu0 0.0
        %3635 = vmatpush1.msra.mxu0 0.0
        %3636 = vmatprep.subr.mxu0 0.0
        %3637 = vmatpush1.msra.mxu0 0.0
        %3638 = vmatprep.subr.mxu0 0.0
        %3639 = vmatpush1.msra.mxu0 0.0
        %3640 = vmatprep.subr.mxu0 0.0
        %3641 = vmatpush1.msra.mxu0 0.0
        %3642 = vmatprep.subr.mxu0 0.0
        %3643 = vmatpush1.msra.mxu0 0.0
        %3644 = vmatprep.subr.mxu0 0.0
        %3645 = vmatpush1.msra.mxu0 0.0
        %3646 = vmatprep.subr.mxu0 0.0
        %3647 = vmatpush1.msra.mxu0 0.0
        %3648 = vmatprep.subr.mxu0 0.0
        %3649 = vmatpush1.msra.mxu0 0.0
        %3650 = vmatprep.subr.mxu0 0.0
        %3651 = vmatpush1.msra.mxu0 0.0
        %3652 = vmatprep.subr.mxu0 0.0
        %3653 = vmatpush1.msra.mxu0 0.0
        %3654 = vmatprep.subr.mxu0 0.0
        %3655 = vmatpush1.msra.mxu0 0.0
        %3656 = vmatprep.subr.mxu0 0.0
        %3657 = vmatpush1.msra.mxu0 0.0
        %3658 = vmatprep.subr.mxu0 0.0
        %3659 = vmatpush1.msra.mxu0 0.0
        %3660 = vmatprep.subr.mxu0 0.0
        %3661 = vmatpush1.msra.mxu0 0.0
        %3662 = vmatprep.subr.mxu0 0.0
        %3663 = vmatpush1.msra.mxu0 0.0
        %3664 = vmatprep.subr.mxu0 0.0
        %3665 = vmatpush1.msra.mxu0 0.0
        %3666 = vmatprep.mubr.f32.mxu0 0.0
        %3667 = vmatmul.mubr.f32.gmra.mrb[0].mxu0 %v3085
        %v3668 = vpop.f32.mrb[0].mxu0
        %v3669 = vadd.f32 %v3250, %v3668
        %v3670 = vpop.f32.mrb[0].mxu0
        %v3671 = vadd.f32 %v3254, %v3670
        %3672 = vmatprep.mubr.f32.mxu0 0.0
        %3673 = vmatmul.mubr.f32.gmra.mrb[0].mxu0 %v3086
        %v3674 = vpop.f32.mrb[0].mxu0
        %v3675 = vadd.f32 %v3250, %v3674
        %v3676 = vpop.f32.mrb[0].mxu0
        %v3677 = vadd.f32 %v3254, %v3676
        %3678 = vmatprep.mubr.f32.mxu0 0.0
        %3679 = vmatmul.mubr.f32.gmra.mrb[0].mxu0 %v3087
        %v3680 = vpop.f32.mrb[0].mxu0
        %v3681 = vadd.f32 %v3250, %v3680
        %v3682 = vpop.f32.mrb[0].mxu0
        %v3683 = vadd.f32 %v3254, %v3682
        %3684 = vmatprep.mubr.f32.mxu0 0.0
        %3685 = vmatmul.mubr.f32.gmra.mrb[0].mxu0 %v3088
        %v3686 = vpop.f32.mrb[0].mxu0
        %v3687 = vadd.f32 %v3250, %v3686
        %v3688 = vpop.f32.mrb[0].mxu0
        %v3689 = vadd.f32 %v3254, %v3688
        %3690 = vmatprep.mubr.f32.mxu0 0.0
        %3691 = vmatmul.mubr.f32.gmra.mrb[0].mxu0 %v3089
        %v3692 = vpop.f32.mrb[0].mxu0
        %v3693 = vadd.f32 %v3250, %v3692
        %v3694 = vpop.f32.mrb[0].mxu0
        %v3695 = vadd.f32 %v3254, %v3694
        %3696 = vmatprep.mubr.f32.mxu0 0.0
        %3697 = vmatmul.mubr.f32.gmra.mrb[0].mxu0 %v3090
        %v3698 = vpop.f32.mrb[0].mxu0
        %v3699 = vadd.f32 %v3250, %v3698
        %v3700 = vpop.f32.mrb[0].mxu0
        %v3701 = vadd.f32 %v3254, %v3700
        %3702 = vmatprep.mubr.f32.mxu0 0.0
        %3703 = vmatmul.mubr.f32.gmra.mrb[0].mxu0 %v3091
        %v3704 = vpop.f32.mrb[0].mxu0
        %v3705 = vadd.f32 %v3250, %v3704
        %v3706 = vpop.f32.mrb[0].mxu0
        %v3707 = vadd.f32 %v3254, %v3706
        %3708 = vmatprep.mubr.f32.mxu0 0.0
        %3709 = vmatmul.mubr.f32.gmra.mrb[0].mxu0 %v3092
        %v3710 = vpop.f32.mrb[0].mxu0
        %v3711 = vadd.f32 %v3250, %v3710
        %v3712 = vpop.f32.mrb[0].mxu0
        %v3713 = vadd.f32 %v3254, %v3712
        %3714 = vdwg.mxu0
        %3715 = vst [vmem:[#allocation3] sm:$0xff] %v3330
        %3716 = vst [vmem:[#allocation3 + $0x8] sm:$0xff] %v3332
        %3717 = vst [vmem:[#allocation3 + $0x10] sm:$0xff] %v3443
        %3718 = vst [vmem:[#allocation3 + $0x18] sm:$0xff] %v3445
        %3719 = vst [vmem:[#allocation3 + $0x20] sm:$0xff] %v3556
        %3720 = vst [vmem:[#allocation3 + $0x28] sm:$0xff] %v3558
        %3721 = vst [vmem:[#allocation3 + $0x30] sm:$0xff] %v3669
        %3722 = vst [vmem:[#allocation3 + $0x38] sm:$0xff] %v3671
        %3723 = vst [vmem:[#allocation3 + $0x40] sm:$0xff] %v3336
        %3724 = vst [vmem:[#allocation3 + $0x48] sm:$0xff] %v3338
        %3725 = vst [vmem:[#allocation3 + $0x50] sm:$0xff] %v3449
        %3726 = vst [vmem:[#allocation3 + $0x58] sm:$0xff] %v3451
        %3727 = vst [vmem:[#allocation3 + $0x60] sm:$0xff] %v3562
        %3728 = vst [vmem:[#allocation3 + $0x68] sm:$0xff] %v3564
        %3729 = vst [vmem:[#allocation3 + $0x70] sm:$0xff] %v3675
        %3730 = vst [vmem:[#allocation3 + $0x78] sm:$0xff] %v3677
        %3731 = vst [vmem:[#allocation3 + $0x80] sm:$0xff] %v3342
        %3732 = vst [vmem:[#allocation3 + $0x88] sm:$0xff] %v3344
        %3733 = vst [vmem:[#allocation3 + $0x90] sm:$0xff] %v3455
        %3734 = vst [vmem:[#allocation3 + $0x98] sm:$0xff] %v3457
        %3735 = vst [vmem:[#allocation3 + $0xa0] sm:$0xff] %v3568
        %3736 = vst [vmem:[#allocation3 + $0xa8] sm:$0xff] %v3570
        %3737 = vst [vmem:[#allocation3 + $0xb0] sm:$0xff] %v3681
        %3738 = vst [vmem:[#allocation3 + $0xb8] sm:$0xff] %v3683
        %3739 = vst [vmem:[#allocation3 + $0xc0] sm:$0xff] %v3348
        %3740 = vst [vmem:[#allocation3 + $0xc8] sm:$0xff] %v3350
        %3741 = vst [vmem:[#allocation3 + $0xd0] sm:$0xff] %v3461
        %3742 = vst [vmem:[#allocation3 + $0xd8] sm:$0xff] %v3463
        %3743 = vst [vmem:[#allocation3 + $0xe0] sm:$0xff] %v3574
        %3744 = vst [vmem:[#allocation3 + $0xe8] sm:$0xff] %v3576
        %3745 = vst [vmem:[#allocation3 + $0xf0] sm:$0xff] %v3687
        %3746 = vst [vmem:[#allocation3 + $0xf8] sm:$0xff] %v3689
        %3747 = vst [vmem:[#allocation3 + $0x100] sm:$0xff] %v3354
        %3748 = vst [vmem:[#allocation3 + $0x108] sm:$0xff] %v3356
        %3749 = vst [vmem:[#allocation3 + $0x110] sm:$0xff] %v3467
        %3750 = vst [vmem:[#allocation3 + $0x118] sm:$0xff] %v3469
        %3751 = vst [vmem:[#allocation3 + $0x120] sm:$0xff] %v3580
        %3752 = vst [vmem:[#allocation3 + $0x128] sm:$0xff] %v3582
        %3753 = vst [vmem:[#allocation3 + $0x130] sm:$0xff] %v3693
        %3754 = vst [vmem:[#allocation3 + $0x138] sm:$0xff] %v3695
        %3755 = vst [vmem:[#allocation3 + $0x140] sm:$0xff] %v3360
        %3756 = vst [vmem:[#allocation3 + $0x148] sm:$0xff] %v3362
        %3757 = vst [vmem:[#allocation3 + $0x150] sm:$0xff] %v3473
        %3758 = vst [vmem:[#allocation3 + $0x158] sm:$0xff] %v3475
        %3759 = vst [vmem:[#allocation3 + $0x160] sm:$0xff] %v3586
        %3760 = vst [vmem:[#allocation3 + $0x168] sm:$0xff] %v3588
        %3761 = vst [vmem:[#allocation3 + $0x170] sm:$0xff] %v3699
        %3762 = vst [vmem:[#allocation3 + $0x178] sm:$0xff] %v3701
        %3763 = vst [vmem:[#allocation3 + $0x180] sm:$0xff] %v3366
        %3764 = vst [vmem:[#allocation3 + $0x188] sm:$0xff] %v3368
        %3765 = vst [vmem:[#allocation3 + $0x190] sm:$0xff] %v3479
        %3766 = vst [vmem:[#allocation3 + $0x198] sm:$0xff] %v3481
        %3767 = vst [vmem:[#allocation3 + $0x1a0] sm:$0xff] %v3592
        %3768 = vst [vmem:[#allocation3 + $0x1a8] sm:$0xff] %v3594
        %3769 = vst [vmem:[#allocation3 + $0x1b0] sm:$0xff] %v3705
        %3770 = vst [vmem:[#allocation3 + $0x1b8] sm:$0xff] %v3707
        %3771 = vst [vmem:[#allocation3 + $0x1c0] sm:$0xff] %v3372
        %3772 = vst [vmem:[#allocation3 + $0x1c8] sm:$0xff] %v3374
        %3773 = vst [vmem:[#allocation3 + $0x1d0] sm:$0xff] %v3485
        %3774 = vst [vmem:[#allocation3 + $0x1d8] sm:$0xff] %v3487
        %3775 = vst [vmem:[#allocation3 + $0x1e0] sm:$0xff] %v3598
        %3776 = vst [vmem:[#allocation3 + $0x1e8] sm:$0xff] %v3600
        %3777 = vst [vmem:[#allocation3 + $0x1f0] sm:$0xff] %v3711
        %3778 = vst [vmem:[#allocation3 + $0x1f8] sm:$0xff] %v3713
        %v3779 = vld [vmem:[#allocation3] sm:$0xff]
        %v3780 = vld [vmem:[#allocation3 + $0x8] sm:$0xff]
        %v3781 = vld [vmem:[#allocation3 + $0x10] sm:$0xff]
        %v3782 = vld [vmem:[#allocation3 + $0x18] sm:$0xff]
        %s3783 = scalar_lea.vmem [#allocation3], 448
        %v3784 = vld [vmem:[%s3783 + $0x20] sm:$0xff]
        %v3785 = vld [vmem:[%s3783 + $0x28] sm:$0xff]
        %v3786 = vld [vmem:[%s3783 + $0x30] sm:$0xff]
        %v3787 = vld [vmem:[%s3783 + $0x38] sm:$0xff]
        %v3788 = vadd.f32 %v3779, %v3784
        %v3789 = vadd.f32 %v3780, %v3785
        %v3790 = vadd.f32 %v3781, %v3786
        %v3791 = vadd.f32 %v3782, %v3787
        %3792 = vst [vmem:[#allocation4] sm:$0xff] %v3788
        %3793 = vst [vmem:[#allocation4 + $0x8] sm:$0xff] %v3789
        %3794 = vst [vmem:[#allocation4 + $0x10] sm:$0xff] %v3790
        %3795 = vst [vmem:[#allocation4 + $0x18] sm:$0xff] %v3791
        %s3796 = scalar_lea.vmem [#allocation3], 64
        %v3797 = vld [vmem:[%s3796] sm:$0xff]
        %v3798 = vld [vmem:[%s3796 + $0x8] sm:$0xff]
        %v3799 = vld [vmem:[%s3796 + $0x10] sm:$0xff]
        %v3800 = vld [vmem:[%s3796 + $0x18] sm:$0xff]
        %s3801 = scalar_lea.vmem [#allocation3], 384
        %v3802 = vld [vmem:[%s3801 + $0x20] sm:$0xff]
        %v3803 = vld [vmem:[%s3801 + $0x28] sm:$0xff]
        %v3804 = vld [vmem:[%s3801 + $0x30] sm:$0xff]
        %v3805 = vld [vmem:[%s3801 + $0x38] sm:$0xff]
        %v3806 = vadd.f32 %v3797, %v3802
        %v3807 = vadd.f32 %v3798, %v3803
        %v3808 = vadd.f32 %v3799, %v3804
        %v3809 = vadd.f32 %v3800, %v3805
        %3810 = vst [vmem:[%s1053] sm:$0xff] %v3806
        %3811 = vst [vmem:[%s1053 + $0x8] sm:$0xff] %v3807
        %3812 = vst [vmem:[%s1053 + $0x10] sm:$0xff] %v3808
        %3813 = vst [vmem:[%s1053 + $0x18] sm:$0xff] %v3809
        %s3814 = scalar_lea.vmem [#allocation3], 128
        %v3815 = vld [vmem:[%s3814] sm:$0xff]
        %v3816 = vld [vmem:[%s3814 + $0x8] sm:$0xff]
        %v3817 = vld [vmem:[%s3814 + $0x10] sm:$0xff]
        %v3818 = vld [vmem:[%s3814 + $0x18] sm:$0xff]
        %s3819 = scalar_lea.vmem [#allocation3], 320
        %v3820 = vld [vmem:[%s3819 + $0x20] sm:$0xff]
        %v3821 = vld [vmem:[%s3819 + $0x28] sm:$0xff]
        %v3822 = vld [vmem:[%s3819 + $0x30] sm:$0xff]
        %v3823 = vld [vmem:[%s3819 + $0x38] sm:$0xff]
        %v3824 = vadd.f32 %v3815, %v3820
        %v3825 = vadd.f32 %v3816, %v3821
        %v3826 = vadd.f32 %v3817, %v3822
        %v3827 = vadd.f32 %v3818, %v3823
        %3828 = vst [vmem:[%s1072] sm:$0xff] %v3824
        %3829 = vst [vmem:[%s1072 + $0x8] sm:$0xff] %v3825
        %3830 = vst [vmem:[%s1072 + $0x10] sm:$0xff] %v3826
        %3831 = vst [vmem:[%s1072 + $0x18] sm:$0xff] %v3827
        %s3832 = scalar_lea.vmem [#allocation3], 192
        %v3833 = vld [vmem:[%s3832] sm:$0xff]
        %v3834 = vld [vmem:[%s3832 + $0x8] sm:$0xff]
        %v3835 = vld [vmem:[%s3832 + $0x10] sm:$0xff]
        %v3836 = vld [vmem:[%s3832 + $0x18] sm:$0xff]
        %s3837 = scalar_lea.vmem [#allocation3], 256
        %v3838 = vld [vmem:[%s3837 + $0x20] sm:$0xff]
        %v3839 = vld [vmem:[%s3837 + $0x28] sm:$0xff]
        %v3840 = vld [vmem:[%s3837 + $0x30] sm:$0xff]
        %v3841 = vld [vmem:[%s3837 + $0x38] sm:$0xff]
        %v3842 = vadd.f32 %v3833, %v3838
        %v3843 = vadd.f32 %v3834, %v3839
        %v3844 = vadd.f32 %v3835, %v3840
        %v3845 = vadd.f32 %v3836, %v3841
        %3846 = vst [vmem:[%s1091] sm:$0xff] %v3842
        %3847 = vst [vmem:[%s1091 + $0x8] sm:$0xff] %v3843
        %3848 = vst [vmem:[%s1091 + $0x10] sm:$0xff] %v3844
        %3849 = vst [vmem:[%s1091 + $0x18] sm:$0xff] %v3845
        %v3850 = vld [vmem:[%s3837] sm:$0xff]
        %v3851 = vld [vmem:[%s3837 + $0x8] sm:$0xff]
        %v3852 = vld [vmem:[%s3837 + $0x10] sm:$0xff]
        %v3853 = vld [vmem:[%s3837 + $0x18] sm:$0xff]
        %v3854 = vld [vmem:[%s3832 + $0x20] sm:$0xff]
        %v3855 = vld [vmem:[%s3832 + $0x28] sm:$0xff]
        %v3856 = vld [vmem:[%s3832 + $0x30] sm:$0xff]
        %v3857 = vld [vmem:[%s3832 + $0x38] sm:$0xff]
        %v3858 = vadd.f32 %v3850, %v3854
        %v3859 = vadd.f32 %v3851, %v3855
        %v3860 = vadd.f32 %v3852, %v3856
        %v3861 = vadd.f32 %v3853, %v3857
        %3862 = vst [vmem:[%s1108] sm:$0xff] %v3858
        %3863 = vst [vmem:[%s1108 + $0x8] sm:$0xff] %v3859
        %3864 = vst [vmem:[%s1108 + $0x10] sm:$0xff] %v3860
        %3865 = vst [vmem:[%s1108 + $0x18] sm:$0xff] %v3861
        %v3866 = vld [vmem:[%s3819] sm:$0xff]
        %v3867 = vld [vmem:[%s3819 + $0x8] sm:$0xff]
        %v3868 = vld [vmem:[%s3819 + $0x10] sm:$0xff]
        %v3869 = vld [vmem:[%s3819 + $0x18] sm:$0xff]
        %v3870 = vld [vmem:[%s3814 + $0x20] sm:$0xff]
        %v3871 = vld [vmem:[%s3814 + $0x28] sm:$0xff]
        %v3872 = vld [vmem:[%s3814 + $0x30] sm:$0xff]
        %v3873 = vld [vmem:[%s3814 + $0x38] sm:$0xff]
        %v3874 = vadd.f32 %v3866, %v3870
        %v3875 = vadd.f32 %v3867, %v3871
        %v3876 = vadd.f32 %v3868, %v3872
        %v3877 = vadd.f32 %v3869, %v3873
        %3878 = vst [vmem:[%s1125] sm:$0xff] %v3874
        %3879 = vst [vmem:[%s1125 + $0x8] sm:$0xff] %v3875
        %3880 = vst [vmem:[%s1125 + $0x10] sm:$0xff] %v3876
        %3881 = vst [vmem:[%s1125 + $0x18] sm:$0xff] %v3877
        %v3882 = vld [vmem:[%s3801] sm:$0xff]
        %v3883 = vld [vmem:[%s3801 + $0x8] sm:$0xff]
        %v3884 = vld [vmem:[%s3801 + $0x10] sm:$0xff]
        %v3885 = vld [vmem:[%s3801 + $0x18] sm:$0xff]
        %v3886 = vld [vmem:[%s3796 + $0x20] sm:$0xff]
        %v3887 = vld [vmem:[%s3796 + $0x28] sm:$0xff]
        %v3888 = vld [vmem:[%s3796 + $0x30] sm:$0xff]
        %v3889 = vld [vmem:[%s3796 + $0x38] sm:$0xff]
        %v3890 = vadd.f32 %v3882, %v3886
        %v3891 = vadd.f32 %v3883, %v3887
        %v3892 = vadd.f32 %v3884, %v3888
        %v3893 = vadd.f32 %v3885, %v3889
        %3894 = vst [vmem:[%s1142] sm:$0xff] %v3890
        %3895 = vst [vmem:[%s1142 + $0x8] sm:$0xff] %v3891
        %3896 = vst [vmem:[%s1142 + $0x10] sm:$0xff] %v3892
        %3897 = vst [vmem:[%s1142 + $0x18] sm:$0xff] %v3893
        %v3898 = vld [vmem:[%s3783] sm:$0xff]
        %v3899 = vld [vmem:[%s3783 + $0x8] sm:$0xff]
        %v3900 = vld [vmem:[%s3783 + $0x10] sm:$0xff]
        %v3901 = vld [vmem:[%s3783 + $0x18] sm:$0xff]
        %v3902 = vld [vmem:[#allocation3 + $0x20] sm:$0xff]
        %v3903 = vld [vmem:[#allocation3 + $0x28] sm:$0xff]
        %v3904 = vld [vmem:[#allocation3 + $0x30] sm:$0xff]
        %v3905 = vld [vmem:[#allocation3 + $0x38] sm:$0xff]
        %v3906 = vadd.f32 %v3898, %v3902
        %v3907 = vadd.f32 %v3899, %v3903
        %v3908 = vadd.f32 %v3900, %v3904
        %v3909 = vadd.f32 %v3901, %v3905
        %3910 = vst [vmem:[%s1159] sm:$0xff] %v3906
        %3911 = vst [vmem:[%s1159 + $0x8] sm:$0xff] %v3907
        %3912 = vst [vmem:[%s1159 + $0x10] sm:$0xff] %v3908
        %3913 = vst [vmem:[%s1159 + $0x18] sm:$0xff] %v3909
        %s3914 = scalar_lea.vmem %s597, 8 [#allocation10]
        %v3915 = vld [vmem:[%s3914] sm:$0xff]
        %s3916 = scalar_lea.vmem %s604, 8 [#allocation11]
        %v3917 = vld [vmem:[%s3916] sm:$0xff]
        %v3918 = vld [vmem:[#allocation4] sm:$0xff]
        %v3919 = vld [vmem:[#allocation4 + $0x8] sm:$0xff]
        %v3920 = vld [vmem:[#allocation4 + $0x10] sm:$0xff]
        %v3921 = vld [vmem:[#allocation4 + $0x18] sm:$0xff]
        %v3922 = vld [vmem:[#allocation8] sm:$0xff]
        %v3923 = vld [vmem:[#allocation8 + $0x8] sm:$0xff]
        %v3924 = vld [vmem:[#allocation8 + $0x10] sm:$0xff]
        %v3925 = vld [vmem:[#allocation8 + $0x18] sm:$0xff]
        %v3926 = vld [vmem:[#allocation8 + $0x20] sm:$0xff]
        %v3927 = vld [vmem:[#allocation8 + $0x28] sm:$0xff]
        %v3928 = vld [vmem:[#allocation8 + $0x30] sm:$0xff]
        %v3929 = vld [vmem:[#allocation8 + $0x38] sm:$0xff]
        %v3930 = vld [vmem:[#allocation8 + $0x40] sm:$0xff]
        %v3931 = vld [vmem:[#allocation8 + $0x48] sm:$0xff]
        %v3932 = vld [vmem:[#allocation8 + $0x50] sm:$0xff]
        %v3933 = vld [vmem:[#allocation8 + $0x58] sm:$0xff]
        %v3934 = vld [vmem:[#allocation8 + $0x60] sm:$0xff]
        %v3935 = vld [vmem:[#allocation8 + $0x68] sm:$0xff]
        %v3936 = vld [vmem:[#allocation8 + $0x70] sm:$0xff]
        %v3937 = vld [vmem:[#allocation8 + $0x78] sm:$0xff]
        %v3938 = vld [vmem:[#allocation8 + $0x80] sm:$0xff]
        %v3939 = vld [vmem:[#allocation8 + $0x88] sm:$0xff]
        %v3940 = vld [vmem:[#allocation8 + $0x90] sm:$0xff]
        %v3941 = vld [vmem:[#allocation8 + $0x98] sm:$0xff]
        %v3942 = vld [vmem:[#allocation8 + $0xa0] sm:$0xff]
        %v3943 = vld [vmem:[#allocation8 + $0xa8] sm:$0xff]
        %v3944 = vld [vmem:[#allocation8 + $0xb0] sm:$0xff]
        %v3945 = vld [vmem:[#allocation8 + $0xb8] sm:$0xff]
        %v3946 = vld [vmem:[#allocation8 + $0xc0] sm:$0xff]
        %v3947 = vld [vmem:[#allocation8 + $0xc8] sm:$0xff]
        %v3948 = vld [vmem:[#allocation8 + $0xd0] sm:$0xff]
        %v3949 = vld [vmem:[#allocation8 + $0xd8] sm:$0xff]
        %v3950 = vld [vmem:[#allocation8 + $0xe0] sm:$0xff]
        %v3951 = vld [vmem:[#allocation8 + $0xe8] sm:$0xff]
        %v3952 = vld [vmem:[#allocation8 + $0xf0] sm:$0xff]
        %v3953 = vld [vmem:[#allocation8 + $0xf8] sm:$0xff]
        %v3954 = vld [vmem:[#allocation8 + $0x100] sm:$0xff]
        %v3955 = vld [vmem:[#allocation8 + $0x108] sm:$0xff]
        %v3956 = vld [vmem:[#allocation8 + $0x110] sm:$0xff]
        %v3957 = vld [vmem:[#allocation8 + $0x118] sm:$0xff]
        %v3958 = vld [vmem:[#allocation8 + $0x120] sm:$0xff]
        %v3959 = vld [vmem:[#allocation8 + $0x128] sm:$0xff]
        %v3960 = vld [vmem:[#allocation8 + $0x130] sm:$0xff]
        %v3961 = vld [vmem:[#allocation8 + $0x138] sm:$0xff]
        %v3962 = vld [vmem:[#allocation8 + $0x140] sm:$0xff]
        %v3963 = vld [vmem:[#allocation8 + $0x148] sm:$0xff]
        %v3964 = vld [vmem:[#allocation8 + $0x150] sm:$0xff]
        %v3965 = vld [vmem:[#allocation8 + $0x158] sm:$0xff]
        %v3966 = vld [vmem:[#allocation8 + $0x160] sm:$0xff]
        %v3967 = vld [vmem:[#allocation8 + $0x168] sm:$0xff]
        %v3968 = vld [vmem:[#allocation8 + $0x170] sm:$0xff]
        %v3969 = vld [vmem:[#allocation8 + $0x178] sm:$0xff]
        %v3970 = vld [vmem:[#allocation8 + $0x180] sm:$0xff]
        %v3971 = vld [vmem:[#allocation8 + $0x188] sm:$0xff]
        %v3972 = vld [vmem:[#allocation8 + $0x190] sm:$0xff]
        %v3973 = vld [vmem:[#allocation8 + $0x198] sm:$0xff]
        %v3974 = vld [vmem:[#allocation8 + $0x1a0] sm:$0xff]
        %v3975 = vld [vmem:[#allocation8 + $0x1a8] sm:$0xff]
        %v3976 = vld [vmem:[#allocation8 + $0x1b0] sm:$0xff]
        %v3977 = vld [vmem:[#allocation8 + $0x1b8] sm:$0xff]
        %v3978 = vld [vmem:[#allocation8 + $0x1c0] sm:$0xff]
        %v3979 = vld [vmem:[#allocation8 + $0x1c8] sm:$0xff]
        %v3980 = vld [vmem:[#allocation8 + $0x1d0] sm:$0xff]
        %v3981 = vld [vmem:[#allocation8 + $0x1d8] sm:$0xff]
        %v3982 = vld [vmem:[#allocation8 + $0x1e0] sm:$0xff]
        %v3983 = vld [vmem:[#allocation8 + $0x1e8] sm:$0xff]
        %v3984 = vld [vmem:[#allocation8 + $0x1f0] sm:$0xff]
        %v3985 = vld [vmem:[#allocation8 + $0x1f8] sm:$0xff]
        %3986 = vmatprep.subr.mxu0 %v3923
        %3987 = vmatpush1.msra.mxu0 %v3922
        %3988 = vmatprep.subr.mxu0 %v3927
        %3989 = vmatpush1.msra.mxu0 %v3926
        %3990 = vmatprep.subr.mxu0 %v3931
        %3991 = vmatpush1.msra.mxu0 %v3930
        %3992 = vmatprep.subr.mxu0 %v3935
        %3993 = vmatpush1.msra.mxu0 %v3934
        %3994 = vmatprep.subr.mxu0 %v3939
        %3995 = vmatpush1.msra.mxu0 %v3938
        %3996 = vmatprep.subr.mxu0 %v3943
        %3997 = vmatpush1.msra.mxu0 %v3942
        %3998 = vmatprep.subr.mxu0 %v3947
        %3999 = vmatpush1.msra.mxu0 %v3946
        %4000 = vmatprep.subr.mxu0 %v3951
        %4001 = vmatpush1.msra.mxu0 %v3950
        %4002 = vmatprep.subr.mxu0 %v3955
        %4003 = vmatpush1.msra.mxu0 %v3954
        %4004 = vmatprep.subr.mxu0 %v3959
        %4005 = vmatpush1.msra.mxu0 %v3958
        %4006 = vmatprep.subr.mxu0 %v3963
        %4007 = vmatpush1.msra.mxu0 %v3962
        %4008 = vmatprep.subr.mxu0 %v3967
        %4009 = vmatpush1.msra.mxu0 %v3966
        %4010 = vmatprep.subr.mxu0 %v3971
        %4011 = vmatpush1.msra.mxu0 %v3970
        %4012 = vmatprep.subr.mxu0 %v3975
        %4013 = vmatpush1.msra.mxu0 %v3974
        %4014 = vmatprep.subr.mxu0 %v3979
        %4015 = vmatpush1.msra.mxu0 %v3978
        %4016 = vmatprep.subr.mxu0 %v3983
        %4017 = vmatpush1.msra.mxu0 %v3982
        %4018 = vmatprep.subr.mxu0 0.0
        %4019 = vmatpush1.msra.mxu0 0.0
        %4020 = vmatprep.subr.mxu0 0.0
        %4021 = vmatpush1.msra.mxu0 0.0
        %4022 = vmatprep.subr.mxu0 0.0
        %4023 = vmatpush1.msra.mxu0 0.0
        %4024 = vmatprep.subr.mxu0 0.0
        %4025 = vmatpush1.msra.mxu0 0.0
        %4026 = vmatprep.subr.mxu0 0.0
        %4027 = vmatpush1.msra.mxu0 0.0
        %4028 = vmatprep.subr.mxu0 0.0
        %4029 = vmatpush1.msra.mxu0 0.0
        %4030 = vmatprep.subr.mxu0 0.0
        %4031 = vmatpush1.msra.mxu0 0.0
        %4032 = vmatprep.subr.mxu0 0.0
        %4033 = vmatpush1.msra.mxu0 0.0
        %4034 = vmatprep.subr.mxu0 0.0
        %4035 = vmatpush1.msra.mxu0 0.0
        %4036 = vmatprep.subr.mxu0 0.0
        %4037 = vmatpush1.msra.mxu0 0.0
        %4038 = vmatprep.subr.mxu0 0.0
        %4039 = vmatpush1.msra.mxu0 0.0
        %4040 = vmatprep.subr.mxu0 0.0
        %4041 = vmatpush1.msra.mxu0 0.0
        %4042 = vmatprep.subr.mxu0 0.0
        %4043 = vmatpush1.msra.mxu0 0.0
        %4044 = vmatprep.subr.mxu0 0.0
        %4045 = vmatpush1.msra.mxu0 0.0
        %4046 = vmatprep.subr.mxu0 0.0
        %4047 = vmatpush1.msra.mxu0 0.0
        %4048 = vmatprep.subr.mxu0 0.0
        %4049 = vmatpush1.msra.mxu0 0.0
        %4050 = vmatprep.mubr.f32.mxu0 0.0
        %4051 = vmatmul.mubr.f32.gmra.mrb[0].mxu0 %v3915
        %v4052 = vpop.f32.mrb[0].mxu0
        %v4053 = vadd.f32 0.0, %v4052
        %v4054 = vpop.f32.mrb[0].mxu0
        %v4055 = vadd.f32 0.0, %v4054
        %4056 = vdwg.mxu0
        %4057 = vmatprep.subr.mxu0 %v3925
        %4058 = vmatpush1.msra.mxu0 %v3924
        %4059 = vmatprep.subr.mxu0 %v3929
        %4060 = vmatpush1.msra.mxu0 %v3928
        %4061 = vmatprep.subr.mxu0 %v3933
        %4062 = vmatpush1.msra.mxu0 %v3932
        %4063 = vmatprep.subr.mxu0 %v3937
        %4064 = vmatpush1.msra.mxu0 %v3936
        %4065 = vmatprep.subr.mxu0 %v3941
        %4066 = vmatpush1.msra.mxu0 %v3940
        %4067 = vmatprep.subr.mxu0 %v3945
        %4068 = vmatpush1.msra.mxu0 %v3944
        %4069 = vmatprep.subr.mxu0 %v3949
        %4070 = vmatpush1.msra.mxu0 %v3948
        %4071 = vmatprep.subr.mxu0 %v3953
        %4072 = vmatpush1.msra.mxu0 %v3952
        %4073 = vmatprep.subr.mxu0 %v3957
        %4074 = vmatpush1.msra.mxu0 %v3956
        %4075 = vmatprep.subr.mxu0 %v3961
        %4076 = vmatpush1.msra.mxu0 %v3960
        %4077 = vmatprep.subr.mxu0 %v3965
        %4078 = vmatpush1.msra.mxu0 %v3964
        %4079 = vmatprep.subr.mxu0 %v3969
        %4080 = vmatpush1.msra.mxu0 %v3968
        %4081 = vmatprep.subr.mxu0 %v3973
        %4082 = vmatpush1.msra.mxu0 %v3972
        %4083 = vmatprep.subr.mxu0 %v3977
        %4084 = vmatpush1.msra.mxu0 %v3976
        %4085 = vmatprep.subr.mxu0 %v3981
        %4086 = vmatpush1.msra.mxu0 %v3980
        %4087 = vmatprep.subr.mxu0 %v3985
        %4088 = vmatpush1.msra.mxu0 %v3984
        %4089 = vmatprep.subr.mxu0 0.0
        %4090 = vmatpush1.msra.mxu0 0.0
        %4091 = vmatprep.subr.mxu0 0.0
        %4092 = vmatpush1.msra.mxu0 0.0
        %4093 = vmatprep.subr.mxu0 0.0
        %4094 = vmatpush1.msra.mxu0 0.0
        %4095 = vmatprep.subr.mxu0 0.0
        %4096 = vmatpush1.msra.mxu0 0.0
        %4097 = vmatprep.subr.mxu0 0.0
        %4098 = vmatpush1.msra.mxu0 0.0
        %4099 = vmatprep.subr.mxu0 0.0
        %4100 = vmatpush1.msra.mxu0 0.0
        %4101 = vmatprep.subr.mxu0 0.0
        %4102 = vmatpush1.msra.mxu0 0.0
        %4103 = vmatprep.subr.mxu0 0.0
        %4104 = vmatpush1.msra.mxu0 0.0
        %4105 = vmatprep.subr.mxu0 0.0
        %4106 = vmatpush1.msra.mxu0 0.0
        %4107 = vmatprep.subr.mxu0 0.0
        %4108 = vmatpush1.msra.mxu0 0.0
        %4109 = vmatprep.subr.mxu0 0.0
        %4110 = vmatpush1.msra.mxu0 0.0
        %4111 = vmatprep.subr.mxu0 0.0
        %4112 = vmatpush1.msra.mxu0 0.0
        %4113 = vmatprep.subr.mxu0 0.0
        %4114 = vmatpush1.msra.mxu0 0.0
        %4115 = vmatprep.subr.mxu0 0.0
        %4116 = vmatpush1.msra.mxu0 0.0
        %4117 = vmatprep.subr.mxu0 0.0
        %4118 = vmatpush1.msra.mxu0 0.0
        %4119 = vmatprep.subr.mxu0 0.0
        %4120 = vmatpush1.msra.mxu0 0.0
        %4121 = vmatprep.mubr.f32.mxu0 0.0
        %4122 = vmatmul.mubr.f32.gmra.mrb[0].mxu0 %v3915
        %v4123 = vpop.f32.mrb[0].mxu0
        %v4124 = vadd.f32 0.0, %v4123
        %v4125 = vpop.f32.mrb[0].mxu0
        %v4126 = vadd.f32 0.0, %v4125
        %4127 = vdwg.mxu0
        %v4128 = vadd.f32 %v3918, %v4053
        %v4129 = vadd.f32 %v3919, %v4055
        %v4130 = vadd.f32 %v3920, %v4124
        %v4131 = vadd.f32 %v3921, %v4126
        %v4132 = vxor.u32 %v4128, 2147483648
        %v4133 = vmul.f32 %v4132, 1.442695
        %v4134 = vpow.pop %v4133
        %v4135 = vadd.f32 %v4134, 1.0
        %v4136 = vrcp.pop %v4135
        %v4137 = vmul.f32 1.0, %v4136
        %v4138 = vxor.u32 %v4129, 2147483648
        %v4139 = vmul.f32 %v4138, 1.442695
        %v4140 = vpow.pop %v4139
        %v4141 = vadd.f32 %v4140, 1.0
        %v4142 = vrcp.pop %v4141
        %v4143 = vmul.f32 1.0, %v4142
        %v4144 = vtanh.pop %v4130
        %v4145 = vxor.u32 %v4131, 2147483648
        %v4146 = vmul.f32 %v4145, 1.442695
        %v4147 = vpow.pop %v4146
        %v4148 = vadd.f32 %v4147, 1.0
        %v4149 = vrcp.pop %v4148
        %v4150 = vmul.f32 1.0, %v4149
        %v4151 = vmul.f32 %v4143, %v3917
        %v4152 = vmul.f32 %v4137, %v4144
        %v4153 = vadd.f32 %v4151, %v4152
        %v4154 = vtanh.pop %v4153
        %v4155 = vmul.f32 %v4150, %v4154
        %4156 = vst [vmem:[#allocation6] sm:$0xff] %v4155
        %v4157 = vld [vmem:[%s1053] sm:$0xff]
        %v4158 = vld [vmem:[%s1053 + $0x8] sm:$0xff]
        %v4159 = vld [vmem:[%s1053 + $0x10] sm:$0xff]
        %v4160 = vld [vmem:[%s1053 + $0x18] sm:$0xff]
        %v4161 = vld [vmem:[#allocation8] sm:$0xff]
        %v4162 = vld [vmem:[#allocation8 + $0x8] sm:$0xff]
        %v4163 = vld [vmem:[#allocation8 + $0x10] sm:$0xff]
        %v4164 = vld [vmem:[#allocation8 + $0x18] sm:$0xff]
        %v4165 = vld [vmem:[#allocation8 + $0x20] sm:$0xff]
        %v4166 = vld [vmem:[#allocation8 + $0x28] sm:$0xff]
        %v4167 = vld [vmem:[#allocation8 + $0x30] sm:$0xff]
        %v4168 = vld [vmem:[#allocation8 + $0x38] sm:$0xff]
        %v4169 = vld [vmem:[#allocation8 + $0x40] sm:$0xff]
        %v4170 = vld [vmem:[#allocation8 + $0x48] sm:$0xff]
        %v4171 = vld [vmem:[#allocation8 + $0x50] sm:$0xff]
        %v4172 = vld [vmem:[#allocation8 + $0x58] sm:$0xff]
        %v4173 = vld [vmem:[#allocation8 + $0x60] sm:$0xff]
        %v4174 = vld [vmem:[#allocation8 + $0x68] sm:$0xff]
        %v4175 = vld [vmem:[#allocation8 + $0x70] sm:$0xff]
        %v4176 = vld [vmem:[#allocation8 + $0x78] sm:$0xff]
        %v4177 = vld [vmem:[#allocation8 + $0x80] sm:$0xff]
        %v4178 = vld [vmem:[#allocation8 + $0x88] sm:$0xff]
        %v4179 = vld [vmem:[#allocation8 + $0x90] sm:$0xff]
        %v4180 = vld [vmem:[#allocation8 + $0x98] sm:$0xff]
        %v4181 = vld [vmem:[#allocation8 + $0xa0] sm:$0xff]
        %v4182 = vld [vmem:[#allocation8 + $0xa8] sm:$0xff]
        %v4183 = vld [vmem:[#allocation8 + $0xb0] sm:$0xff]
        %v4184 = vld [vmem:[#allocation8 + $0xb8] sm:$0xff]
        %v4185 = vld [vmem:[#allocation8 + $0xc0] sm:$0xff]
        %v4186 = vld [vmem:[#allocation8 + $0xc8] sm:$0xff]
        %v4187 = vld [vmem:[#allocation8 + $0xd0] sm:$0xff]
        %v4188 = vld [vmem:[#allocation8 + $0xd8] sm:$0xff]
        %v4189 = vld [vmem:[#allocation8 + $0xe0] sm:$0xff]
        %v4190 = vld [vmem:[#allocation8 + $0xe8] sm:$0xff]
        %v4191 = vld [vmem:[#allocation8 + $0xf0] sm:$0xff]
        %v4192 = vld [vmem:[#allocation8 + $0xf8] sm:$0xff]
        %v4193 = vld [vmem:[#allocation8 + $0x100] sm:$0xff]
        %v4194 = vld [vmem:[#allocation8 + $0x108] sm:$0xff]
        %v4195 = vld [vmem:[#allocation8 + $0x110] sm:$0xff]
        %v4196 = vld [vmem:[#allocation8 + $0x118] sm:$0xff]
        %v4197 = vld [vmem:[#allocation8 + $0x120] sm:$0xff]
        %v4198 = vld [vmem:[#allocation8 + $0x128] sm:$0xff]
        %v4199 = vld [vmem:[#allocation8 + $0x130] sm:$0xff]
        %v4200 = vld [vmem:[#allocation8 + $0x138] sm:$0xff]
        %v4201 = vld [vmem:[#allocation8 + $0x140] sm:$0xff]
        %v4202 = vld [vmem:[#allocation8 + $0x148] sm:$0xff]
        %v4203 = vld [vmem:[#allocation8 + $0x150] sm:$0xff]
        %v4204 = vld [vmem:[#allocation8 + $0x158] sm:$0xff]
        %v4205 = vld [vmem:[#allocation8 + $0x160] sm:$0xff]
        %v4206 = vld [vmem:[#allocation8 + $0x168] sm:$0xff]
        %v4207 = vld [vmem:[#allocation8 + $0x170] sm:$0xff]
        %v4208 = vld [vmem:[#allocation8 + $0x178] sm:$0xff]
        %v4209 = vld [vmem:[#allocation8 + $0x180] sm:$0xff]
        %v4210 = vld [vmem:[#allocation8 + $0x188] sm:$0xff]
        %v4211 = vld [vmem:[#allocation8 + $0x190] sm:$0xff]
        %v4212 = vld [vmem:[#allocation8 + $0x198] sm:$0xff]
        %v4213 = vld [vmem:[#allocation8 + $0x1a0] sm:$0xff]
        %v4214 = vld [vmem:[#allocation8 + $0x1a8] sm:$0xff]
        %v4215 = vld [vmem:[#allocation8 + $0x1b0] sm:$0xff]
        %v4216 = vld [vmem:[#allocation8 + $0x1b8] sm:$0xff]
        %v4217 = vld [vmem:[#allocation8 + $0x1c0] sm:$0xff]
        %v4218 = vld [vmem:[#allocation8 + $0x1c8] sm:$0xff]
        %v4219 = vld [vmem:[#allocation8 + $0x1d0] sm:$0xff]
        %v4220 = vld [vmem:[#allocation8 + $0x1d8] sm:$0xff]
        %v4221 = vld [vmem:[#allocation8 + $0x1e0] sm:$0xff]
        %v4222 = vld [vmem:[#allocation8 + $0x1e8] sm:$0xff]
        %v4223 = vld [vmem:[#allocation8 + $0x1f0] sm:$0xff]
        %v4224 = vld [vmem:[#allocation8 + $0x1f8] sm:$0xff]
        %4225 = vmatprep.subr.mxu0 %v4162
        %4226 = vmatpush1.msra.mxu0 %v4161
        %4227 = vmatprep.subr.mxu0 %v4166
        %4228 = vmatpush1.msra.mxu0 %v4165
        %4229 = vmatprep.subr.mxu0 %v4170
        %4230 = vmatpush1.msra.mxu0 %v4169
        %4231 = vmatprep.subr.mxu0 %v4174
        %4232 = vmatpush1.msra.mxu0 %v4173
        %4233 = vmatprep.subr.mxu0 %v4178
        %4234 = vmatpush1.msra.mxu0 %v4177
        %4235 = vmatprep.subr.mxu0 %v4182
        %4236 = vmatpush1.msra.mxu0 %v4181
        %4237 = vmatprep.subr.mxu0 %v4186
        %4238 = vmatpush1.msra.mxu0 %v4185
        %4239 = vmatprep.subr.mxu0 %v4190
        %4240 = vmatpush1.msra.mxu0 %v4189
        %4241 = vmatprep.subr.mxu0 %v4194
        %4242 = vmatpush1.msra.mxu0 %v4193
        %4243 = vmatprep.subr.mxu0 %v4198
        %4244 = vmatpush1.msra.mxu0 %v4197
        %4245 = vmatprep.subr.mxu0 %v4202
        %4246 = vmatpush1.msra.mxu0 %v4201
        %4247 = vmatprep.subr.mxu0 %v4206
        %4248 = vmatpush1.msra.mxu0 %v4205
        %4249 = vmatprep.subr.mxu0 %v4210
        %4250 = vmatpush1.msra.mxu0 %v4209
        %4251 = vmatprep.subr.mxu0 %v4214
        %4252 = vmatpush1.msra.mxu0 %v4213
        %4253 = vmatprep.subr.mxu0 %v4218
        %4254 = vmatpush1.msra.mxu0 %v4217
        %4255 = vmatprep.subr.mxu0 %v4222
        %4256 = vmatpush1.msra.mxu0 %v4221
        %4257 = vmatprep.subr.mxu0 0.0
        %4258 = vmatpush1.msra.mxu0 0.0
        %4259 = vmatprep.subr.mxu0 0.0
        %4260 = vmatpush1.msra.mxu0 0.0
        %4261 = vmatprep.subr.mxu0 0.0
        %4262 = vmatpush1.msra.mxu0 0.0
        %4263 = vmatprep.subr.mxu0 0.0
        %4264 = vmatpush1.msra.mxu0 0.0
        %4265 = vmatprep.subr.mxu0 0.0
        %4266 = vmatpush1.msra.mxu0 0.0
        %4267 = vmatprep.subr.mxu0 0.0
        %4268 = vmatpush1.msra.mxu0 0.0
        %4269 = vmatprep.subr.mxu0 0.0
        %4270 = vmatpush1.msra.mxu0 0.0
        %4271 = vmatprep.subr.mxu0 0.0
        %4272 = vmatpush1.msra.mxu0 0.0
        %4273 = vmatprep.subr.mxu0 0.0
        %4274 = vmatpush1.msra.mxu0 0.0
        %4275 = vmatprep.subr.mxu0 0.0
        %4276 = vmatpush1.msra.mxu0 0.0
        %4277 = vmatprep.subr.mxu0 0.0
        %4278 = vmatpush1.msra.mxu0 0.0
        %4279 = vmatprep.subr.mxu0 0.0
        %4280 = vmatpush1.msra.mxu0 0.0
        %4281 = vmatprep.subr.mxu0 0.0
        %4282 = vmatpush1.msra.mxu0 0.0
        %4283 = vmatprep.subr.mxu0 0.0
        %4284 = vmatpush1.msra.mxu0 0.0
        %4285 = vmatprep.subr.mxu0 0.0
        %4286 = vmatpush1.msra.mxu0 0.0
        %4287 = vmatprep.subr.mxu0 0.0
        %4288 = vmatpush1.msra.mxu0 0.0
        %4289 = vmatprep.mubr.f32.mxu0 0.0
        %4290 = vmatmul.mubr.f32.gmra.mrb[0].mxu0 %v4155
        %v4291 = vpop.f32.mrb[0].mxu0
        %v4292 = vadd.f32 0.0, %v4291
        %v4293 = vpop.f32.mrb[0].mxu0
        %v4294 = vadd.f32 0.0, %v4293
        %4295 = vdwg.mxu0
        %4296 = vmatprep.subr.mxu0 %v4164
        %4297 = vmatpush1.msra.mxu0 %v4163
        %4298 = vmatprep.subr.mxu0 %v4168
        %4299 = vmatpush1.msra.mxu0 %v4167
        %4300 = vmatprep.subr.mxu0 %v4172
        %4301 = vmatpush1.msra.mxu0 %v4171
        %4302 = vmatprep.subr.mxu0 %v4176
        %4303 = vmatpush1.msra.mxu0 %v4175
        %4304 = vmatprep.subr.mxu0 %v4180
        %4305 = vmatpush1.msra.mxu0 %v4179
        %4306 = vmatprep.subr.mxu0 %v4184
        %4307 = vmatpush1.msra.mxu0 %v4183
        %4308 = vmatprep.subr.mxu0 %v4188
        %4309 = vmatpush1.msra.mxu0 %v4187
        %4310 = vmatprep.subr.mxu0 %v4192
        %4311 = vmatpush1.msra.mxu0 %v4191
        %4312 = vmatprep.subr.mxu0 %v4196
        %4313 = vmatpush1.msra.mxu0 %v4195
        %4314 = vmatprep.subr.mxu0 %v4200
        %4315 = vmatpush1.msra.mxu0 %v4199
        %4316 = vmatprep.subr.mxu0 %v4204
        %4317 = vmatpush1.msra.mxu0 %v4203
        %4318 = vmatprep.subr.mxu0 %v4208
        %4319 = vmatpush1.msra.mxu0 %v4207
        %4320 = vmatprep.subr.mxu0 %v4212
        %4321 = vmatpush1.msra.mxu0 %v4211
        %4322 = vmatprep.subr.mxu0 %v4216
        %4323 = vmatpush1.msra.mxu0 %v4215
        %4324 = vmatprep.subr.mxu0 %v4220
        %4325 = vmatpush1.msra.mxu0 %v4219
        %4326 = vmatprep.subr.mxu0 %v4224
        %4327 = vmatpush1.msra.mxu0 %v4223
        %4328 = vmatprep.subr.mxu0 0.0
        %4329 = vmatpush1.msra.mxu0 0.0
        %4330 = vmatprep.subr.mxu0 0.0
        %4331 = vmatpush1.msra.mxu0 0.0
        %4332 = vmatprep.subr.mxu0 0.0
        %4333 = vmatpush1.msra.mxu0 0.0
        %4334 = vmatprep.subr.mxu0 0.0
        %4335 = vmatpush1.msra.mxu0 0.0
        %4336 = vmatprep.subr.mxu0 0.0
        %4337 = vmatpush1.msra.mxu0 0.0
        %4338 = vmatprep.subr.mxu0 0.0
        %4339 = vmatpush1.msra.mxu0 0.0
        %4340 = vmatprep.subr.mxu0 0.0
        %4341 = vmatpush1.msra.mxu0 0.0
        %4342 = vmatprep.subr.mxu0 0.0
        %4343 = vmatpush1.msra.mxu0 0.0
        %4344 = vmatprep.subr.mxu0 0.0
        %4345 = vmatpush1.msra.mxu0 0.0
        %4346 = vmatprep.subr.mxu0 0.0
        %4347 = vmatpush1.msra.mxu0 0.0
        %4348 = vmatprep.subr.mxu0 0.0
        %4349 = vmatpush1.msra.mxu0 0.0
        %4350 = vmatprep.subr.mxu0 0.0
        %4351 = vmatpush1.msra.mxu0 0.0
        %4352 = vmatprep.subr.mxu0 0.0
        %4353 = vmatpush1.msra.mxu0 0.0
        %4354 = vmatprep.subr.mxu0 0.0
        %4355 = vmatpush1.msra.mxu0 0.0
        %4356 = vmatprep.subr.mxu0 0.0
        %4357 = vmatpush1.msra.mxu0 0.0
        %4358 = vmatprep.subr.mxu0 0.0
        %4359 = vmatpush1.msra.mxu0 0.0
        %4360 = vmatprep.mubr.f32.mxu0 0.0
        %4361 = vmatmul.mubr.f32.gmra.mrb[0].mxu0 %v4155
        %v4362 = vpop.f32.mrb[0].mxu0
        %v4363 = vadd.f32 0.0, %v4362
        %v4364 = vpop.f32.mrb[0].mxu0
        %v4365 = vadd.f32 0.0, %v4364
        %4366 = vdwg.mxu0
        %v4367 = vadd.f32 %v4157, %v4292
        %v4368 = vadd.f32 %v4158, %v4294
        %v4369 = vadd.f32 %v4159, %v4363
        %v4370 = vadd.f32 %v4160, %v4365
        %v4371 = vxor.u32 %v4367, 2147483648
        %v4372 = vmul.f32 %v4371, 1.442695
        %v4373 = vpow.pop %v4372
        %v4374 = vadd.f32 %v4373, 1.0
        %v4375 = vrcp.pop %v4374
        %v4376 = vmul.f32 1.0, %v4375
        %v4377 = vxor.u32 %v4368, 2147483648
        %v4378 = vmul.f32 %v4377, 1.442695
        %v4379 = vpow.pop %v4378
        %v4380 = vadd.f32 %v4379, 1.0
        %v4381 = vrcp.pop %v4380
        %v4382 = vmul.f32 1.0, %v4381
        %v4383 = vtanh.pop %v4369
        %v4384 = vxor.u32 %v4370, 2147483648
        %v4385 = vmul.f32 %v4384, 1.442695
        %v4386 = vpow.pop %v4385
        %v4387 = vadd.f32 %v4386, 1.0
        %v4388 = vrcp.pop %v4387
        %v4389 = vmul.f32 1.0, %v4388
        %v4390 = vmul.f32 %v4382, %v4153
        %v4391 = vmul.f32 %v4376, %v4383
        %v4392 = vadd.f32 %v4390, %v4391
        %v4393 = vtanh.pop %v4392
        %v4394 = vmul.f32 %v4389, %v4393
        %s4395 = scalar_lea.vmem [#allocation6], 8
        %4396 = vst [vmem:[%s4395] sm:$0xff] %v4394
        %v4397 = vld [vmem:[%s1072] sm:$0xff]
        %v4398 = vld [vmem:[%s1072 + $0x8] sm:$0xff]
        %v4399 = vld [vmem:[%s1072 + $0x10] sm:$0xff]
        %v4400 = vld [vmem:[%s1072 + $0x18] sm:$0xff]
        %v4401 = vld [vmem:[#allocation8] sm:$0xff]
        %v4402 = vld [vmem:[#allocation8 + $0x8] sm:$0xff]
        %v4403 = vld [vmem:[#allocation8 + $0x10] sm:$0xff]
        %v4404 = vld [vmem:[#allocation8 + $0x18] sm:$0xff]
        %v4405 = vld [vmem:[#allocation8 + $0x20] sm:$0xff]
        %v4406 = vld [vmem:[#allocation8 + $0x28] sm:$0xff]
        %v4407 = vld [vmem:[#allocation8 + $0x30] sm:$0xff]
        %v4408 = vld [vmem:[#allocation8 + $0x38] sm:$0xff]
        %v4409 = vld [vmem:[#allocation8 + $0x40] sm:$0xff]
        %v4410 = vld [vmem:[#allocation8 + $0x48] sm:$0xff]
        %v4411 = vld [vmem:[#allocation8 + $0x50] sm:$0xff]
        %v4412 = vld [vmem:[#allocation8 + $0x58] sm:$0xff]
        %v4413 = vld [vmem:[#allocation8 + $0x60] sm:$0xff]
        %v4414 = vld [vmem:[#allocation8 + $0x68] sm:$0xff]
        %v4415 = vld [vmem:[#allocation8 + $0x70] sm:$0xff]
        %v4416 = vld [vmem:[#allocation8 + $0x78] sm:$0xff]
        %v4417 = vld [vmem:[#allocation8 + $0x80] sm:$0xff]
        %v4418 = vld [vmem:[#allocation8 + $0x88] sm:$0xff]
        %v4419 = vld [vmem:[#allocation8 + $0x90] sm:$0xff]
        %v4420 = vld [vmem:[#allocation8 + $0x98] sm:$0xff]
        %v4421 = vld [vmem:[#allocation8 + $0xa0] sm:$0xff]
        %v4422 = vld [vmem:[#allocation8 + $0xa8] sm:$0xff]
        %v4423 = vld [vmem:[#allocation8 + $0xb0] sm:$0xff]
        %v4424 = vld [vmem:[#allocation8 + $0xb8] sm:$0xff]
        %v4425 = vld [vmem:[#allocation8 + $0xc0] sm:$0xff]
        %v4426 = vld [vmem:[#allocation8 + $0xc8] sm:$0xff]
        %v4427 = vld [vmem:[#allocation8 + $0xd0] sm:$0xff]
        %v4428 = vld [vmem:[#allocation8 + $0xd8] sm:$0xff]
        %v4429 = vld [vmem:[#allocation8 + $0xe0] sm:$0xff]
        %v4430 = vld [vmem:[#allocation8 + $0xe8] sm:$0xff]
        %v4431 = vld [vmem:[#allocation8 + $0xf0] sm:$0xff]
        %v4432 = vld [vmem:[#allocation8 + $0xf8] sm:$0xff]
        %v4433 = vld [vmem:[#allocation8 + $0x100] sm:$0xff]
        %v4434 = vld [vmem:[#allocation8 + $0x108] sm:$0xff]
        %v4435 = vld [vmem:[#allocation8 + $0x110] sm:$0xff]
        %v4436 = vld [vmem:[#allocation8 + $0x118] sm:$0xff]
        %v4437 = vld [vmem:[#allocation8 + $0x120] sm:$0xff]
        %v4438 = vld [vmem:[#allocation8 + $0x128] sm:$0xff]
        %v4439 = vld [vmem:[#allocation8 + $0x130] sm:$0xff]
        %v4440 = vld [vmem:[#allocation8 + $0x138] sm:$0xff]
        %v4441 = vld [vmem:[#allocation8 + $0x140] sm:$0xff]
        %v4442 = vld [vmem:[#allocation8 + $0x148] sm:$0xff]
        %v4443 = vld [vmem:[#allocation8 + $0x150] sm:$0xff]
        %v4444 = vld [vmem:[#allocation8 + $0x158] sm:$0xff]
        %v4445 = vld [vmem:[#allocation8 + $0x160] sm:$0xff]
        %v4446 = vld [vmem:[#allocation8 + $0x168] sm:$0xff]
        %v4447 = vld [vmem:[#allocation8 + $0x170] sm:$0xff]
        %v4448 = vld [vmem:[#allocation8 + $0x178] sm:$0xff]
        %v4449 = vld [vmem:[#allocation8 + $0x180] sm:$0xff]
        %v4450 = vld [vmem:[#allocation8 + $0x188] sm:$0xff]
        %v4451 = vld [vmem:[#allocation8 + $0x190] sm:$0xff]
        %v4452 = vld [vmem:[#allocation8 + $0x198] sm:$0xff]
        %v4453 = vld [vmem:[#allocation8 + $0x1a0] sm:$0xff]
        %v4454 = vld [vmem:[#allocation8 + $0x1a8] sm:$0xff]
        %v4455 = vld [vmem:[#allocation8 + $0x1b0] sm:$0xff]
        %v4456 = vld [vmem:[#allocation8 + $0x1b8] sm:$0xff]
        %v4457 = vld [vmem:[#allocation8 + $0x1c0] sm:$0xff]
        %v4458 = vld [vmem:[#allocation8 + $0x1c8] sm:$0xff]
        %v4459 = vld [vmem:[#allocation8 + $0x1d0] sm:$0xff]
        %v4460 = vld [vmem:[#allocation8 + $0x1d8] sm:$0xff]
        %v4461 = vld [vmem:[#allocation8 + $0x1e0] sm:$0xff]
        %v4462 = vld [vmem:[#allocation8 + $0x1e8] sm:$0xff]
        %v4463 = vld [vmem:[#allocation8 + $0x1f0] sm:$0xff]
        %v4464 = vld [vmem:[#allocation8 + $0x1f8] sm:$0xff]
        %4465 = vmatprep.subr.mxu0 %v4402
        %4466 = vmatpush1.msra.mxu0 %v4401
        %4467 = vmatprep.subr.mxu0 %v4406
        %4468 = vmatpush1.msra.mxu0 %v4405
        %4469 = vmatprep.subr.mxu0 %v4410
        %4470 = vmatpush1.msra.mxu0 %v4409
        %4471 = vmatprep.subr.mxu0 %v4414
        %4472 = vmatpush1.msra.mxu0 %v4413
        %4473 = vmatprep.subr.mxu0 %v4418
        %4474 = vmatpush1.msra.mxu0 %v4417
        %4475 = vmatprep.subr.mxu0 %v4422
        %4476 = vmatpush1.msra.mxu0 %v4421
        %4477 = vmatprep.subr.mxu0 %v4426
        %4478 = vmatpush1.msra.mxu0 %v4425
        %4479 = vmatprep.subr.mxu0 %v4430
        %4480 = vmatpush1.msra.mxu0 %v4429
        %4481 = vmatprep.subr.mxu0 %v4434
        %4482 = vmatpush1.msra.mxu0 %v4433
        %4483 = vmatprep.subr.mxu0 %v4438
        %4484 = vmatpush1.msra.mxu0 %v4437
        %4485 = vmatprep.subr.mxu0 %v4442
        %4486 = vmatpush1.msra.mxu0 %v4441
        %4487 = vmatprep.subr.mxu0 %v4446
        %4488 = vmatpush1.msra.mxu0 %v4445
        %4489 = vmatprep.subr.mxu0 %v4450
        %4490 = vmatpush1.msra.mxu0 %v4449
        %4491 = vmatprep.subr.mxu0 %v4454
        %4492 = vmatpush1.msra.mxu0 %v4453
        %4493 = vmatprep.subr.mxu0 %v4458
        %4494 = vmatpush1.msra.mxu0 %v4457
        %4495 = vmatprep.subr.mxu0 %v4462
        %4496 = vmatpush1.msra.mxu0 %v4461
        %4497 = vmatprep.subr.mxu0 0.0
        %4498 = vmatpush1.msra.mxu0 0.0
        %4499 = vmatprep.subr.mxu0 0.0
        %4500 = vmatpush1.msra.mxu0 0.0
        %4501 = vmatprep.subr.mxu0 0.0
        %4502 = vmatpush1.msra.mxu0 0.0
        %4503 = vmatprep.subr.mxu0 0.0
        %4504 = vmatpush1.msra.mxu0 0.0
        %4505 = vmatprep.subr.mxu0 0.0
        %4506 = vmatpush1.msra.mxu0 0.0
        %4507 = vmatprep.subr.mxu0 0.0
        %4508 = vmatpush1.msra.mxu0 0.0
        %4509 = vmatprep.subr.mxu0 0.0
        %4510 = vmatpush1.msra.mxu0 0.0
        %4511 = vmatprep.subr.mxu0 0.0
        %4512 = vmatpush1.msra.mxu0 0.0
        %4513 = vmatprep.subr.mxu0 0.0
        %4514 = vmatpush1.msra.mxu0 0.0
        %4515 = vmatprep.subr.mxu0 0.0
        %4516 = vmatpush1.msra.mxu0 0.0
        %4517 = vmatprep.subr.mxu0 0.0
        %4518 = vmatpush1.msra.mxu0 0.0
        %4519 = vmatprep.subr.mxu0 0.0
        %4520 = vmatpush1.msra.mxu0 0.0
        %4521 = vmatprep.subr.mxu0 0.0
        %4522 = vmatpush1.msra.mxu0 0.0
        %4523 = vmatprep.subr.mxu0 0.0
        %4524 = vmatpush1.msra.mxu0 0.0
        %4525 = vmatprep.subr.mxu0 0.0
        %4526 = vmatpush1.msra.mxu0 0.0
        %4527 = vmatprep.subr.mxu0 0.0
        %4528 = vmatpush1.msra.mxu0 0.0
        %4529 = vmatprep.mubr.f32.mxu0 0.0
        %4530 = vmatmul.mubr.f32.gmra.mrb[0].mxu0 %v4394
        %v4531 = vpop.f32.mrb[0].mxu0
        %v4532 = vadd.f32 0.0, %v4531
        %v4533 = vpop.f32.mrb[0].mxu0
        %v4534 = vadd.f32 0.0, %v4533
        %4535 = vdwg.mxu0
        %4536 = vmatprep.subr.mxu0 %v4404
        %4537 = vmatpush1.msra.mxu0 %v4403
        %4538 = vmatprep.subr.mxu0 %v4408
        %4539 = vmatpush1.msra.mxu0 %v4407
        %4540 = vmatprep.subr.mxu0 %v4412
        %4541 = vmatpush1.msra.mxu0 %v4411
        %4542 = vmatprep.subr.mxu0 %v4416
        %4543 = vmatpush1.msra.mxu0 %v4415
        %4544 = vmatprep.subr.mxu0 %v4420
        %4545 = vmatpush1.msra.mxu0 %v4419
        %4546 = vmatprep.subr.mxu0 %v4424
        %4547 = vmatpush1.msra.mxu0 %v4423
        %4548 = vmatprep.subr.mxu0 %v4428
        %4549 = vmatpush1.msra.mxu0 %v4427
        %4550 = vmatprep.subr.mxu0 %v4432
        %4551 = vmatpush1.msra.mxu0 %v4431
        %4552 = vmatprep.subr.mxu0 %v4436
        %4553 = vmatpush1.msra.mxu0 %v4435
        %4554 = vmatprep.subr.mxu0 %v4440
        %4555 = vmatpush1.msra.mxu0 %v4439
        %4556 = vmatprep.subr.mxu0 %v4444
        %4557 = vmatpush1.msra.mxu0 %v4443
        %4558 = vmatprep.subr.mxu0 %v4448
        %4559 = vmatpush1.msra.mxu0 %v4447
        %4560 = vmatprep.subr.mxu0 %v4452
        %4561 = vmatpush1.msra.mxu0 %v4451
        %4562 = vmatprep.subr.mxu0 %v4456
        %4563 = vmatpush1.msra.mxu0 %v4455
        %4564 = vmatprep.subr.mxu0 %v4460
        %4565 = vmatpush1.msra.mxu0 %v4459
        %4566 = vmatprep.subr.mxu0 %v4464
        %4567 = vmatpush1.msra.mxu0 %v4463
        %4568 = vmatprep.subr.mxu0 0.0
        %4569 = vmatpush1.msra.mxu0 0.0
        %4570 = vmatprep.subr.mxu0 0.0
        %4571 = vmatpush1.msra.mxu0 0.0
        %4572 = vmatprep.subr.mxu0 0.0
        %4573 = vmatpush1.msra.mxu0 0.0
        %4574 = vmatprep.subr.mxu0 0.0
        %4575 = vmatpush1.msra.mxu0 0.0
        %4576 = vmatprep.subr.mxu0 0.0
        %4577 = vmatpush1.msra.mxu0 0.0
        %4578 = vmatprep.subr.mxu0 0.0
        %4579 = vmatpush1.msra.mxu0 0.0
        %4580 = vmatprep.subr.mxu0 0.0
        %4581 = vmatpush1.msra.mxu0 0.0
        %4582 = vmatprep.subr.mxu0 0.0
        %4583 = vmatpush1.msra.mxu0 0.0
        %4584 = vmatprep.subr.mxu0 0.0
        %4585 = vmatpush1.msra.mxu0 0.0
        %4586 = vmatprep.subr.mxu0 0.0
        %4587 = vmatpush1.msra.mxu0 0.0
        %4588 = vmatprep.subr.mxu0 0.0
        %4589 = vmatpush1.msra.mxu0 0.0
        %4590 = vmatprep.subr.mxu0 0.0
        %4591 = vmatpush1.msra.mxu0 0.0
        %4592 = vmatprep.subr.mxu0 0.0
        %4593 = vmatpush1.msra.mxu0 0.0
        %4594 = vmatprep.subr.mxu0 0.0
        %4595 = vmatpush1.msra.mxu0 0.0
        %4596 = vmatprep.subr.mxu0 0.0
        %4597 = vmatpush1.msra.mxu0 0.0
        %4598 = vmatprep.subr.mxu0 0.0
        %4599 = vmatpush1.msra.mxu0 0.0
        %4600 = vmatprep.mubr.f32.mxu0 0.0
        %4601 = vmatmul.mubr.f32.gmra.mrb[0].mxu0 %v4394
        %v4602 = vpop.f32.mrb[0].mxu0
        %v4603 = vadd.f32 0.0, %v4602
        %v4604 = vpop.f32.mrb[0].mxu0
        %v4605 = vadd.f32 0.0, %v4604
        %4606 = vdwg.mxu0
        %v4607 = vadd.f32 %v4397, %v4532
        %v4608 = vadd.f32 %v4398, %v4534
        %v4609 = vadd.f32 %v4399, %v4603
        %v4610 = vadd.f32 %v4400, %v4605
        %v4611 = vxor.u32 %v4607, 2147483648
        %v4612 = vmul.f32 %v4611, 1.442695
        %v4613 = vpow.pop %v4612
        %v4614 = vadd.f32 %v4613, 1.0
        %v4615 = vrcp.pop %v4614
        %v4616 = vmul.f32 1.0, %v4615
        %v4617 = vxor.u32 %v4608, 2147483648
        %v4618 = vmul.f32 %v4617, 1.442695
        %v4619 = vpow.pop %v4618
        %v4620 = vadd.f32 %v4619, 1.0
        %v4621 = vrcp.pop %v4620
        %v4622 = vmul.f32 1.0, %v4621
        %v4623 = vtanh.pop %v4609
        %v4624 = vxor.u32 %v4610, 2147483648
        %v4625 = vmul.f32 %v4624, 1.442695
        %v4626 = vpow.pop %v4625
        %v4627 = vadd.f32 %v4626, 1.0
        %v4628 = vrcp.pop %v4627
        %v4629 = vmul.f32 1.0, %v4628
        %v4630 = vmul.f32 %v4622, %v4392
        %v4631 = vmul.f32 %v4616, %v4623
        %v4632 = vadd.f32 %v4630, %v4631
        %v4633 = vtanh.pop %v4632
        %v4634 = vmul.f32 %v4629, %v4633
        %s4635 = scalar_lea.vmem [#allocation6], 16
        %4636 = vst [vmem:[%s4635] sm:$0xff] %v4634
        %v4637 = vld [vmem:[%s1091] sm:$0xff]
        %v4638 = vld [vmem:[%s1091 + $0x8] sm:$0xff]
        %v4639 = vld [vmem:[%s1091 + $0x10] sm:$0xff]
        %v4640 = vld [vmem:[%s1091 + $0x18] sm:$0xff]
        %v4641 = vld [vmem:[#allocation8] sm:$0xff]
        %v4642 = vld [vmem:[#allocation8 + $0x8] sm:$0xff]
        %v4643 = vld [vmem:[#allocation8 + $0x10] sm:$0xff]
        %v4644 = vld [vmem:[#allocation8 + $0x18] sm:$0xff]
        %v4645 = vld [vmem:[#allocation8 + $0x20] sm:$0xff]
        %v4646 = vld [vmem:[#allocation8 + $0x28] sm:$0xff]
        %v4647 = vld [vmem:[#allocation8 + $0x30] sm:$0xff]
        %v4648 = vld [vmem:[#allocation8 + $0x38] sm:$0xff]
        %v4649 = vld [vmem:[#allocation8 + $0x40] sm:$0xff]
        %v4650 = vld [vmem:[#allocation8 + $0x48] sm:$0xff]
        %v4651 = vld [vmem:[#allocation8 + $0x50] sm:$0xff]
        %v4652 = vld [vmem:[#allocation8 + $0x58] sm:$0xff]
        %v4653 = vld [vmem:[#allocation8 + $0x60] sm:$0xff]
        %v4654 = vld [vmem:[#allocation8 + $0x68] sm:$0xff]
        %v4655 = vld [vmem:[#allocation8 + $0x70] sm:$0xff]
        %v4656 = vld [vmem:[#allocation8 + $0x78] sm:$0xff]
        %v4657 = vld [vmem:[#allocation8 + $0x80] sm:$0xff]
        %v4658 = vld [vmem:[#allocation8 + $0x88] sm:$0xff]
        %v4659 = vld [vmem:[#allocation8 + $0x90] sm:$0xff]
        %v4660 = vld [vmem:[#allocation8 + $0x98] sm:$0xff]
        %v4661 = vld [vmem:[#allocation8 + $0xa0] sm:$0xff]
        %v4662 = vld [vmem:[#allocation8 + $0xa8] sm:$0xff]
        %v4663 = vld [vmem:[#allocation8 + $0xb0] sm:$0xff]
        %v4664 = vld [vmem:[#allocation8 + $0xb8] sm:$0xff]
        %v4665 = vld [vmem:[#allocation8 + $0xc0] sm:$0xff]
        %v4666 = vld [vmem:[#allocation8 + $0xc8] sm:$0xff]
        %v4667 = vld [vmem:[#allocation8 + $0xd0] sm:$0xff]
        %v4668 = vld [vmem:[#allocation8 + $0xd8] sm:$0xff]
        %v4669 = vld [vmem:[#allocation8 + $0xe0] sm:$0xff]
        %v4670 = vld [vmem:[#allocation8 + $0xe8] sm:$0xff]
        %v4671 = vld [vmem:[#allocation8 + $0xf0] sm:$0xff]
        %v4672 = vld [vmem:[#allocation8 + $0xf8] sm:$0xff]
        %v4673 = vld [vmem:[#allocation8 + $0x100] sm:$0xff]
        %v4674 = vld [vmem:[#allocation8 + $0x108] sm:$0xff]
        %v4675 = vld [vmem:[#allocation8 + $0x110] sm:$0xff]
        %v4676 = vld [vmem:[#allocation8 + $0x118] sm:$0xff]
        %v4677 = vld [vmem:[#allocation8 + $0x120] sm:$0xff]
        %v4678 = vld [vmem:[#allocation8 + $0x128] sm:$0xff]
        %v4679 = vld [vmem:[#allocation8 + $0x130] sm:$0xff]
        %v4680 = vld [vmem:[#allocation8 + $0x138] sm:$0xff]
        %v4681 = vld [vmem:[#allocation8 + $0x140] sm:$0xff]
        %v4682 = vld [vmem:[#allocation8 + $0x148] sm:$0xff]
        %v4683 = vld [vmem:[#allocation8 + $0x150] sm:$0xff]
        %v4684 = vld [vmem:[#allocation8 + $0x158] sm:$0xff]
        %v4685 = vld [vmem:[#allocation8 + $0x160] sm:$0xff]
        %v4686 = vld [vmem:[#allocation8 + $0x168] sm:$0xff]
        %v4687 = vld [vmem:[#allocation8 + $0x170] sm:$0xff]
        %v4688 = vld [vmem:[#allocation8 + $0x178] sm:$0xff]
        %v4689 = vld [vmem:[#allocation8 + $0x180] sm:$0xff]
        %v4690 = vld [vmem:[#allocation8 + $0x188] sm:$0xff]
        %v4691 = vld [vmem:[#allocation8 + $0x190] sm:$0xff]
        %v4692 = vld [vmem:[#allocation8 + $0x198] sm:$0xff]
        %v4693 = vld [vmem:[#allocation8 + $0x1a0] sm:$0xff]
        %v4694 = vld [vmem:[#allocation8 + $0x1a8] sm:$0xff]
        %v4695 = vld [vmem:[#allocation8 + $0x1b0] sm:$0xff]
        %v4696 = vld [vmem:[#allocation8 + $0x1b8] sm:$0xff]
        %v4697 = vld [vmem:[#allocation8 + $0x1c0] sm:$0xff]
        %v4698 = vld [vmem:[#allocation8 + $0x1c8] sm:$0xff]
        %v4699 = vld [vmem:[#allocation8 + $0x1d0] sm:$0xff]
        %v4700 = vld [vmem:[#allocation8 + $0x1d8] sm:$0xff]
        %v4701 = vld [vmem:[#allocation8 + $0x1e0] sm:$0xff]
        %v4702 = vld [vmem:[#allocation8 + $0x1e8] sm:$0xff]
        %v4703 = vld [vmem:[#allocation8 + $0x1f0] sm:$0xff]
        %v4704 = vld [vmem:[#allocation8 + $0x1f8] sm:$0xff]
        %4705 = vmatprep.subr.mxu0 %v4642
        %4706 = vmatpush1.msra.mxu0 %v4641
        %4707 = vmatprep.subr.mxu0 %v4646
        %4708 = vmatpush1.msra.mxu0 %v4645
        %4709 = vmatprep.subr.mxu0 %v4650
        %4710 = vmatpush1.msra.mxu0 %v4649
        %4711 = vmatprep.subr.mxu0 %v4654
        %4712 = vmatpush1.msra.mxu0 %v4653
        %4713 = vmatprep.subr.mxu0 %v4658
        %4714 = vmatpush1.msra.mxu0 %v4657
        %4715 = vmatprep.subr.mxu0 %v4662
        %4716 = vmatpush1.msra.mxu0 %v4661
        %4717 = vmatprep.subr.mxu0 %v4666
        %4718 = vmatpush1.msra.mxu0 %v4665
        %4719 = vmatprep.subr.mxu0 %v4670
        %4720 = vmatpush1.msra.mxu0 %v4669
        %4721 = vmatprep.subr.mxu0 %v4674
        %4722 = vmatpush1.msra.mxu0 %v4673
        %4723 = vmatprep.subr.mxu0 %v4678
        %4724 = vmatpush1.msra.mxu0 %v4677
        %4725 = vmatprep.subr.mxu0 %v4682
        %4726 = vmatpush1.msra.mxu0 %v4681
        %4727 = vmatprep.subr.mxu0 %v4686
        %4728 = vmatpush1.msra.mxu0 %v4685
        %4729 = vmatprep.subr.mxu0 %v4690
        %4730 = vmatpush1.msra.mxu0 %v4689
        %4731 = vmatprep.subr.mxu0 %v4694
        %4732 = vmatpush1.msra.mxu0 %v4693
        %4733 = vmatprep.subr.mxu0 %v4698
        %4734 = vmatpush1.msra.mxu0 %v4697
        %4735 = vmatprep.subr.mxu0 %v4702
        %4736 = vmatpush1.msra.mxu0 %v4701
        %4737 = vmatprep.subr.mxu0 0.0
        %4738 = vmatpush1.msra.mxu0 0.0
        %4739 = vmatprep.subr.mxu0 0.0
        %4740 = vmatpush1.msra.mxu0 0.0
        %4741 = vmatprep.subr.mxu0 0.0
        %4742 = vmatpush1.msra.mxu0 0.0
        %4743 = vmatprep.subr.mxu0 0.0
        %4744 = vmatpush1.msra.mxu0 0.0
        %4745 = vmatprep.subr.mxu0 0.0
        %4746 = vmatpush1.msra.mxu0 0.0
        %4747 = vmatprep.subr.mxu0 0.0
        %4748 = vmatpush1.msra.mxu0 0.0
        %4749 = vmatprep.subr.mxu0 0.0
        %4750 = vmatpush1.msra.mxu0 0.0
        %4751 = vmatprep.subr.mxu0 0.0
        %4752 = vmatpush1.msra.mxu0 0.0
        %4753 = vmatprep.subr.mxu0 0.0
        %4754 = vmatpush1.msra.mxu0 0.0
        %4755 = vmatprep.subr.mxu0 0.0
        %4756 = vmatpush1.msra.mxu0 0.0
        %4757 = vmatprep.subr.mxu0 0.0
        %4758 = vmatpush1.msra.mxu0 0.0
        %4759 = vmatprep.subr.mxu0 0.0
        %4760 = vmatpush1.msra.mxu0 0.0
        %4761 = vmatprep.subr.mxu0 0.0
        %4762 = vmatpush1.msra.mxu0 0.0
        %4763 = vmatprep.subr.mxu0 0.0
        %4764 = vmatpush1.msra.mxu0 0.0
        %4765 = vmatprep.subr.mxu0 0.0
        %4766 = vmatpush1.msra.mxu0 0.0
        %4767 = vmatprep.subr.mxu0 0.0
        %4768 = vmatpush1.msra.mxu0 0.0
        %4769 = vmatprep.mubr.f32.mxu0 0.0
        %4770 = vmatmul.mubr.f32.gmra.mrb[0].mxu0 %v4634
        %v4771 = vpop.f32.mrb[0].mxu0
        %v4772 = vadd.f32 0.0, %v4771
        %v4773 = vpop.f32.mrb[0].mxu0
        %v4774 = vadd.f32 0.0, %v4773
        %4775 = vdwg.mxu0
        %4776 = vmatprep.subr.mxu0 %v4644
        %4777 = vmatpush1.msra.mxu0 %v4643
        %4778 = vmatprep.subr.mxu0 %v4648
        %4779 = vmatpush1.msra.mxu0 %v4647
        %4780 = vmatprep.subr.mxu0 %v4652
        %4781 = vmatpush1.msra.mxu0 %v4651
        %4782 = vmatprep.subr.mxu0 %v4656
        %4783 = vmatpush1.msra.mxu0 %v4655
        %4784 = vmatprep.subr.mxu0 %v4660
        %4785 = vmatpush1.msra.mxu0 %v4659
        %4786 = vmatprep.subr.mxu0 %v4664
        %4787 = vmatpush1.msra.mxu0 %v4663
        %4788 = vmatprep.subr.mxu0 %v4668
        %4789 = vmatpush1.msra.mxu0 %v4667
        %4790 = vmatprep.subr.mxu0 %v4672
        %4791 = vmatpush1.msra.mxu0 %v4671
        %4792 = vmatprep.subr.mxu0 %v4676
        %4793 = vmatpush1.msra.mxu0 %v4675
        %4794 = vmatprep.subr.mxu0 %v4680
        %4795 = vmatpush1.msra.mxu0 %v4679
        %4796 = vmatprep.subr.mxu0 %v4684
        %4797 = vmatpush1.msra.mxu0 %v4683
        %4798 = vmatprep.subr.mxu0 %v4688
        %4799 = vmatpush1.msra.mxu0 %v4687
        %4800 = vmatprep.subr.mxu0 %v4692
        %4801 = vmatpush1.msra.mxu0 %v4691
        %4802 = vmatprep.subr.mxu0 %v4696
        %4803 = vmatpush1.msra.mxu0 %v4695
        %4804 = vmatprep.subr.mxu0 %v4700
        %4805 = vmatpush1.msra.mxu0 %v4699
        %4806 = vmatprep.subr.mxu0 %v4704
        %4807 = vmatpush1.msra.mxu0 %v4703
        %4808 = vmatprep.subr.mxu0 0.0
        %4809 = vmatpush1.msra.mxu0 0.0
        %4810 = vmatprep.subr.mxu0 0.0
        %4811 = vmatpush1.msra.mxu0 0.0
        %4812 = vmatprep.subr.mxu0 0.0
        %4813 = vmatpush1.msra.mxu0 0.0
        %4814 = vmatprep.subr.mxu0 0.0
        %4815 = vmatpush1.msra.mxu0 0.0
        %4816 = vmatprep.subr.mxu0 0.0
        %4817 = vmatpush1.msra.mxu0 0.0
        %4818 = vmatprep.subr.mxu0 0.0
        %4819 = vmatpush1.msra.mxu0 0.0
        %4820 = vmatprep.subr.mxu0 0.0
        %4821 = vmatpush1.msra.mxu0 0.0
        %4822 = vmatprep.subr.mxu0 0.0
        %4823 = vmatpush1.msra.mxu0 0.0
        %4824 = vmatprep.subr.mxu0 0.0
        %4825 = vmatpush1.msra.mxu0 0.0
        %4826 = vmatprep.subr.mxu0 0.0
        %4827 = vmatpush1.msra.mxu0 0.0
        %4828 = vmatprep.subr.mxu0 0.0
        %4829 = vmatpush1.msra.mxu0 0.0
        %4830 = vmatprep.subr.mxu0 0.0
        %4831 = vmatpush1.msra.mxu0 0.0
        %4832 = vmatprep.subr.mxu0 0.0
        %4833 = vmatpush1.msra.mxu0 0.0
        %4834 = vmatprep.subr.mxu0 0.0
        %4835 = vmatpush1.msra.mxu0 0.0
        %4836 = vmatprep.subr.mxu0 0.0
        %4837 = vmatpush1.msra.mxu0 0.0
        %4838 = vmatprep.subr.mxu0 0.0
        %4839 = vmatpush1.msra.mxu0 0.0
        %4840 = vmatprep.mubr.f32.mxu0 0.0
        %4841 = vmatmul.mubr.f32.gmra.mrb[0].mxu0 %v4634
        %v4842 = vpop.f32.mrb[0].mxu0
        %v4843 = vadd.f32 0.0, %v4842
        %v4844 = vpop.f32.mrb[0].mxu0
        %v4845 = vadd.f32 0.0, %v4844
        %4846 = vdwg.mxu0
        %v4847 = vadd.f32 %v4637, %v4772
        %v4848 = vadd.f32 %v4638, %v4774
        %v4849 = vadd.f32 %v4639, %v4843
        %v4850 = vadd.f32 %v4640, %v4845
        %v4851 = vxor.u32 %v4847, 2147483648
        %v4852 = vmul.f32 %v4851, 1.442695
        %v4853 = vpow.pop %v4852
        %v4854 = vadd.f32 %v4853, 1.0
        %v4855 = vrcp.pop %v4854
        %v4856 = vmul.f32 1.0, %v4855
        %v4857 = vxor.u32 %v4848, 2147483648
        %v4858 = vmul.f32 %v4857, 1.442695
        %v4859 = vpow.pop %v4858
        %v4860 = vadd.f32 %v4859, 1.0
        %v4861 = vrcp.pop %v4860
        %v4862 = vmul.f32 1.0, %v4861
        %v4863 = vtanh.pop %v4849
        %v4864 = vxor.u32 %v4850, 2147483648
        %v4865 = vmul.f32 %v4864, 1.442695
        %v4866 = vpow.pop %v4865
        %v4867 = vadd.f32 %v4866, 1.0
        %v4868 = vrcp.pop %v4867
        %v4869 = vmul.f32 1.0, %v4868
        %v4870 = vmul.f32 %v4862, %v4632
        %v4871 = vmul.f32 %v4856, %v4863
        %v4872 = vadd.f32 %v4870, %v4871
        %v4873 = vtanh.pop %v4872
        %v4874 = vmul.f32 %v4869, %v4873
        %s4875 = scalar_lea.vmem [#allocation6], 24
        %4876 = vst [vmem:[%s4875] sm:$0xff] %v4874
        %v4877 = vld [vmem:[%s1108] sm:$0xff]
        %v4878 = vld [vmem:[%s1108 + $0x8] sm:$0xff]
        %v4879 = vld [vmem:[%s1108 + $0x10] sm:$0xff]
        %v4880 = vld [vmem:[%s1108 + $0x18] sm:$0xff]
        %v4881 = vld [vmem:[#allocation8] sm:$0xff]
        %v4882 = vld [vmem:[#allocation8 + $0x8] sm:$0xff]
        %v4883 = vld [vmem:[#allocation8 + $0x10] sm:$0xff]
        %v4884 = vld [vmem:[#allocation8 + $0x18] sm:$0xff]
        %v4885 = vld [vmem:[#allocation8 + $0x20] sm:$0xff]
        %v4886 = vld [vmem:[#allocation8 + $0x28] sm:$0xff]
        %v4887 = vld [vmem:[#allocation8 + $0x30] sm:$0xff]
        %v4888 = vld [vmem:[#allocation8 + $0x38] sm:$0xff]
        %v4889 = vld [vmem:[#allocation8 + $0x40] sm:$0xff]
        %v4890 = vld [vmem:[#allocation8 + $0x48] sm:$0xff]
        %v4891 = vld [vmem:[#allocation8 + $0x50] sm:$0xff]
        %v4892 = vld [vmem:[#allocation8 + $0x58] sm:$0xff]
        %v4893 = vld [vmem:[#allocation8 + $0x60] sm:$0xff]
        %v4894 = vld [vmem:[#allocation8 + $0x68] sm:$0xff]
        %v4895 = vld [vmem:[#allocation8 + $0x70] sm:$0xff]
        %v4896 = vld [vmem:[#allocation8 + $0x78] sm:$0xff]
        %v4897 = vld [vmem:[#allocation8 + $0x80] sm:$0xff]
        %v4898 = vld [vmem:[#allocation8 + $0x88] sm:$0xff]
        %v4899 = vld [vmem:[#allocation8 + $0x90] sm:$0xff]
        %v4900 = vld [vmem:[#allocation8 + $0x98] sm:$0xff]
        %v4901 = vld [vmem:[#allocation8 + $0xa0] sm:$0xff]
        %v4902 = vld [vmem:[#allocation8 + $0xa8] sm:$0xff]
        %v4903 = vld [vmem:[#allocation8 + $0xb0] sm:$0xff]
        %v4904 = vld [vmem:[#allocation8 + $0xb8] sm:$0xff]
        %v4905 = vld [vmem:[#allocation8 + $0xc0] sm:$0xff]
        %v4906 = vld [vmem:[#allocation8 + $0xc8] sm:$0xff]
        %v4907 = vld [vmem:[#allocation8 + $0xd0] sm:$0xff]
        %v4908 = vld [vmem:[#allocation8 + $0xd8] sm:$0xff]
        %v4909 = vld [vmem:[#allocation8 + $0xe0] sm:$0xff]
        %v4910 = vld [vmem:[#allocation8 + $0xe8] sm:$0xff]
        %v4911 = vld [vmem:[#allocation8 + $0xf0] sm:$0xff]
        %v4912 = vld [vmem:[#allocation8 + $0xf8] sm:$0xff]
        %v4913 = vld [vmem:[#allocation8 + $0x100] sm:$0xff]
        %v4914 = vld [vmem:[#allocation8 + $0x108] sm:$0xff]
        %v4915 = vld [vmem:[#allocation8 + $0x110] sm:$0xff]
        %v4916 = vld [vmem:[#allocation8 + $0x118] sm:$0xff]
        %v4917 = vld [vmem:[#allocation8 + $0x120] sm:$0xff]
        %v4918 = vld [vmem:[#allocation8 + $0x128] sm:$0xff]
        %v4919 = vld [vmem:[#allocation8 + $0x130] sm:$0xff]
        %v4920 = vld [vmem:[#allocation8 + $0x138] sm:$0xff]
        %v4921 = vld [vmem:[#allocation8 + $0x140] sm:$0xff]
        %v4922 = vld [vmem:[#allocation8 + $0x148] sm:$0xff]
        %v4923 = vld [vmem:[#allocation8 + $0x150] sm:$0xff]
        %v4924 = vld [vmem:[#allocation8 + $0x158] sm:$0xff]
        %v4925 = vld [vmem:[#allocation8 + $0x160] sm:$0xff]
        %v4926 = vld [vmem:[#allocation8 + $0x168] sm:$0xff]
        %v4927 = vld [vmem:[#allocation8 + $0x170] sm:$0xff]
        %v4928 = vld [vmem:[#allocation8 + $0x178] sm:$0xff]
        %v4929 = vld [vmem:[#allocation8 + $0x180] sm:$0xff]
        %v4930 = vld [vmem:[#allocation8 + $0x188] sm:$0xff]
        %v4931 = vld [vmem:[#allocation8 + $0x190] sm:$0xff]
        %v4932 = vld [vmem:[#allocation8 + $0x198] sm:$0xff]
        %v4933 = vld [vmem:[#allocation8 + $0x1a0] sm:$0xff]
        %v4934 = vld [vmem:[#allocation8 + $0x1a8] sm:$0xff]
        %v4935 = vld [vmem:[#allocation8 + $0x1b0] sm:$0xff]
        %v4936 = vld [vmem:[#allocation8 + $0x1b8] sm:$0xff]
        %v4937 = vld [vmem:[#allocation8 + $0x1c0] sm:$0xff]
        %v4938 = vld [vmem:[#allocation8 + $0x1c8] sm:$0xff]
        %v4939 = vld [vmem:[#allocation8 + $0x1d0] sm:$0xff]
        %v4940 = vld [vmem:[#allocation8 + $0x1d8] sm:$0xff]
        %v4941 = vld [vmem:[#allocation8 + $0x1e0] sm:$0xff]
        %v4942 = vld [vmem:[#allocation8 + $0x1e8] sm:$0xff]
        %v4943 = vld [vmem:[#allocation8 + $0x1f0] sm:$0xff]
        %v4944 = vld [vmem:[#allocation8 + $0x1f8] sm:$0xff]
        %4945 = vmatprep.subr.mxu0 %v4882
        %4946 = vmatpush1.msra.mxu0 %v4881
        %4947 = vmatprep.subr.mxu0 %v4886
        %4948 = vmatpush1.msra.mxu0 %v4885
        %4949 = vmatprep.subr.mxu0 %v4890
        %4950 = vmatpush1.msra.mxu0 %v4889
        %4951 = vmatprep.subr.mxu0 %v4894
        %4952 = vmatpush1.msra.mxu0 %v4893
        %4953 = vmatprep.subr.mxu0 %v4898
        %4954 = vmatpush1.msra.mxu0 %v4897
        %4955 = vmatprep.subr.mxu0 %v4902
        %4956 = vmatpush1.msra.mxu0 %v4901
        %4957 = vmatprep.subr.mxu0 %v4906
        %4958 = vmatpush1.msra.mxu0 %v4905
        %4959 = vmatprep.subr.mxu0 %v4910
        %4960 = vmatpush1.msra.mxu0 %v4909
        %4961 = vmatprep.subr.mxu0 %v4914
        %4962 = vmatpush1.msra.mxu0 %v4913
        %4963 = vmatprep.subr.mxu0 %v4918
        %4964 = vmatpush1.msra.mxu0 %v4917
        %4965 = vmatprep.subr.mxu0 %v4922
        %4966 = vmatpush1.msra.mxu0 %v4921
        %4967 = vmatprep.subr.mxu0 %v4926
        %4968 = vmatpush1.msra.mxu0 %v4925
        %4969 = vmatprep.subr.mxu0 %v4930
        %4970 = vmatpush1.msra.mxu0 %v4929
        %4971 = vmatprep.subr.mxu0 %v4934
        %4972 = vmatpush1.msra.mxu0 %v4933
        %4973 = vmatprep.subr.mxu0 %v4938
        %4974 = vmatpush1.msra.mxu0 %v4937
        %4975 = vmatprep.subr.mxu0 %v4942
        %4976 = vmatpush1.msra.mxu0 %v4941
        %4977 = vmatprep.subr.mxu0 0.0
        %4978 = vmatpush1.msra.mxu0 0.0
        %4979 = vmatprep.subr.mxu0 0.0
        %4980 = vmatpush1.msra.mxu0 0.0
        %4981 = vmatprep.subr.mxu0 0.0
        %4982 = vmatpush1.msra.mxu0 0.0
        %4983 = vmatprep.subr.mxu0 0.0
        %4984 = vmatpush1.msra.mxu0 0.0
        %4985 = vmatprep.subr.mxu0 0.0
        %4986 = vmatpush1.msra.mxu0 0.0
        %4987 = vmatprep.subr.mxu0 0.0
        %4988 = vmatpush1.msra.mxu0 0.0
        %4989 = vmatprep.subr.mxu0 0.0
        %4990 = vmatpush1.msra.mxu0 0.0
        %4991 = vmatprep.subr.mxu0 0.0
        %4992 = vmatpush1.msra.mxu0 0.0
        %4993 = vmatprep.subr.mxu0 0.0
        %4994 = vmatpush1.msra.mxu0 0.0
        %4995 = vmatprep.subr.mxu0 0.0
        %4996 = vmatpush1.msra.mxu0 0.0
        %4997 = vmatprep.subr.mxu0 0.0
        %4998 = vmatpush1.msra.mxu0 0.0
        %4999 = vmatprep.subr.mxu0 0.0
        %5000 = vmatpush1.msra.mxu0 0.0
        %5001 = vmatprep.subr.mxu0 0.0
        %5002 = vmatpush1.msra.mxu0 0.0
        %5003 = vmatprep.subr.mxu0 0.0
        %5004 = vmatpush1.msra.mxu0 0.0
        %5005 = vmatprep.subr.mxu0 0.0
        %5006 = vmatpush1.msra.mxu0 0.0
        %5007 = vmatprep.subr.mxu0 0.0
        %5008 = vmatpush1.msra.mxu0 0.0
        %5009 = vmatprep.mubr.f32.mxu0 0.0
        %5010 = vmatmul.mubr.f32.gmra.mrb[0].mxu0 %v4874
        %v5011 = vpop.f32.mrb[0].mxu0
        %v5012 = vadd.f32 0.0, %v5011
        %v5013 = vpop.f32.mrb[0].mxu0
        %v5014 = vadd.f32 0.0, %v5013
        %5015 = vdwg.mxu0
        %5016 = vmatprep.subr.mxu0 %v4884
        %5017 = vmatpush1.msra.mxu0 %v4883
        %5018 = vmatprep.subr.mxu0 %v4888
        %5019 = vmatpush1.msra.mxu0 %v4887
        %5020 = vmatprep.subr.mxu0 %v4892
        %5021 = vmatpush1.msra.mxu0 %v4891
        %5022 = vmatprep.subr.mxu0 %v4896
        %5023 = vmatpush1.msra.mxu0 %v4895
        %5024 = vmatprep.subr.mxu0 %v4900
        %5025 = vmatpush1.msra.mxu0 %v4899
        %5026 = vmatprep.subr.mxu0 %v4904
        %5027 = vmatpush1.msra.mxu0 %v4903
        %5028 = vmatprep.subr.mxu0 %v4908
        %5029 = vmatpush1.msra.mxu0 %v4907
        %5030 = vmatprep.subr.mxu0 %v4912
        %5031 = vmatpush1.msra.mxu0 %v4911
        %5032 = vmatprep.subr.mxu0 %v4916
        %5033 = vmatpush1.msra.mxu0 %v4915
        %5034 = vmatprep.subr.mxu0 %v4920
        %5035 = vmatpush1.msra.mxu0 %v4919
        %5036 = vmatprep.subr.mxu0 %v4924
        %5037 = vmatpush1.msra.mxu0 %v4923
        %5038 = vmatprep.subr.mxu0 %v4928
        %5039 = vmatpush1.msra.mxu0 %v4927
        %5040 = vmatprep.subr.mxu0 %v4932
        %5041 = vmatpush1.msra.mxu0 %v4931
        %5042 = vmatprep.subr.mxu0 %v4936
        %5043 = vmatpush1.msra.mxu0 %v4935
        %5044 = vmatprep.subr.mxu0 %v4940
        %5045 = vmatpush1.msra.mxu0 %v4939
        %5046 = vmatprep.subr.mxu0 %v4944
        %5047 = vmatpush1.msra.mxu0 %v4943
        %5048 = vmatprep.subr.mxu0 0.0
        %5049 = vmatpush1.msra.mxu0 0.0
        %5050 = vmatprep.subr.mxu0 0.0
        %5051 = vmatpush1.msra.mxu0 0.0
        %5052 = vmatprep.subr.mxu0 0.0
        %5053 = vmatpush1.msra.mxu0 0.0
        %5054 = vmatprep.subr.mxu0 0.0
        %5055 = vmatpush1.msra.mxu0 0.0
        %5056 = vmatprep.subr.mxu0 0.0
        %5057 = vmatpush1.msra.mxu0 0.0
        %5058 = vmatprep.subr.mxu0 0.0
        %5059 = vmatpush1.msra.mxu0 0.0
        %5060 = vmatprep.subr.mxu0 0.0
        %5061 = vmatpush1.msra.mxu0 0.0
        %5062 = vmatprep.subr.mxu0 0.0
        %5063 = vmatpush1.msra.mxu0 0.0
        %5064 = vmatprep.subr.mxu0 0.0
        %5065 = vmatpush1.msra.mxu0 0.0
        %5066 = vmatprep.subr.mxu0 0.0
        %5067 = vmatpush1.msra.mxu0 0.0
        %5068 = vmatprep.subr.mxu0 0.0
        %5069 = vmatpush1.msra.mxu0 0.0
        %5070 = vmatprep.subr.mxu0 0.0
        %5071 = vmatpush1.msra.mxu0 0.0
        %5072 = vmatprep.subr.mxu0 0.0
        %5073 = vmatpush1.msra.mxu0 0.0
        %5074 = vmatprep.subr.mxu0 0.0
        %5075 = vmatpush1.msra.mxu0 0.0
        %5076 = vmatprep.subr.mxu0 0.0
        %5077 = vmatpush1.msra.mxu0 0.0
        %5078 = vmatprep.subr.mxu0 0.0
        %5079 = vmatpush1.msra.mxu0 0.0
        %5080 = vmatprep.mubr.f32.mxu0 0.0
        %5081 = vmatmul.mubr.f32.gmra.mrb[0].mxu0 %v4874
        %v5082 = vpop.f32.mrb[0].mxu0
        %v5083 = vadd.f32 0.0, %v5082
        %v5084 = vpop.f32.mrb[0].mxu0
        %v5085 = vadd.f32 0.0, %v5084
        %5086 = vdwg.mxu0
        %v5087 = vadd.f32 %v4877, %v5012
        %v5088 = vadd.f32 %v4878, %v5014
        %v5089 = vadd.f32 %v4879, %v5083
        %v5090 = vadd.f32 %v4880, %v5085
        %v5091 = vxor.u32 %v5087, 2147483648
        %v5092 = vmul.f32 %v5091, 1.442695
        %v5093 = vpow.pop %v5092
        %v5094 = vadd.f32 %v5093, 1.0
        %v5095 = vrcp.pop %v5094
        %v5096 = vmul.f32 1.0, %v5095
        %v5097 = vxor.u32 %v5088, 2147483648
        %v5098 = vmul.f32 %v5097, 1.442695
        %v5099 = vpow.pop %v5098
        %v5100 = vadd.f32 %v5099, 1.0
        %v5101 = vrcp.pop %v5100
        %v5102 = vmul.f32 1.0, %v5101
        %v5103 = vtanh.pop %v5089
        %v5104 = vxor.u32 %v5090, 2147483648
        %v5105 = vmul.f32 %v5104, 1.442695
        %v5106 = vpow.pop %v5105
        %v5107 = vadd.f32 %v5106, 1.0
        %v5108 = vrcp.pop %v5107
        %v5109 = vmul.f32 1.0, %v5108
        %v5110 = vmul.f32 %v5102, %v4872
        %v5111 = vmul.f32 %v5096, %v5103
        %v5112 = vadd.f32 %v5110, %v5111
        %v5113 = vtanh.pop %v5112
        %v5114 = vmul.f32 %v5109, %v5113
        %s5115 = scalar_lea.vmem [#allocation6], 32
        %5116 = vst [vmem:[%s5115] sm:$0xff] %v5114
        %v5117 = vld [vmem:[%s1125] sm:$0xff]
        %v5118 = vld [vmem:[%s1125 + $0x8] sm:$0xff]
        %v5119 = vld [vmem:[%s1125 + $0x10] sm:$0xff]
        %v5120 = vld [vmem:[%s1125 + $0x18] sm:$0xff]
        %v5121 = vld [vmem:[#allocation8] sm:$0xff]
        %v5122 = vld [vmem:[#allocation8 + $0x8] sm:$0xff]
        %v5123 = vld [vmem:[#allocation8 + $0x10] sm:$0xff]
        %v5124 = vld [vmem:[#allocation8 + $0x18] sm:$0xff]
        %v5125 = vld [vmem:[#allocation8 + $0x20] sm:$0xff]
        %v5126 = vld [vmem:[#allocation8 + $0x28] sm:$0xff]
        %v5127 = vld [vmem:[#allocation8 + $0x30] sm:$0xff]
        %v5128 = vld [vmem:[#allocation8 + $0x38] sm:$0xff]
        %v5129 = vld [vmem:[#allocation8 + $0x40] sm:$0xff]
        %v5130 = vld [vmem:[#allocation8 + $0x48] sm:$0xff]
        %v5131 = vld [vmem:[#allocation8 + $0x50] sm:$0xff]
        %v5132 = vld [vmem:[#allocation8 + $0x58] sm:$0xff]
        %v5133 = vld [vmem:[#allocation8 + $0x60] sm:$0xff]
        %v5134 = vld [vmem:[#allocation8 + $0x68] sm:$0xff]
        %v5135 = vld [vmem:[#allocation8 + $0x70] sm:$0xff]
        %v5136 = vld [vmem:[#allocation8 + $0x78] sm:$0xff]
        %v5137 = vld [vmem:[#allocation8 + $0x80] sm:$0xff]
        %v5138 = vld [vmem:[#allocation8 + $0x88] sm:$0xff]
        %v5139 = vld [vmem:[#allocation8 + $0x90] sm:$0xff]
        %v5140 = vld [vmem:[#allocation8 + $0x98] sm:$0xff]
        %v5141 = vld [vmem:[#allocation8 + $0xa0] sm:$0xff]
        %v5142 = vld [vmem:[#allocation8 + $0xa8] sm:$0xff]
        %v5143 = vld [vmem:[#allocation8 + $0xb0] sm:$0xff]
        %v5144 = vld [vmem:[#allocation8 + $0xb8] sm:$0xff]
        %v5145 = vld [vmem:[#allocation8 + $0xc0] sm:$0xff]
        %v5146 = vld [vmem:[#allocation8 + $0xc8] sm:$0xff]
        %v5147 = vld [vmem:[#allocation8 + $0xd0] sm:$0xff]
        %v5148 = vld [vmem:[#allocation8 + $0xd8] sm:$0xff]
        %v5149 = vld [vmem:[#allocation8 + $0xe0] sm:$0xff]
        %v5150 = vld [vmem:[#allocation8 + $0xe8] sm:$0xff]
        %v5151 = vld [vmem:[#allocation8 + $0xf0] sm:$0xff]
        %v5152 = vld [vmem:[#allocation8 + $0xf8] sm:$0xff]
        %v5153 = vld [vmem:[#allocation8 + $0x100] sm:$0xff]
        %v5154 = vld [vmem:[#allocation8 + $0x108] sm:$0xff]
        %v5155 = vld [vmem:[#allocation8 + $0x110] sm:$0xff]
        %v5156 = vld [vmem:[#allocation8 + $0x118] sm:$0xff]
        %v5157 = vld [vmem:[#allocation8 + $0x120] sm:$0xff]
        %v5158 = vld [vmem:[#allocation8 + $0x128] sm:$0xff]
        %v5159 = vld [vmem:[#allocation8 + $0x130] sm:$0xff]
        %v5160 = vld [vmem:[#allocation8 + $0x138] sm:$0xff]
        %v5161 = vld [vmem:[#allocation8 + $0x140] sm:$0xff]
        %v5162 = vld [vmem:[#allocation8 + $0x148] sm:$0xff]
        %v5163 = vld [vmem:[#allocation8 + $0x150] sm:$0xff]
        %v5164 = vld [vmem:[#allocation8 + $0x158] sm:$0xff]
        %v5165 = vld [vmem:[#allocation8 + $0x160] sm:$0xff]
        %v5166 = vld [vmem:[#allocation8 + $0x168] sm:$0xff]
        %v5167 = vld [vmem:[#allocation8 + $0x170] sm:$0xff]
        %v5168 = vld [vmem:[#allocation8 + $0x178] sm:$0xff]
        %v5169 = vld [vmem:[#allocation8 + $0x180] sm:$0xff]
        %v5170 = vld [vmem:[#allocation8 + $0x188] sm:$0xff]
        %v5171 = vld [vmem:[#allocation8 + $0x190] sm:$0xff]
        %v5172 = vld [vmem:[#allocation8 + $0x198] sm:$0xff]
        %v5173 = vld [vmem:[#allocation8 + $0x1a0] sm:$0xff]
        %v5174 = vld [vmem:[#allocation8 + $0x1a8] sm:$0xff]
        %v5175 = vld [vmem:[#allocation8 + $0x1b0] sm:$0xff]
        %v5176 = vld [vmem:[#allocation8 + $0x1b8] sm:$0xff]
        %v5177 = vld [vmem:[#allocation8 + $0x1c0] sm:$0xff]
        %v5178 = vld [vmem:[#allocation8 + $0x1c8] sm:$0xff]
        %v5179 = vld [vmem:[#allocation8 + $0x1d0] sm:$0xff]
        %v5180 = vld [vmem:[#allocation8 + $0x1d8] sm:$0xff]
        %v5181 = vld [vmem:[#allocation8 + $0x1e0] sm:$0xff]
        %v5182 = vld [vmem:[#allocation8 + $0x1e8] sm:$0xff]
        %v5183 = vld [vmem:[#allocation8 + $0x1f0] sm:$0xff]
        %v5184 = vld [vmem:[#allocation8 + $0x1f8] sm:$0xff]
        %5185 = vmatprep.subr.mxu0 %v5122
        %5186 = vmatpush1.msra.mxu0 %v5121
        %5187 = vmatprep.subr.mxu0 %v5126
        %5188 = vmatpush1.msra.mxu0 %v5125
        %5189 = vmatprep.subr.mxu0 %v5130
        %5190 = vmatpush1.msra.mxu0 %v5129
        %5191 = vmatprep.subr.mxu0 %v5134
        %5192 = vmatpush1.msra.mxu0 %v5133
        %5193 = vmatprep.subr.mxu0 %v5138
        %5194 = vmatpush1.msra.mxu0 %v5137
        %5195 = vmatprep.subr.mxu0 %v5142
        %5196 = vmatpush1.msra.mxu0 %v5141
        %5197 = vmatprep.subr.mxu0 %v5146
        %5198 = vmatpush1.msra.mxu0 %v5145
        %5199 = vmatprep.subr.mxu0 %v5150
        %5200 = vmatpush1.msra.mxu0 %v5149
        %5201 = vmatprep.subr.mxu0 %v5154
        %5202 = vmatpush1.msra.mxu0 %v5153
        %5203 = vmatprep.subr.mxu0 %v5158
        %5204 = vmatpush1.msra.mxu0 %v5157
        %5205 = vmatprep.subr.mxu0 %v5162
        %5206 = vmatpush1.msra.mxu0 %v5161
        %5207 = vmatprep.subr.mxu0 %v5166
        %5208 = vmatpush1.msra.mxu0 %v5165
        %5209 = vmatprep.subr.mxu0 %v5170
        %5210 = vmatpush1.msra.mxu0 %v5169
        %5211 = vmatprep.subr.mxu0 %v5174
        %5212 = vmatpush1.msra.mxu0 %v5173
        %5213 = vmatprep.subr.mxu0 %v5178
        %5214 = vmatpush1.msra.mxu0 %v5177
        %5215 = vmatprep.subr.mxu0 %v5182
        %5216 = vmatpush1.msra.mxu0 %v5181
        %5217 = vmatprep.subr.mxu0 0.0
        %5218 = vmatpush1.msra.mxu0 0.0
        %5219 = vmatprep.subr.mxu0 0.0
        %5220 = vmatpush1.msra.mxu0 0.0
        %5221 = vmatprep.subr.mxu0 0.0
        %5222 = vmatpush1.msra.mxu0 0.0
        %5223 = vmatprep.subr.mxu0 0.0
        %5224 = vmatpush1.msra.mxu0 0.0
        %5225 = vmatprep.subr.mxu0 0.0
        %5226 = vmatpush1.msra.mxu0 0.0
        %5227 = vmatprep.subr.mxu0 0.0
        %5228 = vmatpush1.msra.mxu0 0.0
        %5229 = vmatprep.subr.mxu0 0.0
        %5230 = vmatpush1.msra.mxu0 0.0
        %5231 = vmatprep.subr.mxu0 0.0
        %5232 = vmatpush1.msra.mxu0 0.0
        %5233 = vmatprep.subr.mxu0 0.0
        %5234 = vmatpush1.msra.mxu0 0.0
        %5235 = vmatprep.subr.mxu0 0.0
        %5236 = vmatpush1.msra.mxu0 0.0
        %5237 = vmatprep.subr.mxu0 0.0
        %5238 = vmatpush1.msra.mxu0 0.0
        %5239 = vmatprep.subr.mxu0 0.0
        %5240 = vmatpush1.msra.mxu0 0.0
        %5241 = vmatprep.subr.mxu0 0.0
        %5242 = vmatpush1.msra.mxu0 0.0
        %5243 = vmatprep.subr.mxu0 0.0
        %5244 = vmatpush1.msra.mxu0 0.0
        %5245 = vmatprep.subr.mxu0 0.0
        %5246 = vmatpush1.msra.mxu0 0.0
        %5247 = vmatprep.subr.mxu0 0.0
        %5248 = vmatpush1.msra.mxu0 0.0
        %5249 = vmatprep.mubr.f32.mxu0 0.0
        %5250 = vmatmul.mubr.f32.gmra.mrb[0].mxu0 %v5114
        %v5251 = vpop.f32.mrb[0].mxu0
        %v5252 = vadd.f32 0.0, %v5251
        %v5253 = vpop.f32.mrb[0].mxu0
        %v5254 = vadd.f32 0.0, %v5253
        %5255 = vdwg.mxu0
        %5256 = vmatprep.subr.mxu0 %v5124
        %5257 = vmatpush1.msra.mxu0 %v5123
        %5258 = vmatprep.subr.mxu0 %v5128
        %5259 = vmatpush1.msra.mxu0 %v5127
        %5260 = vmatprep.subr.mxu0 %v5132
        %5261 = vmatpush1.msra.mxu0 %v5131
        %5262 = vmatprep.subr.mxu0 %v5136
        %5263 = vmatpush1.msra.mxu0 %v5135
        %5264 = vmatprep.subr.mxu0 %v5140
        %5265 = vmatpush1.msra.mxu0 %v5139
        %5266 = vmatprep.subr.mxu0 %v5144
        %5267 = vmatpush1.msra.mxu0 %v5143
        %5268 = vmatprep.subr.mxu0 %v5148
        %5269 = vmatpush1.msra.mxu0 %v5147
        %5270 = vmatprep.subr.mxu0 %v5152
        %5271 = vmatpush1.msra.mxu0 %v5151
        %5272 = vmatprep.subr.mxu0 %v5156
        %5273 = vmatpush1.msra.mxu0 %v5155
        %5274 = vmatprep.subr.mxu0 %v5160
        %5275 = vmatpush1.msra.mxu0 %v5159
        %5276 = vmatprep.subr.mxu0 %v5164
        %5277 = vmatpush1.msra.mxu0 %v5163
        %5278 = vmatprep.subr.mxu0 %v5168
        %5279 = vmatpush1.msra.mxu0 %v5167
        %5280 = vmatprep.subr.mxu0 %v5172
        %5281 = vmatpush1.msra.mxu0 %v5171
        %5282 = vmatprep.subr.mxu0 %v5176
        %5283 = vmatpush1.msra.mxu0 %v5175
        %5284 = vmatprep.subr.mxu0 %v5180
        %5285 = vmatpush1.msra.mxu0 %v5179
        %5286 = vmatprep.subr.mxu0 %v5184
        %5287 = vmatpush1.msra.mxu0 %v5183
        %5288 = vmatprep.subr.mxu0 0.0
        %5289 = vmatpush1.msra.mxu0 0.0
        %5290 = vmatprep.subr.mxu0 0.0
        %5291 = vmatpush1.msra.mxu0 0.0
        %5292 = vmatprep.subr.mxu0 0.0
        %5293 = vmatpush1.msra.mxu0 0.0
        %5294 = vmatprep.subr.mxu0 0.0
        %5295 = vmatpush1.msra.mxu0 0.0
        %5296 = vmatprep.subr.mxu0 0.0
        %5297 = vmatpush1.msra.mxu0 0.0
        %5298 = vmatprep.subr.mxu0 0.0
        %5299 = vmatpush1.msra.mxu0 0.0
        %5300 = vmatprep.subr.mxu0 0.0
        %5301 = vmatpush1.msra.mxu0 0.0
        %5302 = vmatprep.subr.mxu0 0.0
        %5303 = vmatpush1.msra.mxu0 0.0
        %5304 = vmatprep.subr.mxu0 0.0
        %5305 = vmatpush1.msra.mxu0 0.0
        %5306 = vmatprep.subr.mxu0 0.0
        %5307 = vmatpush1.msra.mxu0 0.0
        %5308 = vmatprep.subr.mxu0 0.0
        %5309 = vmatpush1.msra.mxu0 0.0
        %5310 = vmatprep.subr.mxu0 0.0
        %5311 = vmatpush1.msra.mxu0 0.0
        %5312 = vmatprep.subr.mxu0 0.0
        %5313 = vmatpush1.msra.mxu0 0.0
        %5314 = vmatprep.subr.mxu0 0.0
        %5315 = vmatpush1.msra.mxu0 0.0
        %5316 = vmatprep.subr.mxu0 0.0
        %5317 = vmatpush1.msra.mxu0 0.0
        %5318 = vmatprep.subr.mxu0 0.0
        %5319 = vmatpush1.msra.mxu0 0.0
        %5320 = vmatprep.mubr.f32.mxu0 0.0
        %5321 = vmatmul.mubr.f32.gmra.mrb[0].mxu0 %v5114
        %v5322 = vpop.f32.mrb[0].mxu0
        %v5323 = vadd.f32 0.0, %v5322
        %v5324 = vpop.f32.mrb[0].mxu0
        %v5325 = vadd.f32 0.0, %v5324
        %5326 = vdwg.mxu0
        %v5327 = vadd.f32 %v5117, %v5252
        %v5328 = vadd.f32 %v5118, %v5254
        %v5329 = vadd.f32 %v5119, %v5323
        %v5330 = vadd.f32 %v5120, %v5325
        %v5331 = vxor.u32 %v5327, 2147483648
        %v5332 = vmul.f32 %v5331, 1.442695
        %v5333 = vpow.pop %v5332
        %v5334 = vadd.f32 %v5333, 1.0
        %v5335 = vrcp.pop %v5334
        %v5336 = vmul.f32 1.0, %v5335
        %v5337 = vxor.u32 %v5328, 2147483648
        %v5338 = vmul.f32 %v5337, 1.442695
        %v5339 = vpow.pop %v5338
        %v5340 = vadd.f32 %v5339, 1.0
        %v5341 = vrcp.pop %v5340
        %v5342 = vmul.f32 1.0, %v5341
        %v5343 = vtanh.pop %v5329
        %v5344 = vxor.u32 %v5330, 2147483648
        %v5345 = vmul.f32 %v5344, 1.442695
        %v5346 = vpow.pop %v5345
        %v5347 = vadd.f32 %v5346, 1.0
        %v5348 = vrcp.pop %v5347
        %v5349 = vmul.f32 1.0, %v5348
        %v5350 = vmul.f32 %v5342, %v5112
        %v5351 = vmul.f32 %v5336, %v5343
        %v5352 = vadd.f32 %v5350, %v5351
        %v5353 = vtanh.pop %v5352
        %v5354 = vmul.f32 %v5349, %v5353
        %s5355 = scalar_lea.vmem [#allocation6], 40
        %5356 = vst [vmem:[%s5355] sm:$0xff] %v5354
        %v5357 = vld [vmem:[%s1142] sm:$0xff]
        %v5358 = vld [vmem:[%s1142 + $0x8] sm:$0xff]
        %v5359 = vld [vmem:[%s1142 + $0x10] sm:$0xff]
        %v5360 = vld [vmem:[%s1142 + $0x18] sm:$0xff]
        %v5361 = vld [vmem:[#allocation8] sm:$0xff]
        %v5362 = vld [vmem:[#allocation8 + $0x8] sm:$0xff]
        %v5363 = vld [vmem:[#allocation8 + $0x10] sm:$0xff]
        %v5364 = vld [vmem:[#allocation8 + $0x18] sm:$0xff]
        %v5365 = vld [vmem:[#allocation8 + $0x20] sm:$0xff]
        %v5366 = vld [vmem:[#allocation8 + $0x28] sm:$0xff]
        %v5367 = vld [vmem:[#allocation8 + $0x30] sm:$0xff]
        %v5368 = vld [vmem:[#allocation8 + $0x38] sm:$0xff]
        %v5369 = vld [vmem:[#allocation8 + $0x40] sm:$0xff]
        %v5370 = vld [vmem:[#allocation8 + $0x48] sm:$0xff]
        %v5371 = vld [vmem:[#allocation8 + $0x50] sm:$0xff]
        %v5372 = vld [vmem:[#allocation8 + $0x58] sm:$0xff]
        %v5373 = vld [vmem:[#allocation8 + $0x60] sm:$0xff]
        %v5374 = vld [vmem:[#allocation8 + $0x68] sm:$0xff]
        %v5375 = vld [vmem:[#allocation8 + $0x70] sm:$0xff]
        %v5376 = vld [vmem:[#allocation8 + $0x78] sm:$0xff]
        %v5377 = vld [vmem:[#allocation8 + $0x80] sm:$0xff]
        %v5378 = vld [vmem:[#allocation8 + $0x88] sm:$0xff]
        %v5379 = vld [vmem:[#allocation8 + $0x90] sm:$0xff]
        %v5380 = vld [vmem:[#allocation8 + $0x98] sm:$0xff]
        %v5381 = vld [vmem:[#allocation8 + $0xa0] sm:$0xff]
        %v5382 = vld [vmem:[#allocation8 + $0xa8] sm:$0xff]
        %v5383 = vld [vmem:[#allocation8 + $0xb0] sm:$0xff]
        %v5384 = vld [vmem:[#allocation8 + $0xb8] sm:$0xff]
        %v5385 = vld [vmem:[#allocation8 + $0xc0] sm:$0xff]
        %v5386 = vld [vmem:[#allocation8 + $0xc8] sm:$0xff]
        %v5387 = vld [vmem:[#allocation8 + $0xd0] sm:$0xff]
        %v5388 = vld [vmem:[#allocation8 + $0xd8] sm:$0xff]
        %v5389 = vld [vmem:[#allocation8 + $0xe0] sm:$0xff]
        %v5390 = vld [vmem:[#allocation8 + $0xe8] sm:$0xff]
        %v5391 = vld [vmem:[#allocation8 + $0xf0] sm:$0xff]
        %v5392 = vld [vmem:[#allocation8 + $0xf8] sm:$0xff]
        %v5393 = vld [vmem:[#allocation8 + $0x100] sm:$0xff]
        %v5394 = vld [vmem:[#allocation8 + $0x108] sm:$0xff]
        %v5395 = vld [vmem:[#allocation8 + $0x110] sm:$0xff]
        %v5396 = vld [vmem:[#allocation8 + $0x118] sm:$0xff]
        %v5397 = vld [vmem:[#allocation8 + $0x120] sm:$0xff]
        %v5398 = vld [vmem:[#allocation8 + $0x128] sm:$0xff]
        %v5399 = vld [vmem:[#allocation8 + $0x130] sm:$0xff]
        %v5400 = vld [vmem:[#allocation8 + $0x138] sm:$0xff]
        %v5401 = vld [vmem:[#allocation8 + $0x140] sm:$0xff]
        %v5402 = vld [vmem:[#allocation8 + $0x148] sm:$0xff]
        %v5403 = vld [vmem:[#allocation8 + $0x150] sm:$0xff]
        %v5404 = vld [vmem:[#allocation8 + $0x158] sm:$0xff]
        %v5405 = vld [vmem:[#allocation8 + $0x160] sm:$0xff]
        %v5406 = vld [vmem:[#allocation8 + $0x168] sm:$0xff]
        %v5407 = vld [vmem:[#allocation8 + $0x170] sm:$0xff]
        %v5408 = vld [vmem:[#allocation8 + $0x178] sm:$0xff]
        %v5409 = vld [vmem:[#allocation8 + $0x180] sm:$0xff]
        %v5410 = vld [vmem:[#allocation8 + $0x188] sm:$0xff]
        %v5411 = vld [vmem:[#allocation8 + $0x190] sm:$0xff]
        %v5412 = vld [vmem:[#allocation8 + $0x198] sm:$0xff]
        %v5413 = vld [vmem:[#allocation8 + $0x1a0] sm:$0xff]
        %v5414 = vld [vmem:[#allocation8 + $0x1a8] sm:$0xff]
        %v5415 = vld [vmem:[#allocation8 + $0x1b0] sm:$0xff]
        %v5416 = vld [vmem:[#allocation8 + $0x1b8] sm:$0xff]
        %v5417 = vld [vmem:[#allocation8 + $0x1c0] sm:$0xff]
        %v5418 = vld [vmem:[#allocation8 + $0x1c8] sm:$0xff]
        %v5419 = vld [vmem:[#allocation8 + $0x1d0] sm:$0xff]
        %v5420 = vld [vmem:[#allocation8 + $0x1d8] sm:$0xff]
        %v5421 = vld [vmem:[#allocation8 + $0x1e0] sm:$0xff]
        %v5422 = vld [vmem:[#allocation8 + $0x1e8] sm:$0xff]
        %v5423 = vld [vmem:[#allocation8 + $0x1f0] sm:$0xff]
        %v5424 = vld [vmem:[#allocation8 + $0x1f8] sm:$0xff]
        %5425 = vmatprep.subr.mxu0 %v5362
        %5426 = vmatpush1.msra.mxu0 %v5361
        %5427 = vmatprep.subr.mxu0 %v5366
        %5428 = vmatpush1.msra.mxu0 %v5365
        %5429 = vmatprep.subr.mxu0 %v5370
        %5430 = vmatpush1.msra.mxu0 %v5369
        %5431 = vmatprep.subr.mxu0 %v5374
        %5432 = vmatpush1.msra.mxu0 %v5373
        %5433 = vmatprep.subr.mxu0 %v5378
        %5434 = vmatpush1.msra.mxu0 %v5377
        %5435 = vmatprep.subr.mxu0 %v5382
        %5436 = vmatpush1.msra.mxu0 %v5381
        %5437 = vmatprep.subr.mxu0 %v5386
        %5438 = vmatpush1.msra.mxu0 %v5385
        %5439 = vmatprep.subr.mxu0 %v5390
        %5440 = vmatpush1.msra.mxu0 %v5389
        %5441 = vmatprep.subr.mxu0 %v5394
        %5442 = vmatpush1.msra.mxu0 %v5393
        %5443 = vmatprep.subr.mxu0 %v5398
        %5444 = vmatpush1.msra.mxu0 %v5397
        %5445 = vmatprep.subr.mxu0 %v5402
        %5446 = vmatpush1.msra.mxu0 %v5401
        %5447 = vmatprep.subr.mxu0 %v5406
        %5448 = vmatpush1.msra.mxu0 %v5405
        %5449 = vmatprep.subr.mxu0 %v5410
        %5450 = vmatpush1.msra.mxu0 %v5409
        %5451 = vmatprep.subr.mxu0 %v5414
        %5452 = vmatpush1.msra.mxu0 %v5413
        %5453 = vmatprep.subr.mxu0 %v5418
        %5454 = vmatpush1.msra.mxu0 %v5417
        %5455 = vmatprep.subr.mxu0 %v5422
        %5456 = vmatpush1.msra.mxu0 %v5421
        %5457 = vmatprep.subr.mxu0 0.0
        %5458 = vmatpush1.msra.mxu0 0.0
        %5459 = vmatprep.subr.mxu0 0.0
        %5460 = vmatpush1.msra.mxu0 0.0
        %5461 = vmatprep.subr.mxu0 0.0
        %5462 = vmatpush1.msra.mxu0 0.0
        %5463 = vmatprep.subr.mxu0 0.0
        %5464 = vmatpush1.msra.mxu0 0.0
        %5465 = vmatprep.subr.mxu0 0.0
        %5466 = vmatpush1.msra.mxu0 0.0
        %5467 = vmatprep.subr.mxu0 0.0
        %5468 = vmatpush1.msra.mxu0 0.0
        %5469 = vmatprep.subr.mxu0 0.0
        %5470 = vmatpush1.msra.mxu0 0.0
        %5471 = vmatprep.subr.mxu0 0.0
        %5472 = vmatpush1.msra.mxu0 0.0
        %5473 = vmatprep.subr.mxu0 0.0
        %5474 = vmatpush1.msra.mxu0 0.0
        %5475 = vmatprep.subr.mxu0 0.0
        %5476 = vmatpush1.msra.mxu0 0.0
        %5477 = vmatprep.subr.mxu0 0.0
        %5478 = vmatpush1.msra.mxu0 0.0
        %5479 = vmatprep.subr.mxu0 0.0
        %5480 = vmatpush1.msra.mxu0 0.0
        %5481 = vmatprep.subr.mxu0 0.0
        %5482 = vmatpush1.msra.mxu0 0.0
        %5483 = vmatprep.subr.mxu0 0.0
        %5484 = vmatpush1.msra.mxu0 0.0
        %5485 = vmatprep.subr.mxu0 0.0
        %5486 = vmatpush1.msra.mxu0 0.0
        %5487 = vmatprep.subr.mxu0 0.0
        %5488 = vmatpush1.msra.mxu0 0.0
        %5489 = vmatprep.mubr.f32.mxu0 0.0
        %5490 = vmatmul.mubr.f32.gmra.mrb[0].mxu0 %v5354
        %v5491 = vpop.f32.mrb[0].mxu0
        %v5492 = vadd.f32 0.0, %v5491
        %v5493 = vpop.f32.mrb[0].mxu0
        %v5494 = vadd.f32 0.0, %v5493
        %5495 = vdwg.mxu0
        %5496 = vmatprep.subr.mxu0 %v5364
        %5497 = vmatpush1.msra.mxu0 %v5363
        %5498 = vmatprep.subr.mxu0 %v5368
        %5499 = vmatpush1.msra.mxu0 %v5367
        %5500 = vmatprep.subr.mxu0 %v5372
        %5501 = vmatpush1.msra.mxu0 %v5371
        %5502 = vmatprep.subr.mxu0 %v5376
        %5503 = vmatpush1.msra.mxu0 %v5375
        %5504 = vmatprep.subr.mxu0 %v5380
        %5505 = vmatpush1.msra.mxu0 %v5379
        %5506 = vmatprep.subr.mxu0 %v5384
        %5507 = vmatpush1.msra.mxu0 %v5383
        %5508 = vmatprep.subr.mxu0 %v5388
        %5509 = vmatpush1.msra.mxu0 %v5387
        %5510 = vmatprep.subr.mxu0 %v5392
        %5511 = vmatpush1.msra.mxu0 %v5391
        %5512 = vmatprep.subr.mxu0 %v5396
        %5513 = vmatpush1.msra.mxu0 %v5395
        %5514 = vmatprep.subr.mxu0 %v5400
        %5515 = vmatpush1.msra.mxu0 %v5399
        %5516 = vmatprep.subr.mxu0 %v5404
        %5517 = vmatpush1.msra.mxu0 %v5403
        %5518 = vmatprep.subr.mxu0 %v5408
        %5519 = vmatpush1.msra.mxu0 %v5407
        %5520 = vmatprep.subr.mxu0 %v5412
        %5521 = vmatpush1.msra.mxu0 %v5411
        %5522 = vmatprep.subr.mxu0 %v5416
        %5523 = vmatpush1.msra.mxu0 %v5415
        %5524 = vmatprep.subr.mxu0 %v5420
        %5525 = vmatpush1.msra.mxu0 %v5419
        %5526 = vmatprep.subr.mxu0 %v5424
        %5527 = vmatpush1.msra.mxu0 %v5423
        %5528 = vmatprep.subr.mxu0 0.0
        %5529 = vmatpush1.msra.mxu0 0.0
        %5530 = vmatprep.subr.mxu0 0.0
        %5531 = vmatpush1.msra.mxu0 0.0
        %5532 = vmatprep.subr.mxu0 0.0
        %5533 = vmatpush1.msra.mxu0 0.0
        %5534 = vmatprep.subr.mxu0 0.0
        %5535 = vmatpush1.msra.mxu0 0.0
        %5536 = vmatprep.subr.mxu0 0.0
        %5537 = vmatpush1.msra.mxu0 0.0
        %5538 = vmatprep.subr.mxu0 0.0
        %5539 = vmatpush1.msra.mxu0 0.0
        %5540 = vmatprep.subr.mxu0 0.0
        %5541 = vmatpush1.msra.mxu0 0.0
        %5542 = vmatprep.subr.mxu0 0.0
        %5543 = vmatpush1.msra.mxu0 0.0
        %5544 = vmatprep.subr.mxu0 0.0
        %5545 = vmatpush1.msra.mxu0 0.0
        %5546 = vmatprep.subr.mxu0 0.0
        %5547 = vmatpush1.msra.mxu0 0.0
        %5548 = vmatprep.subr.mxu0 0.0
        %5549 = vmatpush1.msra.mxu0 0.0
        %5550 = vmatprep.subr.mxu0 0.0
        %5551 = vmatpush1.msra.mxu0 0.0
        %5552 = vmatprep.subr.mxu0 0.0
        %5553 = vmatpush1.msra.mxu0 0.0
        %5554 = vmatprep.subr.mxu0 0.0
        %5555 = vmatpush1.msra.mxu0 0.0
        %5556 = vmatprep.subr.mxu0 0.0
        %5557 = vmatpush1.msra.mxu0 0.0
        %5558 = vmatprep.subr.mxu0 0.0
        %5559 = vmatpush1.msra.mxu0 0.0
        %5560 = vmatprep.mubr.f32.mxu0 0.0
        %5561 = vmatmul.mubr.f32.gmra.mrb[0].mxu0 %v5354
        %v5562 = vpop.f32.mrb[0].mxu0
        %v5563 = vadd.f32 0.0, %v5562
        %v5564 = vpop.f32.mrb[0].mxu0
        %v5565 = vadd.f32 0.0, %v5564
        %5566 = vdwg.mxu0
        %v5567 = vadd.f32 %v5357, %v5492
        %v5568 = vadd.f32 %v5358, %v5494
        %v5569 = vadd.f32 %v5359, %v5563
        %v5570 = vadd.f32 %v5360, %v5565
        %v5571 = vxor.u32 %v5567, 2147483648
        %v5572 = vmul.f32 %v5571, 1.442695
        %v5573 = vpow.pop %v5572
        %v5574 = vadd.f32 %v5573, 1.0
        %v5575 = vrcp.pop %v5574
        %v5576 = vmul.f32 1.0, %v5575
        %v5577 = vxor.u32 %v5568, 2147483648
        %v5578 = vmul.f32 %v5577, 1.442695
        %v5579 = vpow.pop %v5578
        %v5580 = vadd.f32 %v5579, 1.0
        %v5581 = vrcp.pop %v5580
        %v5582 = vmul.f32 1.0, %v5581
        %v5583 = vtanh.pop %v5569
        %v5584 = vxor.u32 %v5570, 2147483648
        %v5585 = vmul.f32 %v5584, 1.442695
        %v5586 = vpow.pop %v5585
        %v5587 = vadd.f32 %v5586, 1.0
        %v5588 = vrcp.pop %v5587
        %v5589 = vmul.f32 1.0, %v5588
        %v5590 = vmul.f32 %v5582, %v5352
        %v5591 = vmul.f32 %v5576, %v5583
        %v5592 = vadd.f32 %v5590, %v5591
        %v5593 = vtanh.pop %v5592
        %v5594 = vmul.f32 %v5589, %v5593
        %s5595 = scalar_lea.vmem [#allocation6], 48
        %5596 = vst [vmem:[%s5595] sm:$0xff] %v5594
        %v5597 = vld [vmem:[%s1159] sm:$0xff]
        %v5598 = vld [vmem:[%s1159 + $0x8] sm:$0xff]
        %v5599 = vld [vmem:[%s1159 + $0x10] sm:$0xff]
        %v5600 = vld [vmem:[%s1159 + $0x18] sm:$0xff]
        %v5601 = vld [vmem:[#allocation8] sm:$0xff]
        %v5602 = vld [vmem:[#allocation8 + $0x8] sm:$0xff]
        %v5603 = vld [vmem:[#allocation8 + $0x10] sm:$0xff]
        %v5604 = vld [vmem:[#allocation8 + $0x18] sm:$0xff]
        %v5605 = vld [vmem:[#allocation8 + $0x20] sm:$0xff]
        %v5606 = vld [vmem:[#allocation8 + $0x28] sm:$0xff]
        %v5607 = vld [vmem:[#allocation8 + $0x30] sm:$0xff]
        %v5608 = vld [vmem:[#allocation8 + $0x38] sm:$0xff]
        %v5609 = vld [vmem:[#allocation8 + $0x40] sm:$0xff]
        %v5610 = vld [vmem:[#allocation8 + $0x48] sm:$0xff]
        %v5611 = vld [vmem:[#allocation8 + $0x50] sm:$0xff]
        %v5612 = vld [vmem:[#allocation8 + $0x58] sm:$0xff]
        %v5613 = vld [vmem:[#allocation8 + $0x60] sm:$0xff]
        %v5614 = vld [vmem:[#allocation8 + $0x68] sm:$0xff]
        %v5615 = vld [vmem:[#allocation8 + $0x70] sm:$0xff]
        %v5616 = vld [vmem:[#allocation8 + $0x78] sm:$0xff]
        %v5617 = vld [vmem:[#allocation8 + $0x80] sm:$0xff]
        %v5618 = vld [vmem:[#allocation8 + $0x88] sm:$0xff]
        %v5619 = vld [vmem:[#allocation8 + $0x90] sm:$0xff]
        %v5620 = vld [vmem:[#allocation8 + $0x98] sm:$0xff]
        %v5621 = vld [vmem:[#allocation8 + $0xa0] sm:$0xff]
        %v5622 = vld [vmem:[#allocation8 + $0xa8] sm:$0xff]
        %v5623 = vld [vmem:[#allocation8 + $0xb0] sm:$0xff]
        %v5624 = vld [vmem:[#allocation8 + $0xb8] sm:$0xff]
        %v5625 = vld [vmem:[#allocation8 + $0xc0] sm:$0xff]
        %v5626 = vld [vmem:[#allocation8 + $0xc8] sm:$0xff]
        %v5627 = vld [vmem:[#allocation8 + $0xd0] sm:$0xff]
        %v5628 = vld [vmem:[#allocation8 + $0xd8] sm:$0xff]
        %v5629 = vld [vmem:[#allocation8 + $0xe0] sm:$0xff]
        %v5630 = vld [vmem:[#allocation8 + $0xe8] sm:$0xff]
        %v5631 = vld [vmem:[#allocation8 + $0xf0] sm:$0xff]
        %v5632 = vld [vmem:[#allocation8 + $0xf8] sm:$0xff]
        %v5633 = vld [vmem:[#allocation8 + $0x100] sm:$0xff]
        %v5634 = vld [vmem:[#allocation8 + $0x108] sm:$0xff]
        %v5635 = vld [vmem:[#allocation8 + $0x110] sm:$0xff]
        %v5636 = vld [vmem:[#allocation8 + $0x118] sm:$0xff]
        %v5637 = vld [vmem:[#allocation8 + $0x120] sm:$0xff]
        %v5638 = vld [vmem:[#allocation8 + $0x128] sm:$0xff]
        %v5639 = vld [vmem:[#allocation8 + $0x130] sm:$0xff]
        %v5640 = vld [vmem:[#allocation8 + $0x138] sm:$0xff]
        %v5641 = vld [vmem:[#allocation8 + $0x140] sm:$0xff]
        %v5642 = vld [vmem:[#allocation8 + $0x148] sm:$0xff]
        %v5643 = vld [vmem:[#allocation8 + $0x150] sm:$0xff]
        %v5644 = vld [vmem:[#allocation8 + $0x158] sm:$0xff]
        %v5645 = vld [vmem:[#allocation8 + $0x160] sm:$0xff]
        %v5646 = vld [vmem:[#allocation8 + $0x168] sm:$0xff]
        %v5647 = vld [vmem:[#allocation8 + $0x170] sm:$0xff]
        %v5648 = vld [vmem:[#allocation8 + $0x178] sm:$0xff]
        %v5649 = vld [vmem:[#allocation8 + $0x180] sm:$0xff]
        %v5650 = vld [vmem:[#allocation8 + $0x188] sm:$0xff]
        %v5651 = vld [vmem:[#allocation8 + $0x190] sm:$0xff]
        %v5652 = vld [vmem:[#allocation8 + $0x198] sm:$0xff]
        %v5653 = vld [vmem:[#allocation8 + $0x1a0] sm:$0xff]
        %v5654 = vld [vmem:[#allocation8 + $0x1a8] sm:$0xff]
        %v5655 = vld [vmem:[#allocation8 + $0x1b0] sm:$0xff]
        %v5656 = vld [vmem:[#allocation8 + $0x1b8] sm:$0xff]
        %v5657 = vld [vmem:[#allocation8 + $0x1c0] sm:$0xff]
        %v5658 = vld [vmem:[#allocation8 + $0x1c8] sm:$0xff]
        %v5659 = vld [vmem:[#allocation8 + $0x1d0] sm:$0xff]
        %v5660 = vld [vmem:[#allocation8 + $0x1d8] sm:$0xff]
        %v5661 = vld [vmem:[#allocation8 + $0x1e0] sm:$0xff]
        %v5662 = vld [vmem:[#allocation8 + $0x1e8] sm:$0xff]
        %v5663 = vld [vmem:[#allocation8 + $0x1f0] sm:$0xff]
        %v5664 = vld [vmem:[#allocation8 + $0x1f8] sm:$0xff]
        %5665 = vmatprep.subr.mxu0 %v5602
        %5666 = vmatpush1.msra.mxu0 %v5601
        %5667 = vmatprep.subr.mxu0 %v5606
        %5668 = vmatpush1.msra.mxu0 %v5605
        %5669 = vmatprep.subr.mxu0 %v5610
        %5670 = vmatpush1.msra.mxu0 %v5609
        %5671 = vmatprep.subr.mxu0 %v5614
        %5672 = vmatpush1.msra.mxu0 %v5613
        %5673 = vmatprep.subr.mxu0 %v5618
        %5674 = vmatpush1.msra.mxu0 %v5617
        %5675 = vmatprep.subr.mxu0 %v5622
        %5676 = vmatpush1.msra.mxu0 %v5621
        %5677 = vmatprep.subr.mxu0 %v5626
        %5678 = vmatpush1.msra.mxu0 %v5625
        %5679 = vmatprep.subr.mxu0 %v5630
        %5680 = vmatpush1.msra.mxu0 %v5629
        %5681 = vmatprep.subr.mxu0 %v5634
        %5682 = vmatpush1.msra.mxu0 %v5633
        %5683 = vmatprep.subr.mxu0 %v5638
        %5684 = vmatpush1.msra.mxu0 %v5637
        %5685 = vmatprep.subr.mxu0 %v5642
        %5686 = vmatpush1.msra.mxu0 %v5641
        %5687 = vmatprep.subr.mxu0 %v5646
        %5688 = vmatpush1.msra.mxu0 %v5645
        %5689 = vmatprep.subr.mxu0 %v5650
        %5690 = vmatpush1.msra.mxu0 %v5649
        %5691 = vmatprep.subr.mxu0 %v5654
        %5692 = vmatpush1.msra.mxu0 %v5653
        %5693 = vmatprep.subr.mxu0 %v5658
        %5694 = vmatpush1.msra.mxu0 %v5657
        %5695 = vmatprep.subr.mxu0 %v5662
        %5696 = vmatpush1.msra.mxu0 %v5661
        %5697 = vmatprep.subr.mxu0 0.0
        %5698 = vmatpush1.msra.mxu0 0.0
        %5699 = vmatprep.subr.mxu0 0.0
        %5700 = vmatpush1.msra.mxu0 0.0
        %5701 = vmatprep.subr.mxu0 0.0
        %5702 = vmatpush1.msra.mxu0 0.0
        %5703 = vmatprep.subr.mxu0 0.0
        %5704 = vmatpush1.msra.mxu0 0.0
        %5705 = vmatprep.subr.mxu0 0.0
        %5706 = vmatpush1.msra.mxu0 0.0
        %5707 = vmatprep.subr.mxu0 0.0
        %5708 = vmatpush1.msra.mxu0 0.0
        %5709 = vmatprep.subr.mxu0 0.0
        %5710 = vmatpush1.msra.mxu0 0.0
        %5711 = vmatprep.subr.mxu0 0.0
        %5712 = vmatpush1.msra.mxu0 0.0
        %5713 = vmatprep.subr.mxu0 0.0
        %5714 = vmatpush1.msra.mxu0 0.0
        %5715 = vmatprep.subr.mxu0 0.0
        %5716 = vmatpush1.msra.mxu0 0.0
        %5717 = vmatprep.subr.mxu0 0.0
        %5718 = vmatpush1.msra.mxu0 0.0
        %5719 = vmatprep.subr.mxu0 0.0
        %5720 = vmatpush1.msra.mxu0 0.0
        %5721 = vmatprep.subr.mxu0 0.0
        %5722 = vmatpush1.msra.mxu0 0.0
        %5723 = vmatprep.subr.mxu0 0.0
        %5724 = vmatpush1.msra.mxu0 0.0
        %5725 = vmatprep.subr.mxu0 0.0
        %5726 = vmatpush1.msra.mxu0 0.0
        %5727 = vmatprep.subr.mxu0 0.0
        %5728 = vmatpush1.msra.mxu0 0.0
        %5729 = vmatprep.mubr.f32.mxu0 0.0
        %5730 = vmatmul.mubr.f32.gmra.mrb[0].mxu0 %v5594
        %v5731 = vpop.f32.mrb[0].mxu0
        %v5732 = vadd.f32 0.0, %v5731
        %v5733 = vpop.f32.mrb[0].mxu0
        %v5734 = vadd.f32 0.0, %v5733
        %5735 = vdwg.mxu0
        %5736 = vmatprep.subr.mxu0 %v5604
        %5737 = vmatpush1.msra.mxu0 %v5603
        %5738 = vmatprep.subr.mxu0 %v5608
        %5739 = vmatpush1.msra.mxu0 %v5607
        %5740 = vmatprep.subr.mxu0 %v5612
        %5741 = vmatpush1.msra.mxu0 %v5611
        %5742 = vmatprep.subr.mxu0 %v5616
        %5743 = vmatpush1.msra.mxu0 %v5615
        %5744 = vmatprep.subr.mxu0 %v5620
        %5745 = vmatpush1.msra.mxu0 %v5619
        %5746 = vmatprep.subr.mxu0 %v5624
        %5747 = vmatpush1.msra.mxu0 %v5623
        %5748 = vmatprep.subr.mxu0 %v5628
        %5749 = vmatpush1.msra.mxu0 %v5627
        %5750 = vmatprep.subr.mxu0 %v5632
        %5751 = vmatpush1.msra.mxu0 %v5631
        %5752 = vmatprep.subr.mxu0 %v5636
        %5753 = vmatpush1.msra.mxu0 %v5635
        %5754 = vmatprep.subr.mxu0 %v5640
        %5755 = vmatpush1.msra.mxu0 %v5639
        %5756 = vmatprep.subr.mxu0 %v5644
        %5757 = vmatpush1.msra.mxu0 %v5643
        %5758 = vmatprep.subr.mxu0 %v5648
        %5759 = vmatpush1.msra.mxu0 %v5647
        %5760 = vmatprep.subr.mxu0 %v5652
        %5761 = vmatpush1.msra.mxu0 %v5651
        %5762 = vmatprep.subr.mxu0 %v5656
        %5763 = vmatpush1.msra.mxu0 %v5655
        %5764 = vmatprep.subr.mxu0 %v5660
        %5765 = vmatpush1.msra.mxu0 %v5659
        %5766 = vmatprep.subr.mxu0 %v5664
        %5767 = vmatpush1.msra.mxu0 %v5663
        %5768 = vmatprep.subr.mxu0 0.0
        %5769 = vmatpush1.msra.mxu0 0.0
        %5770 = vmatprep.subr.mxu0 0.0
        %5771 = vmatpush1.msra.mxu0 0.0
        %5772 = vmatprep.subr.mxu0 0.0
        %5773 = vmatpush1.msra.mxu0 0.0
        %5774 = vmatprep.subr.mxu0 0.0
        %5775 = vmatpush1.msra.mxu0 0.0
        %5776 = vmatprep.subr.mxu0 0.0
        %5777 = vmatpush1.msra.mxu0 0.0
        %5778 = vmatprep.subr.mxu0 0.0
        %5779 = vmatpush1.msra.mxu0 0.0
        %5780 = vmatprep.subr.mxu0 0.0
        %5781 = vmatpush1.msra.mxu0 0.0
        %5782 = vmatprep.subr.mxu0 0.0
        %5783 = vmatpush1.msra.mxu0 0.0
        %5784 = vmatprep.subr.mxu0 0.0
        %5785 = vmatpush1.msra.mxu0 0.0
        %5786 = vmatprep.subr.mxu0 0.0
        %5787 = vmatpush1.msra.mxu0 0.0
        %5788 = vmatprep.subr.mxu0 0.0
        %5789 = vmatpush1.msra.mxu0 0.0
        %5790 = vmatprep.subr.mxu0 0.0
        %5791 = vmatpush1.msra.mxu0 0.0
        %5792 = vmatprep.subr.mxu0 0.0
        %5793 = vmatpush1.msra.mxu0 0.0
        %5794 = vmatprep.subr.mxu0 0.0
        %5795 = vmatpush1.msra.mxu0 0.0
        %5796 = vmatprep.subr.mxu0 0.0
        %5797 = vmatpush1.msra.mxu0 0.0
        %5798 = vmatprep.subr.mxu0 0.0
        %5799 = vmatpush1.msra.mxu0 0.0
        %5800 = vmatprep.mubr.f32.mxu0 0.0
        %5801 = vmatmul.mubr.f32.gmra.mrb[0].mxu0 %v5594
        %v5802 = vpop.f32.mrb[0].mxu0
        %v5803 = vadd.f32 0.0, %v5802
        %v5804 = vpop.f32.mrb[0].mxu0
        %v5805 = vadd.f32 0.0, %v5804
        %5806 = vdwg.mxu0
        %v5807 = vadd.f32 %v5597, %v5732
        %v5808 = vadd.f32 %v5598, %v5734
        %v5809 = vadd.f32 %v5599, %v5803
        %v5810 = vadd.f32 %v5600, %v5805
        %v5811 = vxor.u32 %v5807, 2147483648
        %v5812 = vmul.f32 %v5811, 1.442695
        %v5813 = vpow.pop %v5812
        %v5814 = vadd.f32 %v5813, 1.0
        %v5815 = vrcp.pop %v5814
        %v5816 = vmul.f32 1.0, %v5815
        %v5817 = vxor.u32 %v5808, 2147483648
        %v5818 = vmul.f32 %v5817, 1.442695
        %v5819 = vpow.pop %v5818
        %v5820 = vadd.f32 %v5819, 1.0
        %v5821 = vrcp.pop %v5820
        %v5822 = vmul.f32 1.0, %v5821
        %v5823 = vtanh.pop %v5809
        %v5824 = vxor.u32 %v5810, 2147483648
        %v5825 = vmul.f32 %v5824, 1.442695
        %v5826 = vpow.pop %v5825
        %v5827 = vadd.f32 %v5826, 1.0
        %v5828 = vrcp.pop %v5827
        %v5829 = vmul.f32 1.0, %v5828
        %v5830 = vmul.f32 %v5822, %v5592
        %v5831 = vmul.f32 %v5816, %v5823
        %v5832 = vadd.f32 %v5830, %v5831
        %v5833 = vtanh.pop %v5832
        %v5834 = vmul.f32 %v5829, %v5833
        %s5835 = scalar_lea.vmem [#allocation6], 56
        %5836 = vst [vmem:[%s5835] sm:$0xff] %v5834
        %v5837 = vld [vmem:[%s5835] sm:$0xff]
        %v5838 = vld [vmem:[#allocation12] sm:$0xff]
        %v5839 = vld [vmem:[#allocation12 + $0x8] sm:$0xff]
        %v5840 = vld [vmem:[#allocation12 + $0x10] sm:$0xff]
        %v5841 = vld [vmem:[#allocation12 + $0x18] sm:$0xff]
        %v5842 = vld [vmem:[#allocation12 + $0x20] sm:$0xff]
        %v5843 = vld [vmem:[#allocation12 + $0x28] sm:$0xff]
        %v5844 = vld [vmem:[#allocation12 + $0x30] sm:$0xff]
        %v5845 = vld [vmem:[#allocation12 + $0x38] sm:$0xff]
        %v5846 = vld [vmem:[#allocation12 + $0x40] sm:$0xff]
        %v5847 = vld [vmem:[#allocation12 + $0x48] sm:$0xff]
        %v5848 = vld [vmem:[#allocation12 + $0x50] sm:$0xff]
        %v5849 = vld [vmem:[#allocation12 + $0x58] sm:$0xff]
        %v5850 = vld [vmem:[#allocation12 + $0x60] sm:$0xff]
        %v5851 = vld [vmem:[#allocation12 + $0x68] sm:$0xff]
        %v5852 = vld [vmem:[#allocation12 + $0x70] sm:$0xff]
        %v5853 = vld [vmem:[#allocation12 + $0x78] sm:$0xff]
        %v5854 = vld [vmem:[#allocation6] sm:$0xff]
        %v5855 = vld [vmem:[#allocation14] sm:$0xff]
        %v5856 = vld [vmem:[#allocation14 + $0x8] sm:$0xff]
        %v5857 = vld [vmem:[#allocation14 + $0x10] sm:$0xff]
        %v5858 = vld [vmem:[#allocation14 + $0x18] sm:$0xff]
        %v5859 = vld [vmem:[#allocation14 + $0x20] sm:$0xff]
        %v5860 = vld [vmem:[#allocation14 + $0x28] sm:$0xff]
        %v5861 = vld [vmem:[#allocation14 + $0x30] sm:$0xff]
        %v5862 = vld [vmem:[#allocation14 + $0x38] sm:$0xff]
        %v5863 = vld [vmem:[#allocation14 + $0x40] sm:$0xff]
        %v5864 = vld [vmem:[#allocation14 + $0x48] sm:$0xff]
        %v5865 = vld [vmem:[#allocation14 + $0x50] sm:$0xff]
        %v5866 = vld [vmem:[#allocation14 + $0x58] sm:$0xff]
        %v5867 = vld [vmem:[#allocation14 + $0x60] sm:$0xff]
        %v5868 = vld [vmem:[#allocation14 + $0x68] sm:$0xff]
        %v5869 = vld [vmem:[#allocation14 + $0x70] sm:$0xff]
        %v5870 = vld [vmem:[#allocation14 + $0x78] sm:$0xff]
        %5871 = vmatprep.subr.mxu0 0.0
        %5872 = vmatpush1.msra.mxu0 %v5855
        %5873 = vmatprep.subr.mxu0 0.0
        %5874 = vmatpush1.msra.mxu0 %v5856
        %5875 = vmatprep.subr.mxu0 0.0
        %5876 = vmatpush1.msra.mxu0 %v5857
        %5877 = vmatprep.subr.mxu0 0.0
        %5878 = vmatpush1.msra.mxu0 %v5858
        %5879 = vmatprep.subr.mxu0 0.0
        %5880 = vmatpush1.msra.mxu0 %v5859
        %5881 = vmatprep.subr.mxu0 0.0
        %5882 = vmatpush1.msra.mxu0 %v5860
        %5883 = vmatprep.subr.mxu0 0.0
        %5884 = vmatpush1.msra.mxu0 %v5861
        %5885 = vmatprep.subr.mxu0 0.0
        %5886 = vmatpush1.msra.mxu0 %v5862
        %5887 = vmatprep.subr.mxu0 0.0
        %5888 = vmatpush1.msra.mxu0 %v5863
        %5889 = vmatprep.subr.mxu0 0.0
        %5890 = vmatpush1.msra.mxu0 %v5864
        %5891 = vmatprep.subr.mxu0 0.0
        %5892 = vmatpush1.msra.mxu0 %v5865
        %5893 = vmatprep.subr.mxu0 0.0
        %5894 = vmatpush1.msra.mxu0 %v5866
        %5895 = vmatprep.subr.mxu0 0.0
        %5896 = vmatpush1.msra.mxu0 %v5867
        %5897 = vmatprep.subr.mxu0 0.0
        %5898 = vmatpush1.msra.mxu0 %v5868
        %5899 = vmatprep.subr.mxu0 0.0
        %5900 = vmatpush1.msra.mxu0 %v5869
        %5901 = vmatprep.subr.mxu0 0.0
        %5902 = vmatpush1.msra.mxu0 %v5870
        %5903 = vmatprep.subr.mxu0 0.0
        %5904 = vmatpush1.msra.mxu0 0.0
        %5905 = vmatprep.subr.mxu0 0.0
        %5906 = vmatpush1.msra.mxu0 0.0
        %5907 = vmatprep.subr.mxu0 0.0
        %5908 = vmatpush1.msra.mxu0 0.0
        %5909 = vmatprep.subr.mxu0 0.0
        %5910 = vmatpush1.msra.mxu0 0.0
        %5911 = vmatprep.subr.mxu0 0.0
        %5912 = vmatpush1.msra.mxu0 0.0
        %5913 = vmatprep.subr.mxu0 0.0
        %5914 = vmatpush1.msra.mxu0 0.0
        %5915 = vmatprep.subr.mxu0 0.0
        %5916 = vmatpush1.msra.mxu0 0.0
        %5917 = vmatprep.subr.mxu0 0.0
        %5918 = vmatpush1.msra.mxu0 0.0
        %5919 = vmatprep.subr.mxu0 0.0
        %5920 = vmatpush1.msra.mxu0 0.0
        %5921 = vmatprep.subr.mxu0 0.0
        %5922 = vmatpush1.msra.mxu0 0.0
        %5923 = vmatprep.subr.mxu0 0.0
        %5924 = vmatpush1.msra.mxu0 0.0
        %5925 = vmatprep.subr.mxu0 0.0
        %5926 = vmatpush1.msra.mxu0 0.0
        %5927 = vmatprep.subr.mxu0 0.0
        %5928 = vmatpush1.msra.mxu0 0.0
        %5929 = vmatprep.subr.mxu0 0.0
        %5930 = vmatpush1.msra.mxu0 0.0
        %5931 = vmatprep.subr.mxu0 0.0
        %5932 = vmatpush1.msra.mxu0 0.0
        %5933 = vmatprep.subr.mxu0 0.0
        %5934 = vmatpush1.msra.mxu0 0.0
        %5935 = vmatprep.mubr.f32.mxu0 0.0
        %5936 = vmatmul.mubr.f32.gmra.mrb[0].mxu0 %v5854
        %v5937 = vpop.f32.mrb[0].mxu0
        %v5938 = vadd.f32 0.0, %v5937
        %v5939 = vpop.f32.mrb[0].mxu0
        %5940 = vdwg.mxu0
        %5941 = vmatprep.subr.mxu0 0.0
        %5942 = vmatpush1.msra.mxu0 %v5838
        %5943 = vmatprep.subr.mxu0 0.0
        %5944 = vmatpush1.msra.mxu0 %v5839
        %5945 = vmatprep.subr.mxu0 0.0
        %5946 = vmatpush1.msra.mxu0 %v5840
        %5947 = vmatprep.subr.mxu0 0.0
        %5948 = vmatpush1.msra.mxu0 %v5841
        %5949 = vmatprep.subr.mxu0 0.0
        %5950 = vmatpush1.msra.mxu0 %v5842
        %5951 = vmatprep.subr.mxu0 0.0
        %5952 = vmatpush1.msra.mxu0 %v5843
        %5953 = vmatprep.subr.mxu0 0.0
        %5954 = vmatpush1.msra.mxu0 %v5844
        %5955 = vmatprep.subr.mxu0 0.0
        %5956 = vmatpush1.msra.mxu0 %v5845
        %5957 = vmatprep.subr.mxu0 0.0
        %5958 = vmatpush1.msra.mxu0 %v5846
        %5959 = vmatprep.subr.mxu0 0.0
        %5960 = vmatpush1.msra.mxu0 %v5847
        %5961 = vmatprep.subr.mxu0 0.0
        %5962 = vmatpush1.msra.mxu0 %v5848
        %5963 = vmatprep.subr.mxu0 0.0
        %5964 = vmatpush1.msra.mxu0 %v5849
        %5965 = vmatprep.subr.mxu0 0.0
        %5966 = vmatpush1.msra.mxu0 %v5850
        %5967 = vmatprep.subr.mxu0 0.0
        %5968 = vmatpush1.msra.mxu0 %v5851
        %5969 = vmatprep.subr.mxu0 0.0
        %5970 = vmatpush1.msra.mxu0 %v5852
        %5971 = vmatprep.subr.mxu0 0.0
        %5972 = vmatpush1.msra.mxu0 %v5853
        %5973 = vmatprep.subr.mxu0 0.0
        %5974 = vmatpush1.msra.mxu0 0.0
        %5975 = vmatprep.subr.mxu0 0.0
        %5976 = vmatpush1.msra.mxu0 0.0
        %5977 = vmatprep.subr.mxu0 0.0
        %5978 = vmatpush1.msra.mxu0 0.0
        %5979 = vmatprep.subr.mxu0 0.0
        %5980 = vmatpush1.msra.mxu0 0.0
        %5981 = vmatprep.subr.mxu0 0.0
        %5982 = vmatpush1.msra.mxu0 0.0
        %5983 = vmatprep.subr.mxu0 0.0
        %5984 = vmatpush1.msra.mxu0 0.0
        %5985 = vmatprep.subr.mxu0 0.0
        %5986 = vmatpush1.msra.mxu0 0.0
        %5987 = vmatprep.subr.mxu0 0.0
        %5988 = vmatpush1.msra.mxu0 0.0
        %5989 = vmatprep.subr.mxu0 0.0
        %5990 = vmatpush1.msra.mxu0 0.0
        %5991 = vmatprep.subr.mxu0 0.0
        %5992 = vmatpush1.msra.mxu0 0.0
        %5993 = vmatprep.subr.mxu0 0.0
        %5994 = vmatpush1.msra.mxu0 0.0
        %5995 = vmatprep.subr.mxu0 0.0
        %5996 = vmatpush1.msra.mxu0 0.0
        %5997 = vmatprep.subr.mxu0 0.0
        %5998 = vmatpush1.msra.mxu0 0.0
        %5999 = vmatprep.subr.mxu0 0.0
        %6000 = vmatpush1.msra.mxu0 0.0
        %6001 = vmatprep.subr.mxu0 0.0
        %6002 = vmatpush1.msra.mxu0 0.0
        %6003 = vmatprep.subr.mxu0 0.0
        %6004 = vmatpush1.msra.mxu0 0.0
        %6005 = vmatprep.mubr.f32.mxu0 0.0
        %6006 = vmatmul.mubr.f32.gmra.mrb[0].mxu0 %v5837
        %v6007 = vpop.f32.mrb[0].mxu0
        %v6008 = vadd.f32 %v5938, %v6007
        %v6009 = vpop.f32.mrb[0].mxu0
        %6010 = vdwg.mxu0
        %v6011 = vld [vmem:[%s11] sm:$0x1]
        %v6013 = vlaneseq
        %v6014 = vshrl.u32 %v6013, 7
        %v6015 = vsub.s32 0, %v6014
        %v6016 = vrot.slane %v6011, %v6015
        %v6018 = vadd.f32 %v6008, %v6016
        %6019 = vst [vmem:[%s667] sm:$0xff] %v6018
        %6020 = vmax.xlane.f32.xlu0 %v6018
        %v6021 = vpop.xlane.xlu0 %6020
        %v6022 = vsub.f32 %v6018, %v6021
        %v6023 = vmul.f32 %v6022, 1.442695
        %v6024 = vpow.pop %v6023
        %6025 = vadd.xlane.f32.xlu0 %v6024
        %v6026 = vpop.xlane.xlu0 %6025
        %v6027 = vrcp.pop %v6026
        %v6028 = vmul.f32 %v6024, %v6027
        %6029 = vst [vmem:[%s671] sm:$0xff] %v6028
        %p6030 = scmp.lt.s32.totalorder %s27, 1
        %s6031 = scalar_select %p6030, %s27, 1
        %s6032 = smul.addr %s6031, 8
        %s6033 = scalar_lea.vmem %s12, %s6032
        %p6034 = scmp.lt.s32.totalorder %s27, 1
        %s6035 = scalar_select %p6034, %s27, 1
        %s6036 = smul.addr %s6035, 8
        %s6037 = scalar_lea.vmem %s13, %s6036
        // Predicated region
        $region195: #{_forward.1} parent=169 // pred_check
          %p6038 = pneg %p312
        $region196: #{_forward.1} parent=169 // pred_check_branch
          %6040 = sbr.rel (%p6038) target = $region198
        $region197: #{_forward.1} parent=169 // pred_region
          _
        $region198: #{_forward.1} parent=169 // pred_fallthru
          _
        // Predicated region
        $region199: #{_forward.1} parent=169 // pred_check
          %p6041 = pneg %p338
        $region200: #{_forward.1} parent=169 // pred_check_branch
          %6043 = sbr.rel (%p6041) target = $region202
        $region201: #{_forward.1} parent=169 // pred_region
          _
        $region202: #{_forward.1} parent=169 // pred_fallthru
          _
      $region170: #{_forward.1} parent=5 // pred_fallthru
        _
      %p6044 = scmp.le.s32.totalorder 2, %s22
      // Predicated region
      $region203: #{_forward.1} parent=5 // pred_check
        %p6045 = pneg %p6044
      $region204: #{_forward.1} parent=5 // pred_check_branch
        %6047 = sbr.rel (%p6045) target = $region206
      $region205: #{_forward.1} parent=5 // pred_region
        %s6048 = ssub.s32 %s22, 2
        // Predicated region
        $region207: #{_forward.1} parent=205 // pred_check
          %p6049 = pneg %p318
        $region208: #{_forward.1} parent=205 // pred_check_branch
          %6051 = sbr.rel (%p6049) target = $region210
        $region209: #{_forward.1} parent=205 // pred_region
          %p6052 = scmp.lt.s32.totalorder %s28, 1
          %s6053 = scalar_select %p6052, %s28, 1
          %s6054 = smul.addr %s6053, 8
          %s6055 = scalar_lea.vmem %s12, %s6054
        $region210: #{_forward.1} parent=205 // pred_fallthru
          _
        // Predicated region
        $region211: #{_forward.1} parent=205 // pred_check
          %p6056 = pneg %p344
        $region212: #{_forward.1} parent=205 // pred_check_branch
          %6058 = sbr.rel (%p6056) target = $region214
        $region213: #{_forward.1} parent=205 // pred_region
          %p6059 = scmp.lt.s32.totalorder %s28, 1
          %s6060 = scalar_select %p6059, %s28, 1
          %s6061 = smul.addr %s6060, 8
          %s6062 = scalar_lea.vmem %s13, %s6061
        $region214: #{_forward.1} parent=205 // pred_fallthru
          _
      $region206: #{_forward.1} parent=5 // pred_fallthru
        _
    $region6: #{_forward.1} parent=1 // loop_footer
      %s26 = sadd.s32 1, %s22
    $region7: #{_forward.1} parent=1 // loop_footer_branch
      %21 = sbr.rel target = $region3
    $region8: #{_forward.1} parent=1 // loop_exit
      _
    %6063 = vsyncpa [#allocation9], 1
    %s6064 = scalar_lea.sflag [#allocation9], 1
    %6065 = vsyncpa %s6064, 1
    %6066 = vsyncpa [#allocation13], 1

</llo_original>
